<compile_context>
chip_gen: v7x
topology: tpu7x:2x2x1
jax: 0.10.0
libtpu: 0.0.40
codegen_flags: <defaults>
</compile_context>

<pallas_src>
import jax
import jax.numpy as jnp
from jax.experimental import pallas as pl
from jax.experimental.pallas import tpu as pltpu

H1 = 512        # gc1 hidden dim
H2 = 128        # gc2 hidden dim
NCLS = 7        # Linear output classes
NCLS_PAD = 128  # padded class dim for lane-dense output stores

TM_MAX = 512    # node-row tile target (review: 256 -> 512)
LANE = 128


def _leaky_relu(x, slope=0.1):
    return jnp.where(x > 0, x, slope * x)


def _round_up(n, m):
    return (n + m - 1) // m * m


def _pad2(a, rows, cols):
    r, c = a.shape
    if r == rows and c == cols:
        return a
    return jnp.pad(a, ((0, rows - r), (0, cols - c)))


def _vmem_limit_bytes():
    """Scoped-VMEM limit = ~3/4 of physical VMEM for the current chip
    (≈96 MiB on v5e/v6e, ≈48 MiB on v7x); conservative fallback if the query
    is unavailable."""
    try:
        cap = int(pltpu.get_tpu_info().vmem_capacity_bytes)
    except Exception:
        cap = 64 * 1024 * 1024
    return (cap * 3) // 4


def _largest_row_tile(n_pad):
    """Largest row tile in {512, 256, 128} that divides n_pad."""
    for t in (512, 256, 128):
        if n_pad % t == 0:
            return t
    return 128


def _pick_k_tile(full_k, est_bytes, budget):
    """Largest contraction tile that fits the VMEM budget.

    Preferring the whole contraction dim makes the dense operand (s / W1)
    VMEM-resident: its block index is then grid-invariant, Pallas DMAs it once,
    and each row tile runs a single dot with zero per-k-step overhead.  If the
    resident slab would overflow VMEM (large graphs, esp. on v7x), fall back to
    streaming it in 512/256/128-wide K tiles.
    """
    for tk in (full_k, 512, 256, 128):
        if tk <= full_k and full_k % tk == 0 and est_bytes(tk) <= budget:
            return tk
    return 128


# ---------------------------------------------------------------------------
# Kernel A: feature transform   s = x @ W   (f32 accumulation; k grid collapses
# to size 1 whenever W is VMEM-resident)
# ---------------------------------------------------------------------------
def _xw_kernel(x_ref, w_ref, o_ref, acc_ref):
    k = pl.program_id(1)

    @pl.when(k == 0)
    def _():
        acc_ref[...] = jnp.zeros_like(acc_ref)

    acc_ref[...] += jnp.dot(x_ref[...], w_ref[...],
                            preferred_element_type=jnp.float32)

    @pl.when(k == pl.num_programs(1) - 1)
    def _():
        o_ref[...] = acc_ref[...].astype(o_ref.dtype)


# ---------------------------------------------------------------------------
# Kernel B/C: graph-conv layer
#   out = LeakyReLU(adj @ s + b_pre) @ W + b_post
# adj @ s is accumulated over neighbor tiles (single tile when s is resident);
# the epilogue (bias, LeakyReLU in f32, feature transform, optional post-bias)
# runs on the last reduction tile.
# ---------------------------------------------------------------------------
def _gc_layer_kernel(adj_ref, s_ref, bpre_ref, w_ref, bpost_ref, o_ref, acc_ref):
    k = pl.program_id(1)

    @pl.when(k == 0)
    def _():
        acc_ref[...] = jnp.zeros_like(acc_ref)

    acc_ref[...] += jnp.dot(adj_ref[...], s_ref[...],
                            preferred_element_type=jnp.float32)

    @pl.when(k == pl.num_programs(1) - 1)
    def _():
        h = _leaky_relu(acc_ref[...] + bpre_ref[...])     # f32 epilogue
        # Dropout(p=0.5) -> identity in inference mode.
        out = jnp.dot(h.astype(w_ref.dtype), w_ref[...],
                      preferred_element_type=jnp.float32) + bpost_ref[...]
        o_ref[...] = out.astype(o_ref.dtype)


# ---------------------------------------------------------------------------
# pallas_call wrappers
# ---------------------------------------------------------------------------
def _matmul_tiled(x, w, out_dtype, tm, budget, vmem_limit):
    nr, kf = x.shape
    h = w.shape[1]
    out_isz = jnp.dtype(out_dtype).itemsize

    def est(tk):
        return (2 * tm * tk * x.dtype.itemsize      # x tiles (double-buffered)
                + 2 * tk * h * w.dtype.itemsize     # W tiles (resident when tk == kf)
                + 2 * tm * h * out_isz              # output tiles
                + tm * h * 4)                       # f32 accumulator scratch

    tk = _pick_k_tile(kf, est, budget)
    grid = (nr // tm, kf // tk)
    flops = 2 * nr * kf * h
    bytes_accessed = (x.size * x.dtype.itemsize + w.size * w.dtype.itemsize
                      + nr * h * out_isz)
    return pl.pallas_call(
        _xw_kernel,
        out_shape=jax.ShapeDtypeStruct((nr, h), out_dtype),
        grid_spec=pltpu.PrefetchScalarGridSpec(
            num_scalar_prefetch=0,
            grid=grid,
            in_specs=[
                pl.BlockSpec((tm, tk), lambda i, k: (i, k)),   # x row/feature tile
                pl.BlockSpec((tk, h), lambda i, k: (k, 0)),    # W feature tile
            ],
            out_specs=pl.BlockSpec((tm, h), lambda i, k: (i, 0)),
            scratch_shapes=[pltpu.VMEM((tm, h), jnp.float32)],
        ),
        compiler_params=pltpu.CompilerParams(
            dimension_semantics=("parallel", "arbitrary"),
            vmem_limit_bytes=vmem_limit),
        cost_estimate=pl.CostEstimate(flops=flops, transcendentals=0,
                                      bytes_accessed=bytes_accessed),
    )(x, w)


def _gc_layer_tiled(adj, s, b_pre, w, b_post, out_dtype, tm, budget, vmem_limit):
    nr, nc = adj.shape
    h_in = s.shape[1]
    h_out = w.shape[1]
    out_isz = jnp.dtype(out_dtype).itemsize

    def est(tk):
        return (2 * tm * tk * adj.dtype.itemsize      # adj tiles (double-buffered)
                + 2 * tk * h_in * s.dtype.itemsize    # s tiles (whole graph when tk == nc)
                + 2 * h_in * h_out * w.dtype.itemsize # weight (grid-invariant)
                + 2 * tm * h_out * out_isz            # output tiles
                + tm * h_in * 4                       # f32 accumulator scratch
                + 2 * (h_in + h_out) * 4)             # biases

    tk = _pick_k_tile(nc, est, budget)
    grid = (nr // tm, nc // tk)
    flops = 2 * nr * nc * h_in + 2 * nr * h_in * h_out
    bytes_accessed = (sum(a.size * a.dtype.itemsize
                          for a in (adj, s, b_pre, w, b_post))
                      + nr * h_out * out_isz)
    return pl.pallas_call(
        _gc_layer_kernel,
        out_shape=jax.ShapeDtypeStruct((nr, h_out), out_dtype),
        grid_spec=pltpu.PrefetchScalarGridSpec(
            num_scalar_prefetch=0,
            grid=grid,
            in_specs=[
                pl.BlockSpec((tm, tk), lambda i, k: (i, k)),       # adj row/col tile
                pl.BlockSpec((tk, h_in), lambda i, k: (k, 0)),     # s neighbor tile / resident slab
                pl.BlockSpec((1, h_in), lambda i, k: (0, 0)),      # pre-activation bias
                pl.BlockSpec((h_in, h_out), lambda i, k: (0, 0)),  # weight (grid-invariant)
                pl.BlockSpec((1, h_out), lambda i, k: (0, 0)),     # post bias
            ],
            out_specs=pl.BlockSpec((tm, h_out), lambda i, k: (i, 0)),
            scratch_shapes=[pltpu.VMEM((tm, h_in), jnp.float32)],
        ),
        compiler_params=pltpu.CompilerParams(
            dimension_semantics=("parallel", "arbitrary"),
            vmem_limit_bytes=vmem_limit),
        cost_estimate=pl.CostEstimate(flops=flops, transcendentals=0,
                                      bytes_accessed=bytes_accessed),
    )(adj, s, b_pre, w, b_post)


def gcn_forward(x, adj, params):
    """GCN forward. x: [N, F] f32, adj: [N, N] f32 dense normalized adjacency."""
    w1, b1, w2, b2, wl_t, bl = params
    n, f = x.shape

    vmem_limit = _vmem_limit_bytes()
    budget = (vmem_limit * 17) // 20   # ~85% of the scoped limit for tile planning

    # Decoupled padding (review): the contraction / neighbor dim only to 128,
    # the output row dim to the row tile.  Zero padding is exact: padded
    # adjacency columns and feature columns contribute nothing, and padded
    # output rows / classes are sliced off below.
    np_c = _round_up(n, LANE)           # adj columns, s rows (contraction dim)
    tm_r = min(TM_MAX, np_c)            # row tile for the adj@s layers
    np_r = _round_up(n, tm_r)           # adj rows / output rows  (np_r >= np_c)
    tm_a = _largest_row_tile(np_c)      # row tile for the x@W1 layer
    fp = _round_up(f, LANE)             # input-feature dim, classes padded 7 -> 128

    bf16 = jnp.bfloat16
    x_p = _pad2(x, np_c, fp).astype(bf16)
    adj_p = _pad2(adj, np_r, np_c).astype(bf16)
    w1_p = _pad2(w1, fp, H1).astype(bf16)
    w2_b = w2.astype(bf16)
    wl_p = _pad2(wl_t, H2, NCLS_PAD).astype(bf16)
    bl_p = _pad2(bl, 1, NCLS_PAD).astype(jnp.float32)
    b1_f = b1.astype(jnp.float32)
    b2_f = b2.astype(jnp.float32)
    zero_post = jnp.zeros((1, H2), jnp.float32)

    # A) s1 = x @ W1                                   [np_c, 512]
    s1 = _matmul_tiled(x_p, w1_p, bf16, tm_a, budget, vmem_limit)
    # B) s2 = LeakyReLU(adj @ s1 + b1) @ W2            [np_r, 128]  (dropout -> identity)
    s2 = _gc_layer_tiled(adj_p, s1, b1_f, w2_b, zero_post, bf16,
                         tm_r, budget, vmem_limit)
    # Layer C contracts over the node dim, which is padded to np_c (<= np_r);
    # the extra all-zero-adjacency rows of s2 carry garbage but are dropped here.
    if np_r != np_c:
        s2 = s2[:np_c]
    # C) out = LeakyReLU(adj @ s2 + b2) @ Wl + bl      [np_r, 128]  (dropout -> identity)
    out_p = _gc_layer_tiled(adj_p, s2, b2_f, wl_p, bl_p, jnp.float32,
                            tm_r, budget, vmem_limit)

    return out_p[:n, :NCLS]


def init_params(key, nfeat, nhid1=H1, nhid2=H2, nclass=NCLS):
    """Deterministic parameter init (Kipf-style uniform(-stdv, stdv))."""
    k1, k2, k3, k4, k5, k6 = jax.random.split(key, 6)
    s1 = 1.0 / jnp.sqrt(nhid1)
    s2 = 1.0 / jnp.sqrt(nhid2)
    s3 = 1.0 / jnp.sqrt(nhid2)  # Linear fan_in = 128
    w1 = jax.random.uniform(k1, (nfeat, nhid1), jnp.float32, -s1, s1)
    b1 = jax.random.uniform(k2, (1, nhid1), jnp.float32, -s1, s1)
    w2 = jax.random.uniform(k3, (nhid1, nhid2), jnp.float32, -s2, s2)
    b2 = jax.random.uniform(k4, (1, nhid2), jnp.float32, -s2, s2)
    # PyTorch Linear stores weight as [out, in]; transpose once here.
    wl = jax.random.uniform(k5, (nclass, nhid2), jnp.float32, -s3, s3)
    bl = jax.random.uniform(k6, (1, nclass), jnp.float32, -s3, s3)
    return (w1, b1, w2, b2, wl.T, bl)


def gcn_reference(x, adj, params):
    """Plain-JAX reference mirroring the kernel's bf16 operand rounding."""
    w1, b1, w2, b2, wl_t, bl = params
    q = lambda a: a.astype(jnp.bfloat16).astype(jnp.float32)
    xq, adjq = q(x), q(adj)
    s1 = q(xq @ q(w1))
    h1 = _leaky_relu(adjq @ s1 + b1)
    s2 = q(q(h1) @ q(w2))
    h2 = _leaky_relu(adjq @ s2 + b2)
    return q(h2) @ q(wl_t) + bl


if __name__ == "__main__":
    N = 200       # number of graph nodes (exercises row padding 200 -> 256)
    NFEAT = 200   # input feature dim (module default 1433, shrunk for the test)

    key = jax.random.PRNGKey(0)
    kx, kadj, kp = jax.random.split(key, 3)

    x = jax.random.normal(kx, (N, NFEAT), dtype=jnp.float32)
    # Symmetric row-normalized dense adjacency with self loops.
    a = (jax.random.uniform(kadj, (N, N)) < 0.05).astype(jnp.float32)
    a = a + a.T + jnp.eye(N, dtype=jnp.float32)
    a = jnp.minimum(a, 1.0)
    adj = a / jnp.sum(a, axis=1, keepdims=True)

    params = init_params(kp, NFEAT)

    fwd = jax.jit(gcn_forward)
    out = jax.block_until_ready(fwd(x, adj, params))
    ref = gcn_reference(x, adj, params)

    assert out.shape == (N, NCLS)
    assert jnp.allclose(out, ref, atol=2e-3, rtol=2e-2), \
        float(jnp.max(jnp.abs(out - ref)))

    print("KERNEL_OK")
</pallas_src>

<mosaic_0001>
module attributes {stable_mosaic.version = 11 : i64} {
  func.func @_xw_kernel(%arg0: i32, %arg1: i32, %arg2: memref<256x256xbf16, #tpu.memory_space<vmem>>, %arg3: memref<256x512xbf16, #tpu.memory_space<vmem>>, %arg4: memref<256x512xbf16, #tpu.memory_space<vmem>>, %arg5: memref<256x512xf32, #tpu.memory_space<vmem>>) attributes {dimension_semantics = [#tpu.dimension_semantics<parallel>, #tpu.dimension_semantics<arbitrary>], iteration_bounds = array<i64: 1, 1>, scalar_prefetch = 0 : i64, scratch_operands = 1 : i64, tpu.core_type = #tpu.core_type<tc>, window_params = [{transform_indices = @transform_0, window_bounds = array<i64: 256, 256>}, {transform_indices = @transform_1, window_bounds = array<i64: 256, 512>}, {transform_indices = @transform_2, window_bounds = array<i64: 256, 512>}]} {
    %c0_i32 = arith.constant 0 : i32
    %0 = arith.cmpi eq, %arg1, %c0_i32 : i32
    %1 = arith.extui %0 : i1 to i32
    %c0_i32_0 = arith.constant 0 : i32
    %2 = arith.cmpi ne, %1, %c0_i32_0 : i32
    scf.if %2 {
      %cst_10 = arith.constant 0.000000e+00 : f32
      %12 = vector.broadcast %cst_10 : f32 to vector<256x512xf32>
      %c0_11 = arith.constant 0 : index
      %c0_12 = arith.constant 0 : index
      %13 = vector.load %arg5[%c0_11, %c0_12] : memref<256x512xf32, #tpu.memory_space<vmem>>, vector<256x512xf32>
      tpu.vector_store %arg5[%c0_11, %c0_12], %12 {strides = array<i32>} : memref<256x512xf32, #tpu.memory_space<vmem>>, vector<256x512xf32>,
    } else {
    }
    %c0 = arith.constant 0 : index
    %c0_1 = arith.constant 0 : index
    %3 = vector.load %arg5[%c0, %c0_1] : memref<256x512xf32, #tpu.memory_space<vmem>>, vector<256x512xf32>
    %c0_2 = arith.constant 0 : index
    %c0_3 = arith.constant 0 : index
    %4 = vector.load %arg2[%c0_2, %c0_3] : memref<256x256xbf16, #tpu.memory_space<vmem>>, vector<256x256xbf16>
    %c0_4 = arith.constant 0 : index
    %c0_5 = arith.constant 0 : index
    %5 = vector.load %arg3[%c0_4, %c0_5] : memref<256x512xbf16, #tpu.memory_space<vmem>>, vector<256x512xbf16>
    %cst = arith.constant dense<0.000000e+00> : vector<256x512xf32>
    %6 = tpu.matmul %4, %5, %cst {dimension_numbers = #tpu.dot_dimension_numbers<[1], [0], [0], [1], [0, 0, 1, 1], [], []>} : vector<256x256xbf16>, vector<256x512xbf16>, vector<256x512xf32> -> vector<256x512xf32>
    %7 = arith.addf %3, %6 : vector<256x512xf32>
    %c0_6 = arith.constant 0 : index
    %c0_7 = arith.constant 0 : index
    %8 = vector.load %arg5[%c0_6, %c0_7] : memref<256x512xf32, #tpu.memory_space<vmem>>, vector<256x512xf32>
    tpu.vector_store %arg5[%c0_6, %c0_7], %7 {strides = array<i32>} : memref<256x512xf32, #tpu.memory_space<vmem>>, vector<256x512xf32>,
    %c0_i32_8 = arith.constant 0 : i32
    %9 = arith.cmpi eq, %arg1, %c0_i32_8 : i32
    %10 = arith.extui %9 : i1 to i32
    %c0_i32_9 = arith.constant 0 : i32
    %11 = arith.cmpi ne, %10, %c0_i32_9 : i32
    scf.if %11 {
      %c0_10 = arith.constant 0 : index
      %c0_11 = arith.constant 0 : index
      %12 = vector.load %arg5[%c0_10, %c0_11] : memref<256x512xf32, #tpu.memory_space<vmem>>, vector<256x512xf32>
      %13 = arith.truncf %12 : vector<256x512xf32> to vector<256x512xbf16>
      %c0_12 = arith.constant 0 : index
      %c0_13 = arith.constant 0 : index
      %14 = vector.load %arg4[%c0_12, %c0_13] : memref<256x512xbf16, #tpu.memory_space<vmem>>, vector<256x512xbf16>
      tpu.vector_store %arg4[%c0_12, %c0_13], %13 {strides = array<i32>} : memref<256x512xbf16, #tpu.memory_space<vmem>>, vector<256x512xbf16>,
    } else {
    }
    return
  }
  func.func @transform_0(%arg0: i32, %arg1: i32) -> (i32, i32) {
    %c0_i32 = arith.constant 0 : i32
    return %arg0, %arg1 : i32, i32
  }
  func.func @transform_1(%arg0: i32, %arg1: i32) -> (i32, i32) {
    %c0_i32 = arith.constant 0 : i32
    %c0_i32_0 = arith.constant 0 : i32
    return %arg1, %c0_i32 : i32, i32
  }
  func.func @transform_2(%arg0: i32, %arg1: i32) -> (i32, i32) {
    %c0_i32 = arith.constant 0 : i32
    %c0_i32_0 = arith.constant 0 : i32
    return %arg0, %c0_i32 : i32, i32
  }
}

module attributes {stable_mosaic.version = 11 : i64} {
  func.func @_gc_layer_kernel(%arg0: i32, %arg1: i32, %arg2: memref<256x256xbf16, #tpu.memory_space<vmem>>, %arg3: memref<256x512xbf16, #tpu.memory_space<vmem>>, %arg4: memref<1x512xf32, #tpu.memory_space<vmem>>, %arg5: memref<512x128xbf16, #tpu.memory_space<vmem>>, %arg6: memref<1x128xf32, #tpu.memory_space<vmem>>, %arg7: memref<256x128xbf16, #tpu.memory_space<vmem>>, %arg8: memref<256x512xf32, #tpu.memory_space<vmem>>) attributes {dimension_semantics = [#tpu.dimension_semantics<parallel>, #tpu.dimension_semantics<arbitrary>], iteration_bounds = array<i64: 1, 1>, scalar_prefetch = 0 : i64, scratch_operands = 1 : i64, tpu.core_type = #tpu.core_type<tc>, window_params = [{transform_indices = @transform_0, window_bounds = array<i64: 256, 256>}, {transform_indices = @transform_1, window_bounds = array<i64: 256, 512>}, {pipeline_mode = #tpu.pipeline_mode<synchronous>, transform_indices = @transform_2, window_bounds = array<i64: 1, 512>}, {pipeline_mode = #tpu.pipeline_mode<synchronous>, transform_indices = @transform_3, window_bounds = array<i64: 512, 128>}, {pipeline_mode = #tpu.pipeline_mode<synchronous>, transform_indices = @transform_4, window_bounds = array<i64: 1, 128>}, {transform_indices = @transform_5, window_bounds = array<i64: 256, 128>}]} {
    %c0_i32 = arith.constant 0 : i32
    %0 = arith.cmpi eq, %arg1, %c0_i32 : i32
    %1 = arith.extui %0 : i1 to i32
    %c0_i32_0 = arith.constant 0 : i32
    %2 = arith.cmpi ne, %1, %c0_i32_0 : i32
    scf.if %2 {
      %cst_10 = arith.constant 0.000000e+00 : f32
      %12 = vector.broadcast %cst_10 : f32 to vector<256x512xf32>
      %c0_11 = arith.constant 0 : index
      %c0_12 = arith.constant 0 : index
      %13 = vector.load %arg8[%c0_11, %c0_12] : memref<256x512xf32, #tpu.memory_space<vmem>>, vector<256x512xf32>
      tpu.vector_store %arg8[%c0_11, %c0_12], %12 {strides = array<i32>} : memref<256x512xf32, #tpu.memory_space<vmem>>, vector<256x512xf32>,
    } else {
    }
    %c0 = arith.constant 0 : index
    %c0_1 = arith.constant 0 : index
    %3 = vector.load %arg8[%c0, %c0_1] : memref<256x512xf32, #tpu.memory_space<vmem>>, vector<256x512xf32>
    %c0_2 = arith.constant 0 : index
    %c0_3 = arith.constant 0 : index
    %4 = vector.load %arg2[%c0_2, %c0_3] : memref<256x256xbf16, #tpu.memory_space<vmem>>, vector<256x256xbf16>
    %c0_4 = arith.constant 0 : index
    %c0_5 = arith.constant 0 : index
    %5 = vector.load %arg3[%c0_4, %c0_5] : memref<256x512xbf16, #tpu.memory_space<vmem>>, vector<256x512xbf16>
    %cst = arith.constant dense<0.000000e+00> : vector<256x512xf32>
    %6 = tpu.matmul %4, %5, %cst {dimension_numbers = #tpu.dot_dimension_numbers<[1], [0], [0], [1], [0, 0, 1, 1], [], []>} : vector<256x256xbf16>, vector<256x512xbf16>, vector<256x512xf32> -> vector<256x512xf32>
    %7 = arith.addf %3, %6 : vector<256x512xf32>
    %c0_6 = arith.constant 0 : index
    %c0_7 = arith.constant 0 : index
    %8 = vector.load %arg8[%c0_6, %c0_7] : memref<256x512xf32, #tpu.memory_space<vmem>>, vector<256x512xf32>
    tpu.vector_store %arg8[%c0_6, %c0_7], %7 {strides = array<i32>} : memref<256x512xf32, #tpu.memory_space<vmem>>, vector<256x512xf32>,
    %c0_i32_8 = arith.constant 0 : i32
    %9 = arith.cmpi eq, %arg1, %c0_i32_8 : i32
    %10 = arith.extui %9 : i1 to i32
    %c0_i32_9 = arith.constant 0 : i32
    %11 = arith.cmpi ne, %10, %c0_i32_9 : i32
    scf.if %11 {
      %c0_10 = arith.constant 0 : index
      %c0_11 = arith.constant 0 : index
      %12 = vector.load %arg8[%c0_10, %c0_11] : memref<256x512xf32, #tpu.memory_space<vmem>>, vector<256x512xf32>
      %c0_12 = arith.constant 0 : index
      %c0_13 = arith.constant 0 : index
      %13 = vector.load %arg4[%c0_12, %c0_13] : memref<1x512xf32, #tpu.memory_space<vmem>>, vector<1x512xf32>
      %14 = vector.broadcast %13 : vector<1x512xf32> to vector<256x512xf32>
      %15 = arith.addf %12, %14 : vector<256x512xf32>
      %cst_14 = arith.constant 0.000000e+00 : f32
      %16 = vector.broadcast %cst_14 : f32 to vector<256x512xf32>
      %17 = arith.cmpf ogt, %15, %16 : vector<256x512xf32>
      %cst_15 = arith.constant 1.000000e-01 : f32
      %18 = vector.broadcast %cst_15 : f32 to vector<256x512xf32>
      %19 = arith.mulf %18, %15 : vector<256x512xf32>
      %20 = arith.select %17, %15, %19 : vector<256x512xi1>, vector<256x512xf32>
      %21 = arith.truncf %20 : vector<256x512xf32> to vector<256x512xbf16>
      %c0_16 = arith.constant 0 : index
      %c0_17 = arith.constant 0 : index
      %22 = vector.load %arg5[%c0_16, %c0_17] : memref<512x128xbf16, #tpu.memory_space<vmem>>, vector<512x128xbf16>
      %cst_18 = arith.constant dense<0.000000e+00> : vector<256x128xf32>
      %23 = tpu.matmul %21, %22, %cst_18 {dimension_numbers = #tpu.dot_dimension_numbers<[1], [0], [0], [1], [0, 0, 1, 1], [], []>} : vector<256x512xbf16>, vector<512x128xbf16>, vector<256x128xf32> -> vector<256x128xf32>
      %c0_19 = arith.constant 0 : index
      %c0_20 = arith.constant 0 : index
      %24 = vector.load %arg6[%c0_19, %c0_20] : memref<1x128xf32, #tpu.memory_space<vmem>>, vector<1x128xf32>
      %25 = vector.broadcast %24 : vector<1x128xf32> to vector<256x128xf32>
      %26 = arith.addf %23, %25 : vector<256x128xf32>
      %27 = arith.truncf %26 : vector<256x128xf32> to vector<256x128xbf16>
      %c0_21 = arith.constant 0 : index
      %c0_22 = arith.constant 0 : index
      %28 = vector.load %arg7[%c0_21, %c0_22] : memref<256x128xbf16, #tpu.memory_space<vmem>>, vector<256x128xbf16>
      tpu.vector_store %arg7[%c0_21, %c0_22], %27 {strides = array<i32>} : memref<256x128xbf16, #tpu.memory_space<vmem>>, vector<256x128xbf16>,
    } else {
    }
    return
  }
  func.func @transform_0(%arg0: i32, %arg1: i32) -> (i32, i32) {
    %c0_i32 = arith.constant 0 : i32
    return %arg0, %arg1 : i32, i32
  }
  func.func @transform_1(%arg0: i32, %arg1: i32) -> (i32, i32) {
    %c0_i32 = arith.constant 0 : i32
    %c0_i32_0 = arith.constant 0 : i32
    return %arg1, %c0_i32 : i32, i32
  }
  func.func @transform_2(%arg0: i32, %arg1: i32) -> (i32, i32) {
    %c0_i32 = arith.constant 0 : i32
    %c0_i32_0 = arith.constant 0 : i32
    %c0_i32_1 = arith.constant 0 : i32
    return %c0_i32, %c0_i32_0 : i32, i32
  }
  func.func @transform_3(%arg0: i32, %arg1: i32) -> (i32, i32) {
    %c0_i32 = arith.constant 0 : i32
    %c0_i32_0 = arith.constant 0 : i32
    %c0_i32_1 = arith.constant 0 : i32
    return %c0_i32, %c0_i32_0 : i32, i32
  }
  func.func @transform_4(%arg0: i32, %arg1: i32) -> (i32, i32) {
    %c0_i32 = arith.constant 0 : i32
    %c0_i32_0 = arith.constant 0 : i32
    %c0_i32_1 = arith.constant 0 : i32
    return %c0_i32, %c0_i32_0 : i32, i32
  }
  func.func @transform_5(%arg0: i32, %arg1: i32) -> (i32, i32) {
    %c0_i32 = arith.constant 0 : i32
    %c0_i32_0 = arith.constant 0 : i32
    return %arg0, %c0_i32 : i32, i32
  }
}

module attributes {stable_mosaic.version = 11 : i64} {
  func.func @_gc_layer_kernel(%arg0: i32, %arg1: i32, %arg2: memref<256x256xbf16, #tpu.memory_space<vmem>>, %arg3: memref<256x128xbf16, #tpu.memory_space<vmem>>, %arg4: memref<1x128xf32, #tpu.memory_space<vmem>>, %arg5: memref<128x128xbf16, #tpu.memory_space<vmem>>, %arg6: memref<1x128xf32, #tpu.memory_space<vmem>>, %arg7: memref<256x128xf32, #tpu.memory_space<vmem>>, %arg8: memref<256x128xf32, #tpu.memory_space<vmem>>) attributes {dimension_semantics = [#tpu.dimension_semantics<parallel>, #tpu.dimension_semantics<arbitrary>], iteration_bounds = array<i64: 1, 1>, scalar_prefetch = 0 : i64, scratch_operands = 1 : i64, tpu.core_type = #tpu.core_type<tc>, window_params = [{transform_indices = @transform_0, window_bounds = array<i64: 256, 256>}, {transform_indices = @transform_1, window_bounds = array<i64: 256, 128>}, {pipeline_mode = #tpu.pipeline_mode<synchronous>, transform_indices = @transform_2, window_bounds = array<i64: 1, 128>}, {pipeline_mode = #tpu.pipeline_mode<synchronous>, transform_indices = @transform_3, window_bounds = array<i64: 128, 128>}, {pipeline_mode = #tpu.pipeline_mode<synchronous>, transform_indices = @transform_4, window_bounds = array<i64: 1, 128>}, {transform_indices = @transform_5, window_bounds = array<i64: 256, 128>}]} {
    %c0_i32 = arith.constant 0 : i32
    %0 = arith.cmpi eq, %arg1, %c0_i32 : i32
    %1 = arith.extui %0 : i1 to i32
    %c0_i32_0 = arith.constant 0 : i32
    %2 = arith.cmpi ne, %1, %c0_i32_0 : i32
    scf.if %2 {
      %cst_10 = arith.constant 0.000000e+00 : f32
      %12 = vector.broadcast %cst_10 : f32 to vector<256x128xf32>
      %c0_11 = arith.constant 0 : index
      %c0_12 = arith.constant 0 : index
      %13 = vector.load %arg8[%c0_11, %c0_12] : memref<256x128xf32, #tpu.memory_space<vmem>>, vector<256x128xf32>
      tpu.vector_store %arg8[%c0_11, %c0_12], %12 {strides = array<i32>} : memref<256x128xf32, #tpu.memory_space<vmem>>, vector<256x128xf32>,
    } else {
    }
    %c0 = arith.constant 0 : index
    %c0_1 = arith.constant 0 : index
    %3 = vector.load %arg8[%c0, %c0_1] : memref<256x128xf32, #tpu.memory_space<vmem>>, vector<256x128xf32>
    %c0_2 = arith.constant 0 : index
    %c0_3 = arith.constant 0 : index
    %4 = vector.load %arg2[%c0_2, %c0_3] : memref<256x256xbf16, #tpu.memory_space<vmem>>, vector<256x256xbf16>
    %c0_4 = arith.constant 0 : index
    %c0_5 = arith.constant 0 : index
    %5 = vector.load %arg3[%c0_4, %c0_5] : memref<256x128xbf16, #tpu.memory_space<vmem>>, vector<256x128xbf16>
    %cst = arith.constant dense<0.000000e+00> : vector<256x128xf32>
    %6 = tpu.matmul %4, %5, %cst {dimension_numbers = #tpu.dot_dimension_numbers<[1], [0], [0], [1], [0, 0, 1, 1], [], []>} : vector<256x256xbf16>, vector<256x128xbf16>, vector<256x128xf32> -> vector<256x128xf32>
    %7 = arith.addf %3, %6 : vector<256x128xf32>
    %c0_6 = arith.constant 0 : index
    %c0_7 = arith.constant 0 : index
    %8 = vector.load %arg8[%c0_6, %c0_7] : memref<256x128xf32, #tpu.memory_space<vmem>>, vector<256x128xf32>
    tpu.vector_store %arg8[%c0_6, %c0_7], %7 {strides = array<i32>} : memref<256x128xf32, #tpu.memory_space<vmem>>, vector<256x128xf32>,
    %c0_i32_8 = arith.constant 0 : i32
    %9 = arith.cmpi eq, %arg1, %c0_i32_8 : i32
    %10 = arith.extui %9 : i1 to i32
    %c0_i32_9 = arith.constant 0 : i32
    %11 = arith.cmpi ne, %10, %c0_i32_9 : i32
    scf.if %11 {
      %c0_10 = arith.constant 0 : index
      %c0_11 = arith.constant 0 : index
      %12 = vector.load %arg8[%c0_10, %c0_11] : memref<256x128xf32, #tpu.memory_space<vmem>>, vector<256x128xf32>
      %c0_12 = arith.constant 0 : index
      %c0_13 = arith.constant 0 : index
      %13 = vector.load %arg4[%c0_12, %c0_13] : memref<1x128xf32, #tpu.memory_space<vmem>>, vector<1x128xf32>
      %14 = vector.broadcast %13 : vector<1x128xf32> to vector<256x128xf32>
      %15 = arith.addf %12, %14 : vector<256x128xf32>
      %cst_14 = arith.constant 0.000000e+00 : f32
      %16 = vector.broadcast %cst_14 : f32 to vector<256x128xf32>
      %17 = arith.cmpf ogt, %15, %16 : vector<256x128xf32>
      %cst_15 = arith.constant 1.000000e-01 : f32
      %18 = vector.broadcast %cst_15 : f32 to vector<256x128xf32>
      %19 = arith.mulf %18, %15 : vector<256x128xf32>
      %20 = arith.select %17, %15, %19 : vector<256x128xi1>, vector<256x128xf32>
      %21 = arith.truncf %20 : vector<256x128xf32> to vector<256x128xbf16>
      %c0_16 = arith.constant 0 : index
      %c0_17 = arith.constant 0 : index
      %22 = vector.load %arg5[%c0_16, %c0_17] : memref<128x128xbf16, #tpu.memory_space<vmem>>, vector<128x128xbf16>
      %cst_18 = arith.constant dense<0.000000e+00> : vector<256x128xf32>
      %23 = tpu.matmul %21, %22, %cst_18 {dimension_numbers = #tpu.dot_dimension_numbers<[1], [0], [0], [1], [0, 0, 1, 1], [], []>} : vector<256x128xbf16>, vector<128x128xbf16>, vector<256x128xf32> -> vector<256x128xf32>
      %c0_19 = arith.constant 0 : index
      %c0_20 = arith.constant 0 : index
      %24 = vector.load %arg6[%c0_19, %c0_20] : memref<1x128xf32, #tpu.memory_space<vmem>>, vector<1x128xf32>
      %25 = vector.broadcast %24 : vector<1x128xf32> to vector<256x128xf32>
      %26 = arith.addf %23, %25 : vector<256x128xf32>
      %c0_21 = arith.constant 0 : index
      %c0_22 = arith.constant 0 : index
      %27 = vector.load %arg7[%c0_21, %c0_22] : memref<256x128xf32, #tpu.memory_space<vmem>>, vector<256x128xf32>
      tpu.vector_store %arg7[%c0_21, %c0_22], %26 {strides = array<i32>} : memref<256x128xf32, #tpu.memory_space<vmem>>, vector<256x128xf32>,
    } else {
    }
    return
  }
  func.func @transform_0(%arg0: i32, %arg1: i32) -> (i32, i32) {
    %c0_i32 = arith.constant 0 : i32
    return %arg0, %arg1 : i32, i32
  }
  func.func @transform_1(%arg0: i32, %arg1: i32) -> (i32, i32) {
    %c0_i32 = arith.constant 0 : i32
    %c0_i32_0 = arith.constant 0 : i32
    return %arg1, %c0_i32 : i32, i32
  }
  func.func @transform_2(%arg0: i32, %arg1: i32) -> (i32, i32) {
    %c0_i32 = arith.constant 0 : i32
    %c0_i32_0 = arith.constant 0 : i32
    %c0_i32_1 = arith.constant 0 : i32
    return %c0_i32, %c0_i32_0 : i32, i32
  }
  func.func @transform_3(%arg0: i32, %arg1: i32) -> (i32, i32) {
    %c0_i32 = arith.constant 0 : i32
    %c0_i32_0 = arith.constant 0 : i32
    %c0_i32_1 = arith.constant 0 : i32
    return %c0_i32, %c0_i32_0 : i32, i32
  }
  func.func @transform_4(%arg0: i32, %arg1: i32) -> (i32, i32) {
    %c0_i32 = arith.constant 0 : i32
    %c0_i32_0 = arith.constant 0 : i32
    %c0_i32_1 = arith.constant 0 : i32
    return %c0_i32, %c0_i32_0 : i32, i32
  }
  func.func @transform_5(%arg0: i32, %arg1: i32) -> (i32, i32) {
    %c0_i32 = arith.constant 0 : i32
    %c0_i32_0 = arith.constant 0 : i32
    return %arg0, %c0_i32 : i32, i32
  }
}

</mosaic_0001>

<llo_original>
// kernel: gcn_forward.5
$region0: #{gcn_forward.5}
  #allocation0 [shape = 'u32[]', space=smem, size = 0x4, offset = 0x4, fixed_abs, tag = 'smem constant byte address 0x4 - core index']
  #allocation1 [shape = 'u32[144,128]{1,0:T(1,128)}', space=vmem, size = 0x12000, scoped, tag = 'internal scratch']
  #allocation2 [shape = 'f32[256,128]{1,0:T(8,128)}', space=vmem, size = 0x20000, scoped, tag = 'scratch operand']
  %s0 = inlined_call_operand.vmem [shape: bf16[256,256], index: 0, kind: input, shape index: {}]
  %s1 = inlined_call_operand.vmem [shape: bf16[256,128], index: 1, kind: input, shape index: {}]
  %s2 = inlined_call_operand.vmem [shape: f32[1,128], index: 2, kind: input, shape index: {}]
  %s3 = inlined_call_operand.vmem [shape: bf16[128,128], index: 3, kind: input, shape index: {}]
  %s4 = inlined_call_operand.vmem [shape: f32[1,128], index: 4, kind: input, shape index: {}]
  %s5 = inlined_call_operand.vmem [shape: f32[256,128], index: 5, kind: output, shape index: {}]
  %s6 = sld [smem:[#allocation0]]
  $region38: #{gcn_forward.5} parent=0
    _
  %s8 = ssub.s32 1, %s6
  %s9 = scalar_select 0, %s8, %s6
  // Predicated region
  $region2: #{gcn_forward.5} parent=0 // pred_check
    _
  $region3: #{gcn_forward.5} parent=0 // pred_check_branch
    %11 = sbr.rel (0) target = $region5
  $region4: #{gcn_forward.5} parent=0 // pred_region
    _
  $region5: #{gcn_forward.5} parent=0 // pred_fallthru
    _
  // Predicated region
  $region6: #{gcn_forward.5} parent=0 // pred_check
    _
  $region7: #{gcn_forward.5} parent=0 // pred_check_branch
    %13 = sbr.rel (0) target = $region9
  $region8: #{gcn_forward.5} parent=0 // pred_region
    _
  $region9: #{gcn_forward.5} parent=0 // pred_fallthru
    _
  // Predicated region
  $region10: #{gcn_forward.5} parent=0 // pred_check
    _
  $region11: #{gcn_forward.5} parent=0 // pred_check_branch
    %15 = sbr.rel (0) target = $region13
  $region12: #{gcn_forward.5} parent=0 // pred_region
    _
  $region13: #{gcn_forward.5} parent=0 // pred_fallthru
    _
  // Predicated region
  $region14: #{gcn_forward.5} parent=0 // pred_check
    _
  $region15: #{gcn_forward.5} parent=0 // pred_check_branch
    %17 = sbr.rel (0) target = $region17
  $region16: #{gcn_forward.5} parent=0 // pred_region
    _
  $region17: #{gcn_forward.5} parent=0 // pred_fallthru
    _
  // Predicated region
  $region18: #{gcn_forward.5} parent=0 // pred_check
    _
  $region19: #{gcn_forward.5} parent=0 // pred_check_branch
    %19 = sbr.rel (0) target = $region21
  $region20: #{gcn_forward.5} parent=0 // pred_region
    _
  $region21: #{gcn_forward.5} parent=0 // pred_fallthru
    _
  %p21 = scmp.eq.s32.totalorder 0, 0
  // Predicated region
  $region22: #{gcn_forward.5} parent=0 // pred_check
    %p22 = pneg %p21
  $region23: #{gcn_forward.5} parent=0 // pred_check_branch
    %24 = sbr.rel (%p22) target = $region25
  $region24: #{gcn_forward.5} parent=0 // pred_region
    %25 = vst [vmem:[#allocation2] sm:$0xff] 0.0
    %26 = vst [vmem:[#allocation2 + $0x8] sm:$0xff] 0.0
    %27 = vst [vmem:[#allocation2 + $0x10] sm:$0xff] 0.0
    %28 = vst [vmem:[#allocation2 + $0x18] sm:$0xff] 0.0
    %29 = vst [vmem:[#allocation2 + $0x20] sm:$0xff] 0.0
    %30 = vst [vmem:[#allocation2 + $0x28] sm:$0xff] 0.0
    %31 = vst [vmem:[#allocation2 + $0x30] sm:$0xff] 0.0
    %32 = vst [vmem:[#allocation2 + $0x38] sm:$0xff] 0.0
    %33 = vst [vmem:[#allocation2 + $0x40] sm:$0xff] 0.0
    %34 = vst [vmem:[#allocation2 + $0x48] sm:$0xff] 0.0
    %35 = vst [vmem:[#allocation2 + $0x50] sm:$0xff] 0.0
    %36 = vst [vmem:[#allocation2 + $0x58] sm:$0xff] 0.0
    %37 = vst [vmem:[#allocation2 + $0x60] sm:$0xff] 0.0
    %38 = vst [vmem:[#allocation2 + $0x68] sm:$0xff] 0.0
    %39 = vst [vmem:[#allocation2 + $0x70] sm:$0xff] 0.0
    %40 = vst [vmem:[#allocation2 + $0x78] sm:$0xff] 0.0
    %41 = vst [vmem:[#allocation2 + $0x80] sm:$0xff] 0.0
    %42 = vst [vmem:[#allocation2 + $0x88] sm:$0xff] 0.0
    %43 = vst [vmem:[#allocation2 + $0x90] sm:$0xff] 0.0
    %44 = vst [vmem:[#allocation2 + $0x98] sm:$0xff] 0.0
    %45 = vst [vmem:[#allocation2 + $0xa0] sm:$0xff] 0.0
    %46 = vst [vmem:[#allocation2 + $0xa8] sm:$0xff] 0.0
    %47 = vst [vmem:[#allocation2 + $0xb0] sm:$0xff] 0.0
    %48 = vst [vmem:[#allocation2 + $0xb8] sm:$0xff] 0.0
    %49 = vst [vmem:[#allocation2 + $0xc0] sm:$0xff] 0.0
    %50 = vst [vmem:[#allocation2 + $0xc8] sm:$0xff] 0.0
    %51 = vst [vmem:[#allocation2 + $0xd0] sm:$0xff] 0.0
    %52 = vst [vmem:[#allocation2 + $0xd8] sm:$0xff] 0.0
    %53 = vst [vmem:[#allocation2 + $0xe0] sm:$0xff] 0.0
    %54 = vst [vmem:[#allocation2 + $0xe8] sm:$0xff] 0.0
    %55 = vst [vmem:[#allocation2 + $0xf0] sm:$0xff] 0.0
    %56 = vst [vmem:[#allocation2 + $0xf8] sm:$0xff] 0.0
  $region25: #{gcn_forward.5} parent=0 // pred_fallthru
    _
  %v57 = vld [vmem:[#allocation2] sm:$0xff]
  %v58 = vld [vmem:[#allocation2 + $0x8] sm:$0xff]
  %v59 = vld [vmem:[#allocation2 + $0x10] sm:$0xff]
  %v60 = vld [vmem:[#allocation2 + $0x18] sm:$0xff]
  %v61 = vld [vmem:[#allocation2 + $0x20] sm:$0xff]
  %v62 = vld [vmem:[#allocation2 + $0x28] sm:$0xff]
  %v63 = vld [vmem:[#allocation2 + $0x30] sm:$0xff]
  %v64 = vld [vmem:[#allocation2 + $0x38] sm:$0xff]
  %v65 = vld [vmem:[#allocation2 + $0x40] sm:$0xff]
  %v66 = vld [vmem:[#allocation2 + $0x48] sm:$0xff]
  %v67 = vld [vmem:[#allocation2 + $0x50] sm:$0xff]
  %v68 = vld [vmem:[#allocation2 + $0x58] sm:$0xff]
  %v69 = vld [vmem:[#allocation2 + $0x60] sm:$0xff]
  %v70 = vld [vmem:[#allocation2 + $0x68] sm:$0xff]
  %v71 = vld [vmem:[#allocation2 + $0x70] sm:$0xff]
  %v72 = vld [vmem:[#allocation2 + $0x78] sm:$0xff]
  %v73 = vld [vmem:[#allocation2 + $0x80] sm:$0xff]
  %v74 = vld [vmem:[#allocation2 + $0x88] sm:$0xff]
  %v75 = vld [vmem:[#allocation2 + $0x90] sm:$0xff]
  %v76 = vld [vmem:[#allocation2 + $0x98] sm:$0xff]
  %v77 = vld [vmem:[#allocation2 + $0xa0] sm:$0xff]
  %v78 = vld [vmem:[#allocation2 + $0xa8] sm:$0xff]
  %v79 = vld [vmem:[#allocation2 + $0xb0] sm:$0xff]
  %v80 = vld [vmem:[#allocation2 + $0xb8] sm:$0xff]
  %v81 = vld [vmem:[#allocation2 + $0xc0] sm:$0xff]
  %v82 = vld [vmem:[#allocation2 + $0xc8] sm:$0xff]
  %v83 = vld [vmem:[#allocation2 + $0xd0] sm:$0xff]
  %v84 = vld [vmem:[#allocation2 + $0xd8] sm:$0xff]
  %v85 = vld [vmem:[#allocation2 + $0xe0] sm:$0xff]
  %v86 = vld [vmem:[#allocation2 + $0xe8] sm:$0xff]
  %v87 = vld [vmem:[#allocation2 + $0xf0] sm:$0xff]
  %v88 = vld [vmem:[#allocation2 + $0xf8] sm:$0xff]
  %v89 = vld [vmem:[%s0] sm:$0xff]
  %v90 = vld [vmem:[%s0 + $0x8] sm:$0xff]
  %v91 = vld [vmem:[%s0 + $0x10] sm:$0xff]
  %v92 = vld [vmem:[%s0 + $0x18] sm:$0xff]
  %v93 = vld [vmem:[%s0 + $0x20] sm:$0xff]
  %v94 = vld [vmem:[%s0 + $0x28] sm:$0xff]
  %v95 = vld [vmem:[%s0 + $0x30] sm:$0xff]
  %v96 = vld [vmem:[%s0 + $0x38] sm:$0xff]
  %v97 = vld [vmem:[%s0 + $0x40] sm:$0xff]
  %v98 = vld [vmem:[%s0 + $0x48] sm:$0xff]
  %v99 = vld [vmem:[%s0 + $0x50] sm:$0xff]
  %v100 = vld [vmem:[%s0 + $0x58] sm:$0xff]
  %v101 = vld [vmem:[%s0 + $0x60] sm:$0xff]
  %v102 = vld [vmem:[%s0 + $0x68] sm:$0xff]
  %v103 = vld [vmem:[%s0 + $0x70] sm:$0xff]
  %v104 = vld [vmem:[%s0 + $0x78] sm:$0xff]
  %v105 = vld [vmem:[%s0 + $0x80] sm:$0xff]
  %v106 = vld [vmem:[%s0 + $0x88] sm:$0xff]
  %v107 = vld [vmem:[%s0 + $0x90] sm:$0xff]
  %v108 = vld [vmem:[%s0 + $0x98] sm:$0xff]
  %v109 = vld [vmem:[%s0 + $0xa0] sm:$0xff]
  %v110 = vld [vmem:[%s0 + $0xa8] sm:$0xff]
  %v111 = vld [vmem:[%s0 + $0xb0] sm:$0xff]
  %v112 = vld [vmem:[%s0 + $0xb8] sm:$0xff]
  %v113 = vld [vmem:[%s0 + $0xc0] sm:$0xff]
  %v114 = vld [vmem:[%s0 + $0xc8] sm:$0xff]
  %v115 = vld [vmem:[%s0 + $0xd0] sm:$0xff]
  %v116 = vld [vmem:[%s0 + $0xd8] sm:$0xff]
  %v117 = vld [vmem:[%s0 + $0xe0] sm:$0xff]
  %v118 = vld [vmem:[%s0 + $0xe8] sm:$0xff]
  %v119 = vld [vmem:[%s0 + $0xf0] sm:$0xff]
  %v120 = vld [vmem:[%s0 + $0xf8] sm:$0xff]
  %v121 = vld [vmem:[%s1] sm:$0xf]
  %v122 = vld [vmem:[%s1 + $0x4] sm:$0xf]
  %v123 = vld [vmem:[%s1 + $0x8] sm:$0xf]
  %v124 = vld [vmem:[%s1 + $0xc] sm:$0xf]
  %v125 = vld [vmem:[%s1 + $0x10] sm:$0xf]
  %v126 = vld [vmem:[%s1 + $0x14] sm:$0xf]
  %v127 = vld [vmem:[%s1 + $0x18] sm:$0xf]
  %v128 = vld [vmem:[%s1 + $0x1c] sm:$0xf]
  %v129 = vld [vmem:[%s1 + $0x20] sm:$0xf]
  %v130 = vld [vmem:[%s1 + $0x24] sm:$0xf]
  %v131 = vld [vmem:[%s1 + $0x28] sm:$0xf]
  %v132 = vld [vmem:[%s1 + $0x2c] sm:$0xf]
  %v133 = vld [vmem:[%s1 + $0x30] sm:$0xf]
  %v134 = vld [vmem:[%s1 + $0x34] sm:$0xf]
  %v135 = vld [vmem:[%s1 + $0x38] sm:$0xf]
  %v136 = vld [vmem:[%s1 + $0x3c] sm:$0xf]
  %v137 = vld [vmem:[%s1 + $0x40] sm:$0xf]
  %v138 = vld [vmem:[%s1 + $0x44] sm:$0xf]
  %v139 = vld [vmem:[%s1 + $0x48] sm:$0xf]
  %v140 = vld [vmem:[%s1 + $0x4c] sm:$0xf]
  %v141 = vld [vmem:[%s1 + $0x50] sm:$0xf]
  %v142 = vld [vmem:[%s1 + $0x54] sm:$0xf]
  %v143 = vld [vmem:[%s1 + $0x58] sm:$0xf]
  %v144 = vld [vmem:[%s1 + $0x5c] sm:$0xf]
  %v145 = vld [vmem:[%s1 + $0x60] sm:$0xf]
  %v146 = vld [vmem:[%s1 + $0x64] sm:$0xf]
  %v147 = vld [vmem:[%s1 + $0x68] sm:$0xf]
  %v148 = vld [vmem:[%s1 + $0x6c] sm:$0xf]
  %v149 = vld [vmem:[%s1 + $0x70] sm:$0xf]
  %v150 = vld [vmem:[%s1 + $0x74] sm:$0xf]
  %v151 = vld [vmem:[%s1 + $0x78] sm:$0xf]
  %v152 = vld [vmem:[%s1 + $0x7c] sm:$0xf]
  %v185 = vunpack.c.l.b16 %v89
  %v186 = vunpack.c.h.b16 %v89
  %v187 = vunpack.c.l.b16 %v90
  %v188 = vunpack.c.h.b16 %v90
  %v189 = vunpack.c.l.b16 %v91
  %v190 = vunpack.c.h.b16 %v91
  %v191 = vunpack.c.l.b16 %v92
  %v192 = vunpack.c.h.b16 %v92
  %v193 = vunpack.c.l.b16 %v93
  %v194 = vunpack.c.h.b16 %v93
  %v195 = vunpack.c.l.b16 %v94
  %v196 = vunpack.c.h.b16 %v94
  %v197 = vunpack.c.l.b16 %v95
  %v198 = vunpack.c.h.b16 %v95
  %v199 = vunpack.c.l.b16 %v96
  %v200 = vunpack.c.h.b16 %v96
  %v201 = vunpack.c.l.b16 %v97
  %v202 = vunpack.c.h.b16 %v97
  %v203 = vunpack.c.l.b16 %v98
  %v204 = vunpack.c.h.b16 %v98
  %v205 = vunpack.c.l.b16 %v99
  %v206 = vunpack.c.h.b16 %v99
  %v207 = vunpack.c.l.b16 %v100
  %v208 = vunpack.c.h.b16 %v100
  %v209 = vunpack.c.l.b16 %v101
  %v210 = vunpack.c.h.b16 %v101
  %v211 = vunpack.c.l.b16 %v102
  %v212 = vunpack.c.h.b16 %v102
  %v213 = vunpack.c.l.b16 %v103
  %v214 = vunpack.c.h.b16 %v103
  %v215 = vunpack.c.l.b16 %v104
  %v216 = vunpack.c.h.b16 %v104
  %v217 = vunpack.c.l.b16 %v105
  %v218 = vunpack.c.h.b16 %v105
  %v219 = vunpack.c.l.b16 %v106
  %v220 = vunpack.c.h.b16 %v106
  %v221 = vunpack.c.l.b16 %v107
  %v222 = vunpack.c.h.b16 %v107
  %v223 = vunpack.c.l.b16 %v108
  %v224 = vunpack.c.h.b16 %v108
  %v225 = vunpack.c.l.b16 %v109
  %v226 = vunpack.c.h.b16 %v109
  %v227 = vunpack.c.l.b16 %v110
  %v228 = vunpack.c.h.b16 %v110
  %v229 = vunpack.c.l.b16 %v111
  %v230 = vunpack.c.h.b16 %v111
  %v231 = vunpack.c.l.b16 %v112
  %v232 = vunpack.c.h.b16 %v112
  %v233 = vunpack.c.l.b16 %v113
  %v234 = vunpack.c.h.b16 %v113
  %v235 = vunpack.c.l.b16 %v114
  %v236 = vunpack.c.h.b16 %v114
  %v237 = vunpack.c.l.b16 %v115
  %v238 = vunpack.c.h.b16 %v115
  %v239 = vunpack.c.l.b16 %v116
  %v240 = vunpack.c.h.b16 %v116
  %v241 = vunpack.c.l.b16 %v117
  %v242 = vunpack.c.h.b16 %v117
  %v243 = vunpack.c.l.b16 %v118
  %v244 = vunpack.c.h.b16 %v118
  %v245 = vunpack.c.l.b16 %v119
  %v246 = vunpack.c.h.b16 %v119
  %v247 = vunpack.c.l.b16 %v120
  %v248 = vunpack.c.h.b16 %v120
  %v249 = vpack.c.b16 %v187, %v185
  %v250 = vpack.c.b16 %v188, %v186
  %v251 = vpack.c.b16 %v191, %v189
  %v252 = vpack.c.b16 %v192, %v190
  %v253 = vpack.c.b16 %v195, %v193
  %v254 = vpack.c.b16 %v196, %v194
  %v255 = vpack.c.b16 %v199, %v197
  %v256 = vpack.c.b16 %v200, %v198
  %v257 = vpack.c.b16 %v203, %v201
  %v258 = vpack.c.b16 %v204, %v202
  %v259 = vpack.c.b16 %v207, %v205
  %v260 = vpack.c.b16 %v208, %v206
  %v261 = vpack.c.b16 %v211, %v209
  %v262 = vpack.c.b16 %v212, %v210
  %v263 = vpack.c.b16 %v215, %v213
  %v264 = vpack.c.b16 %v216, %v214
  %v265 = vpack.c.b16 %v219, %v217
  %v266 = vpack.c.b16 %v220, %v218
  %v267 = vpack.c.b16 %v223, %v221
  %v268 = vpack.c.b16 %v224, %v222
  %v269 = vpack.c.b16 %v227, %v225
  %v270 = vpack.c.b16 %v228, %v226
  %v271 = vpack.c.b16 %v231, %v229
  %v272 = vpack.c.b16 %v232, %v230
  %v273 = vpack.c.b16 %v235, %v233
  %v274 = vpack.c.b16 %v236, %v234
  %v275 = vpack.c.b16 %v239, %v237
  %v276 = vpack.c.b16 %v240, %v238
  %v277 = vpack.c.b16 %v243, %v241
  %v278 = vpack.c.b16 %v244, %v242
  %v279 = vpack.c.b16 %v247, %v245
  %v280 = vpack.c.b16 %v248, %v246
  %v345 = vunpack.c.l.b16 %v121
  %v346 = vunpack.c.l.b16 %v122
  %v347 = vunpack.c.l.b16 %v123
  %v348 = vunpack.c.l.b16 %v124
  %v349 = vunpack.c.l.b16 %v125
  %v350 = vunpack.c.l.b16 %v126
  %v351 = vunpack.c.l.b16 %v127
  %v352 = vunpack.c.l.b16 %v128
  %v353 = vunpack.c.l.b16 %v129
  %v354 = vunpack.c.l.b16 %v130
  %v355 = vunpack.c.l.b16 %v131
  %v356 = vunpack.c.l.b16 %v132
  %v357 = vunpack.c.l.b16 %v133
  %v358 = vunpack.c.l.b16 %v134
  %v359 = vunpack.c.l.b16 %v135
  %v360 = vunpack.c.l.b16 %v136
  %v361 = vunpack.c.l.b16 %v137
  %v362 = vunpack.c.l.b16 %v138
  %v363 = vunpack.c.l.b16 %v139
  %v364 = vunpack.c.l.b16 %v140
  %v365 = vunpack.c.l.b16 %v141
  %v366 = vunpack.c.l.b16 %v142
  %v367 = vunpack.c.l.b16 %v143
  %v368 = vunpack.c.l.b16 %v144
  %v369 = vunpack.c.l.b16 %v145
  %v370 = vunpack.c.l.b16 %v146
  %v371 = vunpack.c.l.b16 %v147
  %v372 = vunpack.c.l.b16 %v148
  %v373 = vunpack.c.l.b16 %v149
  %v374 = vunpack.c.l.b16 %v150
  %v375 = vunpack.c.l.b16 %v151
  %v376 = vunpack.c.l.b16 %v152
  %v377 = vpack.c.b16 %v346, %v345
  %v378 = vpack.c.b16 %v348, %v347
  %v379 = vpack.c.b16 %v350, %v349
  %v380 = vpack.c.b16 %v352, %v351
  %v381 = vpack.c.b16 %v354, %v353
  %v382 = vpack.c.b16 %v356, %v355
  %v383 = vpack.c.b16 %v358, %v357
  %v384 = vpack.c.b16 %v360, %v359
  %v385 = vpack.c.b16 %v362, %v361
  %v386 = vpack.c.b16 %v364, %v363
  %v387 = vpack.c.b16 %v366, %v365
  %v388 = vpack.c.b16 %v368, %v367
  %v389 = vpack.c.b16 %v370, %v369
  %v390 = vpack.c.b16 %v372, %v371
  %v391 = vpack.c.b16 %v374, %v373
  %v392 = vpack.c.b16 %v376, %v375
  %409 = vmatprep.subr.bf16.mxu0 0
  %410 = vmatpush1.bf16.msra.mxu0 %v377
  %411 = vmatprep.subr.bf16.mxu0 0
  %412 = vmatpush1.bf16.msra.mxu0 %v378
  %413 = vmatprep.subr.bf16.mxu0 0
  %414 = vmatpush1.bf16.msra.mxu0 %v379
  %415 = vmatprep.subr.bf16.mxu0 0
  %416 = vmatpush1.bf16.msra.mxu0 %v380
  %417 = vmatprep.subr.bf16.mxu0 0
  %418 = vmatpush1.bf16.msra.mxu0 %v381
  %419 = vmatprep.subr.bf16.mxu0 0
  %420 = vmatpush1.bf16.msra.mxu0 %v382
  %421 = vmatprep.subr.bf16.mxu0 0
  %422 = vmatpush1.bf16.msra.mxu0 %v383
  %423 = vmatprep.subr.bf16.mxu0 0
  %424 = vmatpush1.bf16.msra.mxu0 %v384
  %425 = vmatprep.subr.bf16.mxu0 0
  %426 = vmatpush1.bf16.msra.mxu0 %v385
  %427 = vmatprep.subr.bf16.mxu0 0
  %428 = vmatpush1.bf16.msra.mxu0 %v386
  %429 = vmatprep.subr.bf16.mxu0 0
  %430 = vmatpush1.bf16.msra.mxu0 %v387
  %431 = vmatprep.subr.bf16.mxu0 0
  %432 = vmatpush1.bf16.msra.mxu0 %v388
  %433 = vmatprep.subr.bf16.mxu0 0
  %434 = vmatpush1.bf16.msra.mxu0 %v389
  %435 = vmatprep.subr.bf16.mxu0 0
  %436 = vmatpush1.bf16.msra.mxu0 %v390
  %437 = vmatprep.subr.bf16.mxu0 0
  %438 = vmatpush1.bf16.msra.mxu0 %v391
  %439 = vmatprep.subr.bf16.mxu0 0
  %440 = vmatpush1.bf16.msra.mxu0 %v392
  %441 = vmatprep.mubr.bf16.mxu0 %v250
  %442 = vmatmul.mubr.bf16.gmra.mrb[0].mxu0 %v249
  %v443 = vpop.f32.mrb[0].mxu0
  %v444 = vadd.f32 0.0, %v443
  %v445 = vpop.f32.mrb[0].mxu0
  %v446 = vpop.f32.mrb[0].mxu0
  %v447 = vadd.f32 0.0, %v446
  %v448 = vpop.f32.mrb[0].mxu0
  %449 = vmatprep.mubr.bf16.mxu0 %v252
  %450 = vmatmul.mubr.bf16.gmra.mrb[0].mxu0 %v251
  %v451 = vpop.f32.mrb[0].mxu0
  %v452 = vadd.f32 0.0, %v451
  %v453 = vpop.f32.mrb[0].mxu0
  %v454 = vpop.f32.mrb[0].mxu0
  %v455 = vadd.f32 0.0, %v454
  %v456 = vpop.f32.mrb[0].mxu0
  %457 = vmatprep.mubr.bf16.mxu0 %v254
  %458 = vmatmul.mubr.bf16.gmra.mrb[0].mxu0 %v253
  %v459 = vpop.f32.mrb[0].mxu0
  %v460 = vadd.f32 0.0, %v459
  %v461 = vpop.f32.mrb[0].mxu0
  %v462 = vpop.f32.mrb[0].mxu0
  %v463 = vadd.f32 0.0, %v462
  %v464 = vpop.f32.mrb[0].mxu0
  %465 = vmatprep.mubr.bf16.mxu0 %v256
  %466 = vmatmul.mubr.bf16.gmra.mrb[0].mxu0 %v255
  %v467 = vpop.f32.mrb[0].mxu0
  %v468 = vadd.f32 0.0, %v467
  %v469 = vpop.f32.mrb[0].mxu0
  %v470 = vpop.f32.mrb[0].mxu0
  %v471 = vadd.f32 0.0, %v470
  %v472 = vpop.f32.mrb[0].mxu0
  %473 = vmatprep.mubr.bf16.mxu0 %v258
  %474 = vmatmul.mubr.bf16.gmra.mrb[0].mxu0 %v257
  %v475 = vpop.f32.mrb[0].mxu0
  %v476 = vadd.f32 0.0, %v475
  %v477 = vpop.f32.mrb[0].mxu0
  %v478 = vpop.f32.mrb[0].mxu0
  %v479 = vadd.f32 0.0, %v478
  %v480 = vpop.f32.mrb[0].mxu0
  %481 = vmatprep.mubr.bf16.mxu0 %v260
  %482 = vmatmul.mubr.bf16.gmra.mrb[0].mxu0 %v259
  %v483 = vpop.f32.mrb[0].mxu0
  %v484 = vadd.f32 0.0, %v483
  %v485 = vpop.f32.mrb[0].mxu0
  %v486 = vpop.f32.mrb[0].mxu0
  %v487 = vadd.f32 0.0, %v486
  %v488 = vpop.f32.mrb[0].mxu0
  %489 = vmatprep.mubr.bf16.mxu0 %v262
  %490 = vmatmul.mubr.bf16.gmra.mrb[0].mxu0 %v261
  %v491 = vpop.f32.mrb[0].mxu0
  %v492 = vadd.f32 0.0, %v491
  %v493 = vpop.f32.mrb[0].mxu0
  %v494 = vpop.f32.mrb[0].mxu0
  %v495 = vadd.f32 0.0, %v494
  %v496 = vpop.f32.mrb[0].mxu0
  %497 = vmatprep.mubr.bf16.mxu0 %v264
  %498 = vmatmul.mubr.bf16.gmra.mrb[0].mxu0 %v263
  %v499 = vpop.f32.mrb[0].mxu0
  %v500 = vadd.f32 0.0, %v499
  %v501 = vpop.f32.mrb[0].mxu0
  %v502 = vpop.f32.mrb[0].mxu0
  %v503 = vadd.f32 0.0, %v502
  %v504 = vpop.f32.mrb[0].mxu0
  %505 = vmatprep.mubr.bf16.mxu0 %v266
  %506 = vmatmul.mubr.bf16.gmra.mrb[0].mxu0 %v265
  %v507 = vpop.f32.mrb[0].mxu0
  %v508 = vadd.f32 0.0, %v507
  %v509 = vpop.f32.mrb[0].mxu0
  %v510 = vpop.f32.mrb[0].mxu0
  %v511 = vadd.f32 0.0, %v510
  %v512 = vpop.f32.mrb[0].mxu0
  %513 = vmatprep.mubr.bf16.mxu0 %v268
  %514 = vmatmul.mubr.bf16.gmra.mrb[0].mxu0 %v267
  %v515 = vpop.f32.mrb[0].mxu0
  %v516 = vadd.f32 0.0, %v515
  %v517 = vpop.f32.mrb[0].mxu0
  %v518 = vpop.f32.mrb[0].mxu0
  %v519 = vadd.f32 0.0, %v518
  %v520 = vpop.f32.mrb[0].mxu0
  %521 = vmatprep.mubr.bf16.mxu0 %v270
  %522 = vmatmul.mubr.bf16.gmra.mrb[0].mxu0 %v269
  %v523 = vpop.f32.mrb[0].mxu0
  %v524 = vadd.f32 0.0, %v523
  %v525 = vpop.f32.mrb[0].mxu0
  %v526 = vpop.f32.mrb[0].mxu0
  %v527 = vadd.f32 0.0, %v526
  %v528 = vpop.f32.mrb[0].mxu0
  %529 = vmatprep.mubr.bf16.mxu0 %v272
  %530 = vmatmul.mubr.bf16.gmra.mrb[0].mxu0 %v271
  %v531 = vpop.f32.mrb[0].mxu0
  %v532 = vadd.f32 0.0, %v531
  %v533 = vpop.f32.mrb[0].mxu0
  %v534 = vpop.f32.mrb[0].mxu0
  %v535 = vadd.f32 0.0, %v534
  %v536 = vpop.f32.mrb[0].mxu0
  %537 = vmatprep.mubr.bf16.mxu0 %v274
  %538 = vmatmul.mubr.bf16.gmra.mrb[0].mxu0 %v273
  %v539 = vpop.f32.mrb[0].mxu0
  %v540 = vadd.f32 0.0, %v539
  %v541 = vpop.f32.mrb[0].mxu0
  %v542 = vpop.f32.mrb[0].mxu0
  %v543 = vadd.f32 0.0, %v542
  %v544 = vpop.f32.mrb[0].mxu0
  %545 = vmatprep.mubr.bf16.mxu0 %v276
  %546 = vmatmul.mubr.bf16.gmra.mrb[0].mxu0 %v275
  %v547 = vpop.f32.mrb[0].mxu0
  %v548 = vadd.f32 0.0, %v547
  %v549 = vpop.f32.mrb[0].mxu0
  %v550 = vpop.f32.mrb[0].mxu0
  %v551 = vadd.f32 0.0, %v550
  %v552 = vpop.f32.mrb[0].mxu0
  %553 = vmatprep.mubr.bf16.mxu0 %v278
  %554 = vmatmul.mubr.bf16.gmra.mrb[0].mxu0 %v277
  %v555 = vpop.f32.mrb[0].mxu0
  %v556 = vadd.f32 0.0, %v555
  %v557 = vpop.f32.mrb[0].mxu0
  %v558 = vpop.f32.mrb[0].mxu0
  %v559 = vadd.f32 0.0, %v558
  %v560 = vpop.f32.mrb[0].mxu0
  %561 = vmatprep.mubr.bf16.mxu0 %v280
  %562 = vmatmul.mubr.bf16.gmra.mrb[0].mxu0 %v279
  %v563 = vpop.f32.mrb[0].mxu0
  %v564 = vadd.f32 0.0, %v563
  %v565 = vpop.f32.mrb[0].mxu0
  %v566 = vpop.f32.mrb[0].mxu0
  %v567 = vadd.f32 0.0, %v566
  %v568 = vpop.f32.mrb[0].mxu0
  %569 = vdwg.mxu0
  %v570 = vadd.f32 %v57, %v444
  %v571 = vadd.f32 %v58, %v447
  %v572 = vadd.f32 %v59, %v452
  %v573 = vadd.f32 %v60, %v455
  %v574 = vadd.f32 %v61, %v460
  %v575 = vadd.f32 %v62, %v463
  %v576 = vadd.f32 %v63, %v468
  %v577 = vadd.f32 %v64, %v471
  %v578 = vadd.f32 %v65, %v476
  %v579 = vadd.f32 %v66, %v479
  %v580 = vadd.f32 %v67, %v484
  %v581 = vadd.f32 %v68, %v487
  %v582 = vadd.f32 %v69, %v492
  %v583 = vadd.f32 %v70, %v495
  %v584 = vadd.f32 %v71, %v500
  %v585 = vadd.f32 %v72, %v503
  %v586 = vadd.f32 %v73, %v508
  %v587 = vadd.f32 %v74, %v511
  %v588 = vadd.f32 %v75, %v516
  %v589 = vadd.f32 %v76, %v519
  %v590 = vadd.f32 %v77, %v524
  %v591 = vadd.f32 %v78, %v527
  %v592 = vadd.f32 %v79, %v532
  %v593 = vadd.f32 %v80, %v535
  %v594 = vadd.f32 %v81, %v540
  %v595 = vadd.f32 %v82, %v543
  %v596 = vadd.f32 %v83, %v548
  %v597 = vadd.f32 %v84, %v551
  %v598 = vadd.f32 %v85, %v556
  %v599 = vadd.f32 %v86, %v559
  %v600 = vadd.f32 %v87, %v564
  %v601 = vadd.f32 %v88, %v567
  %602 = vst [vmem:[#allocation2] sm:$0xff] %v570
  %603 = vst [vmem:[#allocation2 + $0x8] sm:$0xff] %v571
  %604 = vst [vmem:[#allocation2 + $0x10] sm:$0xff] %v572
  %605 = vst [vmem:[#allocation2 + $0x18] sm:$0xff] %v573
  %606 = vst [vmem:[#allocation2 + $0x20] sm:$0xff] %v574
  %607 = vst [vmem:[#allocation2 + $0x28] sm:$0xff] %v575
  %608 = vst [vmem:[#allocation2 + $0x30] sm:$0xff] %v576
  %609 = vst [vmem:[#allocation2 + $0x38] sm:$0xff] %v577
  %610 = vst [vmem:[#allocation2 + $0x40] sm:$0xff] %v578
  %611 = vst [vmem:[#allocation2 + $0x48] sm:$0xff] %v579
  %612 = vst [vmem:[#allocation2 + $0x50] sm:$0xff] %v580
  %613 = vst [vmem:[#allocation2 + $0x58] sm:$0xff] %v581
  %614 = vst [vmem:[#allocation2 + $0x60] sm:$0xff] %v582
  %615 = vst [vmem:[#allocation2 + $0x68] sm:$0xff] %v583
  %616 = vst [vmem:[#allocation2 + $0x70] sm:$0xff] %v584
  %617 = vst [vmem:[#allocation2 + $0x78] sm:$0xff] %v585
  %618 = vst [vmem:[#allocation2 + $0x80] sm:$0xff] %v586
  %619 = vst [vmem:[#allocation2 + $0x88] sm:$0xff] %v587
  %620 = vst [vmem:[#allocation2 + $0x90] sm:$0xff] %v588
  %621 = vst [vmem:[#allocation2 + $0x98] sm:$0xff] %v589
  %622 = vst [vmem:[#allocation2 + $0xa0] sm:$0xff] %v590
  %623 = vst [vmem:[#allocation2 + $0xa8] sm:$0xff] %v591
  %624 = vst [vmem:[#allocation2 + $0xb0] sm:$0xff] %v592
  %625 = vst [vmem:[#allocation2 + $0xb8] sm:$0xff] %v593
  %626 = vst [vmem:[#allocation2 + $0xc0] sm:$0xff] %v594
  %627 = vst [vmem:[#allocation2 + $0xc8] sm:$0xff] %v595
  %628 = vst [vmem:[#allocation2 + $0xd0] sm:$0xff] %v596
  %629 = vst [vmem:[#allocation2 + $0xd8] sm:$0xff] %v597
  %630 = vst [vmem:[#allocation2 + $0xe0] sm:$0xff] %v598
  %631 = vst [vmem:[#allocation2 + $0xe8] sm:$0xff] %v599
  %632 = vst [vmem:[#allocation2 + $0xf0] sm:$0xff] %v600
  %633 = vst [vmem:[#allocation2 + $0xf8] sm:$0xff] %v601
  // Predicated region
  $region26: #{gcn_forward.5} parent=0 // pred_check
    %p634 = pneg %p21
  $region27: #{gcn_forward.5} parent=0 // pred_check_branch
    %636 = sbr.rel (%p634) target = $region29
  $region28: #{gcn_forward.5} parent=0 // pred_region
    %v637 = vld [vmem:[#allocation2] sm:$0xff]
    %v638 = vld [vmem:[#allocation2 + $0x8] sm:$0xff]
    %v639 = vld [vmem:[#allocation2 + $0x10] sm:$0xff]
    %v640 = vld [vmem:[#allocation2 + $0x18] sm:$0xff]
    %v641 = vld [vmem:[#allocation2 + $0x20] sm:$0xff]
    %v642 = vld [vmem:[#allocation2 + $0x28] sm:$0xff]
    %v643 = vld [vmem:[#allocation2 + $0x30] sm:$0xff]
    %v644 = vld [vmem:[#allocation2 + $0x38] sm:$0xff]
    %v645 = vld [vmem:[#allocation2 + $0x40] sm:$0xff]
    %v646 = vld [vmem:[#allocation2 + $0x48] sm:$0xff]
    %v647 = vld [vmem:[#allocation2 + $0x50] sm:$0xff]
    %v648 = vld [vmem:[#allocation2 + $0x58] sm:$0xff]
    %v649 = vld [vmem:[#allocation2 + $0x60] sm:$0xff]
    %v650 = vld [vmem:[#allocation2 + $0x68] sm:$0xff]
    %v651 = vld [vmem:[#allocation2 + $0x70] sm:$0xff]
    %v652 = vld [vmem:[#allocation2 + $0x78] sm:$0xff]
    %v653 = vld [vmem:[#allocation2 + $0x80] sm:$0xff]
    %v654 = vld [vmem:[#allocation2 + $0x88] sm:$0xff]
    %v655 = vld [vmem:[#allocation2 + $0x90] sm:$0xff]
    %v656 = vld [vmem:[#allocation2 + $0x98] sm:$0xff]
    %v657 = vld [vmem:[#allocation2 + $0xa0] sm:$0xff]
    %v658 = vld [vmem:[#allocation2 + $0xa8] sm:$0xff]
    %v659 = vld [vmem:[#allocation2 + $0xb0] sm:$0xff]
    %v660 = vld [vmem:[#allocation2 + $0xb8] sm:$0xff]
    %v661 = vld [vmem:[#allocation2 + $0xc0] sm:$0xff]
    %v662 = vld [vmem:[#allocation2 + $0xc8] sm:$0xff]
    %v663 = vld [vmem:[#allocation2 + $0xd0] sm:$0xff]
    %v664 = vld [vmem:[#allocation2 + $0xd8] sm:$0xff]
    %v665 = vld [vmem:[#allocation2 + $0xe0] sm:$0xff]
    %v666 = vld [vmem:[#allocation2 + $0xe8] sm:$0xff]
    %v667 = vld [vmem:[#allocation2 + $0xf0] sm:$0xff]
    %v668 = vld [vmem:[#allocation2 + $0xf8] sm:$0xff]
    %v669 = vld [vmem:[%s2] sm:$0x1]
    %v671 = vlaneseq
    %v672 = vshrl.u32 %v671, 7
    %v673 = vsub.s32 0, %v672
    %v674 = vrot.slane %v669, %v673
    %v676 = vadd.f32 %v637, %v674
    %v677 = vadd.f32 %v638, %v674
    %v678 = vadd.f32 %v639, %v674
    %v679 = vadd.f32 %v640, %v674
    %v680 = vadd.f32 %v641, %v674
    %v681 = vadd.f32 %v642, %v674
    %v682 = vadd.f32 %v643, %v674
    %v683 = vadd.f32 %v644, %v674
    %v684 = vadd.f32 %v645, %v674
    %v685 = vadd.f32 %v646, %v674
    %v686 = vadd.f32 %v647, %v674
    %v687 = vadd.f32 %v648, %v674
    %v688 = vadd.f32 %v649, %v674
    %v689 = vadd.f32 %v650, %v674
    %v690 = vadd.f32 %v651, %v674
    %v691 = vadd.f32 %v652, %v674
    %v692 = vadd.f32 %v653, %v674
    %v693 = vadd.f32 %v654, %v674
    %v694 = vadd.f32 %v655, %v674
    %v695 = vadd.f32 %v656, %v674
    %v696 = vadd.f32 %v657, %v674
    %v697 = vadd.f32 %v658, %v674
    %v698 = vadd.f32 %v659, %v674
    %v699 = vadd.f32 %v660, %v674
    %v700 = vadd.f32 %v661, %v674
    %v701 = vadd.f32 %v662, %v674
    %v702 = vadd.f32 %v663, %v674
    %v703 = vadd.f32 %v664, %v674
    %v704 = vadd.f32 %v665, %v674
    %v705 = vadd.f32 %v666, %v674
    %v706 = vadd.f32 %v667, %v674
    %v707 = vadd.f32 %v668, %v674
    %vm708 = vcmp.gt.f32.partialorder %v676, 0.0
    %vm709 = vcmp.gt.f32.partialorder %v677, 0.0
    %vm710 = vcmp.gt.f32.partialorder %v678, 0.0
    %vm711 = vcmp.gt.f32.partialorder %v679, 0.0
    %vm712 = vcmp.gt.f32.partialorder %v680, 0.0
    %vm713 = vcmp.gt.f32.partialorder %v681, 0.0
    %vm714 = vcmp.gt.f32.partialorder %v682, 0.0
    %vm715 = vcmp.gt.f32.partialorder %v683, 0.0
    %vm716 = vcmp.gt.f32.partialorder %v684, 0.0
    %vm717 = vcmp.gt.f32.partialorder %v685, 0.0
    %vm718 = vcmp.gt.f32.partialorder %v686, 0.0
    %vm719 = vcmp.gt.f32.partialorder %v687, 0.0
    %vm720 = vcmp.gt.f32.partialorder %v688, 0.0
    %vm721 = vcmp.gt.f32.partialorder %v689, 0.0
    %vm722 = vcmp.gt.f32.partialorder %v690, 0.0
    %vm723 = vcmp.gt.f32.partialorder %v691, 0.0
    %vm724 = vcmp.gt.f32.partialorder %v692, 0.0
    %vm725 = vcmp.gt.f32.partialorder %v693, 0.0
    %vm726 = vcmp.gt.f32.partialorder %v694, 0.0
    %vm727 = vcmp.gt.f32.partialorder %v695, 0.0
    %vm728 = vcmp.gt.f32.partialorder %v696, 0.0
    %vm729 = vcmp.gt.f32.partialorder %v697, 0.0
    %vm730 = vcmp.gt.f32.partialorder %v698, 0.0
    %vm731 = vcmp.gt.f32.partialorder %v699, 0.0
    %vm732 = vcmp.gt.f32.partialorder %v700, 0.0
    %vm733 = vcmp.gt.f32.partialorder %v701, 0.0
    %vm734 = vcmp.gt.f32.partialorder %v702, 0.0
    %vm735 = vcmp.gt.f32.partialorder %v703, 0.0
    %vm736 = vcmp.gt.f32.partialorder %v704, 0.0
    %vm737 = vcmp.gt.f32.partialorder %v705, 0.0
    %vm738 = vcmp.gt.f32.partialorder %v706, 0.0
    %vm739 = vcmp.gt.f32.partialorder %v707, 0.0
    %v740 = vmul.f32 %v676, 0.1
    %v741 = vmul.f32 %v677, 0.1
    %v742 = vmul.f32 %v678, 0.1
    %v743 = vmul.f32 %v679, 0.1
    %v744 = vmul.f32 %v680, 0.1
    %v745 = vmul.f32 %v681, 0.1
    %v746 = vmul.f32 %v682, 0.1
    %v747 = vmul.f32 %v683, 0.1
    %v748 = vmul.f32 %v684, 0.1
    %v749 = vmul.f32 %v685, 0.1
    %v750 = vmul.f32 %v686, 0.1
    %v751 = vmul.f32 %v687, 0.1
    %v752 = vmul.f32 %v688, 0.1
    %v753 = vmul.f32 %v689, 0.1
    %v754 = vmul.f32 %v690, 0.1
    %v755 = vmul.f32 %v691, 0.1
    %v756 = vmul.f32 %v692, 0.1
    %v757 = vmul.f32 %v693, 0.1
    %v758 = vmul.f32 %v694, 0.1
    %v759 = vmul.f32 %v695, 0.1
    %v760 = vmul.f32 %v696, 0.1
    %v761 = vmul.f32 %v697, 0.1
    %v762 = vmul.f32 %v698, 0.1
    %v763 = vmul.f32 %v699, 0.1
    %v764 = vmul.f32 %v700, 0.1
    %v765 = vmul.f32 %v701, 0.1
    %v766 = vmul.f32 %v702, 0.1
    %v767 = vmul.f32 %v703, 0.1
    %v768 = vmul.f32 %v704, 0.1
    %v769 = vmul.f32 %v705, 0.1
    %v770 = vmul.f32 %v706, 0.1
    %v771 = vmul.f32 %v707, 0.1
    %v772 = vsel %vm708, %v676, %v740
    %v773 = vsel %vm709, %v677, %v741
    %v774 = vsel %vm710, %v678, %v742
    %v775 = vsel %vm711, %v679, %v743
    %v776 = vsel %vm712, %v680, %v744
    %v777 = vsel %vm713, %v681, %v745
    %v778 = vsel %vm714, %v682, %v746
    %v779 = vsel %vm715, %v683, %v747
    %v780 = vsel %vm716, %v684, %v748
    %v781 = vsel %vm717, %v685, %v749
    %v782 = vsel %vm718, %v686, %v750
    %v783 = vsel %vm719, %v687, %v751
    %v784 = vsel %vm720, %v688, %v752
    %v785 = vsel %vm721, %v689, %v753
    %v786 = vsel %vm722, %v690, %v754
    %v787 = vsel %vm723, %v691, %v755
    %v788 = vsel %vm724, %v692, %v756
    %v789 = vsel %vm725, %v693, %v757
    %v790 = vsel %vm726, %v694, %v758
    %v791 = vsel %vm727, %v695, %v759
    %v792 = vsel %vm728, %v696, %v760
    %v793 = vsel %vm729, %v697, %v761
    %v794 = vsel %vm730, %v698, %v762
    %v795 = vsel %vm731, %v699, %v763
    %v796 = vsel %vm732, %v700, %v764
    %v797 = vsel %vm733, %v701, %v765
    %v798 = vsel %vm734, %v702, %v766
    %v799 = vsel %vm735, %v703, %v767
    %v800 = vsel %vm736, %v704, %v768
    %v801 = vsel %vm737, %v705, %v769
    %v802 = vsel %vm738, %v706, %v770
    %v803 = vsel %vm739, %v707, %v771
    %v804 = vpack.c.bf16 %v773, %v772
    %v805 = vpack.c.bf16 %v775, %v774
    %v806 = vpack.c.bf16 %v777, %v776
    %v807 = vpack.c.bf16 %v779, %v778
    %v808 = vpack.c.bf16 %v781, %v780
    %v809 = vpack.c.bf16 %v783, %v782
    %v810 = vpack.c.bf16 %v785, %v784
    %v811 = vpack.c.bf16 %v787, %v786
    %v812 = vpack.c.bf16 %v789, %v788
    %v813 = vpack.c.bf16 %v791, %v790
    %v814 = vpack.c.bf16 %v793, %v792
    %v815 = vpack.c.bf16 %v795, %v794
    %v816 = vpack.c.bf16 %v797, %v796
    %v817 = vpack.c.bf16 %v799, %v798
    %v818 = vpack.c.bf16 %v801, %v800
    %v819 = vpack.c.bf16 %v803, %v802
    %v820 = vld [vmem:[%s3] sm:$0xf]
    %v821 = vld [vmem:[%s3 + $0x4] sm:$0xf]
    %v822 = vld [vmem:[%s3 + $0x8] sm:$0xf]
    %v823 = vld [vmem:[%s3 + $0xc] sm:$0xf]
    %v824 = vld [vmem:[%s3 + $0x10] sm:$0xf]
    %v825 = vld [vmem:[%s3 + $0x14] sm:$0xf]
    %v826 = vld [vmem:[%s3 + $0x18] sm:$0xf]
    %v827 = vld [vmem:[%s3 + $0x1c] sm:$0xf]
    %v828 = vld [vmem:[%s3 + $0x20] sm:$0xf]
    %v829 = vld [vmem:[%s3 + $0x24] sm:$0xf]
    %v830 = vld [vmem:[%s3 + $0x28] sm:$0xf]
    %v831 = vld [vmem:[%s3 + $0x2c] sm:$0xf]
    %v832 = vld [vmem:[%s3 + $0x30] sm:$0xf]
    %v833 = vld [vmem:[%s3 + $0x34] sm:$0xf]
    %v834 = vld [vmem:[%s3 + $0x38] sm:$0xf]
    %v835 = vld [vmem:[%s3 + $0x3c] sm:$0xf]
    %v836 = vld [vmem:[%s4] sm:$0x1]
    %v838 = vlaneseq
    %v839 = vshrl.u32 %v838, 7
    %v840 = vsub.s32 0, %v839
    %v841 = vrot.slane %v836, %v840
    %v859 = vunpack.c.l.b16 %v820
    %v860 = vunpack.c.l.b16 %v821
    %v861 = vunpack.c.l.b16 %v822
    %v862 = vunpack.c.l.b16 %v823
    %v863 = vunpack.c.l.b16 %v824
    %v864 = vunpack.c.l.b16 %v825
    %v865 = vunpack.c.l.b16 %v826
    %v866 = vunpack.c.l.b16 %v827
    %v867 = vunpack.c.l.b16 %v828
    %v868 = vunpack.c.l.b16 %v829
    %v869 = vunpack.c.l.b16 %v830
    %v870 = vunpack.c.l.b16 %v831
    %v871 = vunpack.c.l.b16 %v832
    %v872 = vunpack.c.l.b16 %v833
    %v873 = vunpack.c.l.b16 %v834
    %v874 = vunpack.c.l.b16 %v835
    %v875 = vpack.c.b16 %v860, %v859
    %v876 = vpack.c.b16 %v862, %v861
    %v877 = vpack.c.b16 %v864, %v863
    %v878 = vpack.c.b16 %v866, %v865
    %v879 = vpack.c.b16 %v868, %v867
    %v880 = vpack.c.b16 %v870, %v869
    %v881 = vpack.c.b16 %v872, %v871
    %v882 = vpack.c.b16 %v874, %v873
    %891 = vmatprep.subr.bf16.mxu0 0
    %892 = vmatpush1.bf16.msra.mxu0 %v875
    %893 = vmatprep.subr.bf16.mxu0 0
    %894 = vmatpush1.bf16.msra.mxu0 %v876
    %895 = vmatprep.subr.bf16.mxu0 0
    %896 = vmatpush1.bf16.msra.mxu0 %v877
    %897 = vmatprep.subr.bf16.mxu0 0
    %898 = vmatpush1.bf16.msra.mxu0 %v878
    %899 = vmatprep.subr.bf16.mxu0 0
    %900 = vmatpush1.bf16.msra.mxu0 %v879
    %901 = vmatprep.subr.bf16.mxu0 0
    %902 = vmatpush1.bf16.msra.mxu0 %v880
    %903 = vmatprep.subr.bf16.mxu0 0
    %904 = vmatpush1.bf16.msra.mxu0 %v881
    %905 = vmatprep.subr.bf16.mxu0 0
    %906 = vmatpush1.bf16.msra.mxu0 %v882
    %907 = vmatprep.subr.bf16.mxu0 0
    %908 = vmatpush1.bf16.msra.mxu0 0
    %909 = vmatprep.subr.bf16.mxu0 0
    %910 = vmatpush1.bf16.msra.mxu0 0
    %911 = vmatprep.subr.bf16.mxu0 0
    %912 = vmatpush1.bf16.msra.mxu0 0
    %913 = vmatprep.subr.bf16.mxu0 0
    %914 = vmatpush1.bf16.msra.mxu0 0
    %915 = vmatprep.subr.bf16.mxu0 0
    %916 = vmatpush1.bf16.msra.mxu0 0
    %917 = vmatprep.subr.bf16.mxu0 0
    %918 = vmatpush1.bf16.msra.mxu0 0
    %919 = vmatprep.subr.bf16.mxu0 0
    %920 = vmatpush1.bf16.msra.mxu0 0
    %921 = vmatprep.subr.bf16.mxu0 0
    %922 = vmatpush1.bf16.msra.mxu0 0
    %923 = vmatprep.mubr.bf16.mxu0 0
    %924 = vmatmul.mubr.bf16.gmra.mrb[0].mxu0 %v804
    %v925 = vpop.f32.mrb[0].mxu0
    %v926 = vadd.f32 %v841, %v925
    %v927 = vpop.f32.mrb[0].mxu0
    %v928 = vpop.f32.mrb[0].mxu0
    %v929 = vadd.f32 %v841, %v928
    %v930 = vpop.f32.mrb[0].mxu0
    %931 = vmatprep.mubr.bf16.mxu0 0
    %932 = vmatmul.mubr.bf16.gmra.mrb[0].mxu0 %v805
    %v933 = vpop.f32.mrb[0].mxu0
    %v934 = vadd.f32 %v841, %v933
    %v935 = vpop.f32.mrb[0].mxu0
    %v936 = vpop.f32.mrb[0].mxu0
    %v937 = vadd.f32 %v841, %v936
    %v938 = vpop.f32.mrb[0].mxu0
    %939 = vmatprep.mubr.bf16.mxu0 0
    %940 = vmatmul.mubr.bf16.gmra.mrb[0].mxu0 %v806
    %v941 = vpop.f32.mrb[0].mxu0
    %v942 = vadd.f32 %v841, %v941
    %v943 = vpop.f32.mrb[0].mxu0
    %v944 = vpop.f32.mrb[0].mxu0
    %v945 = vadd.f32 %v841, %v944
    %v946 = vpop.f32.mrb[0].mxu0
    %947 = vmatprep.mubr.bf16.mxu0 0
    %948 = vmatmul.mubr.bf16.gmra.mrb[0].mxu0 %v807
    %v949 = vpop.f32.mrb[0].mxu0
    %v950 = vadd.f32 %v841, %v949
    %v951 = vpop.f32.mrb[0].mxu0
    %v952 = vpop.f32.mrb[0].mxu0
    %v953 = vadd.f32 %v841, %v952
    %v954 = vpop.f32.mrb[0].mxu0
    %955 = vmatprep.mubr.bf16.mxu0 0
    %956 = vmatmul.mubr.bf16.gmra.mrb[0].mxu0 %v808
    %v957 = vpop.f32.mrb[0].mxu0
    %v958 = vadd.f32 %v841, %v957
    %v959 = vpop.f32.mrb[0].mxu0
    %v960 = vpop.f32.mrb[0].mxu0
    %v961 = vadd.f32 %v841, %v960
    %v962 = vpop.f32.mrb[0].mxu0
    %963 = vmatprep.mubr.bf16.mxu0 0
    %964 = vmatmul.mubr.bf16.gmra.mrb[0].mxu0 %v809
    %v965 = vpop.f32.mrb[0].mxu0
    %v966 = vadd.f32 %v841, %v965
    %v967 = vpop.f32.mrb[0].mxu0
    %v968 = vpop.f32.mrb[0].mxu0
    %v969 = vadd.f32 %v841, %v968
    %v970 = vpop.f32.mrb[0].mxu0
    %971 = vmatprep.mubr.bf16.mxu0 0
    %972 = vmatmul.mubr.bf16.gmra.mrb[0].mxu0 %v810
    %v973 = vpop.f32.mrb[0].mxu0
    %v974 = vadd.f32 %v841, %v973
    %v975 = vpop.f32.mrb[0].mxu0
    %v976 = vpop.f32.mrb[0].mxu0
    %v977 = vadd.f32 %v841, %v976
    %v978 = vpop.f32.mrb[0].mxu0
    %979 = vmatprep.mubr.bf16.mxu0 0
    %980 = vmatmul.mubr.bf16.gmra.mrb[0].mxu0 %v811
    %v981 = vpop.f32.mrb[0].mxu0
    %v982 = vadd.f32 %v841, %v981
    %v983 = vpop.f32.mrb[0].mxu0
    %v984 = vpop.f32.mrb[0].mxu0
    %v985 = vadd.f32 %v841, %v984
    %v986 = vpop.f32.mrb[0].mxu0
    %987 = vmatprep.mubr.bf16.mxu0 0
    %988 = vmatmul.mubr.bf16.gmra.mrb[0].mxu0 %v812
    %v989 = vpop.f32.mrb[0].mxu0
    %v990 = vadd.f32 %v841, %v989
    %v991 = vpop.f32.mrb[0].mxu0
    %v992 = vpop.f32.mrb[0].mxu0
    %v993 = vadd.f32 %v841, %v992
    %v994 = vpop.f32.mrb[0].mxu0
    %995 = vmatprep.mubr.bf16.mxu0 0
    %996 = vmatmul.mubr.bf16.gmra.mrb[0].mxu0 %v813
    %v997 = vpop.f32.mrb[0].mxu0
    %v998 = vadd.f32 %v841, %v997
    %v999 = vpop.f32.mrb[0].mxu0
    %v1000 = vpop.f32.mrb[0].mxu0
    %v1001 = vadd.f32 %v841, %v1000
    %v1002 = vpop.f32.mrb[0].mxu0
    %1003 = vmatprep.mubr.bf16.mxu0 0
    %1004 = vmatmul.mubr.bf16.gmra.mrb[0].mxu0 %v814
    %v1005 = vpop.f32.mrb[0].mxu0
    %v1006 = vadd.f32 %v841, %v1005
    %v1007 = vpop.f32.mrb[0].mxu0
    %v1008 = vpop.f32.mrb[0].mxu0
    %v1009 = vadd.f32 %v841, %v1008
    %v1010 = vpop.f32.mrb[0].mxu0
    %1011 = vmatprep.mubr.bf16.mxu0 0
    %1012 = vmatmul.mubr.bf16.gmra.mrb[0].mxu0 %v815
    %v1013 = vpop.f32.mrb[0].mxu0
    %v1014 = vadd.f32 %v841, %v1013
    %v1015 = vpop.f32.mrb[0].mxu0
    %v1016 = vpop.f32.mrb[0].mxu0
    %v1017 = vadd.f32 %v841, %v1016
    %v1018 = vpop.f32.mrb[0].mxu0
    %1019 = vmatprep.mubr.bf16.mxu0 0
    %1020 = vmatmul.mubr.bf16.gmra.mrb[0].mxu0 %v816
    %v1021 = vpop.f32.mrb[0].mxu0
    %v1022 = vadd.f32 %v841, %v1021
    %v1023 = vpop.f32.mrb[0].mxu0
    %v1024 = vpop.f32.mrb[0].mxu0
    %v1025 = vadd.f32 %v841, %v1024
    %v1026 = vpop.f32.mrb[0].mxu0
    %1027 = vmatprep.mubr.bf16.mxu0 0
    %1028 = vmatmul.mubr.bf16.gmra.mrb[0].mxu0 %v817
    %v1029 = vpop.f32.mrb[0].mxu0
    %v1030 = vadd.f32 %v841, %v1029
    %v1031 = vpop.f32.mrb[0].mxu0
    %v1032 = vpop.f32.mrb[0].mxu0
    %v1033 = vadd.f32 %v841, %v1032
    %v1034 = vpop.f32.mrb[0].mxu0
    %1035 = vmatprep.mubr.bf16.mxu0 0
    %1036 = vmatmul.mubr.bf16.gmra.mrb[0].mxu0 %v818
    %v1037 = vpop.f32.mrb[0].mxu0
    %v1038 = vadd.f32 %v841, %v1037
    %v1039 = vpop.f32.mrb[0].mxu0
    %v1040 = vpop.f32.mrb[0].mxu0
    %v1041 = vadd.f32 %v841, %v1040
    %v1042 = vpop.f32.mrb[0].mxu0
    %1043 = vmatprep.mubr.bf16.mxu0 0
    %1044 = vmatmul.mubr.bf16.gmra.mrb[0].mxu0 %v819
    %v1045 = vpop.f32.mrb[0].mxu0
    %v1046 = vadd.f32 %v841, %v1045
    %v1047 = vpop.f32.mrb[0].mxu0
    %v1048 = vpop.f32.mrb[0].mxu0
    %v1049 = vadd.f32 %v841, %v1048
    %v1050 = vpop.f32.mrb[0].mxu0
    %1051 = vdwg.mxu0
    %1052 = vst [vmem:[%s5] sm:$0xff] %v926
    %1053 = vst [vmem:[%s5 + $0x8] sm:$0xff] %v929
    %1054 = vst [vmem:[%s5 + $0x10] sm:$0xff] %v934
    %1055 = vst [vmem:[%s5 + $0x18] sm:$0xff] %v937
    %1056 = vst [vmem:[%s5 + $0x20] sm:$0xff] %v942
    %1057 = vst [vmem:[%s5 + $0x28] sm:$0xff] %v945
    %1058 = vst [vmem:[%s5 + $0x30] sm:$0xff] %v950
    %1059 = vst [vmem:[%s5 + $0x38] sm:$0xff] %v953
    %1060 = vst [vmem:[%s5 + $0x40] sm:$0xff] %v958
    %1061 = vst [vmem:[%s5 + $0x48] sm:$0xff] %v961
    %1062 = vst [vmem:[%s5 + $0x50] sm:$0xff] %v966
    %1063 = vst [vmem:[%s5 + $0x58] sm:$0xff] %v969
    %1064 = vst [vmem:[%s5 + $0x60] sm:$0xff] %v974
    %1065 = vst [vmem:[%s5 + $0x68] sm:$0xff] %v977
    %1066 = vst [vmem:[%s5 + $0x70] sm:$0xff] %v982
    %1067 = vst [vmem:[%s5 + $0x78] sm:$0xff] %v985
    %1068 = vst [vmem:[%s5 + $0x80] sm:$0xff] %v990
    %1069 = vst [vmem:[%s5 + $0x88] sm:$0xff] %v993
    %1070 = vst [vmem:[%s5 + $0x90] sm:$0xff] %v998
    %1071 = vst [vmem:[%s5 + $0x98] sm:$0xff] %v1001
    %1072 = vst [vmem:[%s5 + $0xa0] sm:$0xff] %v1006
    %1073 = vst [vmem:[%s5 + $0xa8] sm:$0xff] %v1009
    %1074 = vst [vmem:[%s5 + $0xb0] sm:$0xff] %v1014
    %1075 = vst [vmem:[%s5 + $0xb8] sm:$0xff] %v1017
    %1076 = vst [vmem:[%s5 + $0xc0] sm:$0xff] %v1022
    %1077 = vst [vmem:[%s5 + $0xc8] sm:$0xff] %v1025
    %1078 = vst [vmem:[%s5 + $0xd0] sm:$0xff] %v1030
    %1079 = vst [vmem:[%s5 + $0xd8] sm:$0xff] %v1033
    %1080 = vst [vmem:[%s5 + $0xe0] sm:$0xff] %v1038
    %1081 = vst [vmem:[%s5 + $0xe8] sm:$0xff] %v1041
    %1082 = vst [vmem:[%s5 + $0xf0] sm:$0xff] %v1046
    %1083 = vst [vmem:[%s5 + $0xf8] sm:$0xff] %v1049
  $region29: #{gcn_forward.5} parent=0 // pred_fallthru
    _
  // Predicated region
  $region30: #{gcn_forward.5} parent=0 // pred_check
    _
  $region31: #{gcn_forward.5} parent=0 // pred_check_branch
    %1085 = sbr.rel (0) target = $region33
  $region32: #{gcn_forward.5} parent=0 // pred_region
    _
  $region33: #{gcn_forward.5} parent=0 // pred_fallthru
    _
  // Predicated region
  $region34: #{gcn_forward.5} parent=0 // pred_check
    _
  $region35: #{gcn_forward.5} parent=0 // pred_check_branch
    %1087 = sbr.rel (0) target = $region37
  $region36: #{gcn_forward.5} parent=0 // pred_region
    _
  $region37: #{gcn_forward.5} parent=0 // pred_fallthru
    _

// kernel: gcn_forward.3
$region0: #{gcn_forward.3}
  #allocation0 [shape = 'u32[]', space=smem, size = 0x4, offset = 0x4, fixed_abs, tag = 'smem constant byte address 0x4 - core index']
  #allocation1 [shape = 'u32[144,128]{1,0:T(1,128)}', space=vmem, size = 0x12000, scoped, tag = 'internal scratch']
  #allocation2 [shape = 'f32[256,512]{1,0:T(8,128)}', space=vmem, size = 0x80000, scoped, tag = 'scratch operand']
  %s0 = inlined_call_operand.vmem [shape: bf16[256,256], index: 0, kind: input, shape index: {}]
  %s1 = inlined_call_operand.vmem [shape: bf16[256,512], index: 1, kind: input, shape index: {}]
  %s2 = inlined_call_operand.vmem [shape: bf16[256,512], index: 2, kind: output, shape index: {}]
  %s3 = sld [smem:[#allocation0]]
  $region26: #{gcn_forward.3} parent=0
    _
  %s5 = ssub.s32 1, %s3
  %s6 = scalar_select 0, %s5, %s3
  // Predicated region
  $region2: #{gcn_forward.3} parent=0 // pred_check
    _
  $region3: #{gcn_forward.3} parent=0 // pred_check_branch
    %8 = sbr.rel (0) target = $region5
  $region4: #{gcn_forward.3} parent=0 // pred_region
    _
  $region5: #{gcn_forward.3} parent=0 // pred_fallthru
    _
  // Predicated region
  $region6: #{gcn_forward.3} parent=0 // pred_check
    _
  $region7: #{gcn_forward.3} parent=0 // pred_check_branch
    %10 = sbr.rel (0) target = $region9
  $region8: #{gcn_forward.3} parent=0 // pred_region
    _
  $region9: #{gcn_forward.3} parent=0 // pred_fallthru
    _
  %p11 = scmp.eq.s32.totalorder 0, 0
  // Predicated region
  $region10: #{gcn_forward.3} parent=0 // pred_check
    %p12 = pneg %p11
  $region11: #{gcn_forward.3} parent=0 // pred_check_branch
    %14 = sbr.rel (%p12) target = $region13
  $region12: #{gcn_forward.3} parent=0 // pred_region
    %15 = vst [vmem:[#allocation2] sm:$0xff] 0.0
    %16 = vst [vmem:[#allocation2 + $0x8] sm:$0xff] 0.0
    %17 = vst [vmem:[#allocation2 + $0x10] sm:$0xff] 0.0
    %18 = vst [vmem:[#allocation2 + $0x18] sm:$0xff] 0.0
    %19 = vst [vmem:[#allocation2 + $0x20] sm:$0xff] 0.0
    %20 = vst [vmem:[#allocation2 + $0x28] sm:$0xff] 0.0
    %21 = vst [vmem:[#allocation2 + $0x30] sm:$0xff] 0.0
    %22 = vst [vmem:[#allocation2 + $0x38] sm:$0xff] 0.0
    %23 = vst [vmem:[#allocation2 + $0x40] sm:$0xff] 0.0
    %24 = vst [vmem:[#allocation2 + $0x48] sm:$0xff] 0.0
    %25 = vst [vmem:[#allocation2 + $0x50] sm:$0xff] 0.0
    %26 = vst [vmem:[#allocation2 + $0x58] sm:$0xff] 0.0
    %27 = vst [vmem:[#allocation2 + $0x60] sm:$0xff] 0.0
    %28 = vst [vmem:[#allocation2 + $0x68] sm:$0xff] 0.0
    %29 = vst [vmem:[#allocation2 + $0x70] sm:$0xff] 0.0
    %30 = vst [vmem:[#allocation2 + $0x78] sm:$0xff] 0.0
    %31 = vst [vmem:[#allocation2 + $0x80] sm:$0xff] 0.0
    %32 = vst [vmem:[#allocation2 + $0x88] sm:$0xff] 0.0
    %33 = vst [vmem:[#allocation2 + $0x90] sm:$0xff] 0.0
    %34 = vst [vmem:[#allocation2 + $0x98] sm:$0xff] 0.0
    %35 = vst [vmem:[#allocation2 + $0xa0] sm:$0xff] 0.0
    %36 = vst [vmem:[#allocation2 + $0xa8] sm:$0xff] 0.0
    %37 = vst [vmem:[#allocation2 + $0xb0] sm:$0xff] 0.0
    %38 = vst [vmem:[#allocation2 + $0xb8] sm:$0xff] 0.0
    %39 = vst [vmem:[#allocation2 + $0xc0] sm:$0xff] 0.0
    %40 = vst [vmem:[#allocation2 + $0xc8] sm:$0xff] 0.0
    %41 = vst [vmem:[#allocation2 + $0xd0] sm:$0xff] 0.0
    %42 = vst [vmem:[#allocation2 + $0xd8] sm:$0xff] 0.0
    %43 = vst [vmem:[#allocation2 + $0xe0] sm:$0xff] 0.0
    %44 = vst [vmem:[#allocation2 + $0xe8] sm:$0xff] 0.0
    %45 = vst [vmem:[#allocation2 + $0xf0] sm:$0xff] 0.0
    %46 = vst [vmem:[#allocation2 + $0xf8] sm:$0xff] 0.0
    %47 = vst [vmem:[#allocation2 + $0x100] sm:$0xff] 0.0
    %48 = vst [vmem:[#allocation2 + $0x108] sm:$0xff] 0.0
    %49 = vst [vmem:[#allocation2 + $0x110] sm:$0xff] 0.0
    %50 = vst [vmem:[#allocation2 + $0x118] sm:$0xff] 0.0
    %51 = vst [vmem:[#allocation2 + $0x120] sm:$0xff] 0.0
    %52 = vst [vmem:[#allocation2 + $0x128] sm:$0xff] 0.0
    %53 = vst [vmem:[#allocation2 + $0x130] sm:$0xff] 0.0
    %54 = vst [vmem:[#allocation2 + $0x138] sm:$0xff] 0.0
    %55 = vst [vmem:[#allocation2 + $0x140] sm:$0xff] 0.0
    %56 = vst [vmem:[#allocation2 + $0x148] sm:$0xff] 0.0
    %57 = vst [vmem:[#allocation2 + $0x150] sm:$0xff] 0.0
    %58 = vst [vmem:[#allocation2 + $0x158] sm:$0xff] 0.0
    %59 = vst [vmem:[#allocation2 + $0x160] sm:$0xff] 0.0
    %60 = vst [vmem:[#allocation2 + $0x168] sm:$0xff] 0.0
    %61 = vst [vmem:[#allocation2 + $0x170] sm:$0xff] 0.0
    %62 = vst [vmem:[#allocation2 + $0x178] sm:$0xff] 0.0
    %63 = vst [vmem:[#allocation2 + $0x180] sm:$0xff] 0.0
    %64 = vst [vmem:[#allocation2 + $0x188] sm:$0xff] 0.0
    %65 = vst [vmem:[#allocation2 + $0x190] sm:$0xff] 0.0
    %66 = vst [vmem:[#allocation2 + $0x198] sm:$0xff] 0.0
    %67 = vst [vmem:[#allocation2 + $0x1a0] sm:$0xff] 0.0
    %68 = vst [vmem:[#allocation2 + $0x1a8] sm:$0xff] 0.0
    %69 = vst [vmem:[#allocation2 + $0x1b0] sm:$0xff] 0.0
    %70 = vst [vmem:[#allocation2 + $0x1b8] sm:$0xff] 0.0
    %71 = vst [vmem:[#allocation2 + $0x1c0] sm:$0xff] 0.0
    %72 = vst [vmem:[#allocation2 + $0x1c8] sm:$0xff] 0.0
    %73 = vst [vmem:[#allocation2 + $0x1d0] sm:$0xff] 0.0
    %74 = vst [vmem:[#allocation2 + $0x1d8] sm:$0xff] 0.0
    %75 = vst [vmem:[#allocation2 + $0x1e0] sm:$0xff] 0.0
    %76 = vst [vmem:[#allocation2 + $0x1e8] sm:$0xff] 0.0
    %77 = vst [vmem:[#allocation2 + $0x1f0] sm:$0xff] 0.0
    %78 = vst [vmem:[#allocation2 + $0x1f8] sm:$0xff] 0.0
    %79 = vst [vmem:[#allocation2 + $0x200] sm:$0xff] 0.0
    %80 = vst [vmem:[#allocation2 + $0x208] sm:$0xff] 0.0
    %81 = vst [vmem:[#allocation2 + $0x210] sm:$0xff] 0.0
    %82 = vst [vmem:[#allocation2 + $0x218] sm:$0xff] 0.0
    %83 = vst [vmem:[#allocation2 + $0x220] sm:$0xff] 0.0
    %84 = vst [vmem:[#allocation2 + $0x228] sm:$0xff] 0.0
    %85 = vst [vmem:[#allocation2 + $0x230] sm:$0xff] 0.0
    %86 = vst [vmem:[#allocation2 + $0x238] sm:$0xff] 0.0
    %87 = vst [vmem:[#allocation2 + $0x240] sm:$0xff] 0.0
    %88 = vst [vmem:[#allocation2 + $0x248] sm:$0xff] 0.0
    %89 = vst [vmem:[#allocation2 + $0x250] sm:$0xff] 0.0
    %90 = vst [vmem:[#allocation2 + $0x258] sm:$0xff] 0.0
    %91 = vst [vmem:[#allocation2 + $0x260] sm:$0xff] 0.0
    %92 = vst [vmem:[#allocation2 + $0x268] sm:$0xff] 0.0
    %93 = vst [vmem:[#allocation2 + $0x270] sm:$0xff] 0.0
    %94 = vst [vmem:[#allocation2 + $0x278] sm:$0xff] 0.0
    %95 = vst [vmem:[#allocation2 + $0x280] sm:$0xff] 0.0
    %96 = vst [vmem:[#allocation2 + $0x288] sm:$0xff] 0.0
    %97 = vst [vmem:[#allocation2 + $0x290] sm:$0xff] 0.0
    %98 = vst [vmem:[#allocation2 + $0x298] sm:$0xff] 0.0
    %99 = vst [vmem:[#allocation2 + $0x2a0] sm:$0xff] 0.0
    %100 = vst [vmem:[#allocation2 + $0x2a8] sm:$0xff] 0.0
    %101 = vst [vmem:[#allocation2 + $0x2b0] sm:$0xff] 0.0
    %102 = vst [vmem:[#allocation2 + $0x2b8] sm:$0xff] 0.0
    %103 = vst [vmem:[#allocation2 + $0x2c0] sm:$0xff] 0.0
    %104 = vst [vmem:[#allocation2 + $0x2c8] sm:$0xff] 0.0
    %105 = vst [vmem:[#allocation2 + $0x2d0] sm:$0xff] 0.0
    %106 = vst [vmem:[#allocation2 + $0x2d8] sm:$0xff] 0.0
    %107 = vst [vmem:[#allocation2 + $0x2e0] sm:$0xff] 0.0
    %108 = vst [vmem:[#allocation2 + $0x2e8] sm:$0xff] 0.0
    %109 = vst [vmem:[#allocation2 + $0x2f0] sm:$0xff] 0.0
    %110 = vst [vmem:[#allocation2 + $0x2f8] sm:$0xff] 0.0
    %111 = vst [vmem:[#allocation2 + $0x300] sm:$0xff] 0.0
    %112 = vst [vmem:[#allocation2 + $0x308] sm:$0xff] 0.0
    %113 = vst [vmem:[#allocation2 + $0x310] sm:$0xff] 0.0
    %114 = vst [vmem:[#allocation2 + $0x318] sm:$0xff] 0.0
    %115 = vst [vmem:[#allocation2 + $0x320] sm:$0xff] 0.0
    %116 = vst [vmem:[#allocation2 + $0x328] sm:$0xff] 0.0
    %117 = vst [vmem:[#allocation2 + $0x330] sm:$0xff] 0.0
    %118 = vst [vmem:[#allocation2 + $0x338] sm:$0xff] 0.0
    %119 = vst [vmem:[#allocation2 + $0x340] sm:$0xff] 0.0
    %120 = vst [vmem:[#allocation2 + $0x348] sm:$0xff] 0.0
    %121 = vst [vmem:[#allocation2 + $0x350] sm:$0xff] 0.0
    %122 = vst [vmem:[#allocation2 + $0x358] sm:$0xff] 0.0
    %123 = vst [vmem:[#allocation2 + $0x360] sm:$0xff] 0.0
    %124 = vst [vmem:[#allocation2 + $0x368] sm:$0xff] 0.0
    %125 = vst [vmem:[#allocation2 + $0x370] sm:$0xff] 0.0
    %126 = vst [vmem:[#allocation2 + $0x378] sm:$0xff] 0.0
    %127 = vst [vmem:[#allocation2 + $0x380] sm:$0xff] 0.0
    %128 = vst [vmem:[#allocation2 + $0x388] sm:$0xff] 0.0
    %129 = vst [vmem:[#allocation2 + $0x390] sm:$0xff] 0.0
    %130 = vst [vmem:[#allocation2 + $0x398] sm:$0xff] 0.0
    %131 = vst [vmem:[#allocation2 + $0x3a0] sm:$0xff] 0.0
    %132 = vst [vmem:[#allocation2 + $0x3a8] sm:$0xff] 0.0
    %133 = vst [vmem:[#allocation2 + $0x3b0] sm:$0xff] 0.0
    %134 = vst [vmem:[#allocation2 + $0x3b8] sm:$0xff] 0.0
    %135 = vst [vmem:[#allocation2 + $0x3c0] sm:$0xff] 0.0
    %136 = vst [vmem:[#allocation2 + $0x3c8] sm:$0xff] 0.0
    %137 = vst [vmem:[#allocation2 + $0x3d0] sm:$0xff] 0.0
    %138 = vst [vmem:[#allocation2 + $0x3d8] sm:$0xff] 0.0
    %139 = vst [vmem:[#allocation2 + $0x3e0] sm:$0xff] 0.0
    %140 = vst [vmem:[#allocation2 + $0x3e8] sm:$0xff] 0.0
    %141 = vst [vmem:[#allocation2 + $0x3f0] sm:$0xff] 0.0
    %142 = vst [vmem:[#allocation2 + $0x3f8] sm:$0xff] 0.0
  $region13: #{gcn_forward.3} parent=0 // pred_fallthru
    _
  %v143 = vld [vmem:[#allocation2] sm:$0xff]
  %v144 = vld [vmem:[#allocation2 + $0x8] sm:$0xff]
  %v145 = vld [vmem:[#allocation2 + $0x10] sm:$0xff]
  %v146 = vld [vmem:[#allocation2 + $0x18] sm:$0xff]
  %v147 = vld [vmem:[#allocation2 + $0x20] sm:$0xff]
  %v148 = vld [vmem:[#allocation2 + $0x28] sm:$0xff]
  %v149 = vld [vmem:[#allocation2 + $0x30] sm:$0xff]
  %v150 = vld [vmem:[#allocation2 + $0x38] sm:$0xff]
  %v151 = vld [vmem:[#allocation2 + $0x40] sm:$0xff]
  %v152 = vld [vmem:[#allocation2 + $0x48] sm:$0xff]
  %v153 = vld [vmem:[#allocation2 + $0x50] sm:$0xff]
  %v154 = vld [vmem:[#allocation2 + $0x58] sm:$0xff]
  %v155 = vld [vmem:[#allocation2 + $0x60] sm:$0xff]
  %v156 = vld [vmem:[#allocation2 + $0x68] sm:$0xff]
  %v157 = vld [vmem:[#allocation2 + $0x70] sm:$0xff]
  %v158 = vld [vmem:[#allocation2 + $0x78] sm:$0xff]
  %v159 = vld [vmem:[#allocation2 + $0x80] sm:$0xff]
  %v160 = vld [vmem:[#allocation2 + $0x88] sm:$0xff]
  %v161 = vld [vmem:[#allocation2 + $0x90] sm:$0xff]
  %v162 = vld [vmem:[#allocation2 + $0x98] sm:$0xff]
  %v163 = vld [vmem:[#allocation2 + $0xa0] sm:$0xff]
  %v164 = vld [vmem:[#allocation2 + $0xa8] sm:$0xff]
  %v165 = vld [vmem:[#allocation2 + $0xb0] sm:$0xff]
  %v166 = vld [vmem:[#allocation2 + $0xb8] sm:$0xff]
  %v167 = vld [vmem:[#allocation2 + $0xc0] sm:$0xff]
  %v168 = vld [vmem:[#allocation2 + $0xc8] sm:$0xff]
  %v169 = vld [vmem:[#allocation2 + $0xd0] sm:$0xff]
  %v170 = vld [vmem:[#allocation2 + $0xd8] sm:$0xff]
  %v171 = vld [vmem:[#allocation2 + $0xe0] sm:$0xff]
  %v172 = vld [vmem:[#allocation2 + $0xe8] sm:$0xff]
  %v173 = vld [vmem:[#allocation2 + $0xf0] sm:$0xff]
  %v174 = vld [vmem:[#allocation2 + $0xf8] sm:$0xff]
  %v175 = vld [vmem:[#allocation2 + $0x100] sm:$0xff]
  %v176 = vld [vmem:[#allocation2 + $0x108] sm:$0xff]
  %v177 = vld [vmem:[#allocation2 + $0x110] sm:$0xff]
  %v178 = vld [vmem:[#allocation2 + $0x118] sm:$0xff]
  %v179 = vld [vmem:[#allocation2 + $0x120] sm:$0xff]
  %v180 = vld [vmem:[#allocation2 + $0x128] sm:$0xff]
  %v181 = vld [vmem:[#allocation2 + $0x130] sm:$0xff]
  %v182 = vld [vmem:[#allocation2 + $0x138] sm:$0xff]
  %v183 = vld [vmem:[#allocation2 + $0x140] sm:$0xff]
  %v184 = vld [vmem:[#allocation2 + $0x148] sm:$0xff]
  %v185 = vld [vmem:[#allocation2 + $0x150] sm:$0xff]
  %v186 = vld [vmem:[#allocation2 + $0x158] sm:$0xff]
  %v187 = vld [vmem:[#allocation2 + $0x160] sm:$0xff]
  %v188 = vld [vmem:[#allocation2 + $0x168] sm:$0xff]
  %v189 = vld [vmem:[#allocation2 + $0x170] sm:$0xff]
  %v190 = vld [vmem:[#allocation2 + $0x178] sm:$0xff]
  %v191 = vld [vmem:[#allocation2 + $0x180] sm:$0xff]
  %v192 = vld [vmem:[#allocation2 + $0x188] sm:$0xff]
  %v193 = vld [vmem:[#allocation2 + $0x190] sm:$0xff]
  %v194 = vld [vmem:[#allocation2 + $0x198] sm:$0xff]
  %v195 = vld [vmem:[#allocation2 + $0x1a0] sm:$0xff]
  %v196 = vld [vmem:[#allocation2 + $0x1a8] sm:$0xff]
  %v197 = vld [vmem:[#allocation2 + $0x1b0] sm:$0xff]
  %v198 = vld [vmem:[#allocation2 + $0x1b8] sm:$0xff]
  %v199 = vld [vmem:[#allocation2 + $0x1c0] sm:$0xff]
  %v200 = vld [vmem:[#allocation2 + $0x1c8] sm:$0xff]
  %v201 = vld [vmem:[#allocation2 + $0x1d0] sm:$0xff]
  %v202 = vld [vmem:[#allocation2 + $0x1d8] sm:$0xff]
  %v203 = vld [vmem:[#allocation2 + $0x1e0] sm:$0xff]
  %v204 = vld [vmem:[#allocation2 + $0x1e8] sm:$0xff]
  %v205 = vld [vmem:[#allocation2 + $0x1f0] sm:$0xff]
  %v206 = vld [vmem:[#allocation2 + $0x1f8] sm:$0xff]
  %v207 = vld [vmem:[#allocation2 + $0x200] sm:$0xff]
  %v208 = vld [vmem:[#allocation2 + $0x208] sm:$0xff]
  %v209 = vld [vmem:[#allocation2 + $0x210] sm:$0xff]
  %v210 = vld [vmem:[#allocation2 + $0x218] sm:$0xff]
  %v211 = vld [vmem:[#allocation2 + $0x220] sm:$0xff]
  %v212 = vld [vmem:[#allocation2 + $0x228] sm:$0xff]
  %v213 = vld [vmem:[#allocation2 + $0x230] sm:$0xff]
  %v214 = vld [vmem:[#allocation2 + $0x238] sm:$0xff]
  %v215 = vld [vmem:[#allocation2 + $0x240] sm:$0xff]
  %v216 = vld [vmem:[#allocation2 + $0x248] sm:$0xff]
  %v217 = vld [vmem:[#allocation2 + $0x250] sm:$0xff]
  %v218 = vld [vmem:[#allocation2 + $0x258] sm:$0xff]
  %v219 = vld [vmem:[#allocation2 + $0x260] sm:$0xff]
  %v220 = vld [vmem:[#allocation2 + $0x268] sm:$0xff]
  %v221 = vld [vmem:[#allocation2 + $0x270] sm:$0xff]
  %v222 = vld [vmem:[#allocation2 + $0x278] sm:$0xff]
  %v223 = vld [vmem:[#allocation2 + $0x280] sm:$0xff]
  %v224 = vld [vmem:[#allocation2 + $0x288] sm:$0xff]
  %v225 = vld [vmem:[#allocation2 + $0x290] sm:$0xff]
  %v226 = vld [vmem:[#allocation2 + $0x298] sm:$0xff]
  %v227 = vld [vmem:[#allocation2 + $0x2a0] sm:$0xff]
  %v228 = vld [vmem:[#allocation2 + $0x2a8] sm:$0xff]
  %v229 = vld [vmem:[#allocation2 + $0x2b0] sm:$0xff]
  %v230 = vld [vmem:[#allocation2 + $0x2b8] sm:$0xff]
  %v231 = vld [vmem:[#allocation2 + $0x2c0] sm:$0xff]
  %v232 = vld [vmem:[#allocation2 + $0x2c8] sm:$0xff]
  %v233 = vld [vmem:[#allocation2 + $0x2d0] sm:$0xff]
  %v234 = vld [vmem:[#allocation2 + $0x2d8] sm:$0xff]
  %v235 = vld [vmem:[#allocation2 + $0x2e0] sm:$0xff]
  %v236 = vld [vmem:[#allocation2 + $0x2e8] sm:$0xff]
  %v237 = vld [vmem:[#allocation2 + $0x2f0] sm:$0xff]
  %v238 = vld [vmem:[#allocation2 + $0x2f8] sm:$0xff]
  %v239 = vld [vmem:[#allocation2 + $0x300] sm:$0xff]
  %v240 = vld [vmem:[#allocation2 + $0x308] sm:$0xff]
  %v241 = vld [vmem:[#allocation2 + $0x310] sm:$0xff]
  %v242 = vld [vmem:[#allocation2 + $0x318] sm:$0xff]
  %v243 = vld [vmem:[#allocation2 + $0x320] sm:$0xff]
  %v244 = vld [vmem:[#allocation2 + $0x328] sm:$0xff]
  %v245 = vld [vmem:[#allocation2 + $0x330] sm:$0xff]
  %v246 = vld [vmem:[#allocation2 + $0x338] sm:$0xff]
  %v247 = vld [vmem:[#allocation2 + $0x340] sm:$0xff]
  %v248 = vld [vmem:[#allocation2 + $0x348] sm:$0xff]
  %v249 = vld [vmem:[#allocation2 + $0x350] sm:$0xff]
  %v250 = vld [vmem:[#allocation2 + $0x358] sm:$0xff]
  %v251 = vld [vmem:[#allocation2 + $0x360] sm:$0xff]
  %v252 = vld [vmem:[#allocation2 + $0x368] sm:$0xff]
  %v253 = vld [vmem:[#allocation2 + $0x370] sm:$0xff]
  %v254 = vld [vmem:[#allocation2 + $0x378] sm:$0xff]
  %v255 = vld [vmem:[#allocation2 + $0x380] sm:$0xff]
  %v256 = vld [vmem:[#allocation2 + $0x388] sm:$0xff]
  %v257 = vld [vmem:[#allocation2 + $0x390] sm:$0xff]
  %v258 = vld [vmem:[#allocation2 + $0x398] sm:$0xff]
  %v259 = vld [vmem:[#allocation2 + $0x3a0] sm:$0xff]
  %v260 = vld [vmem:[#allocation2 + $0x3a8] sm:$0xff]
  %v261 = vld [vmem:[#allocation2 + $0x3b0] sm:$0xff]
  %v262 = vld [vmem:[#allocation2 + $0x3b8] sm:$0xff]
  %v263 = vld [vmem:[#allocation2 + $0x3c0] sm:$0xff]
  %v264 = vld [vmem:[#allocation2 + $0x3c8] sm:$0xff]
  %v265 = vld [vmem:[#allocation2 + $0x3d0] sm:$0xff]
  %v266 = vld [vmem:[#allocation2 + $0x3d8] sm:$0xff]
  %v267 = vld [vmem:[#allocation2 + $0x3e0] sm:$0xff]
  %v268 = vld [vmem:[#allocation2 + $0x3e8] sm:$0xff]
  %v269 = vld [vmem:[#allocation2 + $0x3f0] sm:$0xff]
  %v270 = vld [vmem:[#allocation2 + $0x3f8] sm:$0xff]
  %v271 = vld [vmem:[%s0] sm:$0xff]
  %v272 = vld [vmem:[%s0 + $0x8] sm:$0xff]
  %v273 = vld [vmem:[%s0 + $0x10] sm:$0xff]
  %v274 = vld [vmem:[%s0 + $0x18] sm:$0xff]
  %v275 = vld [vmem:[%s0 + $0x20] sm:$0xff]
  %v276 = vld [vmem:[%s0 + $0x28] sm:$0xff]
  %v277 = vld [vmem:[%s0 + $0x30] sm:$0xff]
  %v278 = vld [vmem:[%s0 + $0x38] sm:$0xff]
  %v279 = vld [vmem:[%s0 + $0x40] sm:$0xff]
  %v280 = vld [vmem:[%s0 + $0x48] sm:$0xff]
  %v281 = vld [vmem:[%s0 + $0x50] sm:$0xff]
  %v282 = vld [vmem:[%s0 + $0x58] sm:$0xff]
  %v283 = vld [vmem:[%s0 + $0x60] sm:$0xff]
  %v284 = vld [vmem:[%s0 + $0x68] sm:$0xff]
  %v285 = vld [vmem:[%s0 + $0x70] sm:$0xff]
  %v286 = vld [vmem:[%s0 + $0x78] sm:$0xff]
  %v287 = vld [vmem:[%s0 + $0x80] sm:$0xff]
  %v288 = vld [vmem:[%s0 + $0x88] sm:$0xff]
  %v289 = vld [vmem:[%s0 + $0x90] sm:$0xff]
  %v290 = vld [vmem:[%s0 + $0x98] sm:$0xff]
  %v291 = vld [vmem:[%s0 + $0xa0] sm:$0xff]
  %v292 = vld [vmem:[%s0 + $0xa8] sm:$0xff]
  %v293 = vld [vmem:[%s0 + $0xb0] sm:$0xff]
  %v294 = vld [vmem:[%s0 + $0xb8] sm:$0xff]
  %v295 = vld [vmem:[%s0 + $0xc0] sm:$0xff]
  %v296 = vld [vmem:[%s0 + $0xc8] sm:$0xff]
  %v297 = vld [vmem:[%s0 + $0xd0] sm:$0xff]
  %v298 = vld [vmem:[%s0 + $0xd8] sm:$0xff]
  %v299 = vld [vmem:[%s0 + $0xe0] sm:$0xff]
  %v300 = vld [vmem:[%s0 + $0xe8] sm:$0xff]
  %v301 = vld [vmem:[%s0 + $0xf0] sm:$0xff]
  %v302 = vld [vmem:[%s0 + $0xf8] sm:$0xff]
  %v303 = vld [vmem:[%s1] sm:$0xff]
  %v304 = vld [vmem:[%s1 + $0x8] sm:$0xff]
  %v305 = vld [vmem:[%s1 + $0x10] sm:$0xff]
  %v306 = vld [vmem:[%s1 + $0x18] sm:$0xff]
  %v307 = vld [vmem:[%s1 + $0x20] sm:$0xff]
  %v308 = vld [vmem:[%s1 + $0x28] sm:$0xff]
  %v309 = vld [vmem:[%s1 + $0x30] sm:$0xff]
  %v310 = vld [vmem:[%s1 + $0x38] sm:$0xff]
  %v311 = vld [vmem:[%s1 + $0x40] sm:$0xff]
  %v312 = vld [vmem:[%s1 + $0x48] sm:$0xff]
  %v313 = vld [vmem:[%s1 + $0x50] sm:$0xff]
  %v314 = vld [vmem:[%s1 + $0x58] sm:$0xff]
  %v315 = vld [vmem:[%s1 + $0x60] sm:$0xff]
  %v316 = vld [vmem:[%s1 + $0x68] sm:$0xff]
  %v317 = vld [vmem:[%s1 + $0x70] sm:$0xff]
  %v318 = vld [vmem:[%s1 + $0x78] sm:$0xff]
  %v319 = vld [vmem:[%s1 + $0x80] sm:$0xff]
  %v320 = vld [vmem:[%s1 + $0x88] sm:$0xff]
  %v321 = vld [vmem:[%s1 + $0x90] sm:$0xff]
  %v322 = vld [vmem:[%s1 + $0x98] sm:$0xff]
  %v323 = vld [vmem:[%s1 + $0xa0] sm:$0xff]
  %v324 = vld [vmem:[%s1 + $0xa8] sm:$0xff]
  %v325 = vld [vmem:[%s1 + $0xb0] sm:$0xff]
  %v326 = vld [vmem:[%s1 + $0xb8] sm:$0xff]
  %v327 = vld [vmem:[%s1 + $0xc0] sm:$0xff]
  %v328 = vld [vmem:[%s1 + $0xc8] sm:$0xff]
  %v329 = vld [vmem:[%s1 + $0xd0] sm:$0xff]
  %v330 = vld [vmem:[%s1 + $0xd8] sm:$0xff]
  %v331 = vld [vmem:[%s1 + $0xe0] sm:$0xff]
  %v332 = vld [vmem:[%s1 + $0xe8] sm:$0xff]
  %v333 = vld [vmem:[%s1 + $0xf0] sm:$0xff]
  %v334 = vld [vmem:[%s1 + $0xf8] sm:$0xff]
  %v335 = vld [vmem:[%s1 + $0x100] sm:$0xff]
  %v336 = vld [vmem:[%s1 + $0x108] sm:$0xff]
  %v337 = vld [vmem:[%s1 + $0x110] sm:$0xff]
  %v338 = vld [vmem:[%s1 + $0x118] sm:$0xff]
  %v339 = vld [vmem:[%s1 + $0x120] sm:$0xff]
  %v340 = vld [vmem:[%s1 + $0x128] sm:$0xff]
  %v341 = vld [vmem:[%s1 + $0x130] sm:$0xff]
  %v342 = vld [vmem:[%s1 + $0x138] sm:$0xff]
  %v343 = vld [vmem:[%s1 + $0x140] sm:$0xff]
  %v344 = vld [vmem:[%s1 + $0x148] sm:$0xff]
  %v345 = vld [vmem:[%s1 + $0x150] sm:$0xff]
  %v346 = vld [vmem:[%s1 + $0x158] sm:$0xff]
  %v347 = vld [vmem:[%s1 + $0x160] sm:$0xff]
  %v348 = vld [vmem:[%s1 + $0x168] sm:$0xff]
  %v349 = vld [vmem:[%s1 + $0x170] sm:$0xff]
  %v350 = vld [vmem:[%s1 + $0x178] sm:$0xff]
  %v351 = vld [vmem:[%s1 + $0x180] sm:$0xff]
  %v352 = vld [vmem:[%s1 + $0x188] sm:$0xff]
  %v353 = vld [vmem:[%s1 + $0x190] sm:$0xff]
  %v354 = vld [vmem:[%s1 + $0x198] sm:$0xff]
  %v355 = vld [vmem:[%s1 + $0x1a0] sm:$0xff]
  %v356 = vld [vmem:[%s1 + $0x1a8] sm:$0xff]
  %v357 = vld [vmem:[%s1 + $0x1b0] sm:$0xff]
  %v358 = vld [vmem:[%s1 + $0x1b8] sm:$0xff]
  %v359 = vld [vmem:[%s1 + $0x1c0] sm:$0xff]
  %v360 = vld [vmem:[%s1 + $0x1c8] sm:$0xff]
  %v361 = vld [vmem:[%s1 + $0x1d0] sm:$0xff]
  %v362 = vld [vmem:[%s1 + $0x1d8] sm:$0xff]
  %v363 = vld [vmem:[%s1 + $0x1e0] sm:$0xff]
  %v364 = vld [vmem:[%s1 + $0x1e8] sm:$0xff]
  %v365 = vld [vmem:[%s1 + $0x1f0] sm:$0xff]
  %v366 = vld [vmem:[%s1 + $0x1f8] sm:$0xff]
  %v399 = vunpack.c.l.b16 %v271
  %v400 = vunpack.c.h.b16 %v271
  %v401 = vunpack.c.l.b16 %v272
  %v402 = vunpack.c.h.b16 %v272
  %v403 = vunpack.c.l.b16 %v273
  %v404 = vunpack.c.h.b16 %v273
  %v405 = vunpack.c.l.b16 %v274
  %v406 = vunpack.c.h.b16 %v274
  %v407 = vunpack.c.l.b16 %v275
  %v408 = vunpack.c.h.b16 %v275
  %v409 = vunpack.c.l.b16 %v276
  %v410 = vunpack.c.h.b16 %v276
  %v411 = vunpack.c.l.b16 %v277
  %v412 = vunpack.c.h.b16 %v277
  %v413 = vunpack.c.l.b16 %v278
  %v414 = vunpack.c.h.b16 %v278
  %v415 = vunpack.c.l.b16 %v279
  %v416 = vunpack.c.h.b16 %v279
  %v417 = vunpack.c.l.b16 %v280
  %v418 = vunpack.c.h.b16 %v280
  %v419 = vunpack.c.l.b16 %v281
  %v420 = vunpack.c.h.b16 %v281
  %v421 = vunpack.c.l.b16 %v282
  %v422 = vunpack.c.h.b16 %v282
  %v423 = vunpack.c.l.b16 %v283
  %v424 = vunpack.c.h.b16 %v283
  %v425 = vunpack.c.l.b16 %v284
  %v426 = vunpack.c.h.b16 %v284
  %v427 = vunpack.c.l.b16 %v285
  %v428 = vunpack.c.h.b16 %v285
  %v429 = vunpack.c.l.b16 %v286
  %v430 = vunpack.c.h.b16 %v286
  %v431 = vunpack.c.l.b16 %v287
  %v432 = vunpack.c.h.b16 %v287
  %v433 = vunpack.c.l.b16 %v288
  %v434 = vunpack.c.h.b16 %v288
  %v435 = vunpack.c.l.b16 %v289
  %v436 = vunpack.c.h.b16 %v289
  %v437 = vunpack.c.l.b16 %v290
  %v438 = vunpack.c.h.b16 %v290
  %v439 = vunpack.c.l.b16 %v291
  %v440 = vunpack.c.h.b16 %v291
  %v441 = vunpack.c.l.b16 %v292
  %v442 = vunpack.c.h.b16 %v292
  %v443 = vunpack.c.l.b16 %v293
  %v444 = vunpack.c.h.b16 %v293
  %v445 = vunpack.c.l.b16 %v294
  %v446 = vunpack.c.h.b16 %v294
  %v447 = vunpack.c.l.b16 %v295
  %v448 = vunpack.c.h.b16 %v295
  %v449 = vunpack.c.l.b16 %v296
  %v450 = vunpack.c.h.b16 %v296
  %v451 = vunpack.c.l.b16 %v297
  %v452 = vunpack.c.h.b16 %v297
  %v453 = vunpack.c.l.b16 %v298
  %v454 = vunpack.c.h.b16 %v298
  %v455 = vunpack.c.l.b16 %v299
  %v456 = vunpack.c.h.b16 %v299
  %v457 = vunpack.c.l.b16 %v300
  %v458 = vunpack.c.h.b16 %v300
  %v459 = vunpack.c.l.b16 %v301
  %v460 = vunpack.c.h.b16 %v301
  %v461 = vunpack.c.l.b16 %v302
  %v462 = vunpack.c.h.b16 %v302
  %v463 = vpack.c.b16 %v401, %v399
  %v464 = vpack.c.b16 %v402, %v400
  %v465 = vpack.c.b16 %v405, %v403
  %v466 = vpack.c.b16 %v406, %v404
  %v467 = vpack.c.b16 %v409, %v407
  %v468 = vpack.c.b16 %v410, %v408
  %v469 = vpack.c.b16 %v413, %v411
  %v470 = vpack.c.b16 %v414, %v412
  %v471 = vpack.c.b16 %v417, %v415
  %v472 = vpack.c.b16 %v418, %v416
  %v473 = vpack.c.b16 %v421, %v419
  %v474 = vpack.c.b16 %v422, %v420
  %v475 = vpack.c.b16 %v425, %v423
  %v476 = vpack.c.b16 %v426, %v424
  %v477 = vpack.c.b16 %v429, %v427
  %v478 = vpack.c.b16 %v430, %v428
  %v479 = vpack.c.b16 %v433, %v431
  %v480 = vpack.c.b16 %v434, %v432
  %v481 = vpack.c.b16 %v437, %v435
  %v482 = vpack.c.b16 %v438, %v436
  %v483 = vpack.c.b16 %v441, %v439
  %v484 = vpack.c.b16 %v442, %v440
  %v485 = vpack.c.b16 %v445, %v443
  %v486 = vpack.c.b16 %v446, %v444
  %v487 = vpack.c.b16 %v449, %v447
  %v488 = vpack.c.b16 %v450, %v448
  %v489 = vpack.c.b16 %v453, %v451
  %v490 = vpack.c.b16 %v454, %v452
  %v491 = vpack.c.b16 %v457, %v455
  %v492 = vpack.c.b16 %v458, %v456
  %v493 = vpack.c.b16 %v461, %v459
  %v494 = vpack.c.b16 %v462, %v460
  %v591 = vunpack.c.l.b16 %v303
  %v592 = vunpack.c.h.b16 %v303
  %v593 = vunpack.c.l.b16 %v304
  %v594 = vunpack.c.h.b16 %v304
  %v595 = vunpack.c.l.b16 %v305
  %v596 = vunpack.c.h.b16 %v305
  %v597 = vunpack.c.l.b16 %v306
  %v598 = vunpack.c.h.b16 %v306
  %v599 = vunpack.c.l.b16 %v307
  %v600 = vunpack.c.h.b16 %v307
  %v601 = vunpack.c.l.b16 %v308
  %v602 = vunpack.c.h.b16 %v308
  %v603 = vunpack.c.l.b16 %v309
  %v604 = vunpack.c.h.b16 %v309
  %v605 = vunpack.c.l.b16 %v310
  %v606 = vunpack.c.h.b16 %v310
  %v607 = vunpack.c.l.b16 %v311
  %v608 = vunpack.c.h.b16 %v311
  %v609 = vunpack.c.l.b16 %v312
  %v610 = vunpack.c.h.b16 %v312
  %v611 = vunpack.c.l.b16 %v313
  %v612 = vunpack.c.h.b16 %v313
  %v613 = vunpack.c.l.b16 %v314
  %v614 = vunpack.c.h.b16 %v314
  %v615 = vunpack.c.l.b16 %v315
  %v616 = vunpack.c.h.b16 %v315
  %v617 = vunpack.c.l.b16 %v316
  %v618 = vunpack.c.h.b16 %v316
  %v619 = vunpack.c.l.b16 %v317
  %v620 = vunpack.c.h.b16 %v317
  %v621 = vunpack.c.l.b16 %v318
  %v622 = vunpack.c.h.b16 %v318
  %v623 = vunpack.c.l.b16 %v319
  %v624 = vunpack.c.h.b16 %v319
  %v625 = vunpack.c.l.b16 %v320
  %v626 = vunpack.c.h.b16 %v320
  %v627 = vunpack.c.l.b16 %v321
  %v628 = vunpack.c.h.b16 %v321
  %v629 = vunpack.c.l.b16 %v322
  %v630 = vunpack.c.h.b16 %v322
  %v631 = vunpack.c.l.b16 %v323
  %v632 = vunpack.c.h.b16 %v323
  %v633 = vunpack.c.l.b16 %v324
  %v634 = vunpack.c.h.b16 %v324
  %v635 = vunpack.c.l.b16 %v325
  %v636 = vunpack.c.h.b16 %v325
  %v637 = vunpack.c.l.b16 %v326
  %v638 = vunpack.c.h.b16 %v326
  %v639 = vunpack.c.l.b16 %v327
  %v640 = vunpack.c.h.b16 %v327
  %v641 = vunpack.c.l.b16 %v328
  %v642 = vunpack.c.h.b16 %v328
  %v643 = vunpack.c.l.b16 %v329
  %v644 = vunpack.c.h.b16 %v329
  %v645 = vunpack.c.l.b16 %v330
  %v646 = vunpack.c.h.b16 %v330
  %v647 = vunpack.c.l.b16 %v331
  %v648 = vunpack.c.h.b16 %v331
  %v649 = vunpack.c.l.b16 %v332
  %v650 = vunpack.c.h.b16 %v332
  %v651 = vunpack.c.l.b16 %v333
  %v652 = vunpack.c.h.b16 %v333
  %v653 = vunpack.c.l.b16 %v334
  %v654 = vunpack.c.h.b16 %v334
  %v655 = vunpack.c.l.b16 %v335
  %v656 = vunpack.c.h.b16 %v335
  %v657 = vunpack.c.l.b16 %v336
  %v658 = vunpack.c.h.b16 %v336
  %v659 = vunpack.c.l.b16 %v337
  %v660 = vunpack.c.h.b16 %v337
  %v661 = vunpack.c.l.b16 %v338
  %v662 = vunpack.c.h.b16 %v338
  %v663 = vunpack.c.l.b16 %v339
  %v664 = vunpack.c.h.b16 %v339
  %v665 = vunpack.c.l.b16 %v340
  %v666 = vunpack.c.h.b16 %v340
  %v667 = vunpack.c.l.b16 %v341
  %v668 = vunpack.c.h.b16 %v341
  %v669 = vunpack.c.l.b16 %v342
  %v670 = vunpack.c.h.b16 %v342
  %v671 = vunpack.c.l.b16 %v343
  %v672 = vunpack.c.h.b16 %v343
  %v673 = vunpack.c.l.b16 %v344
  %v674 = vunpack.c.h.b16 %v344
  %v675 = vunpack.c.l.b16 %v345
  %v676 = vunpack.c.h.b16 %v345
  %v677 = vunpack.c.l.b16 %v346
  %v678 = vunpack.c.h.b16 %v346
  %v679 = vunpack.c.l.b16 %v347
  %v680 = vunpack.c.h.b16 %v347
  %v681 = vunpack.c.l.b16 %v348
  %v682 = vunpack.c.h.b16 %v348
  %v683 = vunpack.c.l.b16 %v349
  %v684 = vunpack.c.h.b16 %v349
  %v685 = vunpack.c.l.b16 %v350
  %v686 = vunpack.c.h.b16 %v350
  %v687 = vunpack.c.l.b16 %v351
  %v688 = vunpack.c.h.b16 %v351
  %v689 = vunpack.c.l.b16 %v352
  %v690 = vunpack.c.h.b16 %v352
  %v691 = vunpack.c.l.b16 %v353
  %v692 = vunpack.c.h.b16 %v353
  %v693 = vunpack.c.l.b16 %v354
  %v694 = vunpack.c.h.b16 %v354
  %v695 = vunpack.c.l.b16 %v355
  %v696 = vunpack.c.h.b16 %v355
  %v697 = vunpack.c.l.b16 %v356
  %v698 = vunpack.c.h.b16 %v356
  %v699 = vunpack.c.l.b16 %v357
  %v700 = vunpack.c.h.b16 %v357
  %v701 = vunpack.c.l.b16 %v358
  %v702 = vunpack.c.h.b16 %v358
  %v703 = vunpack.c.l.b16 %v359
  %v704 = vunpack.c.h.b16 %v359
  %v705 = vunpack.c.l.b16 %v360
  %v706 = vunpack.c.h.b16 %v360
  %v707 = vunpack.c.l.b16 %v361
  %v708 = vunpack.c.h.b16 %v361
  %v709 = vunpack.c.l.b16 %v362
  %v710 = vunpack.c.h.b16 %v362
  %v711 = vunpack.c.l.b16 %v363
  %v712 = vunpack.c.h.b16 %v363
  %v713 = vunpack.c.l.b16 %v364
  %v714 = vunpack.c.h.b16 %v364
  %v715 = vunpack.c.l.b16 %v365
  %v716 = vunpack.c.h.b16 %v365
  %v717 = vunpack.c.l.b16 %v366
  %v718 = vunpack.c.h.b16 %v366
  %v719 = vpack.c.b16 %v595, %v591
  %v720 = vpack.c.b16 %v596, %v592
  %v721 = vpack.c.b16 %v597, %v593
  %v722 = vpack.c.b16 %v598, %v594
  %v723 = vpack.c.b16 %v603, %v599
  %v724 = vpack.c.b16 %v604, %v600
  %v725 = vpack.c.b16 %v605, %v601
  %v726 = vpack.c.b16 %v606, %v602
  %v727 = vpack.c.b16 %v611, %v607
  %v728 = vpack.c.b16 %v612, %v608
  %v729 = vpack.c.b16 %v613, %v609
  %v730 = vpack.c.b16 %v614, %v610
  %v731 = vpack.c.b16 %v619, %v615
  %v732 = vpack.c.b16 %v620, %v616
  %v733 = vpack.c.b16 %v621, %v617
  %v734 = vpack.c.b16 %v622, %v618
  %v735 = vpack.c.b16 %v627, %v623
  %v736 = vpack.c.b16 %v628, %v624
  %v737 = vpack.c.b16 %v629, %v625
  %v738 = vpack.c.b16 %v630, %v626
  %v739 = vpack.c.b16 %v635, %v631
  %v740 = vpack.c.b16 %v636, %v632
  %v741 = vpack.c.b16 %v637, %v633
  %v742 = vpack.c.b16 %v638, %v634
  %v743 = vpack.c.b16 %v643, %v639
  %v744 = vpack.c.b16 %v644, %v640
  %v745 = vpack.c.b16 %v645, %v641
  %v746 = vpack.c.b16 %v646, %v642
  %v747 = vpack.c.b16 %v651, %v647
  %v748 = vpack.c.b16 %v652, %v648
  %v749 = vpack.c.b16 %v653, %v649
  %v750 = vpack.c.b16 %v654, %v650
  %v751 = vpack.c.b16 %v659, %v655
  %v752 = vpack.c.b16 %v660, %v656
  %v753 = vpack.c.b16 %v661, %v657
  %v754 = vpack.c.b16 %v662, %v658
  %v755 = vpack.c.b16 %v667, %v663
  %v756 = vpack.c.b16 %v668, %v664
  %v757 = vpack.c.b16 %v669, %v665
  %v758 = vpack.c.b16 %v670, %v666
  %v759 = vpack.c.b16 %v675, %v671
  %v760 = vpack.c.b16 %v676, %v672
  %v761 = vpack.c.b16 %v677, %v673
  %v762 = vpack.c.b16 %v678, %v674
  %v763 = vpack.c.b16 %v683, %v679
  %v764 = vpack.c.b16 %v684, %v680
  %v765 = vpack.c.b16 %v685, %v681
  %v766 = vpack.c.b16 %v686, %v682
  %v767 = vpack.c.b16 %v691, %v687
  %v768 = vpack.c.b16 %v692, %v688
  %v769 = vpack.c.b16 %v693, %v689
  %v770 = vpack.c.b16 %v694, %v690
  %v771 = vpack.c.b16 %v699, %v695
  %v772 = vpack.c.b16 %v700, %v696
  %v773 = vpack.c.b16 %v701, %v697
  %v774 = vpack.c.b16 %v702, %v698
  %v775 = vpack.c.b16 %v707, %v703
  %v776 = vpack.c.b16 %v708, %v704
  %v777 = vpack.c.b16 %v709, %v705
  %v778 = vpack.c.b16 %v710, %v706
  %v779 = vpack.c.b16 %v715, %v711
  %v780 = vpack.c.b16 %v716, %v712
  %v781 = vpack.c.b16 %v717, %v713
  %v782 = vpack.c.b16 %v718, %v714
  %847 = vmatprep.subr.bf16.mxu0 %v720
  %848 = vmatpush1.bf16.msra.mxu0 %v719
  %849 = vmatprep.subr.bf16.mxu0 %v724
  %850 = vmatpush1.bf16.msra.mxu0 %v723
  %851 = vmatprep.subr.bf16.mxu0 %v728
  %852 = vmatpush1.bf16.msra.mxu0 %v727
  %853 = vmatprep.subr.bf16.mxu0 %v732
  %854 = vmatpush1.bf16.msra.mxu0 %v731
  %855 = vmatprep.subr.bf16.mxu0 %v736
  %856 = vmatpush1.bf16.msra.mxu0 %v735
  %857 = vmatprep.subr.bf16.mxu0 %v740
  %858 = vmatpush1.bf16.msra.mxu0 %v739
  %859 = vmatprep.subr.bf16.mxu0 %v744
  %860 = vmatpush1.bf16.msra.mxu0 %v743
  %861 = vmatprep.subr.bf16.mxu0 %v748
  %862 = vmatpush1.bf16.msra.mxu0 %v747
  %863 = vmatprep.subr.bf16.mxu0 %v752
  %864 = vmatpush1.bf16.msra.mxu0 %v751
  %865 = vmatprep.subr.bf16.mxu0 %v756
  %866 = vmatpush1.bf16.msra.mxu0 %v755
  %867 = vmatprep.subr.bf16.mxu0 %v760
  %868 = vmatpush1.bf16.msra.mxu0 %v759
  %869 = vmatprep.subr.bf16.mxu0 %v764
  %870 = vmatpush1.bf16.msra.mxu0 %v763
  %871 = vmatprep.subr.bf16.mxu0 %v768
  %872 = vmatpush1.bf16.msra.mxu0 %v767
  %873 = vmatprep.subr.bf16.mxu0 %v772
  %874 = vmatpush1.bf16.msra.mxu0 %v771
  %875 = vmatprep.subr.bf16.mxu0 %v776
  %876 = vmatpush1.bf16.msra.mxu0 %v775
  %877 = vmatprep.subr.bf16.mxu0 %v780
  %878 = vmatpush1.bf16.msra.mxu0 %v779
  %879 = vmatprep.mubr.bf16.mxu0 %v464
  %880 = vmatmul.mubr.bf16.gmra.mrb[0].mxu0 %v463
  %v881 = vpop.f32.mrb[0].mxu0
  %v882 = vadd.f32 0.0, %v881
  %v883 = vpop.f32.mrb[0].mxu0
  %v884 = vadd.f32 0.0, %v883
  %v885 = vpop.f32.mrb[0].mxu0
  %v886 = vadd.f32 0.0, %v885
  %v887 = vpop.f32.mrb[0].mxu0
  %v888 = vadd.f32 0.0, %v887
  %889 = vmatprep.mubr.bf16.mxu0 %v466
  %890 = vmatmul.mubr.bf16.gmra.mrb[0].mxu0 %v465
  %v891 = vpop.f32.mrb[0].mxu0
  %v892 = vadd.f32 0.0, %v891
  %v893 = vpop.f32.mrb[0].mxu0
  %v894 = vadd.f32 0.0, %v893
  %v895 = vpop.f32.mrb[0].mxu0
  %v896 = vadd.f32 0.0, %v895
  %v897 = vpop.f32.mrb[0].mxu0
  %v898 = vadd.f32 0.0, %v897
  %899 = vmatprep.mubr.bf16.mxu0 %v468
  %900 = vmatmul.mubr.bf16.gmra.mrb[0].mxu0 %v467
  %v901 = vpop.f32.mrb[0].mxu0
  %v902 = vadd.f32 0.0, %v901
  %v903 = vpop.f32.mrb[0].mxu0
  %v904 = vadd.f32 0.0, %v903
  %v905 = vpop.f32.mrb[0].mxu0
  %v906 = vadd.f32 0.0, %v905
  %v907 = vpop.f32.mrb[0].mxu0
  %v908 = vadd.f32 0.0, %v907
  %909 = vmatprep.mubr.bf16.mxu0 %v470
  %910 = vmatmul.mubr.bf16.gmra.mrb[0].mxu0 %v469
  %v911 = vpop.f32.mrb[0].mxu0
  %v912 = vadd.f32 0.0, %v911
  %v913 = vpop.f32.mrb[0].mxu0
  %v914 = vadd.f32 0.0, %v913
  %v915 = vpop.f32.mrb[0].mxu0
  %v916 = vadd.f32 0.0, %v915
  %v917 = vpop.f32.mrb[0].mxu0
  %v918 = vadd.f32 0.0, %v917
  %919 = vmatprep.mubr.bf16.mxu0 %v472
  %920 = vmatmul.mubr.bf16.gmra.mrb[0].mxu0 %v471
  %v921 = vpop.f32.mrb[0].mxu0
  %v922 = vadd.f32 0.0, %v921
  %v923 = vpop.f32.mrb[0].mxu0
  %v924 = vadd.f32 0.0, %v923
  %v925 = vpop.f32.mrb[0].mxu0
  %v926 = vadd.f32 0.0, %v925
  %v927 = vpop.f32.mrb[0].mxu0
  %v928 = vadd.f32 0.0, %v927
  %929 = vmatprep.mubr.bf16.mxu0 %v474
  %930 = vmatmul.mubr.bf16.gmra.mrb[0].mxu0 %v473
  %v931 = vpop.f32.mrb[0].mxu0
  %v932 = vadd.f32 0.0, %v931
  %v933 = vpop.f32.mrb[0].mxu0
  %v934 = vadd.f32 0.0, %v933
  %v935 = vpop.f32.mrb[0].mxu0
  %v936 = vadd.f32 0.0, %v935
  %v937 = vpop.f32.mrb[0].mxu0
  %v938 = vadd.f32 0.0, %v937
  %939 = vmatprep.mubr.bf16.mxu0 %v476
  %940 = vmatmul.mubr.bf16.gmra.mrb[0].mxu0 %v475
  %v941 = vpop.f32.mrb[0].mxu0
  %v942 = vadd.f32 0.0, %v941
  %v943 = vpop.f32.mrb[0].mxu0
  %v944 = vadd.f32 0.0, %v943
  %v945 = vpop.f32.mrb[0].mxu0
  %v946 = vadd.f32 0.0, %v945
  %v947 = vpop.f32.mrb[0].mxu0
  %v948 = vadd.f32 0.0, %v947
  %949 = vmatprep.mubr.bf16.mxu0 %v478
  %950 = vmatmul.mubr.bf16.gmra.mrb[0].mxu0 %v477
  %v951 = vpop.f32.mrb[0].mxu0
  %v952 = vadd.f32 0.0, %v951
  %v953 = vpop.f32.mrb[0].mxu0
  %v954 = vadd.f32 0.0, %v953
  %v955 = vpop.f32.mrb[0].mxu0
  %v956 = vadd.f32 0.0, %v955
  %v957 = vpop.f32.mrb[0].mxu0
  %v958 = vadd.f32 0.0, %v957
  %959 = vmatprep.mubr.bf16.mxu0 %v480
  %960 = vmatmul.mubr.bf16.gmra.mrb[0].mxu0 %v479
  %v961 = vpop.f32.mrb[0].mxu0
  %v962 = vadd.f32 0.0, %v961
  %v963 = vpop.f32.mrb[0].mxu0
  %v964 = vadd.f32 0.0, %v963
  %v965 = vpop.f32.mrb[0].mxu0
  %v966 = vadd.f32 0.0, %v965
  %v967 = vpop.f32.mrb[0].mxu0
  %v968 = vadd.f32 0.0, %v967
  %969 = vmatprep.mubr.bf16.mxu0 %v482
  %970 = vmatmul.mubr.bf16.gmra.mrb[0].mxu0 %v481
  %v971 = vpop.f32.mrb[0].mxu0
  %v972 = vadd.f32 0.0, %v971
  %v973 = vpop.f32.mrb[0].mxu0
  %v974 = vadd.f32 0.0, %v973
  %v975 = vpop.f32.mrb[0].mxu0
  %v976 = vadd.f32 0.0, %v975
  %v977 = vpop.f32.mrb[0].mxu0
  %v978 = vadd.f32 0.0, %v977
  %979 = vmatprep.mubr.bf16.mxu0 %v484
  %980 = vmatmul.mubr.bf16.gmra.mrb[0].mxu0 %v483
  %v981 = vpop.f32.mrb[0].mxu0
  %v982 = vadd.f32 0.0, %v981
  %v983 = vpop.f32.mrb[0].mxu0
  %v984 = vadd.f32 0.0, %v983
  %v985 = vpop.f32.mrb[0].mxu0
  %v986 = vadd.f32 0.0, %v985
  %v987 = vpop.f32.mrb[0].mxu0
  %v988 = vadd.f32 0.0, %v987
  %989 = vmatprep.mubr.bf16.mxu0 %v486
  %990 = vmatmul.mubr.bf16.gmra.mrb[0].mxu0 %v485
  %v991 = vpop.f32.mrb[0].mxu0
  %v992 = vadd.f32 0.0, %v991
  %v993 = vpop.f32.mrb[0].mxu0
  %v994 = vadd.f32 0.0, %v993
  %v995 = vpop.f32.mrb[0].mxu0
  %v996 = vadd.f32 0.0, %v995
  %v997 = vpop.f32.mrb[0].mxu0
  %v998 = vadd.f32 0.0, %v997
  %999 = vmatprep.mubr.bf16.mxu0 %v488
  %1000 = vmatmul.mubr.bf16.gmra.mrb[0].mxu0 %v487
  %v1001 = vpop.f32.mrb[0].mxu0
  %v1002 = vadd.f32 0.0, %v1001
  %v1003 = vpop.f32.mrb[0].mxu0
  %v1004 = vadd.f32 0.0, %v1003
  %v1005 = vpop.f32.mrb[0].mxu0
  %v1006 = vadd.f32 0.0, %v1005
  %v1007 = vpop.f32.mrb[0].mxu0
  %v1008 = vadd.f32 0.0, %v1007
  %1009 = vmatprep.mubr.bf16.mxu0 %v490
  %1010 = vmatmul.mubr.bf16.gmra.mrb[0].mxu0 %v489
  %v1011 = vpop.f32.mrb[0].mxu0
  %v1012 = vadd.f32 0.0, %v1011
  %v1013 = vpop.f32.mrb[0].mxu0
  %v1014 = vadd.f32 0.0, %v1013
  %v1015 = vpop.f32.mrb[0].mxu0
  %v1016 = vadd.f32 0.0, %v1015
  %v1017 = vpop.f32.mrb[0].mxu0
  %v1018 = vadd.f32 0.0, %v1017
  %1019 = vmatprep.mubr.bf16.mxu0 %v492
  %1020 = vmatmul.mubr.bf16.gmra.mrb[0].mxu0 %v491
  %v1021 = vpop.f32.mrb[0].mxu0
  %v1022 = vadd.f32 0.0, %v1021
  %v1023 = vpop.f32.mrb[0].mxu0
  %v1024 = vadd.f32 0.0, %v1023
  %v1025 = vpop.f32.mrb[0].mxu0
  %v1026 = vadd.f32 0.0, %v1025
  %v1027 = vpop.f32.mrb[0].mxu0
  %v1028 = vadd.f32 0.0, %v1027
  %1029 = vmatprep.mubr.bf16.mxu0 %v494
  %1030 = vmatmul.mubr.bf16.gmra.mrb[0].mxu0 %v493
  %v1031 = vpop.f32.mrb[0].mxu0
  %v1032 = vadd.f32 0.0, %v1031
  %v1033 = vpop.f32.mrb[0].mxu0
  %v1034 = vadd.f32 0.0, %v1033
  %v1035 = vpop.f32.mrb[0].mxu0
  %v1036 = vadd.f32 0.0, %v1035
  %v1037 = vpop.f32.mrb[0].mxu0
  %v1038 = vadd.f32 0.0, %v1037
  %1039 = vdwg.mxu0
  %1040 = vmatprep.subr.bf16.mxu0 %v722
  %1041 = vmatpush1.bf16.msra.mxu0 %v721
  %1042 = vmatprep.subr.bf16.mxu0 %v726
  %1043 = vmatpush1.bf16.msra.mxu0 %v725
  %1044 = vmatprep.subr.bf16.mxu0 %v730
  %1045 = vmatpush1.bf16.msra.mxu0 %v729
  %1046 = vmatprep.subr.bf16.mxu0 %v734
  %1047 = vmatpush1.bf16.msra.mxu0 %v733
  %1048 = vmatprep.subr.bf16.mxu0 %v738
  %1049 = vmatpush1.bf16.msra.mxu0 %v737
  %1050 = vmatprep.subr.bf16.mxu0 %v742
  %1051 = vmatpush1.bf16.msra.mxu0 %v741
  %1052 = vmatprep.subr.bf16.mxu0 %v746
  %1053 = vmatpush1.bf16.msra.mxu0 %v745
  %1054 = vmatprep.subr.bf16.mxu0 %v750
  %1055 = vmatpush1.bf16.msra.mxu0 %v749
  %1056 = vmatprep.subr.bf16.mxu0 %v754
  %1057 = vmatpush1.bf16.msra.mxu0 %v753
  %1058 = vmatprep.subr.bf16.mxu0 %v758
  %1059 = vmatpush1.bf16.msra.mxu0 %v757
  %1060 = vmatprep.subr.bf16.mxu0 %v762
  %1061 = vmatpush1.bf16.msra.mxu0 %v761
  %1062 = vmatprep.subr.bf16.mxu0 %v766
  %1063 = vmatpush1.bf16.msra.mxu0 %v765
  %1064 = vmatprep.subr.bf16.mxu0 %v770
  %1065 = vmatpush1.bf16.msra.mxu0 %v769
  %1066 = vmatprep.subr.bf16.mxu0 %v774
  %1067 = vmatpush1.bf16.msra.mxu0 %v773
  %1068 = vmatprep.subr.bf16.mxu0 %v778
  %1069 = vmatpush1.bf16.msra.mxu0 %v777
  %1070 = vmatprep.subr.bf16.mxu0 %v782
  %1071 = vmatpush1.bf16.msra.mxu0 %v781
  %1072 = vmatprep.mubr.bf16.mxu0 %v464
  %1073 = vmatmul.mubr.bf16.gmra.mrb[0].mxu0 %v463
  %v1074 = vpop.f32.mrb[0].mxu0
  %v1075 = vadd.f32 0.0, %v1074
  %v1076 = vpop.f32.mrb[0].mxu0
  %v1077 = vadd.f32 0.0, %v1076
  %v1078 = vpop.f32.mrb[0].mxu0
  %v1079 = vadd.f32 0.0, %v1078
  %v1080 = vpop.f32.mrb[0].mxu0
  %v1081 = vadd.f32 0.0, %v1080
  %1082 = vmatprep.mubr.bf16.mxu0 %v466
  %1083 = vmatmul.mubr.bf16.gmra.mrb[0].mxu0 %v465
  %v1084 = vpop.f32.mrb[0].mxu0
  %v1085 = vadd.f32 0.0, %v1084
  %v1086 = vpop.f32.mrb[0].mxu0
  %v1087 = vadd.f32 0.0, %v1086
  %v1088 = vpop.f32.mrb[0].mxu0
  %v1089 = vadd.f32 0.0, %v1088
  %v1090 = vpop.f32.mrb[0].mxu0
  %v1091 = vadd.f32 0.0, %v1090
  %1092 = vmatprep.mubr.bf16.mxu0 %v468
  %1093 = vmatmul.mubr.bf16.gmra.mrb[0].mxu0 %v467
  %v1094 = vpop.f32.mrb[0].mxu0
  %v1095 = vadd.f32 0.0, %v1094
  %v1096 = vpop.f32.mrb[0].mxu0
  %v1097 = vadd.f32 0.0, %v1096
  %v1098 = vpop.f32.mrb[0].mxu0
  %v1099 = vadd.f32 0.0, %v1098
  %v1100 = vpop.f32.mrb[0].mxu0
  %v1101 = vadd.f32 0.0, %v1100
  %1102 = vmatprep.mubr.bf16.mxu0 %v470
  %1103 = vmatmul.mubr.bf16.gmra.mrb[0].mxu0 %v469
  %v1104 = vpop.f32.mrb[0].mxu0
  %v1105 = vadd.f32 0.0, %v1104
  %v1106 = vpop.f32.mrb[0].mxu0
  %v1107 = vadd.f32 0.0, %v1106
  %v1108 = vpop.f32.mrb[0].mxu0
  %v1109 = vadd.f32 0.0, %v1108
  %v1110 = vpop.f32.mrb[0].mxu0
  %v1111 = vadd.f32 0.0, %v1110
  %1112 = vmatprep.mubr.bf16.mxu0 %v472
  %1113 = vmatmul.mubr.bf16.gmra.mrb[0].mxu0 %v471
  %v1114 = vpop.f32.mrb[0].mxu0
  %v1115 = vadd.f32 0.0, %v1114
  %v1116 = vpop.f32.mrb[0].mxu0
  %v1117 = vadd.f32 0.0, %v1116
  %v1118 = vpop.f32.mrb[0].mxu0
  %v1119 = vadd.f32 0.0, %v1118
  %v1120 = vpop.f32.mrb[0].mxu0
  %v1121 = vadd.f32 0.0, %v1120
  %1122 = vmatprep.mubr.bf16.mxu0 %v474
  %1123 = vmatmul.mubr.bf16.gmra.mrb[0].mxu0 %v473
  %v1124 = vpop.f32.mrb[0].mxu0
  %v1125 = vadd.f32 0.0, %v1124
  %v1126 = vpop.f32.mrb[0].mxu0
  %v1127 = vadd.f32 0.0, %v1126
  %v1128 = vpop.f32.mrb[0].mxu0
  %v1129 = vadd.f32 0.0, %v1128
  %v1130 = vpop.f32.mrb[0].mxu0
  %v1131 = vadd.f32 0.0, %v1130
  %1132 = vmatprep.mubr.bf16.mxu0 %v476
  %1133 = vmatmul.mubr.bf16.gmra.mrb[0].mxu0 %v475
  %v1134 = vpop.f32.mrb[0].mxu0
  %v1135 = vadd.f32 0.0, %v1134
  %v1136 = vpop.f32.mrb[0].mxu0
  %v1137 = vadd.f32 0.0, %v1136
  %v1138 = vpop.f32.mrb[0].mxu0
  %v1139 = vadd.f32 0.0, %v1138
  %v1140 = vpop.f32.mrb[0].mxu0
  %v1141 = vadd.f32 0.0, %v1140
  %1142 = vmatprep.mubr.bf16.mxu0 %v478
  %1143 = vmatmul.mubr.bf16.gmra.mrb[0].mxu0 %v477
  %v1144 = vpop.f32.mrb[0].mxu0
  %v1145 = vadd.f32 0.0, %v1144
  %v1146 = vpop.f32.mrb[0].mxu0
  %v1147 = vadd.f32 0.0, %v1146
  %v1148 = vpop.f32.mrb[0].mxu0
  %v1149 = vadd.f32 0.0, %v1148
  %v1150 = vpop.f32.mrb[0].mxu0
  %v1151 = vadd.f32 0.0, %v1150
  %1152 = vmatprep.mubr.bf16.mxu0 %v480
  %1153 = vmatmul.mubr.bf16.gmra.mrb[0].mxu0 %v479
  %v1154 = vpop.f32.mrb[0].mxu0
  %v1155 = vadd.f32 0.0, %v1154
  %v1156 = vpop.f32.mrb[0].mxu0
  %v1157 = vadd.f32 0.0, %v1156
  %v1158 = vpop.f32.mrb[0].mxu0
  %v1159 = vadd.f32 0.0, %v1158
  %v1160 = vpop.f32.mrb[0].mxu0
  %v1161 = vadd.f32 0.0, %v1160
  %1162 = vmatprep.mubr.bf16.mxu0 %v482
  %1163 = vmatmul.mubr.bf16.gmra.mrb[0].mxu0 %v481
  %v1164 = vpop.f32.mrb[0].mxu0
  %v1165 = vadd.f32 0.0, %v1164
  %v1166 = vpop.f32.mrb[0].mxu0
  %v1167 = vadd.f32 0.0, %v1166
  %v1168 = vpop.f32.mrb[0].mxu0
  %v1169 = vadd.f32 0.0, %v1168
  %v1170 = vpop.f32.mrb[0].mxu0
  %v1171 = vadd.f32 0.0, %v1170
  %1172 = vmatprep.mubr.bf16.mxu0 %v484
  %1173 = vmatmul.mubr.bf16.gmra.mrb[0].mxu0 %v483
  %v1174 = vpop.f32.mrb[0].mxu0
  %v1175 = vadd.f32 0.0, %v1174
  %v1176 = vpop.f32.mrb[0].mxu0
  %v1177 = vadd.f32 0.0, %v1176
  %v1178 = vpop.f32.mrb[0].mxu0
  %v1179 = vadd.f32 0.0, %v1178
  %v1180 = vpop.f32.mrb[0].mxu0
  %v1181 = vadd.f32 0.0, %v1180
  %1182 = vmatprep.mubr.bf16.mxu0 %v486
  %1183 = vmatmul.mubr.bf16.gmra.mrb[0].mxu0 %v485
  %v1184 = vpop.f32.mrb[0].mxu0
  %v1185 = vadd.f32 0.0, %v1184
  %v1186 = vpop.f32.mrb[0].mxu0
  %v1187 = vadd.f32 0.0, %v1186
  %v1188 = vpop.f32.mrb[0].mxu0
  %v1189 = vadd.f32 0.0, %v1188
  %v1190 = vpop.f32.mrb[0].mxu0
  %v1191 = vadd.f32 0.0, %v1190
  %1192 = vmatprep.mubr.bf16.mxu0 %v488
  %1193 = vmatmul.mubr.bf16.gmra.mrb[0].mxu0 %v487
  %v1194 = vpop.f32.mrb[0].mxu0
  %v1195 = vadd.f32 0.0, %v1194
  %v1196 = vpop.f32.mrb[0].mxu0
  %v1197 = vadd.f32 0.0, %v1196
  %v1198 = vpop.f32.mrb[0].mxu0
  %v1199 = vadd.f32 0.0, %v1198
  %v1200 = vpop.f32.mrb[0].mxu0
  %v1201 = vadd.f32 0.0, %v1200
  %1202 = vmatprep.mubr.bf16.mxu0 %v490
  %1203 = vmatmul.mubr.bf16.gmra.mrb[0].mxu0 %v489
  %v1204 = vpop.f32.mrb[0].mxu0
  %v1205 = vadd.f32 0.0, %v1204
  %v1206 = vpop.f32.mrb[0].mxu0
  %v1207 = vadd.f32 0.0, %v1206
  %v1208 = vpop.f32.mrb[0].mxu0
  %v1209 = vadd.f32 0.0, %v1208
  %v1210 = vpop.f32.mrb[0].mxu0
  %v1211 = vadd.f32 0.0, %v1210
  %1212 = vmatprep.mubr.bf16.mxu0 %v492
  %1213 = vmatmul.mubr.bf16.gmra.mrb[0].mxu0 %v491
  %v1214 = vpop.f32.mrb[0].mxu0
  %v1215 = vadd.f32 0.0, %v1214
  %v1216 = vpop.f32.mrb[0].mxu0
  %v1217 = vadd.f32 0.0, %v1216
  %v1218 = vpop.f32.mrb[0].mxu0
  %v1219 = vadd.f32 0.0, %v1218
  %v1220 = vpop.f32.mrb[0].mxu0
  %v1221 = vadd.f32 0.0, %v1220
  %1222 = vmatprep.mubr.bf16.mxu0 %v494
  %1223 = vmatmul.mubr.bf16.gmra.mrb[0].mxu0 %v493
  %v1224 = vpop.f32.mrb[0].mxu0
  %v1225 = vadd.f32 0.0, %v1224
  %v1226 = vpop.f32.mrb[0].mxu0
  %v1227 = vadd.f32 0.0, %v1226
  %v1228 = vpop.f32.mrb[0].mxu0
  %v1229 = vadd.f32 0.0, %v1228
  %v1230 = vpop.f32.mrb[0].mxu0
  %v1231 = vadd.f32 0.0, %v1230
  %1232 = vdwg.mxu0
  %v1233 = vadd.f32 %v143, %v882
  %v1234 = vadd.f32 %v144, %v884
  %v1235 = vadd.f32 %v145, %v1075
  %v1236 = vadd.f32 %v146, %v1077
  %v1237 = vadd.f32 %v147, %v886
  %v1238 = vadd.f32 %v148, %v888
  %v1239 = vadd.f32 %v149, %v1079
  %v1240 = vadd.f32 %v150, %v1081
  %v1241 = vadd.f32 %v151, %v892
  %v1242 = vadd.f32 %v152, %v894
  %v1243 = vadd.f32 %v153, %v1085
  %v1244 = vadd.f32 %v154, %v1087
  %v1245 = vadd.f32 %v155, %v896
  %v1246 = vadd.f32 %v156, %v898
  %v1247 = vadd.f32 %v157, %v1089
  %v1248 = vadd.f32 %v158, %v1091
  %v1249 = vadd.f32 %v159, %v902
  %v1250 = vadd.f32 %v160, %v904
  %v1251 = vadd.f32 %v161, %v1095
  %v1252 = vadd.f32 %v162, %v1097
  %v1253 = vadd.f32 %v163, %v906
  %v1254 = vadd.f32 %v164, %v908
  %v1255 = vadd.f32 %v165, %v1099
  %v1256 = vadd.f32 %v166, %v1101
  %v1257 = vadd.f32 %v167, %v912
  %v1258 = vadd.f32 %v168, %v914
  %v1259 = vadd.f32 %v169, %v1105
  %v1260 = vadd.f32 %v170, %v1107
  %v1261 = vadd.f32 %v171, %v916
  %v1262 = vadd.f32 %v172, %v918
  %v1263 = vadd.f32 %v173, %v1109
  %v1264 = vadd.f32 %v174, %v1111
  %v1265 = vadd.f32 %v175, %v922
  %v1266 = vadd.f32 %v176, %v924
  %v1267 = vadd.f32 %v177, %v1115
  %v1268 = vadd.f32 %v178, %v1117
  %v1269 = vadd.f32 %v179, %v926
  %v1270 = vadd.f32 %v180, %v928
  %v1271 = vadd.f32 %v181, %v1119
  %v1272 = vadd.f32 %v182, %v1121
  %v1273 = vadd.f32 %v183, %v932
  %v1274 = vadd.f32 %v184, %v934
  %v1275 = vadd.f32 %v185, %v1125
  %v1276 = vadd.f32 %v186, %v1127
  %v1277 = vadd.f32 %v187, %v936
  %v1278 = vadd.f32 %v188, %v938
  %v1279 = vadd.f32 %v189, %v1129
  %v1280 = vadd.f32 %v190, %v1131
  %v1281 = vadd.f32 %v191, %v942
  %v1282 = vadd.f32 %v192, %v944
  %v1283 = vadd.f32 %v193, %v1135
  %v1284 = vadd.f32 %v194, %v1137
  %v1285 = vadd.f32 %v195, %v946
  %v1286 = vadd.f32 %v196, %v948
  %v1287 = vadd.f32 %v197, %v1139
  %v1288 = vadd.f32 %v198, %v1141
  %v1289 = vadd.f32 %v199, %v952
  %v1290 = vadd.f32 %v200, %v954
  %v1291 = vadd.f32 %v201, %v1145
  %v1292 = vadd.f32 %v202, %v1147
  %v1293 = vadd.f32 %v203, %v956
  %v1294 = vadd.f32 %v204, %v958
  %v1295 = vadd.f32 %v205, %v1149
  %v1296 = vadd.f32 %v206, %v1151
  %v1297 = vadd.f32 %v207, %v962
  %v1298 = vadd.f32 %v208, %v964
  %v1299 = vadd.f32 %v209, %v1155
  %v1300 = vadd.f32 %v210, %v1157
  %v1301 = vadd.f32 %v211, %v966
  %v1302 = vadd.f32 %v212, %v968
  %v1303 = vadd.f32 %v213, %v1159
  %v1304 = vadd.f32 %v214, %v1161
  %v1305 = vadd.f32 %v215, %v972
  %v1306 = vadd.f32 %v216, %v974
  %v1307 = vadd.f32 %v217, %v1165
  %v1308 = vadd.f32 %v218, %v1167
  %v1309 = vadd.f32 %v219, %v976
  %v1310 = vadd.f32 %v220, %v978
  %v1311 = vadd.f32 %v221, %v1169
  %v1312 = vadd.f32 %v222, %v1171
  %v1313 = vadd.f32 %v223, %v982
  %v1314 = vadd.f32 %v224, %v984
  %v1315 = vadd.f32 %v225, %v1175
  %v1316 = vadd.f32 %v226, %v1177
  %v1317 = vadd.f32 %v227, %v986
  %v1318 = vadd.f32 %v228, %v988
  %v1319 = vadd.f32 %v229, %v1179
  %v1320 = vadd.f32 %v230, %v1181
  %v1321 = vadd.f32 %v231, %v992
  %v1322 = vadd.f32 %v232, %v994
  %v1323 = vadd.f32 %v233, %v1185
  %v1324 = vadd.f32 %v234, %v1187
  %v1325 = vadd.f32 %v235, %v996
  %v1326 = vadd.f32 %v236, %v998
  %v1327 = vadd.f32 %v237, %v1189
  %v1328 = vadd.f32 %v238, %v1191
  %v1329 = vadd.f32 %v239, %v1002
  %v1330 = vadd.f32 %v240, %v1004
  %v1331 = vadd.f32 %v241, %v1195
  %v1332 = vadd.f32 %v242, %v1197
  %v1333 = vadd.f32 %v243, %v1006
  %v1334 = vadd.f32 %v244, %v1008
  %v1335 = vadd.f32 %v245, %v1199
  %v1336 = vadd.f32 %v246, %v1201
  %v1337 = vadd.f32 %v247, %v1012
  %v1338 = vadd.f32 %v248, %v1014
  %v1339 = vadd.f32 %v249, %v1205
  %v1340 = vadd.f32 %v250, %v1207
  %v1341 = vadd.f32 %v251, %v1016
  %v1342 = vadd.f32 %v252, %v1018
  %v1343 = vadd.f32 %v253, %v1209
  %v1344 = vadd.f32 %v254, %v1211
  %v1345 = vadd.f32 %v255, %v1022
  %v1346 = vadd.f32 %v256, %v1024
  %v1347 = vadd.f32 %v257, %v1215
  %v1348 = vadd.f32 %v258, %v1217
  %v1349 = vadd.f32 %v259, %v1026
  %v1350 = vadd.f32 %v260, %v1028
  %v1351 = vadd.f32 %v261, %v1219
  %v1352 = vadd.f32 %v262, %v1221
  %v1353 = vadd.f32 %v263, %v1032
  %v1354 = vadd.f32 %v264, %v1034
  %v1355 = vadd.f32 %v265, %v1225
  %v1356 = vadd.f32 %v266, %v1227
  %v1357 = vadd.f32 %v267, %v1036
  %v1358 = vadd.f32 %v268, %v1038
  %v1359 = vadd.f32 %v269, %v1229
  %v1360 = vadd.f32 %v270, %v1231
  %1361 = vst [vmem:[#allocation2] sm:$0xff] %v1233
  %1362 = vst [vmem:[#allocation2 + $0x8] sm:$0xff] %v1234
  %1363 = vst [vmem:[#allocation2 + $0x10] sm:$0xff] %v1235
  %1364 = vst [vmem:[#allocation2 + $0x18] sm:$0xff] %v1236
  %1365 = vst [vmem:[#allocation2 + $0x20] sm:$0xff] %v1237
  %1366 = vst [vmem:[#allocation2 + $0x28] sm:$0xff] %v1238
  %1367 = vst [vmem:[#allocation2 + $0x30] sm:$0xff] %v1239
  %1368 = vst [vmem:[#allocation2 + $0x38] sm:$0xff] %v1240
  %1369 = vst [vmem:[#allocation2 + $0x40] sm:$0xff] %v1241
  %1370 = vst [vmem:[#allocation2 + $0x48] sm:$0xff] %v1242
  %1371 = vst [vmem:[#allocation2 + $0x50] sm:$0xff] %v1243
  %1372 = vst [vmem:[#allocation2 + $0x58] sm:$0xff] %v1244
  %1373 = vst [vmem:[#allocation2 + $0x60] sm:$0xff] %v1245
  %1374 = vst [vmem:[#allocation2 + $0x68] sm:$0xff] %v1246
  %1375 = vst [vmem:[#allocation2 + $0x70] sm:$0xff] %v1247
  %1376 = vst [vmem:[#allocation2 + $0x78] sm:$0xff] %v1248
  %1377 = vst [vmem:[#allocation2 + $0x80] sm:$0xff] %v1249
  %1378 = vst [vmem:[#allocation2 + $0x88] sm:$0xff] %v1250
  %1379 = vst [vmem:[#allocation2 + $0x90] sm:$0xff] %v1251
  %1380 = vst [vmem:[#allocation2 + $0x98] sm:$0xff] %v1252
  %1381 = vst [vmem:[#allocation2 + $0xa0] sm:$0xff] %v1253
  %1382 = vst [vmem:[#allocation2 + $0xa8] sm:$0xff] %v1254
  %1383 = vst [vmem:[#allocation2 + $0xb0] sm:$0xff] %v1255
  %1384 = vst [vmem:[#allocation2 + $0xb8] sm:$0xff] %v1256
  %1385 = vst [vmem:[#allocation2 + $0xc0] sm:$0xff] %v1257
  %1386 = vst [vmem:[#allocation2 + $0xc8] sm:$0xff] %v1258
  %1387 = vst [vmem:[#allocation2 + $0xd0] sm:$0xff] %v1259
  %1388 = vst [vmem:[#allocation2 + $0xd8] sm:$0xff] %v1260
  %1389 = vst [vmem:[#allocation2 + $0xe0] sm:$0xff] %v1261
  %1390 = vst [vmem:[#allocation2 + $0xe8] sm:$0xff] %v1262
  %1391 = vst [vmem:[#allocation2 + $0xf0] sm:$0xff] %v1263
  %1392 = vst [vmem:[#allocation2 + $0xf8] sm:$0xff] %v1264
  %1393 = vst [vmem:[#allocation2 + $0x100] sm:$0xff] %v1265
  %1394 = vst [vmem:[#allocation2 + $0x108] sm:$0xff] %v1266
  %1395 = vst [vmem:[#allocation2 + $0x110] sm:$0xff] %v1267
  %1396 = vst [vmem:[#allocation2 + $0x118] sm:$0xff] %v1268
  %1397 = vst [vmem:[#allocation2 + $0x120] sm:$0xff] %v1269
  %1398 = vst [vmem:[#allocation2 + $0x128] sm:$0xff] %v1270
  %1399 = vst [vmem:[#allocation2 + $0x130] sm:$0xff] %v1271
  %1400 = vst [vmem:[#allocation2 + $0x138] sm:$0xff] %v1272
  %1401 = vst [vmem:[#allocation2 + $0x140] sm:$0xff] %v1273
  %1402 = vst [vmem:[#allocation2 + $0x148] sm:$0xff] %v1274
  %1403 = vst [vmem:[#allocation2 + $0x150] sm:$0xff] %v1275
  %1404 = vst [vmem:[#allocation2 + $0x158] sm:$0xff] %v1276
  %1405 = vst [vmem:[#allocation2 + $0x160] sm:$0xff] %v1277
  %1406 = vst [vmem:[#allocation2 + $0x168] sm:$0xff] %v1278
  %1407 = vst [vmem:[#allocation2 + $0x170] sm:$0xff] %v1279
  %1408 = vst [vmem:[#allocation2 + $0x178] sm:$0xff] %v1280
  %1409 = vst [vmem:[#allocation2 + $0x180] sm:$0xff] %v1281
  %1410 = vst [vmem:[#allocation2 + $0x188] sm:$0xff] %v1282
  %1411 = vst [vmem:[#allocation2 + $0x190] sm:$0xff] %v1283
  %1412 = vst [vmem:[#allocation2 + $0x198] sm:$0xff] %v1284
  %1413 = vst [vmem:[#allocation2 + $0x1a0] sm:$0xff] %v1285
  %1414 = vst [vmem:[#allocation2 + $0x1a8] sm:$0xff] %v1286
  %1415 = vst [vmem:[#allocation2 + $0x1b0] sm:$0xff] %v1287
  %1416 = vst [vmem:[#allocation2 + $0x1b8] sm:$0xff] %v1288
  %1417 = vst [vmem:[#allocation2 + $0x1c0] sm:$0xff] %v1289
  %1418 = vst [vmem:[#allocation2 + $0x1c8] sm:$0xff] %v1290
  %1419 = vst [vmem:[#allocation2 + $0x1d0] sm:$0xff] %v1291
  %1420 = vst [vmem:[#allocation2 + $0x1d8] sm:$0xff] %v1292
  %1421 = vst [vmem:[#allocation2 + $0x1e0] sm:$0xff] %v1293
  %1422 = vst [vmem:[#allocation2 + $0x1e8] sm:$0xff] %v1294
  %1423 = vst [vmem:[#allocation2 + $0x1f0] sm:$0xff] %v1295
  %1424 = vst [vmem:[#allocation2 + $0x1f8] sm:$0xff] %v1296
  %1425 = vst [vmem:[#allocation2 + $0x200] sm:$0xff] %v1297
  %1426 = vst [vmem:[#allocation2 + $0x208] sm:$0xff] %v1298
  %1427 = vst [vmem:[#allocation2 + $0x210] sm:$0xff] %v1299
  %1428 = vst [vmem:[#allocation2 + $0x218] sm:$0xff] %v1300
  %1429 = vst [vmem:[#allocation2 + $0x220] sm:$0xff] %v1301
  %1430 = vst [vmem:[#allocation2 + $0x228] sm:$0xff] %v1302
  %1431 = vst [vmem:[#allocation2 + $0x230] sm:$0xff] %v1303
  %1432 = vst [vmem:[#allocation2 + $0x238] sm:$0xff] %v1304
  %1433 = vst [vmem:[#allocation2 + $0x240] sm:$0xff] %v1305
  %1434 = vst [vmem:[#allocation2 + $0x248] sm:$0xff] %v1306
  %1435 = vst [vmem:[#allocation2 + $0x250] sm:$0xff] %v1307
  %1436 = vst [vmem:[#allocation2 + $0x258] sm:$0xff] %v1308
  %1437 = vst [vmem:[#allocation2 + $0x260] sm:$0xff] %v1309
  %1438 = vst [vmem:[#allocation2 + $0x268] sm:$0xff] %v1310
  %1439 = vst [vmem:[#allocation2 + $0x270] sm:$0xff] %v1311
  %1440 = vst [vmem:[#allocation2 + $0x278] sm:$0xff] %v1312
  %1441 = vst [vmem:[#allocation2 + $0x280] sm:$0xff] %v1313
  %1442 = vst [vmem:[#allocation2 + $0x288] sm:$0xff] %v1314
  %1443 = vst [vmem:[#allocation2 + $0x290] sm:$0xff] %v1315
  %1444 = vst [vmem:[#allocation2 + $0x298] sm:$0xff] %v1316
  %1445 = vst [vmem:[#allocation2 + $0x2a0] sm:$0xff] %v1317
  %1446 = vst [vmem:[#allocation2 + $0x2a8] sm:$0xff] %v1318
  %1447 = vst [vmem:[#allocation2 + $0x2b0] sm:$0xff] %v1319
  %1448 = vst [vmem:[#allocation2 + $0x2b8] sm:$0xff] %v1320
  %1449 = vst [vmem:[#allocation2 + $0x2c0] sm:$0xff] %v1321
  %1450 = vst [vmem:[#allocation2 + $0x2c8] sm:$0xff] %v1322
  %1451 = vst [vmem:[#allocation2 + $0x2d0] sm:$0xff] %v1323
  %1452 = vst [vmem:[#allocation2 + $0x2d8] sm:$0xff] %v1324
  %1453 = vst [vmem:[#allocation2 + $0x2e0] sm:$0xff] %v1325
  %1454 = vst [vmem:[#allocation2 + $0x2e8] sm:$0xff] %v1326
  %1455 = vst [vmem:[#allocation2 + $0x2f0] sm:$0xff] %v1327
  %1456 = vst [vmem:[#allocation2 + $0x2f8] sm:$0xff] %v1328
  %1457 = vst [vmem:[#allocation2 + $0x300] sm:$0xff] %v1329
  %1458 = vst [vmem:[#allocation2 + $0x308] sm:$0xff] %v1330
  %1459 = vst [vmem:[#allocation2 + $0x310] sm:$0xff] %v1331
  %1460 = vst [vmem:[#allocation2 + $0x318] sm:$0xff] %v1332
  %1461 = vst [vmem:[#allocation2 + $0x320] sm:$0xff] %v1333
  %1462 = vst [vmem:[#allocation2 + $0x328] sm:$0xff] %v1334
  %1463 = vst [vmem:[#allocation2 + $0x330] sm:$0xff] %v1335
  %1464 = vst [vmem:[#allocation2 + $0x338] sm:$0xff] %v1336
  %1465 = vst [vmem:[#allocation2 + $0x340] sm:$0xff] %v1337
  %1466 = vst [vmem:[#allocation2 + $0x348] sm:$0xff] %v1338
  %1467 = vst [vmem:[#allocation2 + $0x350] sm:$0xff] %v1339
  %1468 = vst [vmem:[#allocation2 + $0x358] sm:$0xff] %v1340
  %1469 = vst [vmem:[#allocation2 + $0x360] sm:$0xff] %v1341
  %1470 = vst [vmem:[#allocation2 + $0x368] sm:$0xff] %v1342
  %1471 = vst [vmem:[#allocation2 + $0x370] sm:$0xff] %v1343
  %1472 = vst [vmem:[#allocation2 + $0x378] sm:$0xff] %v1344
  %1473 = vst [vmem:[#allocation2 + $0x380] sm:$0xff] %v1345
  %1474 = vst [vmem:[#allocation2 + $0x388] sm:$0xff] %v1346
  %1475 = vst [vmem:[#allocation2 + $0x390] sm:$0xff] %v1347
  %1476 = vst [vmem:[#allocation2 + $0x398] sm:$0xff] %v1348
  %1477 = vst [vmem:[#allocation2 + $0x3a0] sm:$0xff] %v1349
  %1478 = vst [vmem:[#allocation2 + $0x3a8] sm:$0xff] %v1350
  %1479 = vst [vmem:[#allocation2 + $0x3b0] sm:$0xff] %v1351
  %1480 = vst [vmem:[#allocation2 + $0x3b8] sm:$0xff] %v1352
  %1481 = vst [vmem:[#allocation2 + $0x3c0] sm:$0xff] %v1353
  %1482 = vst [vmem:[#allocation2 + $0x3c8] sm:$0xff] %v1354
  %1483 = vst [vmem:[#allocation2 + $0x3d0] sm:$0xff] %v1355
  %1484 = vst [vmem:[#allocation2 + $0x3d8] sm:$0xff] %v1356
  %1485 = vst [vmem:[#allocation2 + $0x3e0] sm:$0xff] %v1357
  %1486 = vst [vmem:[#allocation2 + $0x3e8] sm:$0xff] %v1358
  %1487 = vst [vmem:[#allocation2 + $0x3f0] sm:$0xff] %v1359
  %1488 = vst [vmem:[#allocation2 + $0x3f8] sm:$0xff] %v1360
  // Predicated region
  $region14: #{gcn_forward.3} parent=0 // pred_check
    %p1489 = pneg %p11
  $region15: #{gcn_forward.3} parent=0 // pred_check_branch
    %1491 = sbr.rel (%p1489) target = $region17
  $region16: #{gcn_forward.3} parent=0 // pred_region
    %v1492 = vld [vmem:[#allocation2] sm:$0xff]
    %v1493 = vld [vmem:[#allocation2 + $0x8] sm:$0xff]
    %v1494 = vld [vmem:[#allocation2 + $0x10] sm:$0xff]
    %v1495 = vld [vmem:[#allocation2 + $0x18] sm:$0xff]
    %v1496 = vld [vmem:[#allocation2 + $0x20] sm:$0xff]
    %v1497 = vld [vmem:[#allocation2 + $0x28] sm:$0xff]
    %v1498 = vld [vmem:[#allocation2 + $0x30] sm:$0xff]
    %v1499 = vld [vmem:[#allocation2 + $0x38] sm:$0xff]
    %v1500 = vld [vmem:[#allocation2 + $0x40] sm:$0xff]
    %v1501 = vld [vmem:[#allocation2 + $0x48] sm:$0xff]
    %v1502 = vld [vmem:[#allocation2 + $0x50] sm:$0xff]
    %v1503 = vld [vmem:[#allocation2 + $0x58] sm:$0xff]
    %v1504 = vld [vmem:[#allocation2 + $0x60] sm:$0xff]
    %v1505 = vld [vmem:[#allocation2 + $0x68] sm:$0xff]
    %v1506 = vld [vmem:[#allocation2 + $0x70] sm:$0xff]
    %v1507 = vld [vmem:[#allocation2 + $0x78] sm:$0xff]
    %v1508 = vld [vmem:[#allocation2 + $0x80] sm:$0xff]
    %v1509 = vld [vmem:[#allocation2 + $0x88] sm:$0xff]
    %v1510 = vld [vmem:[#allocation2 + $0x90] sm:$0xff]
    %v1511 = vld [vmem:[#allocation2 + $0x98] sm:$0xff]
    %v1512 = vld [vmem:[#allocation2 + $0xa0] sm:$0xff]
    %v1513 = vld [vmem:[#allocation2 + $0xa8] sm:$0xff]
    %v1514 = vld [vmem:[#allocation2 + $0xb0] sm:$0xff]
    %v1515 = vld [vmem:[#allocation2 + $0xb8] sm:$0xff]
    %v1516 = vld [vmem:[#allocation2 + $0xc0] sm:$0xff]
    %v1517 = vld [vmem:[#allocation2 + $0xc8] sm:$0xff]
    %v1518 = vld [vmem:[#allocation2 + $0xd0] sm:$0xff]
    %v1519 = vld [vmem:[#allocation2 + $0xd8] sm:$0xff]
    %v1520 = vld [vmem:[#allocation2 + $0xe0] sm:$0xff]
    %v1521 = vld [vmem:[#allocation2 + $0xe8] sm:$0xff]
    %v1522 = vld [vmem:[#allocation2 + $0xf0] sm:$0xff]
    %v1523 = vld [vmem:[#allocation2 + $0xf8] sm:$0xff]
    %v1524 = vld [vmem:[#allocation2 + $0x100] sm:$0xff]
    %v1525 = vld [vmem:[#allocation2 + $0x108] sm:$0xff]
    %v1526 = vld [vmem:[#allocation2 + $0x110] sm:$0xff]
    %v1527 = vld [vmem:[#allocation2 + $0x118] sm:$0xff]
    %v1528 = vld [vmem:[#allocation2 + $0x120] sm:$0xff]
    %v1529 = vld [vmem:[#allocation2 + $0x128] sm:$0xff]
    %v1530 = vld [vmem:[#allocation2 + $0x130] sm:$0xff]
    %v1531 = vld [vmem:[#allocation2 + $0x138] sm:$0xff]
    %v1532 = vld [vmem:[#allocation2 + $0x140] sm:$0xff]
    %v1533 = vld [vmem:[#allocation2 + $0x148] sm:$0xff]
    %v1534 = vld [vmem:[#allocation2 + $0x150] sm:$0xff]
    %v1535 = vld [vmem:[#allocation2 + $0x158] sm:$0xff]
    %v1536 = vld [vmem:[#allocation2 + $0x160] sm:$0xff]
    %v1537 = vld [vmem:[#allocation2 + $0x168] sm:$0xff]
    %v1538 = vld [vmem:[#allocation2 + $0x170] sm:$0xff]
    %v1539 = vld [vmem:[#allocation2 + $0x178] sm:$0xff]
    %v1540 = vld [vmem:[#allocation2 + $0x180] sm:$0xff]
    %v1541 = vld [vmem:[#allocation2 + $0x188] sm:$0xff]
    %v1542 = vld [vmem:[#allocation2 + $0x190] sm:$0xff]
    %v1543 = vld [vmem:[#allocation2 + $0x198] sm:$0xff]
    %v1544 = vld [vmem:[#allocation2 + $0x1a0] sm:$0xff]
    %v1545 = vld [vmem:[#allocation2 + $0x1a8] sm:$0xff]
    %v1546 = vld [vmem:[#allocation2 + $0x1b0] sm:$0xff]
    %v1547 = vld [vmem:[#allocation2 + $0x1b8] sm:$0xff]
    %v1548 = vld [vmem:[#allocation2 + $0x1c0] sm:$0xff]
    %v1549 = vld [vmem:[#allocation2 + $0x1c8] sm:$0xff]
    %v1550 = vld [vmem:[#allocation2 + $0x1d0] sm:$0xff]
    %v1551 = vld [vmem:[#allocation2 + $0x1d8] sm:$0xff]
    %v1552 = vld [vmem:[#allocation2 + $0x1e0] sm:$0xff]
    %v1553 = vld [vmem:[#allocation2 + $0x1e8] sm:$0xff]
    %v1554 = vld [vmem:[#allocation2 + $0x1f0] sm:$0xff]
    %v1555 = vld [vmem:[#allocation2 + $0x1f8] sm:$0xff]
    %v1556 = vld [vmem:[#allocation2 + $0x200] sm:$0xff]
    %v1557 = vld [vmem:[#allocation2 + $0x208] sm:$0xff]
    %v1558 = vld [vmem:[#allocation2 + $0x210] sm:$0xff]
    %v1559 = vld [vmem:[#allocation2 + $0x218] sm:$0xff]
    %v1560 = vld [vmem:[#allocation2 + $0x220] sm:$0xff]
    %v1561 = vld [vmem:[#allocation2 + $0x228] sm:$0xff]
    %v1562 = vld [vmem:[#allocation2 + $0x230] sm:$0xff]
    %v1563 = vld [vmem:[#allocation2 + $0x238] sm:$0xff]
    %v1564 = vld [vmem:[#allocation2 + $0x240] sm:$0xff]
    %v1565 = vld [vmem:[#allocation2 + $0x248] sm:$0xff]
    %v1566 = vld [vmem:[#allocation2 + $0x250] sm:$0xff]
    %v1567 = vld [vmem:[#allocation2 + $0x258] sm:$0xff]
    %v1568 = vld [vmem:[#allocation2 + $0x260] sm:$0xff]
    %v1569 = vld [vmem:[#allocation2 + $0x268] sm:$0xff]
    %v1570 = vld [vmem:[#allocation2 + $0x270] sm:$0xff]
    %v1571 = vld [vmem:[#allocation2 + $0x278] sm:$0xff]
    %v1572 = vld [vmem:[#allocation2 + $0x280] sm:$0xff]
    %v1573 = vld [vmem:[#allocation2 + $0x288] sm:$0xff]
    %v1574 = vld [vmem:[#allocation2 + $0x290] sm:$0xff]
    %v1575 = vld [vmem:[#allocation2 + $0x298] sm:$0xff]
    %v1576 = vld [vmem:[#allocation2 + $0x2a0] sm:$0xff]
    %v1577 = vld [vmem:[#allocation2 + $0x2a8] sm:$0xff]
    %v1578 = vld [vmem:[#allocation2 + $0x2b0] sm:$0xff]
    %v1579 = vld [vmem:[#allocation2 + $0x2b8] sm:$0xff]
    %v1580 = vld [vmem:[#allocation2 + $0x2c0] sm:$0xff]
    %v1581 = vld [vmem:[#allocation2 + $0x2c8] sm:$0xff]
    %v1582 = vld [vmem:[#allocation2 + $0x2d0] sm:$0xff]
    %v1583 = vld [vmem:[#allocation2 + $0x2d8] sm:$0xff]
    %v1584 = vld [vmem:[#allocation2 + $0x2e0] sm:$0xff]
    %v1585 = vld [vmem:[#allocation2 + $0x2e8] sm:$0xff]
    %v1586 = vld [vmem:[#allocation2 + $0x2f0] sm:$0xff]
    %v1587 = vld [vmem:[#allocation2 + $0x2f8] sm:$0xff]
    %v1588 = vld [vmem:[#allocation2 + $0x300] sm:$0xff]
    %v1589 = vld [vmem:[#allocation2 + $0x308] sm:$0xff]
    %v1590 = vld [vmem:[#allocation2 + $0x310] sm:$0xff]
    %v1591 = vld [vmem:[#allocation2 + $0x318] sm:$0xff]
    %v1592 = vld [vmem:[#allocation2 + $0x320] sm:$0xff]
    %v1593 = vld [vmem:[#allocation2 + $0x328] sm:$0xff]
    %v1594 = vld [vmem:[#allocation2 + $0x330] sm:$0xff]
    %v1595 = vld [vmem:[#allocation2 + $0x338] sm:$0xff]
    %v1596 = vld [vmem:[#allocation2 + $0x340] sm:$0xff]
    %v1597 = vld [vmem:[#allocation2 + $0x348] sm:$0xff]
    %v1598 = vld [vmem:[#allocation2 + $0x350] sm:$0xff]
    %v1599 = vld [vmem:[#allocation2 + $0x358] sm:$0xff]
    %v1600 = vld [vmem:[#allocation2 + $0x360] sm:$0xff]
    %v1601 = vld [vmem:[#allocation2 + $0x368] sm:$0xff]
    %v1602 = vld [vmem:[#allocation2 + $0x370] sm:$0xff]
    %v1603 = vld [vmem:[#allocation2 + $0x378] sm:$0xff]
    %v1604 = vld [vmem:[#allocation2 + $0x380] sm:$0xff]
    %v1605 = vld [vmem:[#allocation2 + $0x388] sm:$0xff]
    %v1606 = vld [vmem:[#allocation2 + $0x390] sm:$0xff]
    %v1607 = vld [vmem:[#allocation2 + $0x398] sm:$0xff]
    %v1608 = vld [vmem:[#allocation2 + $0x3a0] sm:$0xff]
    %v1609 = vld [vmem:[#allocation2 + $0x3a8] sm:$0xff]
    %v1610 = vld [vmem:[#allocation2 + $0x3b0] sm:$0xff]
    %v1611 = vld [vmem:[#allocation2 + $0x3b8] sm:$0xff]
    %v1612 = vld [vmem:[#allocation2 + $0x3c0] sm:$0xff]
    %v1613 = vld [vmem:[#allocation2 + $0x3c8] sm:$0xff]
    %v1614 = vld [vmem:[#allocation2 + $0x3d0] sm:$0xff]
    %v1615 = vld [vmem:[#allocation2 + $0x3d8] sm:$0xff]
    %v1616 = vld [vmem:[#allocation2 + $0x3e0] sm:$0xff]
    %v1617 = vld [vmem:[#allocation2 + $0x3e8] sm:$0xff]
    %v1618 = vld [vmem:[#allocation2 + $0x3f0] sm:$0xff]
    %v1619 = vld [vmem:[#allocation2 + $0x3f8] sm:$0xff]
    %v1620 = vpack.c.bf16 %v1496, %v1492
    %v1621 = vpack.c.bf16 %v1497, %v1493
    %v1622 = vpack.c.bf16 %v1498, %v1494
    %v1623 = vpack.c.bf16 %v1499, %v1495
    %v1624 = vpack.c.bf16 %v1504, %v1500
    %v1625 = vpack.c.bf16 %v1505, %v1501
    %v1626 = vpack.c.bf16 %v1506, %v1502
    %v1627 = vpack.c.bf16 %v1507, %v1503
    %v1628 = vpack.c.bf16 %v1512, %v1508
    %v1629 = vpack.c.bf16 %v1513, %v1509
    %v1630 = vpack.c.bf16 %v1514, %v1510
    %v1631 = vpack.c.bf16 %v1515, %v1511
    %v1632 = vpack.c.bf16 %v1520, %v1516
    %v1633 = vpack.c.bf16 %v1521, %v1517
    %v1634 = vpack.c.bf16 %v1522, %v1518
    %v1635 = vpack.c.bf16 %v1523, %v1519
    %v1636 = vpack.c.bf16 %v1528, %v1524
    %v1637 = vpack.c.bf16 %v1529, %v1525
    %v1638 = vpack.c.bf16 %v1530, %v1526
    %v1639 = vpack.c.bf16 %v1531, %v1527
    %v1640 = vpack.c.bf16 %v1536, %v1532
    %v1641 = vpack.c.bf16 %v1537, %v1533
    %v1642 = vpack.c.bf16 %v1538, %v1534
    %v1643 = vpack.c.bf16 %v1539, %v1535
    %v1644 = vpack.c.bf16 %v1544, %v1540
    %v1645 = vpack.c.bf16 %v1545, %v1541
    %v1646 = vpack.c.bf16 %v1546, %v1542
    %v1647 = vpack.c.bf16 %v1547, %v1543
    %v1648 = vpack.c.bf16 %v1552, %v1548
    %v1649 = vpack.c.bf16 %v1553, %v1549
    %v1650 = vpack.c.bf16 %v1554, %v1550
    %v1651 = vpack.c.bf16 %v1555, %v1551
    %v1652 = vpack.c.bf16 %v1560, %v1556
    %v1653 = vpack.c.bf16 %v1561, %v1557
    %v1654 = vpack.c.bf16 %v1562, %v1558
    %v1655 = vpack.c.bf16 %v1563, %v1559
    %v1656 = vpack.c.bf16 %v1568, %v1564
    %v1657 = vpack.c.bf16 %v1569, %v1565
    %v1658 = vpack.c.bf16 %v1570, %v1566
    %v1659 = vpack.c.bf16 %v1571, %v1567
    %v1660 = vpack.c.bf16 %v1576, %v1572
    %v1661 = vpack.c.bf16 %v1577, %v1573
    %v1662 = vpack.c.bf16 %v1578, %v1574
    %v1663 = vpack.c.bf16 %v1579, %v1575
    %v1664 = vpack.c.bf16 %v1584, %v1580
    %v1665 = vpack.c.bf16 %v1585, %v1581
    %v1666 = vpack.c.bf16 %v1586, %v1582
    %v1667 = vpack.c.bf16 %v1587, %v1583
    %v1668 = vpack.c.bf16 %v1592, %v1588
    %v1669 = vpack.c.bf16 %v1593, %v1589
    %v1670 = vpack.c.bf16 %v1594, %v1590
    %v1671 = vpack.c.bf16 %v1595, %v1591
    %v1672 = vpack.c.bf16 %v1600, %v1596
    %v1673 = vpack.c.bf16 %v1601, %v1597
    %v1674 = vpack.c.bf16 %v1602, %v1598
    %v1675 = vpack.c.bf16 %v1603, %v1599
    %v1676 = vpack.c.bf16 %v1608, %v1604
    %v1677 = vpack.c.bf16 %v1609, %v1605
    %v1678 = vpack.c.bf16 %v1610, %v1606
    %v1679 = vpack.c.bf16 %v1611, %v1607
    %v1680 = vpack.c.bf16 %v1616, %v1612
    %v1681 = vpack.c.bf16 %v1617, %v1613
    %v1682 = vpack.c.bf16 %v1618, %v1614
    %v1683 = vpack.c.bf16 %v1619, %v1615
    %v1748 = vunpack.c.l.b16 %v1620
    %v1749 = vunpack.c.l.b16 %v1621
    %v1750 = vunpack.c.l.b16 %v1622
    %v1751 = vunpack.c.l.b16 %v1623
    %v1752 = vunpack.c.h.b16 %v1620
    %v1753 = vunpack.c.h.b16 %v1621
    %v1754 = vunpack.c.h.b16 %v1622
    %v1755 = vunpack.c.h.b16 %v1623
    %v1756 = vunpack.c.l.b16 %v1624
    %v1757 = vunpack.c.l.b16 %v1625
    %v1758 = vunpack.c.l.b16 %v1626
    %v1759 = vunpack.c.l.b16 %v1627
    %v1760 = vunpack.c.h.b16 %v1624
    %v1761 = vunpack.c.h.b16 %v1625
    %v1762 = vunpack.c.h.b16 %v1626
    %v1763 = vunpack.c.h.b16 %v1627
    %v1764 = vunpack.c.l.b16 %v1628
    %v1765 = vunpack.c.l.b16 %v1629
    %v1766 = vunpack.c.l.b16 %v1630
    %v1767 = vunpack.c.l.b16 %v1631
    %v1768 = vunpack.c.h.b16 %v1628
    %v1769 = vunpack.c.h.b16 %v1629
    %v1770 = vunpack.c.h.b16 %v1630
    %v1771 = vunpack.c.h.b16 %v1631
    %v1772 = vunpack.c.l.b16 %v1632
    %v1773 = vunpack.c.l.b16 %v1633
    %v1774 = vunpack.c.l.b16 %v1634
    %v1775 = vunpack.c.l.b16 %v1635
    %v1776 = vunpack.c.h.b16 %v1632
    %v1777 = vunpack.c.h.b16 %v1633
    %v1778 = vunpack.c.h.b16 %v1634
    %v1779 = vunpack.c.h.b16 %v1635
    %v1780 = vunpack.c.l.b16 %v1636
    %v1781 = vunpack.c.l.b16 %v1637
    %v1782 = vunpack.c.l.b16 %v1638
    %v1783 = vunpack.c.l.b16 %v1639
    %v1784 = vunpack.c.h.b16 %v1636
    %v1785 = vunpack.c.h.b16 %v1637
    %v1786 = vunpack.c.h.b16 %v1638
    %v1787 = vunpack.c.h.b16 %v1639
    %v1788 = vunpack.c.l.b16 %v1640
    %v1789 = vunpack.c.l.b16 %v1641
    %v1790 = vunpack.c.l.b16 %v1642
    %v1791 = vunpack.c.l.b16 %v1643
    %v1792 = vunpack.c.h.b16 %v1640
    %v1793 = vunpack.c.h.b16 %v1641
    %v1794 = vunpack.c.h.b16 %v1642
    %v1795 = vunpack.c.h.b16 %v1643
    %v1796 = vunpack.c.l.b16 %v1644
    %v1797 = vunpack.c.l.b16 %v1645
    %v1798 = vunpack.c.l.b16 %v1646
    %v1799 = vunpack.c.l.b16 %v1647
    %v1800 = vunpack.c.h.b16 %v1644
    %v1801 = vunpack.c.h.b16 %v1645
    %v1802 = vunpack.c.h.b16 %v1646
    %v1803 = vunpack.c.h.b16 %v1647
    %v1804 = vunpack.c.l.b16 %v1648
    %v1805 = vunpack.c.l.b16 %v1649
    %v1806 = vunpack.c.l.b16 %v1650
    %v1807 = vunpack.c.l.b16 %v1651
    %v1808 = vunpack.c.h.b16 %v1648
    %v1809 = vunpack.c.h.b16 %v1649
    %v1810 = vunpack.c.h.b16 %v1650
    %v1811 = vunpack.c.h.b16 %v1651
    %v1812 = vunpack.c.l.b16 %v1652
    %v1813 = vunpack.c.l.b16 %v1653
    %v1814 = vunpack.c.l.b16 %v1654
    %v1815 = vunpack.c.l.b16 %v1655
    %v1816 = vunpack.c.h.b16 %v1652
    %v1817 = vunpack.c.h.b16 %v1653
    %v1818 = vunpack.c.h.b16 %v1654
    %v1819 = vunpack.c.h.b16 %v1655
    %v1820 = vunpack.c.l.b16 %v1656
    %v1821 = vunpack.c.l.b16 %v1657
    %v1822 = vunpack.c.l.b16 %v1658
    %v1823 = vunpack.c.l.b16 %v1659
    %v1824 = vunpack.c.h.b16 %v1656
    %v1825 = vunpack.c.h.b16 %v1657
    %v1826 = vunpack.c.h.b16 %v1658
    %v1827 = vunpack.c.h.b16 %v1659
    %v1828 = vunpack.c.l.b16 %v1660
    %v1829 = vunpack.c.l.b16 %v1661
    %v1830 = vunpack.c.l.b16 %v1662
    %v1831 = vunpack.c.l.b16 %v1663
    %v1832 = vunpack.c.h.b16 %v1660
    %v1833 = vunpack.c.h.b16 %v1661
    %v1834 = vunpack.c.h.b16 %v1662
    %v1835 = vunpack.c.h.b16 %v1663
    %v1836 = vunpack.c.l.b16 %v1664
    %v1837 = vunpack.c.l.b16 %v1665
    %v1838 = vunpack.c.l.b16 %v1666
    %v1839 = vunpack.c.l.b16 %v1667
    %v1840 = vunpack.c.h.b16 %v1664
    %v1841 = vunpack.c.h.b16 %v1665
    %v1842 = vunpack.c.h.b16 %v1666
    %v1843 = vunpack.c.h.b16 %v1667
    %v1844 = vunpack.c.l.b16 %v1668
    %v1845 = vunpack.c.l.b16 %v1669
    %v1846 = vunpack.c.l.b16 %v1670
    %v1847 = vunpack.c.l.b16 %v1671
    %v1848 = vunpack.c.h.b16 %v1668
    %v1849 = vunpack.c.h.b16 %v1669
    %v1850 = vunpack.c.h.b16 %v1670
    %v1851 = vunpack.c.h.b16 %v1671
    %v1852 = vunpack.c.l.b16 %v1672
    %v1853 = vunpack.c.l.b16 %v1673
    %v1854 = vunpack.c.l.b16 %v1674
    %v1855 = vunpack.c.l.b16 %v1675
    %v1856 = vunpack.c.h.b16 %v1672
    %v1857 = vunpack.c.h.b16 %v1673
    %v1858 = vunpack.c.h.b16 %v1674
    %v1859 = vunpack.c.h.b16 %v1675
    %v1860 = vunpack.c.l.b16 %v1676
    %v1861 = vunpack.c.l.b16 %v1677
    %v1862 = vunpack.c.l.b16 %v1678
    %v1863 = vunpack.c.l.b16 %v1679
    %v1864 = vunpack.c.h.b16 %v1676
    %v1865 = vunpack.c.h.b16 %v1677
    %v1866 = vunpack.c.h.b16 %v1678
    %v1867 = vunpack.c.h.b16 %v1679
    %v1868 = vunpack.c.l.b16 %v1680
    %v1869 = vunpack.c.l.b16 %v1681
    %v1870 = vunpack.c.l.b16 %v1682
    %v1871 = vunpack.c.l.b16 %v1683
    %v1872 = vunpack.c.h.b16 %v1680
    %v1873 = vunpack.c.h.b16 %v1681
    %v1874 = vunpack.c.h.b16 %v1682
    %v1875 = vunpack.c.h.b16 %v1683
    %v1876 = vpack.c.b16 %v1749, %v1748
    %v1877 = vpack.c.b16 %v1751, %v1750
    %v1878 = vpack.c.b16 %v1753, %v1752
    %v1879 = vpack.c.b16 %v1755, %v1754
    %v1880 = vpack.c.b16 %v1757, %v1756
    %v1881 = vpack.c.b16 %v1759, %v1758
    %v1882 = vpack.c.b16 %v1761, %v1760
    %v1883 = vpack.c.b16 %v1763, %v1762
    %v1884 = vpack.c.b16 %v1765, %v1764
    %v1885 = vpack.c.b16 %v1767, %v1766
    %v1886 = vpack.c.b16 %v1769, %v1768
    %v1887 = vpack.c.b16 %v1771, %v1770
    %v1888 = vpack.c.b16 %v1773, %v1772
    %v1889 = vpack.c.b16 %v1775, %v1774
    %v1890 = vpack.c.b16 %v1777, %v1776
    %v1891 = vpack.c.b16 %v1779, %v1778
    %v1892 = vpack.c.b16 %v1781, %v1780
    %v1893 = vpack.c.b16 %v1783, %v1782
    %v1894 = vpack.c.b16 %v1785, %v1784
    %v1895 = vpack.c.b16 %v1787, %v1786
    %v1896 = vpack.c.b16 %v1789, %v1788
    %v1897 = vpack.c.b16 %v1791, %v1790
    %v1898 = vpack.c.b16 %v1793, %v1792
    %v1899 = vpack.c.b16 %v1795, %v1794
    %v1900 = vpack.c.b16 %v1797, %v1796
    %v1901 = vpack.c.b16 %v1799, %v1798
    %v1902 = vpack.c.b16 %v1801, %v1800
    %v1903 = vpack.c.b16 %v1803, %v1802
    %v1904 = vpack.c.b16 %v1805, %v1804
    %v1905 = vpack.c.b16 %v1807, %v1806
    %v1906 = vpack.c.b16 %v1809, %v1808
    %v1907 = vpack.c.b16 %v1811, %v1810
    %v1908 = vpack.c.b16 %v1813, %v1812
    %v1909 = vpack.c.b16 %v1815, %v1814
    %v1910 = vpack.c.b16 %v1817, %v1816
    %v1911 = vpack.c.b16 %v1819, %v1818
    %v1912 = vpack.c.b16 %v1821, %v1820
    %v1913 = vpack.c.b16 %v1823, %v1822
    %v1914 = vpack.c.b16 %v1825, %v1824
    %v1915 = vpack.c.b16 %v1827, %v1826
    %v1916 = vpack.c.b16 %v1829, %v1828
    %v1917 = vpack.c.b16 %v1831, %v1830
    %v1918 = vpack.c.b16 %v1833, %v1832
    %v1919 = vpack.c.b16 %v1835, %v1834
    %v1920 = vpack.c.b16 %v1837, %v1836
    %v1921 = vpack.c.b16 %v1839, %v1838
    %v1922 = vpack.c.b16 %v1841, %v1840
    %v1923 = vpack.c.b16 %v1843, %v1842
    %v1924 = vpack.c.b16 %v1845, %v1844
    %v1925 = vpack.c.b16 %v1847, %v1846
    %v1926 = vpack.c.b16 %v1849, %v1848
    %v1927 = vpack.c.b16 %v1851, %v1850
    %v1928 = vpack.c.b16 %v1853, %v1852
    %v1929 = vpack.c.b16 %v1855, %v1854
    %v1930 = vpack.c.b16 %v1857, %v1856
    %v1931 = vpack.c.b16 %v1859, %v1858
    %v1932 = vpack.c.b16 %v1861, %v1860
    %v1933 = vpack.c.b16 %v1863, %v1862
    %v1934 = vpack.c.b16 %v1865, %v1864
    %v1935 = vpack.c.b16 %v1867, %v1866
    %v1936 = vpack.c.b16 %v1869, %v1868
    %v1937 = vpack.c.b16 %v1871, %v1870
    %v1938 = vpack.c.b16 %v1873, %v1872
    %v1939 = vpack.c.b16 %v1875, %v1874
    %2004 = vst [vmem:[%s2] sm:$0xff] %v1876
    %2005 = vst [vmem:[%s2 + $0x8] sm:$0xff] %v1877
    %2006 = vst [vmem:[%s2 + $0x10] sm:$0xff] %v1878
    %2007 = vst [vmem:[%s2 + $0x18] sm:$0xff] %v1879
    %2008 = vst [vmem:[%s2 + $0x20] sm:$0xff] %v1880
    %2009 = vst [vmem:[%s2 + $0x28] sm:$0xff] %v1881
    %2010 = vst [vmem:[%s2 + $0x30] sm:$0xff] %v1882
    %2011 = vst [vmem:[%s2 + $0x38] sm:$0xff] %v1883
    %2012 = vst [vmem:[%s2 + $0x40] sm:$0xff] %v1884
    %2013 = vst [vmem:[%s2 + $0x48] sm:$0xff] %v1885
    %2014 = vst [vmem:[%s2 + $0x50] sm:$0xff] %v1886
    %2015 = vst [vmem:[%s2 + $0x58] sm:$0xff] %v1887
    %2016 = vst [vmem:[%s2 + $0x60] sm:$0xff] %v1888
    %2017 = vst [vmem:[%s2 + $0x68] sm:$0xff] %v1889
    %2018 = vst [vmem:[%s2 + $0x70] sm:$0xff] %v1890
    %2019 = vst [vmem:[%s2 + $0x78] sm:$0xff] %v1891
    %2020 = vst [vmem:[%s2 + $0x80] sm:$0xff] %v1892
    %2021 = vst [vmem:[%s2 + $0x88] sm:$0xff] %v1893
    %2022 = vst [vmem:[%s2 + $0x90] sm:$0xff] %v1894
    %2023 = vst [vmem:[%s2 + $0x98] sm:$0xff] %v1895
    %2024 = vst [vmem:[%s2 + $0xa0] sm:$0xff] %v1896
    %2025 = vst [vmem:[%s2 + $0xa8] sm:$0xff] %v1897
    %2026 = vst [vmem:[%s2 + $0xb0] sm:$0xff] %v1898
    %2027 = vst [vmem:[%s2 + $0xb8] sm:$0xff] %v1899
    %2028 = vst [vmem:[%s2 + $0xc0] sm:$0xff] %v1900
    %2029 = vst [vmem:[%s2 + $0xc8] sm:$0xff] %v1901
    %2030 = vst [vmem:[%s2 + $0xd0] sm:$0xff] %v1902
    %2031 = vst [vmem:[%s2 + $0xd8] sm:$0xff] %v1903
    %2032 = vst [vmem:[%s2 + $0xe0] sm:$0xff] %v1904
    %2033 = vst [vmem:[%s2 + $0xe8] sm:$0xff] %v1905
    %2034 = vst [vmem:[%s2 + $0xf0] sm:$0xff] %v1906
    %2035 = vst [vmem:[%s2 + $0xf8] sm:$0xff] %v1907
    %2036 = vst [vmem:[%s2 + $0x100] sm:$0xff] %v1908
    %2037 = vst [vmem:[%s2 + $0x108] sm:$0xff] %v1909
    %2038 = vst [vmem:[%s2 + $0x110] sm:$0xff] %v1910
    %2039 = vst [vmem:[%s2 + $0x118] sm:$0xff] %v1911
    %2040 = vst [vmem:[%s2 + $0x120] sm:$0xff] %v1912
    %2041 = vst [vmem:[%s2 + $0x128] sm:$0xff] %v1913
    %2042 = vst [vmem:[%s2 + $0x130] sm:$0xff] %v1914
    %2043 = vst [vmem:[%s2 + $0x138] sm:$0xff] %v1915
    %2044 = vst [vmem:[%s2 + $0x140] sm:$0xff] %v1916
    %2045 = vst [vmem:[%s2 + $0x148] sm:$0xff] %v1917
    %2046 = vst [vmem:[%s2 + $0x150] sm:$0xff] %v1918
    %2047 = vst [vmem:[%s2 + $0x158] sm:$0xff] %v1919
    %2048 = vst [vmem:[%s2 + $0x160] sm:$0xff] %v1920
    %2049 = vst [vmem:[%s2 + $0x168] sm:$0xff] %v1921
    %2050 = vst [vmem:[%s2 + $0x170] sm:$0xff] %v1922
    %2051 = vst [vmem:[%s2 + $0x178] sm:$0xff] %v1923
    %2052 = vst [vmem:[%s2 + $0x180] sm:$0xff] %v1924
    %2053 = vst [vmem:[%s2 + $0x188] sm:$0xff] %v1925
    %2054 = vst [vmem:[%s2 + $0x190] sm:$0xff] %v1926
    %2055 = vst [vmem:[%s2 + $0x198] sm:$0xff] %v1927
    %2056 = vst [vmem:[%s2 + $0x1a0] sm:$0xff] %v1928
    %2057 = vst [vmem:[%s2 + $0x1a8] sm:$0xff] %v1929
    %2058 = vst [vmem:[%s2 + $0x1b0] sm:$0xff] %v1930
    %2059 = vst [vmem:[%s2 + $0x1b8] sm:$0xff] %v1931
    %2060 = vst [vmem:[%s2 + $0x1c0] sm:$0xff] %v1932
    %2061 = vst [vmem:[%s2 + $0x1c8] sm:$0xff] %v1933
    %2062 = vst [vmem:[%s2 + $0x1d0] sm:$0xff] %v1934
    %2063 = vst [vmem:[%s2 + $0x1d8] sm:$0xff] %v1935
    %2064 = vst [vmem:[%s2 + $0x1e0] sm:$0xff] %v1936
    %2065 = vst [vmem:[%s2 + $0x1e8] sm:$0xff] %v1937
    %2066 = vst [vmem:[%s2 + $0x1f0] sm:$0xff] %v1938
    %2067 = vst [vmem:[%s2 + $0x1f8] sm:$0xff] %v1939
  $region17: #{gcn_forward.3} parent=0 // pred_fallthru
    _
  // Predicated region
  $region18: #{gcn_forward.3} parent=0 // pred_check
    _
  $region19: #{gcn_forward.3} parent=0 // pred_check_branch
    %2069 = sbr.rel (0) target = $region21
  $region20: #{gcn_forward.3} parent=0 // pred_region
    _
  $region21: #{gcn_forward.3} parent=0 // pred_fallthru
    _
  // Predicated region
  $region22: #{gcn_forward.3} parent=0 // pred_check
    _
  $region23: #{gcn_forward.3} parent=0 // pred_check_branch
    %2071 = sbr.rel (0) target = $region25
  $region24: #{gcn_forward.3} parent=0 // pred_region
    _
  $region25: #{gcn_forward.3} parent=0 // pred_fallthru
    _

// kernel: gcn_forward.4
$region0: #{gcn_forward.4}
  #allocation0 [shape = 'u32[]', space=smem, size = 0x4, offset = 0x4, fixed_abs, tag = 'smem constant byte address 0x4 - core index']
  #allocation1 [shape = 'u32[144,128]{1,0:T(1,128)}', space=vmem, size = 0x12000, scoped, tag = 'internal scratch']
  #allocation2 [shape = 'f32[256,512]{1,0:T(8,128)}', space=vmem, size = 0x80000, scoped, tag = 'scratch operand']
  %s0 = inlined_call_operand.vmem [shape: bf16[256,256], index: 0, kind: input, shape index: {}]
  %s1 = inlined_call_operand.vmem [shape: bf16[256,512], index: 1, kind: input, shape index: {}]
  %s2 = inlined_call_operand.vmem [shape: f32[1,512], index: 2, kind: input, shape index: {}]
  %s3 = inlined_call_operand.vmem [shape: bf16[512,128], index: 3, kind: input, shape index: {}]
  %s4 = inlined_call_operand.vmem [shape: f32[1,128], index: 4, kind: input, shape index: {}]
  %s5 = inlined_call_operand.vmem [shape: bf16[256,128], index: 5, kind: output, shape index: {}]
  %s6 = sld [smem:[#allocation0]]
  $region38: #{gcn_forward.4} parent=0
    _
  %s8 = ssub.s32 1, %s6
  %s9 = scalar_select 0, %s8, %s6
  // Predicated region
  $region2: #{gcn_forward.4} parent=0 // pred_check
    _
  $region3: #{gcn_forward.4} parent=0 // pred_check_branch
    %11 = sbr.rel (0) target = $region5
  $region4: #{gcn_forward.4} parent=0 // pred_region
    _
  $region5: #{gcn_forward.4} parent=0 // pred_fallthru
    _
  // Predicated region
  $region6: #{gcn_forward.4} parent=0 // pred_check
    _
  $region7: #{gcn_forward.4} parent=0 // pred_check_branch
    %13 = sbr.rel (0) target = $region9
  $region8: #{gcn_forward.4} parent=0 // pred_region
    _
  $region9: #{gcn_forward.4} parent=0 // pred_fallthru
    _
  // Predicated region
  $region10: #{gcn_forward.4} parent=0 // pred_check
    _
  $region11: #{gcn_forward.4} parent=0 // pred_check_branch
    %15 = sbr.rel (0) target = $region13
  $region12: #{gcn_forward.4} parent=0 // pred_region
    _
  $region13: #{gcn_forward.4} parent=0 // pred_fallthru
    _
  // Predicated region
  $region14: #{gcn_forward.4} parent=0 // pred_check
    _
  $region15: #{gcn_forward.4} parent=0 // pred_check_branch
    %17 = sbr.rel (0) target = $region17
  $region16: #{gcn_forward.4} parent=0 // pred_region
    _
  $region17: #{gcn_forward.4} parent=0 // pred_fallthru
    _
  // Predicated region
  $region18: #{gcn_forward.4} parent=0 // pred_check
    _
  $region19: #{gcn_forward.4} parent=0 // pred_check_branch
    %19 = sbr.rel (0) target = $region21
  $region20: #{gcn_forward.4} parent=0 // pred_region
    _
  $region21: #{gcn_forward.4} parent=0 // pred_fallthru
    _
  %p21 = scmp.eq.s32.totalorder 0, 0
  // Predicated region
  $region22: #{gcn_forward.4} parent=0 // pred_check
    %p22 = pneg %p21
  $region23: #{gcn_forward.4} parent=0 // pred_check_branch
    %24 = sbr.rel (%p22) target = $region25
  $region24: #{gcn_forward.4} parent=0 // pred_region
    %25 = vst [vmem:[#allocation2] sm:$0xff] 0.0
    %26 = vst [vmem:[#allocation2 + $0x8] sm:$0xff] 0.0
    %27 = vst [vmem:[#allocation2 + $0x10] sm:$0xff] 0.0
    %28 = vst [vmem:[#allocation2 + $0x18] sm:$0xff] 0.0
    %29 = vst [vmem:[#allocation2 + $0x20] sm:$0xff] 0.0
    %30 = vst [vmem:[#allocation2 + $0x28] sm:$0xff] 0.0
    %31 = vst [vmem:[#allocation2 + $0x30] sm:$0xff] 0.0
    %32 = vst [vmem:[#allocation2 + $0x38] sm:$0xff] 0.0
    %33 = vst [vmem:[#allocation2 + $0x40] sm:$0xff] 0.0
    %34 = vst [vmem:[#allocation2 + $0x48] sm:$0xff] 0.0
    %35 = vst [vmem:[#allocation2 + $0x50] sm:$0xff] 0.0
    %36 = vst [vmem:[#allocation2 + $0x58] sm:$0xff] 0.0
    %37 = vst [vmem:[#allocation2 + $0x60] sm:$0xff] 0.0
    %38 = vst [vmem:[#allocation2 + $0x68] sm:$0xff] 0.0
    %39 = vst [vmem:[#allocation2 + $0x70] sm:$0xff] 0.0
    %40 = vst [vmem:[#allocation2 + $0x78] sm:$0xff] 0.0
    %41 = vst [vmem:[#allocation2 + $0x80] sm:$0xff] 0.0
    %42 = vst [vmem:[#allocation2 + $0x88] sm:$0xff] 0.0
    %43 = vst [vmem:[#allocation2 + $0x90] sm:$0xff] 0.0
    %44 = vst [vmem:[#allocation2 + $0x98] sm:$0xff] 0.0
    %45 = vst [vmem:[#allocation2 + $0xa0] sm:$0xff] 0.0
    %46 = vst [vmem:[#allocation2 + $0xa8] sm:$0xff] 0.0
    %47 = vst [vmem:[#allocation2 + $0xb0] sm:$0xff] 0.0
    %48 = vst [vmem:[#allocation2 + $0xb8] sm:$0xff] 0.0
    %49 = vst [vmem:[#allocation2 + $0xc0] sm:$0xff] 0.0
    %50 = vst [vmem:[#allocation2 + $0xc8] sm:$0xff] 0.0
    %51 = vst [vmem:[#allocation2 + $0xd0] sm:$0xff] 0.0
    %52 = vst [vmem:[#allocation2 + $0xd8] sm:$0xff] 0.0
    %53 = vst [vmem:[#allocation2 + $0xe0] sm:$0xff] 0.0
    %54 = vst [vmem:[#allocation2 + $0xe8] sm:$0xff] 0.0
    %55 = vst [vmem:[#allocation2 + $0xf0] sm:$0xff] 0.0
    %56 = vst [vmem:[#allocation2 + $0xf8] sm:$0xff] 0.0
    %57 = vst [vmem:[#allocation2 + $0x100] sm:$0xff] 0.0
    %58 = vst [vmem:[#allocation2 + $0x108] sm:$0xff] 0.0
    %59 = vst [vmem:[#allocation2 + $0x110] sm:$0xff] 0.0
    %60 = vst [vmem:[#allocation2 + $0x118] sm:$0xff] 0.0
    %61 = vst [vmem:[#allocation2 + $0x120] sm:$0xff] 0.0
    %62 = vst [vmem:[#allocation2 + $0x128] sm:$0xff] 0.0
    %63 = vst [vmem:[#allocation2 + $0x130] sm:$0xff] 0.0
    %64 = vst [vmem:[#allocation2 + $0x138] sm:$0xff] 0.0
    %65 = vst [vmem:[#allocation2 + $0x140] sm:$0xff] 0.0
    %66 = vst [vmem:[#allocation2 + $0x148] sm:$0xff] 0.0
    %67 = vst [vmem:[#allocation2 + $0x150] sm:$0xff] 0.0
    %68 = vst [vmem:[#allocation2 + $0x158] sm:$0xff] 0.0
    %69 = vst [vmem:[#allocation2 + $0x160] sm:$0xff] 0.0
    %70 = vst [vmem:[#allocation2 + $0x168] sm:$0xff] 0.0
    %71 = vst [vmem:[#allocation2 + $0x170] sm:$0xff] 0.0
    %72 = vst [vmem:[#allocation2 + $0x178] sm:$0xff] 0.0
    %73 = vst [vmem:[#allocation2 + $0x180] sm:$0xff] 0.0
    %74 = vst [vmem:[#allocation2 + $0x188] sm:$0xff] 0.0
    %75 = vst [vmem:[#allocation2 + $0x190] sm:$0xff] 0.0
    %76 = vst [vmem:[#allocation2 + $0x198] sm:$0xff] 0.0
    %77 = vst [vmem:[#allocation2 + $0x1a0] sm:$0xff] 0.0
    %78 = vst [vmem:[#allocation2 + $0x1a8] sm:$0xff] 0.0
    %79 = vst [vmem:[#allocation2 + $0x1b0] sm:$0xff] 0.0
    %80 = vst [vmem:[#allocation2 + $0x1b8] sm:$0xff] 0.0
    %81 = vst [vmem:[#allocation2 + $0x1c0] sm:$0xff] 0.0
    %82 = vst [vmem:[#allocation2 + $0x1c8] sm:$0xff] 0.0
    %83 = vst [vmem:[#allocation2 + $0x1d0] sm:$0xff] 0.0
    %84 = vst [vmem:[#allocation2 + $0x1d8] sm:$0xff] 0.0
    %85 = vst [vmem:[#allocation2 + $0x1e0] sm:$0xff] 0.0
    %86 = vst [vmem:[#allocation2 + $0x1e8] sm:$0xff] 0.0
    %87 = vst [vmem:[#allocation2 + $0x1f0] sm:$0xff] 0.0
    %88 = vst [vmem:[#allocation2 + $0x1f8] sm:$0xff] 0.0
    %89 = vst [vmem:[#allocation2 + $0x200] sm:$0xff] 0.0
    %90 = vst [vmem:[#allocation2 + $0x208] sm:$0xff] 0.0
    %91 = vst [vmem:[#allocation2 + $0x210] sm:$0xff] 0.0
    %92 = vst [vmem:[#allocation2 + $0x218] sm:$0xff] 0.0
    %93 = vst [vmem:[#allocation2 + $0x220] sm:$0xff] 0.0
    %94 = vst [vmem:[#allocation2 + $0x228] sm:$0xff] 0.0
    %95 = vst [vmem:[#allocation2 + $0x230] sm:$0xff] 0.0
    %96 = vst [vmem:[#allocation2 + $0x238] sm:$0xff] 0.0
    %97 = vst [vmem:[#allocation2 + $0x240] sm:$0xff] 0.0
    %98 = vst [vmem:[#allocation2 + $0x248] sm:$0xff] 0.0
    %99 = vst [vmem:[#allocation2 + $0x250] sm:$0xff] 0.0
    %100 = vst [vmem:[#allocation2 + $0x258] sm:$0xff] 0.0
    %101 = vst [vmem:[#allocation2 + $0x260] sm:$0xff] 0.0
    %102 = vst [vmem:[#allocation2 + $0x268] sm:$0xff] 0.0
    %103 = vst [vmem:[#allocation2 + $0x270] sm:$0xff] 0.0
    %104 = vst [vmem:[#allocation2 + $0x278] sm:$0xff] 0.0
    %105 = vst [vmem:[#allocation2 + $0x280] sm:$0xff] 0.0
    %106 = vst [vmem:[#allocation2 + $0x288] sm:$0xff] 0.0
    %107 = vst [vmem:[#allocation2 + $0x290] sm:$0xff] 0.0
    %108 = vst [vmem:[#allocation2 + $0x298] sm:$0xff] 0.0
    %109 = vst [vmem:[#allocation2 + $0x2a0] sm:$0xff] 0.0
    %110 = vst [vmem:[#allocation2 + $0x2a8] sm:$0xff] 0.0
    %111 = vst [vmem:[#allocation2 + $0x2b0] sm:$0xff] 0.0
    %112 = vst [vmem:[#allocation2 + $0x2b8] sm:$0xff] 0.0
    %113 = vst [vmem:[#allocation2 + $0x2c0] sm:$0xff] 0.0
    %114 = vst [vmem:[#allocation2 + $0x2c8] sm:$0xff] 0.0
    %115 = vst [vmem:[#allocation2 + $0x2d0] sm:$0xff] 0.0
    %116 = vst [vmem:[#allocation2 + $0x2d8] sm:$0xff] 0.0
    %117 = vst [vmem:[#allocation2 + $0x2e0] sm:$0xff] 0.0
    %118 = vst [vmem:[#allocation2 + $0x2e8] sm:$0xff] 0.0
    %119 = vst [vmem:[#allocation2 + $0x2f0] sm:$0xff] 0.0
    %120 = vst [vmem:[#allocation2 + $0x2f8] sm:$0xff] 0.0
    %121 = vst [vmem:[#allocation2 + $0x300] sm:$0xff] 0.0
    %122 = vst [vmem:[#allocation2 + $0x308] sm:$0xff] 0.0
    %123 = vst [vmem:[#allocation2 + $0x310] sm:$0xff] 0.0
    %124 = vst [vmem:[#allocation2 + $0x318] sm:$0xff] 0.0
    %125 = vst [vmem:[#allocation2 + $0x320] sm:$0xff] 0.0
    %126 = vst [vmem:[#allocation2 + $0x328] sm:$0xff] 0.0
    %127 = vst [vmem:[#allocation2 + $0x330] sm:$0xff] 0.0
    %128 = vst [vmem:[#allocation2 + $0x338] sm:$0xff] 0.0
    %129 = vst [vmem:[#allocation2 + $0x340] sm:$0xff] 0.0
    %130 = vst [vmem:[#allocation2 + $0x348] sm:$0xff] 0.0
    %131 = vst [vmem:[#allocation2 + $0x350] sm:$0xff] 0.0
    %132 = vst [vmem:[#allocation2 + $0x358] sm:$0xff] 0.0
    %133 = vst [vmem:[#allocation2 + $0x360] sm:$0xff] 0.0
    %134 = vst [vmem:[#allocation2 + $0x368] sm:$0xff] 0.0
    %135 = vst [vmem:[#allocation2 + $0x370] sm:$0xff] 0.0
    %136 = vst [vmem:[#allocation2 + $0x378] sm:$0xff] 0.0
    %137 = vst [vmem:[#allocation2 + $0x380] sm:$0xff] 0.0
    %138 = vst [vmem:[#allocation2 + $0x388] sm:$0xff] 0.0
    %139 = vst [vmem:[#allocation2 + $0x390] sm:$0xff] 0.0
    %140 = vst [vmem:[#allocation2 + $0x398] sm:$0xff] 0.0
    %141 = vst [vmem:[#allocation2 + $0x3a0] sm:$0xff] 0.0
    %142 = vst [vmem:[#allocation2 + $0x3a8] sm:$0xff] 0.0
    %143 = vst [vmem:[#allocation2 + $0x3b0] sm:$0xff] 0.0
    %144 = vst [vmem:[#allocation2 + $0x3b8] sm:$0xff] 0.0
    %145 = vst [vmem:[#allocation2 + $0x3c0] sm:$0xff] 0.0
    %146 = vst [vmem:[#allocation2 + $0x3c8] sm:$0xff] 0.0
    %147 = vst [vmem:[#allocation2 + $0x3d0] sm:$0xff] 0.0
    %148 = vst [vmem:[#allocation2 + $0x3d8] sm:$0xff] 0.0
    %149 = vst [vmem:[#allocation2 + $0x3e0] sm:$0xff] 0.0
    %150 = vst [vmem:[#allocation2 + $0x3e8] sm:$0xff] 0.0
    %151 = vst [vmem:[#allocation2 + $0x3f0] sm:$0xff] 0.0
    %152 = vst [vmem:[#allocation2 + $0x3f8] sm:$0xff] 0.0
  $region25: #{gcn_forward.4} parent=0 // pred_fallthru
    _
  %v153 = vld [vmem:[#allocation2] sm:$0xff]
  %v154 = vld [vmem:[#allocation2 + $0x8] sm:$0xff]
  %v155 = vld [vmem:[#allocation2 + $0x10] sm:$0xff]
  %v156 = vld [vmem:[#allocation2 + $0x18] sm:$0xff]
  %v157 = vld [vmem:[#allocation2 + $0x20] sm:$0xff]
  %v158 = vld [vmem:[#allocation2 + $0x28] sm:$0xff]
  %v159 = vld [vmem:[#allocation2 + $0x30] sm:$0xff]
  %v160 = vld [vmem:[#allocation2 + $0x38] sm:$0xff]
  %v161 = vld [vmem:[#allocation2 + $0x40] sm:$0xff]
  %v162 = vld [vmem:[#allocation2 + $0x48] sm:$0xff]
  %v163 = vld [vmem:[#allocation2 + $0x50] sm:$0xff]
  %v164 = vld [vmem:[#allocation2 + $0x58] sm:$0xff]
  %v165 = vld [vmem:[#allocation2 + $0x60] sm:$0xff]
  %v166 = vld [vmem:[#allocation2 + $0x68] sm:$0xff]
  %v167 = vld [vmem:[#allocation2 + $0x70] sm:$0xff]
  %v168 = vld [vmem:[#allocation2 + $0x78] sm:$0xff]
  %v169 = vld [vmem:[#allocation2 + $0x80] sm:$0xff]
  %v170 = vld [vmem:[#allocation2 + $0x88] sm:$0xff]
  %v171 = vld [vmem:[#allocation2 + $0x90] sm:$0xff]
  %v172 = vld [vmem:[#allocation2 + $0x98] sm:$0xff]
  %v173 = vld [vmem:[#allocation2 + $0xa0] sm:$0xff]
  %v174 = vld [vmem:[#allocation2 + $0xa8] sm:$0xff]
  %v175 = vld [vmem:[#allocation2 + $0xb0] sm:$0xff]
  %v176 = vld [vmem:[#allocation2 + $0xb8] sm:$0xff]
  %v177 = vld [vmem:[#allocation2 + $0xc0] sm:$0xff]
  %v178 = vld [vmem:[#allocation2 + $0xc8] sm:$0xff]
  %v179 = vld [vmem:[#allocation2 + $0xd0] sm:$0xff]
  %v180 = vld [vmem:[#allocation2 + $0xd8] sm:$0xff]
  %v181 = vld [vmem:[#allocation2 + $0xe0] sm:$0xff]
  %v182 = vld [vmem:[#allocation2 + $0xe8] sm:$0xff]
  %v183 = vld [vmem:[#allocation2 + $0xf0] sm:$0xff]
  %v184 = vld [vmem:[#allocation2 + $0xf8] sm:$0xff]
  %v185 = vld [vmem:[#allocation2 + $0x100] sm:$0xff]
  %v186 = vld [vmem:[#allocation2 + $0x108] sm:$0xff]
  %v187 = vld [vmem:[#allocation2 + $0x110] sm:$0xff]
  %v188 = vld [vmem:[#allocation2 + $0x118] sm:$0xff]
  %v189 = vld [vmem:[#allocation2 + $0x120] sm:$0xff]
  %v190 = vld [vmem:[#allocation2 + $0x128] sm:$0xff]
  %v191 = vld [vmem:[#allocation2 + $0x130] sm:$0xff]
  %v192 = vld [vmem:[#allocation2 + $0x138] sm:$0xff]
  %v193 = vld [vmem:[#allocation2 + $0x140] sm:$0xff]
  %v194 = vld [vmem:[#allocation2 + $0x148] sm:$0xff]
  %v195 = vld [vmem:[#allocation2 + $0x150] sm:$0xff]
  %v196 = vld [vmem:[#allocation2 + $0x158] sm:$0xff]
  %v197 = vld [vmem:[#allocation2 + $0x160] sm:$0xff]
  %v198 = vld [vmem:[#allocation2 + $0x168] sm:$0xff]
  %v199 = vld [vmem:[#allocation2 + $0x170] sm:$0xff]
  %v200 = vld [vmem:[#allocation2 + $0x178] sm:$0xff]
  %v201 = vld [vmem:[#allocation2 + $0x180] sm:$0xff]
  %v202 = vld [vmem:[#allocation2 + $0x188] sm:$0xff]
  %v203 = vld [vmem:[#allocation2 + $0x190] sm:$0xff]
  %v204 = vld [vmem:[#allocation2 + $0x198] sm:$0xff]
  %v205 = vld [vmem:[#allocation2 + $0x1a0] sm:$0xff]
  %v206 = vld [vmem:[#allocation2 + $0x1a8] sm:$0xff]
  %v207 = vld [vmem:[#allocation2 + $0x1b0] sm:$0xff]
  %v208 = vld [vmem:[#allocation2 + $0x1b8] sm:$0xff]
  %v209 = vld [vmem:[#allocation2 + $0x1c0] sm:$0xff]
  %v210 = vld [vmem:[#allocation2 + $0x1c8] sm:$0xff]
  %v211 = vld [vmem:[#allocation2 + $0x1d0] sm:$0xff]
  %v212 = vld [vmem:[#allocation2 + $0x1d8] sm:$0xff]
  %v213 = vld [vmem:[#allocation2 + $0x1e0] sm:$0xff]
  %v214 = vld [vmem:[#allocation2 + $0x1e8] sm:$0xff]
  %v215 = vld [vmem:[#allocation2 + $0x1f0] sm:$0xff]
  %v216 = vld [vmem:[#allocation2 + $0x1f8] sm:$0xff]
  %v217 = vld [vmem:[#allocation2 + $0x200] sm:$0xff]
  %v218 = vld [vmem:[#allocation2 + $0x208] sm:$0xff]
  %v219 = vld [vmem:[#allocation2 + $0x210] sm:$0xff]
  %v220 = vld [vmem:[#allocation2 + $0x218] sm:$0xff]
  %v221 = vld [vmem:[#allocation2 + $0x220] sm:$0xff]
  %v222 = vld [vmem:[#allocation2 + $0x228] sm:$0xff]
  %v223 = vld [vmem:[#allocation2 + $0x230] sm:$0xff]
  %v224 = vld [vmem:[#allocation2 + $0x238] sm:$0xff]
  %v225 = vld [vmem:[#allocation2 + $0x240] sm:$0xff]
  %v226 = vld [vmem:[#allocation2 + $0x248] sm:$0xff]
  %v227 = vld [vmem:[#allocation2 + $0x250] sm:$0xff]
  %v228 = vld [vmem:[#allocation2 + $0x258] sm:$0xff]
  %v229 = vld [vmem:[#allocation2 + $0x260] sm:$0xff]
  %v230 = vld [vmem:[#allocation2 + $0x268] sm:$0xff]
  %v231 = vld [vmem:[#allocation2 + $0x270] sm:$0xff]
  %v232 = vld [vmem:[#allocation2 + $0x278] sm:$0xff]
  %v233 = vld [vmem:[#allocation2 + $0x280] sm:$0xff]
  %v234 = vld [vmem:[#allocation2 + $0x288] sm:$0xff]
  %v235 = vld [vmem:[#allocation2 + $0x290] sm:$0xff]
  %v236 = vld [vmem:[#allocation2 + $0x298] sm:$0xff]
  %v237 = vld [vmem:[#allocation2 + $0x2a0] sm:$0xff]
  %v238 = vld [vmem:[#allocation2 + $0x2a8] sm:$0xff]
  %v239 = vld [vmem:[#allocation2 + $0x2b0] sm:$0xff]
  %v240 = vld [vmem:[#allocation2 + $0x2b8] sm:$0xff]
  %v241 = vld [vmem:[#allocation2 + $0x2c0] sm:$0xff]
  %v242 = vld [vmem:[#allocation2 + $0x2c8] sm:$0xff]
  %v243 = vld [vmem:[#allocation2 + $0x2d0] sm:$0xff]
  %v244 = vld [vmem:[#allocation2 + $0x2d8] sm:$0xff]
  %v245 = vld [vmem:[#allocation2 + $0x2e0] sm:$0xff]
  %v246 = vld [vmem:[#allocation2 + $0x2e8] sm:$0xff]
  %v247 = vld [vmem:[#allocation2 + $0x2f0] sm:$0xff]
  %v248 = vld [vmem:[#allocation2 + $0x2f8] sm:$0xff]
  %v249 = vld [vmem:[#allocation2 + $0x300] sm:$0xff]
  %v250 = vld [vmem:[#allocation2 + $0x308] sm:$0xff]
  %v251 = vld [vmem:[#allocation2 + $0x310] sm:$0xff]
  %v252 = vld [vmem:[#allocation2 + $0x318] sm:$0xff]
  %v253 = vld [vmem:[#allocation2 + $0x320] sm:$0xff]
  %v254 = vld [vmem:[#allocation2 + $0x328] sm:$0xff]
  %v255 = vld [vmem:[#allocation2 + $0x330] sm:$0xff]
  %v256 = vld [vmem:[#allocation2 + $0x338] sm:$0xff]
  %v257 = vld [vmem:[#allocation2 + $0x340] sm:$0xff]
  %v258 = vld [vmem:[#allocation2 + $0x348] sm:$0xff]
  %v259 = vld [vmem:[#allocation2 + $0x350] sm:$0xff]
  %v260 = vld [vmem:[#allocation2 + $0x358] sm:$0xff]
  %v261 = vld [vmem:[#allocation2 + $0x360] sm:$0xff]
  %v262 = vld [vmem:[#allocation2 + $0x368] sm:$0xff]
  %v263 = vld [vmem:[#allocation2 + $0x370] sm:$0xff]
  %v264 = vld [vmem:[#allocation2 + $0x378] sm:$0xff]
  %v265 = vld [vmem:[#allocation2 + $0x380] sm:$0xff]
  %v266 = vld [vmem:[#allocation2 + $0x388] sm:$0xff]
  %v267 = vld [vmem:[#allocation2 + $0x390] sm:$0xff]
  %v268 = vld [vmem:[#allocation2 + $0x398] sm:$0xff]
  %v269 = vld [vmem:[#allocation2 + $0x3a0] sm:$0xff]
  %v270 = vld [vmem:[#allocation2 + $0x3a8] sm:$0xff]
  %v271 = vld [vmem:[#allocation2 + $0x3b0] sm:$0xff]
  %v272 = vld [vmem:[#allocation2 + $0x3b8] sm:$0xff]
  %v273 = vld [vmem:[#allocation2 + $0x3c0] sm:$0xff]
  %v274 = vld [vmem:[#allocation2 + $0x3c8] sm:$0xff]
  %v275 = vld [vmem:[#allocation2 + $0x3d0] sm:$0xff]
  %v276 = vld [vmem:[#allocation2 + $0x3d8] sm:$0xff]
  %v277 = vld [vmem:[#allocation2 + $0x3e0] sm:$0xff]
  %v278 = vld [vmem:[#allocation2 + $0x3e8] sm:$0xff]
  %v279 = vld [vmem:[#allocation2 + $0x3f0] sm:$0xff]
  %v280 = vld [vmem:[#allocation2 + $0x3f8] sm:$0xff]
  %v281 = vld [vmem:[%s0] sm:$0xff]
  %v282 = vld [vmem:[%s0 + $0x8] sm:$0xff]
  %v283 = vld [vmem:[%s0 + $0x10] sm:$0xff]
  %v284 = vld [vmem:[%s0 + $0x18] sm:$0xff]
  %v285 = vld [vmem:[%s0 + $0x20] sm:$0xff]
  %v286 = vld [vmem:[%s0 + $0x28] sm:$0xff]
  %v287 = vld [vmem:[%s0 + $0x30] sm:$0xff]
  %v288 = vld [vmem:[%s0 + $0x38] sm:$0xff]
  %v289 = vld [vmem:[%s0 + $0x40] sm:$0xff]
  %v290 = vld [vmem:[%s0 + $0x48] sm:$0xff]
  %v291 = vld [vmem:[%s0 + $0x50] sm:$0xff]
  %v292 = vld [vmem:[%s0 + $0x58] sm:$0xff]
  %v293 = vld [vmem:[%s0 + $0x60] sm:$0xff]
  %v294 = vld [vmem:[%s0 + $0x68] sm:$0xff]
  %v295 = vld [vmem:[%s0 + $0x70] sm:$0xff]
  %v296 = vld [vmem:[%s0 + $0x78] sm:$0xff]
  %v297 = vld [vmem:[%s0 + $0x80] sm:$0xff]
  %v298 = vld [vmem:[%s0 + $0x88] sm:$0xff]
  %v299 = vld [vmem:[%s0 + $0x90] sm:$0xff]
  %v300 = vld [vmem:[%s0 + $0x98] sm:$0xff]
  %v301 = vld [vmem:[%s0 + $0xa0] sm:$0xff]
  %v302 = vld [vmem:[%s0 + $0xa8] sm:$0xff]
  %v303 = vld [vmem:[%s0 + $0xb0] sm:$0xff]
  %v304 = vld [vmem:[%s0 + $0xb8] sm:$0xff]
  %v305 = vld [vmem:[%s0 + $0xc0] sm:$0xff]
  %v306 = vld [vmem:[%s0 + $0xc8] sm:$0xff]
  %v307 = vld [vmem:[%s0 + $0xd0] sm:$0xff]
  %v308 = vld [vmem:[%s0 + $0xd8] sm:$0xff]
  %v309 = vld [vmem:[%s0 + $0xe0] sm:$0xff]
  %v310 = vld [vmem:[%s0 + $0xe8] sm:$0xff]
  %v311 = vld [vmem:[%s0 + $0xf0] sm:$0xff]
  %v312 = vld [vmem:[%s0 + $0xf8] sm:$0xff]
  %v313 = vld [vmem:[%s1] sm:$0xff]
  %v314 = vld [vmem:[%s1 + $0x8] sm:$0xff]
  %v315 = vld [vmem:[%s1 + $0x10] sm:$0xff]
  %v316 = vld [vmem:[%s1 + $0x18] sm:$0xff]
  %v317 = vld [vmem:[%s1 + $0x20] sm:$0xff]
  %v318 = vld [vmem:[%s1 + $0x28] sm:$0xff]
  %v319 = vld [vmem:[%s1 + $0x30] sm:$0xff]
  %v320 = vld [vmem:[%s1 + $0x38] sm:$0xff]
  %v321 = vld [vmem:[%s1 + $0x40] sm:$0xff]
  %v322 = vld [vmem:[%s1 + $0x48] sm:$0xff]
  %v323 = vld [vmem:[%s1 + $0x50] sm:$0xff]
  %v324 = vld [vmem:[%s1 + $0x58] sm:$0xff]
  %v325 = vld [vmem:[%s1 + $0x60] sm:$0xff]
  %v326 = vld [vmem:[%s1 + $0x68] sm:$0xff]
  %v327 = vld [vmem:[%s1 + $0x70] sm:$0xff]
  %v328 = vld [vmem:[%s1 + $0x78] sm:$0xff]
  %v329 = vld [vmem:[%s1 + $0x80] sm:$0xff]
  %v330 = vld [vmem:[%s1 + $0x88] sm:$0xff]
  %v331 = vld [vmem:[%s1 + $0x90] sm:$0xff]
  %v332 = vld [vmem:[%s1 + $0x98] sm:$0xff]
  %v333 = vld [vmem:[%s1 + $0xa0] sm:$0xff]
  %v334 = vld [vmem:[%s1 + $0xa8] sm:$0xff]
  %v335 = vld [vmem:[%s1 + $0xb0] sm:$0xff]
  %v336 = vld [vmem:[%s1 + $0xb8] sm:$0xff]
  %v337 = vld [vmem:[%s1 + $0xc0] sm:$0xff]
  %v338 = vld [vmem:[%s1 + $0xc8] sm:$0xff]
  %v339 = vld [vmem:[%s1 + $0xd0] sm:$0xff]
  %v340 = vld [vmem:[%s1 + $0xd8] sm:$0xff]
  %v341 = vld [vmem:[%s1 + $0xe0] sm:$0xff]
  %v342 = vld [vmem:[%s1 + $0xe8] sm:$0xff]
  %v343 = vld [vmem:[%s1 + $0xf0] sm:$0xff]
  %v344 = vld [vmem:[%s1 + $0xf8] sm:$0xff]
  %v345 = vld [vmem:[%s1 + $0x100] sm:$0xff]
  %v346 = vld [vmem:[%s1 + $0x108] sm:$0xff]
  %v347 = vld [vmem:[%s1 + $0x110] sm:$0xff]
  %v348 = vld [vmem:[%s1 + $0x118] sm:$0xff]
  %v349 = vld [vmem:[%s1 + $0x120] sm:$0xff]
  %v350 = vld [vmem:[%s1 + $0x128] sm:$0xff]
  %v351 = vld [vmem:[%s1 + $0x130] sm:$0xff]
  %v352 = vld [vmem:[%s1 + $0x138] sm:$0xff]
  %v353 = vld [vmem:[%s1 + $0x140] sm:$0xff]
  %v354 = vld [vmem:[%s1 + $0x148] sm:$0xff]
  %v355 = vld [vmem:[%s1 + $0x150] sm:$0xff]
  %v356 = vld [vmem:[%s1 + $0x158] sm:$0xff]
  %v357 = vld [vmem:[%s1 + $0x160] sm:$0xff]
  %v358 = vld [vmem:[%s1 + $0x168] sm:$0xff]
  %v359 = vld [vmem:[%s1 + $0x170] sm:$0xff]
  %v360 = vld [vmem:[%s1 + $0x178] sm:$0xff]
  %v361 = vld [vmem:[%s1 + $0x180] sm:$0xff]
  %v362 = vld [vmem:[%s1 + $0x188] sm:$0xff]
  %v363 = vld [vmem:[%s1 + $0x190] sm:$0xff]
  %v364 = vld [vmem:[%s1 + $0x198] sm:$0xff]
  %v365 = vld [vmem:[%s1 + $0x1a0] sm:$0xff]
  %v366 = vld [vmem:[%s1 + $0x1a8] sm:$0xff]
  %v367 = vld [vmem:[%s1 + $0x1b0] sm:$0xff]
  %v368 = vld [vmem:[%s1 + $0x1b8] sm:$0xff]
  %v369 = vld [vmem:[%s1 + $0x1c0] sm:$0xff]
  %v370 = vld [vmem:[%s1 + $0x1c8] sm:$0xff]
  %v371 = vld [vmem:[%s1 + $0x1d0] sm:$0xff]
  %v372 = vld [vmem:[%s1 + $0x1d8] sm:$0xff]
  %v373 = vld [vmem:[%s1 + $0x1e0] sm:$0xff]
  %v374 = vld [vmem:[%s1 + $0x1e8] sm:$0xff]
  %v375 = vld [vmem:[%s1 + $0x1f0] sm:$0xff]
  %v376 = vld [vmem:[%s1 + $0x1f8] sm:$0xff]
  %v409 = vunpack.c.l.b16 %v281
  %v410 = vunpack.c.h.b16 %v281
  %v411 = vunpack.c.l.b16 %v282
  %v412 = vunpack.c.h.b16 %v282
  %v413 = vunpack.c.l.b16 %v283
  %v414 = vunpack.c.h.b16 %v283
  %v415 = vunpack.c.l.b16 %v284
  %v416 = vunpack.c.h.b16 %v284
  %v417 = vunpack.c.l.b16 %v285
  %v418 = vunpack.c.h.b16 %v285
  %v419 = vunpack.c.l.b16 %v286
  %v420 = vunpack.c.h.b16 %v286
  %v421 = vunpack.c.l.b16 %v287
  %v422 = vunpack.c.h.b16 %v287
  %v423 = vunpack.c.l.b16 %v288
  %v424 = vunpack.c.h.b16 %v288
  %v425 = vunpack.c.l.b16 %v289
  %v426 = vunpack.c.h.b16 %v289
  %v427 = vunpack.c.l.b16 %v290
  %v428 = vunpack.c.h.b16 %v290
  %v429 = vunpack.c.l.b16 %v291
  %v430 = vunpack.c.h.b16 %v291
  %v431 = vunpack.c.l.b16 %v292
  %v432 = vunpack.c.h.b16 %v292
  %v433 = vunpack.c.l.b16 %v293
  %v434 = vunpack.c.h.b16 %v293
  %v435 = vunpack.c.l.b16 %v294
  %v436 = vunpack.c.h.b16 %v294
  %v437 = vunpack.c.l.b16 %v295
  %v438 = vunpack.c.h.b16 %v295
  %v439 = vunpack.c.l.b16 %v296
  %v440 = vunpack.c.h.b16 %v296
  %v441 = vunpack.c.l.b16 %v297
  %v442 = vunpack.c.h.b16 %v297
  %v443 = vunpack.c.l.b16 %v298
  %v444 = vunpack.c.h.b16 %v298
  %v445 = vunpack.c.l.b16 %v299
  %v446 = vunpack.c.h.b16 %v299
  %v447 = vunpack.c.l.b16 %v300
  %v448 = vunpack.c.h.b16 %v300
  %v449 = vunpack.c.l.b16 %v301
  %v450 = vunpack.c.h.b16 %v301
  %v451 = vunpack.c.l.b16 %v302
  %v452 = vunpack.c.h.b16 %v302
  %v453 = vunpack.c.l.b16 %v303
  %v454 = vunpack.c.h.b16 %v303
  %v455 = vunpack.c.l.b16 %v304
  %v456 = vunpack.c.h.b16 %v304
  %v457 = vunpack.c.l.b16 %v305
  %v458 = vunpack.c.h.b16 %v305
  %v459 = vunpack.c.l.b16 %v306
  %v460 = vunpack.c.h.b16 %v306
  %v461 = vunpack.c.l.b16 %v307
  %v462 = vunpack.c.h.b16 %v307
  %v463 = vunpack.c.l.b16 %v308
  %v464 = vunpack.c.h.b16 %v308
  %v465 = vunpack.c.l.b16 %v309
  %v466 = vunpack.c.h.b16 %v309
  %v467 = vunpack.c.l.b16 %v310
  %v468 = vunpack.c.h.b16 %v310
  %v469 = vunpack.c.l.b16 %v311
  %v470 = vunpack.c.h.b16 %v311
  %v471 = vunpack.c.l.b16 %v312
  %v472 = vunpack.c.h.b16 %v312
  %v473 = vpack.c.b16 %v411, %v409
  %v474 = vpack.c.b16 %v412, %v410
  %v475 = vpack.c.b16 %v415, %v413
  %v476 = vpack.c.b16 %v416, %v414
  %v477 = vpack.c.b16 %v419, %v417
  %v478 = vpack.c.b16 %v420, %v418
  %v479 = vpack.c.b16 %v423, %v421
  %v480 = vpack.c.b16 %v424, %v422
  %v481 = vpack.c.b16 %v427, %v425
  %v482 = vpack.c.b16 %v428, %v426
  %v483 = vpack.c.b16 %v431, %v429
  %v484 = vpack.c.b16 %v432, %v430
  %v485 = vpack.c.b16 %v435, %v433
  %v486 = vpack.c.b16 %v436, %v434
  %v487 = vpack.c.b16 %v439, %v437
  %v488 = vpack.c.b16 %v440, %v438
  %v489 = vpack.c.b16 %v443, %v441
  %v490 = vpack.c.b16 %v444, %v442
  %v491 = vpack.c.b16 %v447, %v445
  %v492 = vpack.c.b16 %v448, %v446
  %v493 = vpack.c.b16 %v451, %v449
  %v494 = vpack.c.b16 %v452, %v450
  %v495 = vpack.c.b16 %v455, %v453
  %v496 = vpack.c.b16 %v456, %v454
  %v497 = vpack.c.b16 %v459, %v457
  %v498 = vpack.c.b16 %v460, %v458
  %v499 = vpack.c.b16 %v463, %v461
  %v500 = vpack.c.b16 %v464, %v462
  %v501 = vpack.c.b16 %v467, %v465
  %v502 = vpack.c.b16 %v468, %v466
  %v503 = vpack.c.b16 %v471, %v469
  %v504 = vpack.c.b16 %v472, %v470
  %v601 = vunpack.c.l.b16 %v313
  %v602 = vunpack.c.h.b16 %v313
  %v603 = vunpack.c.l.b16 %v314
  %v604 = vunpack.c.h.b16 %v314
  %v605 = vunpack.c.l.b16 %v315
  %v606 = vunpack.c.h.b16 %v315
  %v607 = vunpack.c.l.b16 %v316
  %v608 = vunpack.c.h.b16 %v316
  %v609 = vunpack.c.l.b16 %v317
  %v610 = vunpack.c.h.b16 %v317
  %v611 = vunpack.c.l.b16 %v318
  %v612 = vunpack.c.h.b16 %v318
  %v613 = vunpack.c.l.b16 %v319
  %v614 = vunpack.c.h.b16 %v319
  %v615 = vunpack.c.l.b16 %v320
  %v616 = vunpack.c.h.b16 %v320
  %v617 = vunpack.c.l.b16 %v321
  %v618 = vunpack.c.h.b16 %v321
  %v619 = vunpack.c.l.b16 %v322
  %v620 = vunpack.c.h.b16 %v322
  %v621 = vunpack.c.l.b16 %v323
  %v622 = vunpack.c.h.b16 %v323
  %v623 = vunpack.c.l.b16 %v324
  %v624 = vunpack.c.h.b16 %v324
  %v625 = vunpack.c.l.b16 %v325
  %v626 = vunpack.c.h.b16 %v325
  %v627 = vunpack.c.l.b16 %v326
  %v628 = vunpack.c.h.b16 %v326
  %v629 = vunpack.c.l.b16 %v327
  %v630 = vunpack.c.h.b16 %v327
  %v631 = vunpack.c.l.b16 %v328
  %v632 = vunpack.c.h.b16 %v328
  %v633 = vunpack.c.l.b16 %v329
  %v634 = vunpack.c.h.b16 %v329
  %v635 = vunpack.c.l.b16 %v330
  %v636 = vunpack.c.h.b16 %v330
  %v637 = vunpack.c.l.b16 %v331
  %v638 = vunpack.c.h.b16 %v331
  %v639 = vunpack.c.l.b16 %v332
  %v640 = vunpack.c.h.b16 %v332
  %v641 = vunpack.c.l.b16 %v333
  %v642 = vunpack.c.h.b16 %v333
  %v643 = vunpack.c.l.b16 %v334
  %v644 = vunpack.c.h.b16 %v334
  %v645 = vunpack.c.l.b16 %v335
  %v646 = vunpack.c.h.b16 %v335
  %v647 = vunpack.c.l.b16 %v336
  %v648 = vunpack.c.h.b16 %v336
  %v649 = vunpack.c.l.b16 %v337
  %v650 = vunpack.c.h.b16 %v337
  %v651 = vunpack.c.l.b16 %v338
  %v652 = vunpack.c.h.b16 %v338
  %v653 = vunpack.c.l.b16 %v339
  %v654 = vunpack.c.h.b16 %v339
  %v655 = vunpack.c.l.b16 %v340
  %v656 = vunpack.c.h.b16 %v340
  %v657 = vunpack.c.l.b16 %v341
  %v658 = vunpack.c.h.b16 %v341
  %v659 = vunpack.c.l.b16 %v342
  %v660 = vunpack.c.h.b16 %v342
  %v661 = vunpack.c.l.b16 %v343
  %v662 = vunpack.c.h.b16 %v343
  %v663 = vunpack.c.l.b16 %v344
  %v664 = vunpack.c.h.b16 %v344
  %v665 = vunpack.c.l.b16 %v345
  %v666 = vunpack.c.h.b16 %v345
  %v667 = vunpack.c.l.b16 %v346
  %v668 = vunpack.c.h.b16 %v346
  %v669 = vunpack.c.l.b16 %v347
  %v670 = vunpack.c.h.b16 %v347
  %v671 = vunpack.c.l.b16 %v348
  %v672 = vunpack.c.h.b16 %v348
  %v673 = vunpack.c.l.b16 %v349
  %v674 = vunpack.c.h.b16 %v349
  %v675 = vunpack.c.l.b16 %v350
  %v676 = vunpack.c.h.b16 %v350
  %v677 = vunpack.c.l.b16 %v351
  %v678 = vunpack.c.h.b16 %v351
  %v679 = vunpack.c.l.b16 %v352
  %v680 = vunpack.c.h.b16 %v352
  %v681 = vunpack.c.l.b16 %v353
  %v682 = vunpack.c.h.b16 %v353
  %v683 = vunpack.c.l.b16 %v354
  %v684 = vunpack.c.h.b16 %v354
  %v685 = vunpack.c.l.b16 %v355
  %v686 = vunpack.c.h.b16 %v355
  %v687 = vunpack.c.l.b16 %v356
  %v688 = vunpack.c.h.b16 %v356
  %v689 = vunpack.c.l.b16 %v357
  %v690 = vunpack.c.h.b16 %v357
  %v691 = vunpack.c.l.b16 %v358
  %v692 = vunpack.c.h.b16 %v358
  %v693 = vunpack.c.l.b16 %v359
  %v694 = vunpack.c.h.b16 %v359
  %v695 = vunpack.c.l.b16 %v360
  %v696 = vunpack.c.h.b16 %v360
  %v697 = vunpack.c.l.b16 %v361
  %v698 = vunpack.c.h.b16 %v361
  %v699 = vunpack.c.l.b16 %v362
  %v700 = vunpack.c.h.b16 %v362
  %v701 = vunpack.c.l.b16 %v363
  %v702 = vunpack.c.h.b16 %v363
  %v703 = vunpack.c.l.b16 %v364
  %v704 = vunpack.c.h.b16 %v364
  %v705 = vunpack.c.l.b16 %v365
  %v706 = vunpack.c.h.b16 %v365
  %v707 = vunpack.c.l.b16 %v366
  %v708 = vunpack.c.h.b16 %v366
  %v709 = vunpack.c.l.b16 %v367
  %v710 = vunpack.c.h.b16 %v367
  %v711 = vunpack.c.l.b16 %v368
  %v712 = vunpack.c.h.b16 %v368
  %v713 = vunpack.c.l.b16 %v369
  %v714 = vunpack.c.h.b16 %v369
  %v715 = vunpack.c.l.b16 %v370
  %v716 = vunpack.c.h.b16 %v370
  %v717 = vunpack.c.l.b16 %v371
  %v718 = vunpack.c.h.b16 %v371
  %v719 = vunpack.c.l.b16 %v372
  %v720 = vunpack.c.h.b16 %v372
  %v721 = vunpack.c.l.b16 %v373
  %v722 = vunpack.c.h.b16 %v373
  %v723 = vunpack.c.l.b16 %v374
  %v724 = vunpack.c.h.b16 %v374
  %v725 = vunpack.c.l.b16 %v375
  %v726 = vunpack.c.h.b16 %v375
  %v727 = vunpack.c.l.b16 %v376
  %v728 = vunpack.c.h.b16 %v376
  %v729 = vpack.c.b16 %v605, %v601
  %v730 = vpack.c.b16 %v606, %v602
  %v731 = vpack.c.b16 %v607, %v603
  %v732 = vpack.c.b16 %v608, %v604
  %v733 = vpack.c.b16 %v613, %v609
  %v734 = vpack.c.b16 %v614, %v610
  %v735 = vpack.c.b16 %v615, %v611
  %v736 = vpack.c.b16 %v616, %v612
  %v737 = vpack.c.b16 %v621, %v617
  %v738 = vpack.c.b16 %v622, %v618
  %v739 = vpack.c.b16 %v623, %v619
  %v740 = vpack.c.b16 %v624, %v620
  %v741 = vpack.c.b16 %v629, %v625
  %v742 = vpack.c.b16 %v630, %v626
  %v743 = vpack.c.b16 %v631, %v627
  %v744 = vpack.c.b16 %v632, %v628
  %v745 = vpack.c.b16 %v637, %v633
  %v746 = vpack.c.b16 %v638, %v634
  %v747 = vpack.c.b16 %v639, %v635
  %v748 = vpack.c.b16 %v640, %v636
  %v749 = vpack.c.b16 %v645, %v641
  %v750 = vpack.c.b16 %v646, %v642
  %v751 = vpack.c.b16 %v647, %v643
  %v752 = vpack.c.b16 %v648, %v644
  %v753 = vpack.c.b16 %v653, %v649
  %v754 = vpack.c.b16 %v654, %v650
  %v755 = vpack.c.b16 %v655, %v651
  %v756 = vpack.c.b16 %v656, %v652
  %v757 = vpack.c.b16 %v661, %v657
  %v758 = vpack.c.b16 %v662, %v658
  %v759 = vpack.c.b16 %v663, %v659
  %v760 = vpack.c.b16 %v664, %v660
  %v761 = vpack.c.b16 %v669, %v665
  %v762 = vpack.c.b16 %v670, %v666
  %v763 = vpack.c.b16 %v671, %v667
  %v764 = vpack.c.b16 %v672, %v668
  %v765 = vpack.c.b16 %v677, %v673
  %v766 = vpack.c.b16 %v678, %v674
  %v767 = vpack.c.b16 %v679, %v675
  %v768 = vpack.c.b16 %v680, %v676
  %v769 = vpack.c.b16 %v685, %v681
  %v770 = vpack.c.b16 %v686, %v682
  %v771 = vpack.c.b16 %v687, %v683
  %v772 = vpack.c.b16 %v688, %v684
  %v773 = vpack.c.b16 %v693, %v689
  %v774 = vpack.c.b16 %v694, %v690
  %v775 = vpack.c.b16 %v695, %v691
  %v776 = vpack.c.b16 %v696, %v692
  %v777 = vpack.c.b16 %v701, %v697
  %v778 = vpack.c.b16 %v702, %v698
  %v779 = vpack.c.b16 %v703, %v699
  %v780 = vpack.c.b16 %v704, %v700
  %v781 = vpack.c.b16 %v709, %v705
  %v782 = vpack.c.b16 %v710, %v706
  %v783 = vpack.c.b16 %v711, %v707
  %v784 = vpack.c.b16 %v712, %v708
  %v785 = vpack.c.b16 %v717, %v713
  %v786 = vpack.c.b16 %v718, %v714
  %v787 = vpack.c.b16 %v719, %v715
  %v788 = vpack.c.b16 %v720, %v716
  %v789 = vpack.c.b16 %v725, %v721
  %v790 = vpack.c.b16 %v726, %v722
  %v791 = vpack.c.b16 %v727, %v723
  %v792 = vpack.c.b16 %v728, %v724
  %857 = vmatprep.subr.bf16.mxu0 %v730
  %858 = vmatpush1.bf16.msra.mxu0 %v729
  %859 = vmatprep.subr.bf16.mxu0 %v734
  %860 = vmatpush1.bf16.msra.mxu0 %v733
  %861 = vmatprep.subr.bf16.mxu0 %v738
  %862 = vmatpush1.bf16.msra.mxu0 %v737
  %863 = vmatprep.subr.bf16.mxu0 %v742
  %864 = vmatpush1.bf16.msra.mxu0 %v741
  %865 = vmatprep.subr.bf16.mxu0 %v746
  %866 = vmatpush1.bf16.msra.mxu0 %v745
  %867 = vmatprep.subr.bf16.mxu0 %v750
  %868 = vmatpush1.bf16.msra.mxu0 %v749
  %869 = vmatprep.subr.bf16.mxu0 %v754
  %870 = vmatpush1.bf16.msra.mxu0 %v753
  %871 = vmatprep.subr.bf16.mxu0 %v758
  %872 = vmatpush1.bf16.msra.mxu0 %v757
  %873 = vmatprep.subr.bf16.mxu0 %v762
  %874 = vmatpush1.bf16.msra.mxu0 %v761
  %875 = vmatprep.subr.bf16.mxu0 %v766
  %876 = vmatpush1.bf16.msra.mxu0 %v765
  %877 = vmatprep.subr.bf16.mxu0 %v770
  %878 = vmatpush1.bf16.msra.mxu0 %v769
  %879 = vmatprep.subr.bf16.mxu0 %v774
  %880 = vmatpush1.bf16.msra.mxu0 %v773
  %881 = vmatprep.subr.bf16.mxu0 %v778
  %882 = vmatpush1.bf16.msra.mxu0 %v777
  %883 = vmatprep.subr.bf16.mxu0 %v782
  %884 = vmatpush1.bf16.msra.mxu0 %v781
  %885 = vmatprep.subr.bf16.mxu0 %v786
  %886 = vmatpush1.bf16.msra.mxu0 %v785
  %887 = vmatprep.subr.bf16.mxu0 %v790
  %888 = vmatpush1.bf16.msra.mxu0 %v789
  %889 = vmatprep.mubr.bf16.mxu0 %v474
  %890 = vmatmul.mubr.bf16.gmra.mrb[0].mxu0 %v473
  %v891 = vpop.f32.mrb[0].mxu0
  %v892 = vadd.f32 0.0, %v891
  %v893 = vpop.f32.mrb[0].mxu0
  %v894 = vadd.f32 0.0, %v893
  %v895 = vpop.f32.mrb[0].mxu0
  %v896 = vadd.f32 0.0, %v895
  %v897 = vpop.f32.mrb[0].mxu0
  %v898 = vadd.f32 0.0, %v897
  %899 = vmatprep.mubr.bf16.mxu0 %v476
  %900 = vmatmul.mubr.bf16.gmra.mrb[0].mxu0 %v475
  %v901 = vpop.f32.mrb[0].mxu0
  %v902 = vadd.f32 0.0, %v901
  %v903 = vpop.f32.mrb[0].mxu0
  %v904 = vadd.f32 0.0, %v903
  %v905 = vpop.f32.mrb[0].mxu0
  %v906 = vadd.f32 0.0, %v905
  %v907 = vpop.f32.mrb[0].mxu0
  %v908 = vadd.f32 0.0, %v907
  %909 = vmatprep.mubr.bf16.mxu0 %v478
  %910 = vmatmul.mubr.bf16.gmra.mrb[0].mxu0 %v477
  %v911 = vpop.f32.mrb[0].mxu0
  %v912 = vadd.f32 0.0, %v911
  %v913 = vpop.f32.mrb[0].mxu0
  %v914 = vadd.f32 0.0, %v913
  %v915 = vpop.f32.mrb[0].mxu0
  %v916 = vadd.f32 0.0, %v915
  %v917 = vpop.f32.mrb[0].mxu0
  %v918 = vadd.f32 0.0, %v917
  %919 = vmatprep.mubr.bf16.mxu0 %v480
  %920 = vmatmul.mubr.bf16.gmra.mrb[0].mxu0 %v479
  %v921 = vpop.f32.mrb[0].mxu0
  %v922 = vadd.f32 0.0, %v921
  %v923 = vpop.f32.mrb[0].mxu0
  %v924 = vadd.f32 0.0, %v923
  %v925 = vpop.f32.mrb[0].mxu0
  %v926 = vadd.f32 0.0, %v925
  %v927 = vpop.f32.mrb[0].mxu0
  %v928 = vadd.f32 0.0, %v927
  %929 = vmatprep.mubr.bf16.mxu0 %v482
  %930 = vmatmul.mubr.bf16.gmra.mrb[0].mxu0 %v481
  %v931 = vpop.f32.mrb[0].mxu0
  %v932 = vadd.f32 0.0, %v931
  %v933 = vpop.f32.mrb[0].mxu0
  %v934 = vadd.f32 0.0, %v933
  %v935 = vpop.f32.mrb[0].mxu0
  %v936 = vadd.f32 0.0, %v935
  %v937 = vpop.f32.mrb[0].mxu0
  %v938 = vadd.f32 0.0, %v937
  %939 = vmatprep.mubr.bf16.mxu0 %v484
  %940 = vmatmul.mubr.bf16.gmra.mrb[0].mxu0 %v483
  %v941 = vpop.f32.mrb[0].mxu0
  %v942 = vadd.f32 0.0, %v941
  %v943 = vpop.f32.mrb[0].mxu0
  %v944 = vadd.f32 0.0, %v943
  %v945 = vpop.f32.mrb[0].mxu0
  %v946 = vadd.f32 0.0, %v945
  %v947 = vpop.f32.mrb[0].mxu0
  %v948 = vadd.f32 0.0, %v947
  %949 = vmatprep.mubr.bf16.mxu0 %v486
  %950 = vmatmul.mubr.bf16.gmra.mrb[0].mxu0 %v485
  %v951 = vpop.f32.mrb[0].mxu0
  %v952 = vadd.f32 0.0, %v951
  %v953 = vpop.f32.mrb[0].mxu0
  %v954 = vadd.f32 0.0, %v953
  %v955 = vpop.f32.mrb[0].mxu0
  %v956 = vadd.f32 0.0, %v955
  %v957 = vpop.f32.mrb[0].mxu0
  %v958 = vadd.f32 0.0, %v957
  %959 = vmatprep.mubr.bf16.mxu0 %v488
  %960 = vmatmul.mubr.bf16.gmra.mrb[0].mxu0 %v487
  %v961 = vpop.f32.mrb[0].mxu0
  %v962 = vadd.f32 0.0, %v961
  %v963 = vpop.f32.mrb[0].mxu0
  %v964 = vadd.f32 0.0, %v963
  %v965 = vpop.f32.mrb[0].mxu0
  %v966 = vadd.f32 0.0, %v965
  %v967 = vpop.f32.mrb[0].mxu0
  %v968 = vadd.f32 0.0, %v967
  %969 = vmatprep.mubr.bf16.mxu0 %v490
  %970 = vmatmul.mubr.bf16.gmra.mrb[0].mxu0 %v489
  %v971 = vpop.f32.mrb[0].mxu0
  %v972 = vadd.f32 0.0, %v971
  %v973 = vpop.f32.mrb[0].mxu0
  %v974 = vadd.f32 0.0, %v973
  %v975 = vpop.f32.mrb[0].mxu0
  %v976 = vadd.f32 0.0, %v975
  %v977 = vpop.f32.mrb[0].mxu0
  %v978 = vadd.f32 0.0, %v977
  %979 = vmatprep.mubr.bf16.mxu0 %v492
  %980 = vmatmul.mubr.bf16.gmra.mrb[0].mxu0 %v491
  %v981 = vpop.f32.mrb[0].mxu0
  %v982 = vadd.f32 0.0, %v981
  %v983 = vpop.f32.mrb[0].mxu0
  %v984 = vadd.f32 0.0, %v983
  %v985 = vpop.f32.mrb[0].mxu0
  %v986 = vadd.f32 0.0, %v985
  %v987 = vpop.f32.mrb[0].mxu0
  %v988 = vadd.f32 0.0, %v987
  %989 = vmatprep.mubr.bf16.mxu0 %v494
  %990 = vmatmul.mubr.bf16.gmra.mrb[0].mxu0 %v493
  %v991 = vpop.f32.mrb[0].mxu0
  %v992 = vadd.f32 0.0, %v991
  %v993 = vpop.f32.mrb[0].mxu0
  %v994 = vadd.f32 0.0, %v993
  %v995 = vpop.f32.mrb[0].mxu0
  %v996 = vadd.f32 0.0, %v995
  %v997 = vpop.f32.mrb[0].mxu0
  %v998 = vadd.f32 0.0, %v997
  %999 = vmatprep.mubr.bf16.mxu0 %v496
  %1000 = vmatmul.mubr.bf16.gmra.mrb[0].mxu0 %v495
  %v1001 = vpop.f32.mrb[0].mxu0
  %v1002 = vadd.f32 0.0, %v1001
  %v1003 = vpop.f32.mrb[0].mxu0
  %v1004 = vadd.f32 0.0, %v1003
  %v1005 = vpop.f32.mrb[0].mxu0
  %v1006 = vadd.f32 0.0, %v1005
  %v1007 = vpop.f32.mrb[0].mxu0
  %v1008 = vadd.f32 0.0, %v1007
  %1009 = vmatprep.mubr.bf16.mxu0 %v498
  %1010 = vmatmul.mubr.bf16.gmra.mrb[0].mxu0 %v497
  %v1011 = vpop.f32.mrb[0].mxu0
  %v1012 = vadd.f32 0.0, %v1011
  %v1013 = vpop.f32.mrb[0].mxu0
  %v1014 = vadd.f32 0.0, %v1013
  %v1015 = vpop.f32.mrb[0].mxu0
  %v1016 = vadd.f32 0.0, %v1015
  %v1017 = vpop.f32.mrb[0].mxu0
  %v1018 = vadd.f32 0.0, %v1017
  %1019 = vmatprep.mubr.bf16.mxu0 %v500
  %1020 = vmatmul.mubr.bf16.gmra.mrb[0].mxu0 %v499
  %v1021 = vpop.f32.mrb[0].mxu0
  %v1022 = vadd.f32 0.0, %v1021
  %v1023 = vpop.f32.mrb[0].mxu0
  %v1024 = vadd.f32 0.0, %v1023
  %v1025 = vpop.f32.mrb[0].mxu0
  %v1026 = vadd.f32 0.0, %v1025
  %v1027 = vpop.f32.mrb[0].mxu0
  %v1028 = vadd.f32 0.0, %v1027
  %1029 = vmatprep.mubr.bf16.mxu0 %v502
  %1030 = vmatmul.mubr.bf16.gmra.mrb[0].mxu0 %v501
  %v1031 = vpop.f32.mrb[0].mxu0
  %v1032 = vadd.f32 0.0, %v1031
  %v1033 = vpop.f32.mrb[0].mxu0
  %v1034 = vadd.f32 0.0, %v1033
  %v1035 = vpop.f32.mrb[0].mxu0
  %v1036 = vadd.f32 0.0, %v1035
  %v1037 = vpop.f32.mrb[0].mxu0
  %v1038 = vadd.f32 0.0, %v1037
  %1039 = vmatprep.mubr.bf16.mxu0 %v504
  %1040 = vmatmul.mubr.bf16.gmra.mrb[0].mxu0 %v503
  %v1041 = vpop.f32.mrb[0].mxu0
  %v1042 = vadd.f32 0.0, %v1041
  %v1043 = vpop.f32.mrb[0].mxu0
  %v1044 = vadd.f32 0.0, %v1043
  %v1045 = vpop.f32.mrb[0].mxu0
  %v1046 = vadd.f32 0.0, %v1045
  %v1047 = vpop.f32.mrb[0].mxu0
  %v1048 = vadd.f32 0.0, %v1047
  %1049 = vdwg.mxu0
  %1050 = vmatprep.subr.bf16.mxu0 %v732
  %1051 = vmatpush1.bf16.msra.mxu0 %v731
  %1052 = vmatprep.subr.bf16.mxu0 %v736
  %1053 = vmatpush1.bf16.msra.mxu0 %v735
  %1054 = vmatprep.subr.bf16.mxu0 %v740
  %1055 = vmatpush1.bf16.msra.mxu0 %v739
  %1056 = vmatprep.subr.bf16.mxu0 %v744
  %1057 = vmatpush1.bf16.msra.mxu0 %v743
  %1058 = vmatprep.subr.bf16.mxu0 %v748
  %1059 = vmatpush1.bf16.msra.mxu0 %v747
  %1060 = vmatprep.subr.bf16.mxu0 %v752
  %1061 = vmatpush1.bf16.msra.mxu0 %v751
  %1062 = vmatprep.subr.bf16.mxu0 %v756
  %1063 = vmatpush1.bf16.msra.mxu0 %v755
  %1064 = vmatprep.subr.bf16.mxu0 %v760
  %1065 = vmatpush1.bf16.msra.mxu0 %v759
  %1066 = vmatprep.subr.bf16.mxu0 %v764
  %1067 = vmatpush1.bf16.msra.mxu0 %v763
  %1068 = vmatprep.subr.bf16.mxu0 %v768
  %1069 = vmatpush1.bf16.msra.mxu0 %v767
  %1070 = vmatprep.subr.bf16.mxu0 %v772
  %1071 = vmatpush1.bf16.msra.mxu0 %v771
  %1072 = vmatprep.subr.bf16.mxu0 %v776
  %1073 = vmatpush1.bf16.msra.mxu0 %v775
  %1074 = vmatprep.subr.bf16.mxu0 %v780
  %1075 = vmatpush1.bf16.msra.mxu0 %v779
  %1076 = vmatprep.subr.bf16.mxu0 %v784
  %1077 = vmatpush1.bf16.msra.mxu0 %v783
  %1078 = vmatprep.subr.bf16.mxu0 %v788
  %1079 = vmatpush1.bf16.msra.mxu0 %v787
  %1080 = vmatprep.subr.bf16.mxu0 %v792
  %1081 = vmatpush1.bf16.msra.mxu0 %v791
  %1082 = vmatprep.mubr.bf16.mxu0 %v474
  %1083 = vmatmul.mubr.bf16.gmra.mrb[0].mxu0 %v473
  %v1084 = vpop.f32.mrb[0].mxu0
  %v1085 = vadd.f32 0.0, %v1084
  %v1086 = vpop.f32.mrb[0].mxu0
  %v1087 = vadd.f32 0.0, %v1086
  %v1088 = vpop.f32.mrb[0].mxu0
  %v1089 = vadd.f32 0.0, %v1088
  %v1090 = vpop.f32.mrb[0].mxu0
  %v1091 = vadd.f32 0.0, %v1090
  %1092 = vmatprep.mubr.bf16.mxu0 %v476
  %1093 = vmatmul.mubr.bf16.gmra.mrb[0].mxu0 %v475
  %v1094 = vpop.f32.mrb[0].mxu0
  %v1095 = vadd.f32 0.0, %v1094
  %v1096 = vpop.f32.mrb[0].mxu0
  %v1097 = vadd.f32 0.0, %v1096
  %v1098 = vpop.f32.mrb[0].mxu0
  %v1099 = vadd.f32 0.0, %v1098
  %v1100 = vpop.f32.mrb[0].mxu0
  %v1101 = vadd.f32 0.0, %v1100
  %1102 = vmatprep.mubr.bf16.mxu0 %v478
  %1103 = vmatmul.mubr.bf16.gmra.mrb[0].mxu0 %v477
  %v1104 = vpop.f32.mrb[0].mxu0
  %v1105 = vadd.f32 0.0, %v1104
  %v1106 = vpop.f32.mrb[0].mxu0
  %v1107 = vadd.f32 0.0, %v1106
  %v1108 = vpop.f32.mrb[0].mxu0
  %v1109 = vadd.f32 0.0, %v1108
  %v1110 = vpop.f32.mrb[0].mxu0
  %v1111 = vadd.f32 0.0, %v1110
  %1112 = vmatprep.mubr.bf16.mxu0 %v480
  %1113 = vmatmul.mubr.bf16.gmra.mrb[0].mxu0 %v479
  %v1114 = vpop.f32.mrb[0].mxu0
  %v1115 = vadd.f32 0.0, %v1114
  %v1116 = vpop.f32.mrb[0].mxu0
  %v1117 = vadd.f32 0.0, %v1116
  %v1118 = vpop.f32.mrb[0].mxu0
  %v1119 = vadd.f32 0.0, %v1118
  %v1120 = vpop.f32.mrb[0].mxu0
  %v1121 = vadd.f32 0.0, %v1120
  %1122 = vmatprep.mubr.bf16.mxu0 %v482
  %1123 = vmatmul.mubr.bf16.gmra.mrb[0].mxu0 %v481
  %v1124 = vpop.f32.mrb[0].mxu0
  %v1125 = vadd.f32 0.0, %v1124
  %v1126 = vpop.f32.mrb[0].mxu0
  %v1127 = vadd.f32 0.0, %v1126
  %v1128 = vpop.f32.mrb[0].mxu0
  %v1129 = vadd.f32 0.0, %v1128
  %v1130 = vpop.f32.mrb[0].mxu0
  %v1131 = vadd.f32 0.0, %v1130
  %1132 = vmatprep.mubr.bf16.mxu0 %v484
  %1133 = vmatmul.mubr.bf16.gmra.mrb[0].mxu0 %v483
  %v1134 = vpop.f32.mrb[0].mxu0
  %v1135 = vadd.f32 0.0, %v1134
  %v1136 = vpop.f32.mrb[0].mxu0
  %v1137 = vadd.f32 0.0, %v1136
  %v1138 = vpop.f32.mrb[0].mxu0
  %v1139 = vadd.f32 0.0, %v1138
  %v1140 = vpop.f32.mrb[0].mxu0
  %v1141 = vadd.f32 0.0, %v1140
  %1142 = vmatprep.mubr.bf16.mxu0 %v486
  %1143 = vmatmul.mubr.bf16.gmra.mrb[0].mxu0 %v485
  %v1144 = vpop.f32.mrb[0].mxu0
  %v1145 = vadd.f32 0.0, %v1144
  %v1146 = vpop.f32.mrb[0].mxu0
  %v1147 = vadd.f32 0.0, %v1146
  %v1148 = vpop.f32.mrb[0].mxu0
  %v1149 = vadd.f32 0.0, %v1148
  %v1150 = vpop.f32.mrb[0].mxu0
  %v1151 = vadd.f32 0.0, %v1150
  %1152 = vmatprep.mubr.bf16.mxu0 %v488
  %1153 = vmatmul.mubr.bf16.gmra.mrb[0].mxu0 %v487
  %v1154 = vpop.f32.mrb[0].mxu0
  %v1155 = vadd.f32 0.0, %v1154
  %v1156 = vpop.f32.mrb[0].mxu0
  %v1157 = vadd.f32 0.0, %v1156
  %v1158 = vpop.f32.mrb[0].mxu0
  %v1159 = vadd.f32 0.0, %v1158
  %v1160 = vpop.f32.mrb[0].mxu0
  %v1161 = vadd.f32 0.0, %v1160
  %1162 = vmatprep.mubr.bf16.mxu0 %v490
  %1163 = vmatmul.mubr.bf16.gmra.mrb[0].mxu0 %v489
  %v1164 = vpop.f32.mrb[0].mxu0
  %v1165 = vadd.f32 0.0, %v1164
  %v1166 = vpop.f32.mrb[0].mxu0
  %v1167 = vadd.f32 0.0, %v1166
  %v1168 = vpop.f32.mrb[0].mxu0
  %v1169 = vadd.f32 0.0, %v1168
  %v1170 = vpop.f32.mrb[0].mxu0
  %v1171 = vadd.f32 0.0, %v1170
  %1172 = vmatprep.mubr.bf16.mxu0 %v492
  %1173 = vmatmul.mubr.bf16.gmra.mrb[0].mxu0 %v491
  %v1174 = vpop.f32.mrb[0].mxu0
  %v1175 = vadd.f32 0.0, %v1174
  %v1176 = vpop.f32.mrb[0].mxu0
  %v1177 = vadd.f32 0.0, %v1176
  %v1178 = vpop.f32.mrb[0].mxu0
  %v1179 = vadd.f32 0.0, %v1178
  %v1180 = vpop.f32.mrb[0].mxu0
  %v1181 = vadd.f32 0.0, %v1180
  %1182 = vmatprep.mubr.bf16.mxu0 %v494
  %1183 = vmatmul.mubr.bf16.gmra.mrb[0].mxu0 %v493
  %v1184 = vpop.f32.mrb[0].mxu0
  %v1185 = vadd.f32 0.0, %v1184
  %v1186 = vpop.f32.mrb[0].mxu0
  %v1187 = vadd.f32 0.0, %v1186
  %v1188 = vpop.f32.mrb[0].mxu0
  %v1189 = vadd.f32 0.0, %v1188
  %v1190 = vpop.f32.mrb[0].mxu0
  %v1191 = vadd.f32 0.0, %v1190
  %1192 = vmatprep.mubr.bf16.mxu0 %v496
  %1193 = vmatmul.mubr.bf16.gmra.mrb[0].mxu0 %v495
  %v1194 = vpop.f32.mrb[0].mxu0
  %v1195 = vadd.f32 0.0, %v1194
  %v1196 = vpop.f32.mrb[0].mxu0
  %v1197 = vadd.f32 0.0, %v1196
  %v1198 = vpop.f32.mrb[0].mxu0
  %v1199 = vadd.f32 0.0, %v1198
  %v1200 = vpop.f32.mrb[0].mxu0
  %v1201 = vadd.f32 0.0, %v1200
  %1202 = vmatprep.mubr.bf16.mxu0 %v498
  %1203 = vmatmul.mubr.bf16.gmra.mrb[0].mxu0 %v497
  %v1204 = vpop.f32.mrb[0].mxu0
  %v1205 = vadd.f32 0.0, %v1204
  %v1206 = vpop.f32.mrb[0].mxu0
  %v1207 = vadd.f32 0.0, %v1206
  %v1208 = vpop.f32.mrb[0].mxu0
  %v1209 = vadd.f32 0.0, %v1208
  %v1210 = vpop.f32.mrb[0].mxu0
  %v1211 = vadd.f32 0.0, %v1210
  %1212 = vmatprep.mubr.bf16.mxu0 %v500
  %1213 = vmatmul.mubr.bf16.gmra.mrb[0].mxu0 %v499
  %v1214 = vpop.f32.mrb[0].mxu0
  %v1215 = vadd.f32 0.0, %v1214
  %v1216 = vpop.f32.mrb[0].mxu0
  %v1217 = vadd.f32 0.0, %v1216
  %v1218 = vpop.f32.mrb[0].mxu0
  %v1219 = vadd.f32 0.0, %v1218
  %v1220 = vpop.f32.mrb[0].mxu0
  %v1221 = vadd.f32 0.0, %v1220
  %1222 = vmatprep.mubr.bf16.mxu0 %v502
  %1223 = vmatmul.mubr.bf16.gmra.mrb[0].mxu0 %v501
  %v1224 = vpop.f32.mrb[0].mxu0
  %v1225 = vadd.f32 0.0, %v1224
  %v1226 = vpop.f32.mrb[0].mxu0
  %v1227 = vadd.f32 0.0, %v1226
  %v1228 = vpop.f32.mrb[0].mxu0
  %v1229 = vadd.f32 0.0, %v1228
  %v1230 = vpop.f32.mrb[0].mxu0
  %v1231 = vadd.f32 0.0, %v1230
  %1232 = vmatprep.mubr.bf16.mxu0 %v504
  %1233 = vmatmul.mubr.bf16.gmra.mrb[0].mxu0 %v503
  %v1234 = vpop.f32.mrb[0].mxu0
  %v1235 = vadd.f32 0.0, %v1234
  %v1236 = vpop.f32.mrb[0].mxu0
  %v1237 = vadd.f32 0.0, %v1236
  %v1238 = vpop.f32.mrb[0].mxu0
  %v1239 = vadd.f32 0.0, %v1238
  %v1240 = vpop.f32.mrb[0].mxu0
  %v1241 = vadd.f32 0.0, %v1240
  %1242 = vdwg.mxu0
  %v1243 = vadd.f32 %v153, %v892
  %v1244 = vadd.f32 %v154, %v894
  %v1245 = vadd.f32 %v155, %v1085
  %v1246 = vadd.f32 %v156, %v1087
  %v1247 = vadd.f32 %v157, %v896
  %v1248 = vadd.f32 %v158, %v898
  %v1249 = vadd.f32 %v159, %v1089
  %v1250 = vadd.f32 %v160, %v1091
  %v1251 = vadd.f32 %v161, %v902
  %v1252 = vadd.f32 %v162, %v904
  %v1253 = vadd.f32 %v163, %v1095
  %v1254 = vadd.f32 %v164, %v1097
  %v1255 = vadd.f32 %v165, %v906
  %v1256 = vadd.f32 %v166, %v908
  %v1257 = vadd.f32 %v167, %v1099
  %v1258 = vadd.f32 %v168, %v1101
  %v1259 = vadd.f32 %v169, %v912
  %v1260 = vadd.f32 %v170, %v914
  %v1261 = vadd.f32 %v171, %v1105
  %v1262 = vadd.f32 %v172, %v1107
  %v1263 = vadd.f32 %v173, %v916
  %v1264 = vadd.f32 %v174, %v918
  %v1265 = vadd.f32 %v175, %v1109
  %v1266 = vadd.f32 %v176, %v1111
  %v1267 = vadd.f32 %v177, %v922
  %v1268 = vadd.f32 %v178, %v924
  %v1269 = vadd.f32 %v179, %v1115
  %v1270 = vadd.f32 %v180, %v1117
  %v1271 = vadd.f32 %v181, %v926
  %v1272 = vadd.f32 %v182, %v928
  %v1273 = vadd.f32 %v183, %v1119
  %v1274 = vadd.f32 %v184, %v1121
  %v1275 = vadd.f32 %v185, %v932
  %v1276 = vadd.f32 %v186, %v934
  %v1277 = vadd.f32 %v187, %v1125
  %v1278 = vadd.f32 %v188, %v1127
  %v1279 = vadd.f32 %v189, %v936
  %v1280 = vadd.f32 %v190, %v938
  %v1281 = vadd.f32 %v191, %v1129
  %v1282 = vadd.f32 %v192, %v1131
  %v1283 = vadd.f32 %v193, %v942
  %v1284 = vadd.f32 %v194, %v944
  %v1285 = vadd.f32 %v195, %v1135
  %v1286 = vadd.f32 %v196, %v1137
  %v1287 = vadd.f32 %v197, %v946
  %v1288 = vadd.f32 %v198, %v948
  %v1289 = vadd.f32 %v199, %v1139
  %v1290 = vadd.f32 %v200, %v1141
  %v1291 = vadd.f32 %v201, %v952
  %v1292 = vadd.f32 %v202, %v954
  %v1293 = vadd.f32 %v203, %v1145
  %v1294 = vadd.f32 %v204, %v1147
  %v1295 = vadd.f32 %v205, %v956
  %v1296 = vadd.f32 %v206, %v958
  %v1297 = vadd.f32 %v207, %v1149
  %v1298 = vadd.f32 %v208, %v1151
  %v1299 = vadd.f32 %v209, %v962
  %v1300 = vadd.f32 %v210, %v964
  %v1301 = vadd.f32 %v211, %v1155
  %v1302 = vadd.f32 %v212, %v1157
  %v1303 = vadd.f32 %v213, %v966
  %v1304 = vadd.f32 %v214, %v968
  %v1305 = vadd.f32 %v215, %v1159
  %v1306 = vadd.f32 %v216, %v1161
  %v1307 = vadd.f32 %v217, %v972
  %v1308 = vadd.f32 %v218, %v974
  %v1309 = vadd.f32 %v219, %v1165
  %v1310 = vadd.f32 %v220, %v1167
  %v1311 = vadd.f32 %v221, %v976
  %v1312 = vadd.f32 %v222, %v978
  %v1313 = vadd.f32 %v223, %v1169
  %v1314 = vadd.f32 %v224, %v1171
  %v1315 = vadd.f32 %v225, %v982
  %v1316 = vadd.f32 %v226, %v984
  %v1317 = vadd.f32 %v227, %v1175
  %v1318 = vadd.f32 %v228, %v1177
  %v1319 = vadd.f32 %v229, %v986
  %v1320 = vadd.f32 %v230, %v988
  %v1321 = vadd.f32 %v231, %v1179
  %v1322 = vadd.f32 %v232, %v1181
  %v1323 = vadd.f32 %v233, %v992
  %v1324 = vadd.f32 %v234, %v994
  %v1325 = vadd.f32 %v235, %v1185
  %v1326 = vadd.f32 %v236, %v1187
  %v1327 = vadd.f32 %v237, %v996
  %v1328 = vadd.f32 %v238, %v998
  %v1329 = vadd.f32 %v239, %v1189
  %v1330 = vadd.f32 %v240, %v1191
  %v1331 = vadd.f32 %v241, %v1002
  %v1332 = vadd.f32 %v242, %v1004
  %v1333 = vadd.f32 %v243, %v1195
  %v1334 = vadd.f32 %v244, %v1197
  %v1335 = vadd.f32 %v245, %v1006
  %v1336 = vadd.f32 %v246, %v1008
  %v1337 = vadd.f32 %v247, %v1199
  %v1338 = vadd.f32 %v248, %v1201
  %v1339 = vadd.f32 %v249, %v1012
  %v1340 = vadd.f32 %v250, %v1014
  %v1341 = vadd.f32 %v251, %v1205
  %v1342 = vadd.f32 %v252, %v1207
  %v1343 = vadd.f32 %v253, %v1016
  %v1344 = vadd.f32 %v254, %v1018
  %v1345 = vadd.f32 %v255, %v1209
  %v1346 = vadd.f32 %v256, %v1211
  %v1347 = vadd.f32 %v257, %v1022
  %v1348 = vadd.f32 %v258, %v1024
  %v1349 = vadd.f32 %v259, %v1215
  %v1350 = vadd.f32 %v260, %v1217
  %v1351 = vadd.f32 %v261, %v1026
  %v1352 = vadd.f32 %v262, %v1028
  %v1353 = vadd.f32 %v263, %v1219
  %v1354 = vadd.f32 %v264, %v1221
  %v1355 = vadd.f32 %v265, %v1032
  %v1356 = vadd.f32 %v266, %v1034
  %v1357 = vadd.f32 %v267, %v1225
  %v1358 = vadd.f32 %v268, %v1227
  %v1359 = vadd.f32 %v269, %v1036
  %v1360 = vadd.f32 %v270, %v1038
  %v1361 = vadd.f32 %v271, %v1229
  %v1362 = vadd.f32 %v272, %v1231
  %v1363 = vadd.f32 %v273, %v1042
  %v1364 = vadd.f32 %v274, %v1044
  %v1365 = vadd.f32 %v275, %v1235
  %v1366 = vadd.f32 %v276, %v1237
  %v1367 = vadd.f32 %v277, %v1046
  %v1368 = vadd.f32 %v278, %v1048
  %v1369 = vadd.f32 %v279, %v1239
  %v1370 = vadd.f32 %v280, %v1241
  %1371 = vst [vmem:[#allocation2] sm:$0xff] %v1243
  %1372 = vst [vmem:[#allocation2 + $0x8] sm:$0xff] %v1244
  %1373 = vst [vmem:[#allocation2 + $0x10] sm:$0xff] %v1245
  %1374 = vst [vmem:[#allocation2 + $0x18] sm:$0xff] %v1246
  %1375 = vst [vmem:[#allocation2 + $0x20] sm:$0xff] %v1247
  %1376 = vst [vmem:[#allocation2 + $0x28] sm:$0xff] %v1248
  %1377 = vst [vmem:[#allocation2 + $0x30] sm:$0xff] %v1249
  %1378 = vst [vmem:[#allocation2 + $0x38] sm:$0xff] %v1250
  %1379 = vst [vmem:[#allocation2 + $0x40] sm:$0xff] %v1251
  %1380 = vst [vmem:[#allocation2 + $0x48] sm:$0xff] %v1252
  %1381 = vst [vmem:[#allocation2 + $0x50] sm:$0xff] %v1253
  %1382 = vst [vmem:[#allocation2 + $0x58] sm:$0xff] %v1254
  %1383 = vst [vmem:[#allocation2 + $0x60] sm:$0xff] %v1255
  %1384 = vst [vmem:[#allocation2 + $0x68] sm:$0xff] %v1256
  %1385 = vst [vmem:[#allocation2 + $0x70] sm:$0xff] %v1257
  %1386 = vst [vmem:[#allocation2 + $0x78] sm:$0xff] %v1258
  %1387 = vst [vmem:[#allocation2 + $0x80] sm:$0xff] %v1259
  %1388 = vst [vmem:[#allocation2 + $0x88] sm:$0xff] %v1260
  %1389 = vst [vmem:[#allocation2 + $0x90] sm:$0xff] %v1261
  %1390 = vst [vmem:[#allocation2 + $0x98] sm:$0xff] %v1262
  %1391 = vst [vmem:[#allocation2 + $0xa0] sm:$0xff] %v1263
  %1392 = vst [vmem:[#allocation2 + $0xa8] sm:$0xff] %v1264
  %1393 = vst [vmem:[#allocation2 + $0xb0] sm:$0xff] %v1265
  %1394 = vst [vmem:[#allocation2 + $0xb8] sm:$0xff] %v1266
  %1395 = vst [vmem:[#allocation2 + $0xc0] sm:$0xff] %v1267
  %1396 = vst [vmem:[#allocation2 + $0xc8] sm:$0xff] %v1268
  %1397 = vst [vmem:[#allocation2 + $0xd0] sm:$0xff] %v1269
  %1398 = vst [vmem:[#allocation2 + $0xd8] sm:$0xff] %v1270
  %1399 = vst [vmem:[#allocation2 + $0xe0] sm:$0xff] %v1271
  %1400 = vst [vmem:[#allocation2 + $0xe8] sm:$0xff] %v1272
  %1401 = vst [vmem:[#allocation2 + $0xf0] sm:$0xff] %v1273
  %1402 = vst [vmem:[#allocation2 + $0xf8] sm:$0xff] %v1274
  %1403 = vst [vmem:[#allocation2 + $0x100] sm:$0xff] %v1275
  %1404 = vst [vmem:[#allocation2 + $0x108] sm:$0xff] %v1276
  %1405 = vst [vmem:[#allocation2 + $0x110] sm:$0xff] %v1277
  %1406 = vst [vmem:[#allocation2 + $0x118] sm:$0xff] %v1278
  %1407 = vst [vmem:[#allocation2 + $0x120] sm:$0xff] %v1279
  %1408 = vst [vmem:[#allocation2 + $0x128] sm:$0xff] %v1280
  %1409 = vst [vmem:[#allocation2 + $0x130] sm:$0xff] %v1281
  %1410 = vst [vmem:[#allocation2 + $0x138] sm:$0xff] %v1282
  %1411 = vst [vmem:[#allocation2 + $0x140] sm:$0xff] %v1283
  %1412 = vst [vmem:[#allocation2 + $0x148] sm:$0xff] %v1284
  %1413 = vst [vmem:[#allocation2 + $0x150] sm:$0xff] %v1285
  %1414 = vst [vmem:[#allocation2 + $0x158] sm:$0xff] %v1286
  %1415 = vst [vmem:[#allocation2 + $0x160] sm:$0xff] %v1287
  %1416 = vst [vmem:[#allocation2 + $0x168] sm:$0xff] %v1288
  %1417 = vst [vmem:[#allocation2 + $0x170] sm:$0xff] %v1289
  %1418 = vst [vmem:[#allocation2 + $0x178] sm:$0xff] %v1290
  %1419 = vst [vmem:[#allocation2 + $0x180] sm:$0xff] %v1291
  %1420 = vst [vmem:[#allocation2 + $0x188] sm:$0xff] %v1292
  %1421 = vst [vmem:[#allocation2 + $0x190] sm:$0xff] %v1293
  %1422 = vst [vmem:[#allocation2 + $0x198] sm:$0xff] %v1294
  %1423 = vst [vmem:[#allocation2 + $0x1a0] sm:$0xff] %v1295
  %1424 = vst [vmem:[#allocation2 + $0x1a8] sm:$0xff] %v1296
  %1425 = vst [vmem:[#allocation2 + $0x1b0] sm:$0xff] %v1297
  %1426 = vst [vmem:[#allocation2 + $0x1b8] sm:$0xff] %v1298
  %1427 = vst [vmem:[#allocation2 + $0x1c0] sm:$0xff] %v1299
  %1428 = vst [vmem:[#allocation2 + $0x1c8] sm:$0xff] %v1300
  %1429 = vst [vmem:[#allocation2 + $0x1d0] sm:$0xff] %v1301
  %1430 = vst [vmem:[#allocation2 + $0x1d8] sm:$0xff] %v1302
  %1431 = vst [vmem:[#allocation2 + $0x1e0] sm:$0xff] %v1303
  %1432 = vst [vmem:[#allocation2 + $0x1e8] sm:$0xff] %v1304
  %1433 = vst [vmem:[#allocation2 + $0x1f0] sm:$0xff] %v1305
  %1434 = vst [vmem:[#allocation2 + $0x1f8] sm:$0xff] %v1306
  %1435 = vst [vmem:[#allocation2 + $0x200] sm:$0xff] %v1307
  %1436 = vst [vmem:[#allocation2 + $0x208] sm:$0xff] %v1308
  %1437 = vst [vmem:[#allocation2 + $0x210] sm:$0xff] %v1309
  %1438 = vst [vmem:[#allocation2 + $0x218] sm:$0xff] %v1310
  %1439 = vst [vmem:[#allocation2 + $0x220] sm:$0xff] %v1311
  %1440 = vst [vmem:[#allocation2 + $0x228] sm:$0xff] %v1312
  %1441 = vst [vmem:[#allocation2 + $0x230] sm:$0xff] %v1313
  %1442 = vst [vmem:[#allocation2 + $0x238] sm:$0xff] %v1314
  %1443 = vst [vmem:[#allocation2 + $0x240] sm:$0xff] %v1315
  %1444 = vst [vmem:[#allocation2 + $0x248] sm:$0xff] %v1316
  %1445 = vst [vmem:[#allocation2 + $0x250] sm:$0xff] %v1317
  %1446 = vst [vmem:[#allocation2 + $0x258] sm:$0xff] %v1318
  %1447 = vst [vmem:[#allocation2 + $0x260] sm:$0xff] %v1319
  %1448 = vst [vmem:[#allocation2 + $0x268] sm:$0xff] %v1320
  %1449 = vst [vmem:[#allocation2 + $0x270] sm:$0xff] %v1321
  %1450 = vst [vmem:[#allocation2 + $0x278] sm:$0xff] %v1322
  %1451 = vst [vmem:[#allocation2 + $0x280] sm:$0xff] %v1323
  %1452 = vst [vmem:[#allocation2 + $0x288] sm:$0xff] %v1324
  %1453 = vst [vmem:[#allocation2 + $0x290] sm:$0xff] %v1325
  %1454 = vst [vmem:[#allocation2 + $0x298] sm:$0xff] %v1326
  %1455 = vst [vmem:[#allocation2 + $0x2a0] sm:$0xff] %v1327
  %1456 = vst [vmem:[#allocation2 + $0x2a8] sm:$0xff] %v1328
  %1457 = vst [vmem:[#allocation2 + $0x2b0] sm:$0xff] %v1329
  %1458 = vst [vmem:[#allocation2 + $0x2b8] sm:$0xff] %v1330
  %1459 = vst [vmem:[#allocation2 + $0x2c0] sm:$0xff] %v1331
  %1460 = vst [vmem:[#allocation2 + $0x2c8] sm:$0xff] %v1332
  %1461 = vst [vmem:[#allocation2 + $0x2d0] sm:$0xff] %v1333
  %1462 = vst [vmem:[#allocation2 + $0x2d8] sm:$0xff] %v1334
  %1463 = vst [vmem:[#allocation2 + $0x2e0] sm:$0xff] %v1335
  %1464 = vst [vmem:[#allocation2 + $0x2e8] sm:$0xff] %v1336
  %1465 = vst [vmem:[#allocation2 + $0x2f0] sm:$0xff] %v1337
  %1466 = vst [vmem:[#allocation2 + $0x2f8] sm:$0xff] %v1338
  %1467 = vst [vmem:[#allocation2 + $0x300] sm:$0xff] %v1339
  %1468 = vst [vmem:[#allocation2 + $0x308] sm:$0xff] %v1340
  %1469 = vst [vmem:[#allocation2 + $0x310] sm:$0xff] %v1341
  %1470 = vst [vmem:[#allocation2 + $0x318] sm:$0xff] %v1342
  %1471 = vst [vmem:[#allocation2 + $0x320] sm:$0xff] %v1343
  %1472 = vst [vmem:[#allocation2 + $0x328] sm:$0xff] %v1344
  %1473 = vst [vmem:[#allocation2 + $0x330] sm:$0xff] %v1345
  %1474 = vst [vmem:[#allocation2 + $0x338] sm:$0xff] %v1346
  %1475 = vst [vmem:[#allocation2 + $0x340] sm:$0xff] %v1347
  %1476 = vst [vmem:[#allocation2 + $0x348] sm:$0xff] %v1348
  %1477 = vst [vmem:[#allocation2 + $0x350] sm:$0xff] %v1349
  %1478 = vst [vmem:[#allocation2 + $0x358] sm:$0xff] %v1350
  %1479 = vst [vmem:[#allocation2 + $0x360] sm:$0xff] %v1351
  %1480 = vst [vmem:[#allocation2 + $0x368] sm:$0xff] %v1352
  %1481 = vst [vmem:[#allocation2 + $0x370] sm:$0xff] %v1353
  %1482 = vst [vmem:[#allocation2 + $0x378] sm:$0xff] %v1354
  %1483 = vst [vmem:[#allocation2 + $0x380] sm:$0xff] %v1355
  %1484 = vst [vmem:[#allocation2 + $0x388] sm:$0xff] %v1356
  %1485 = vst [vmem:[#allocation2 + $0x390] sm:$0xff] %v1357
  %1486 = vst [vmem:[#allocation2 + $0x398] sm:$0xff] %v1358
  %1487 = vst [vmem:[#allocation2 + $0x3a0] sm:$0xff] %v1359
  %1488 = vst [vmem:[#allocation2 + $0x3a8] sm:$0xff] %v1360
  %1489 = vst [vmem:[#allocation2 + $0x3b0] sm:$0xff] %v1361
  %1490 = vst [vmem:[#allocation2 + $0x3b8] sm:$0xff] %v1362
  %1491 = vst [vmem:[#allocation2 + $0x3c0] sm:$0xff] %v1363
  %1492 = vst [vmem:[#allocation2 + $0x3c8] sm:$0xff] %v1364
  %1493 = vst [vmem:[#allocation2 + $0x3d0] sm:$0xff] %v1365
  %1494 = vst [vmem:[#allocation2 + $0x3d8] sm:$0xff] %v1366
  %1495 = vst [vmem:[#allocation2 + $0x3e0] sm:$0xff] %v1367
  %1496 = vst [vmem:[#allocation2 + $0x3e8] sm:$0xff] %v1368
  %1497 = vst [vmem:[#allocation2 + $0x3f0] sm:$0xff] %v1369
  %1498 = vst [vmem:[#allocation2 + $0x3f8] sm:$0xff] %v1370
  // Predicated region
  $region26: #{gcn_forward.4} parent=0 // pred_check
    %p1499 = pneg %p21
  $region27: #{gcn_forward.4} parent=0 // pred_check_branch
    %1501 = sbr.rel (%p1499) target = $region29
  $region28: #{gcn_forward.4} parent=0 // pred_region
    %v1502 = vld [vmem:[#allocation2] sm:$0xff]
    %v1503 = vld [vmem:[#allocation2 + $0x8] sm:$0xff]
    %v1504 = vld [vmem:[#allocation2 + $0x10] sm:$0xff]
    %v1505 = vld [vmem:[#allocation2 + $0x18] sm:$0xff]
    %v1506 = vld [vmem:[#allocation2 + $0x20] sm:$0xff]
    %v1507 = vld [vmem:[#allocation2 + $0x28] sm:$0xff]
    %v1508 = vld [vmem:[#allocation2 + $0x30] sm:$0xff]
    %v1509 = vld [vmem:[#allocation2 + $0x38] sm:$0xff]
    %v1510 = vld [vmem:[#allocation2 + $0x40] sm:$0xff]
    %v1511 = vld [vmem:[#allocation2 + $0x48] sm:$0xff]
    %v1512 = vld [vmem:[#allocation2 + $0x50] sm:$0xff]
    %v1513 = vld [vmem:[#allocation2 + $0x58] sm:$0xff]
    %v1514 = vld [vmem:[#allocation2 + $0x60] sm:$0xff]
    %v1515 = vld [vmem:[#allocation2 + $0x68] sm:$0xff]
    %v1516 = vld [vmem:[#allocation2 + $0x70] sm:$0xff]
    %v1517 = vld [vmem:[#allocation2 + $0x78] sm:$0xff]
    %v1518 = vld [vmem:[#allocation2 + $0x80] sm:$0xff]
    %v1519 = vld [vmem:[#allocation2 + $0x88] sm:$0xff]
    %v1520 = vld [vmem:[#allocation2 + $0x90] sm:$0xff]
    %v1521 = vld [vmem:[#allocation2 + $0x98] sm:$0xff]
    %v1522 = vld [vmem:[#allocation2 + $0xa0] sm:$0xff]
    %v1523 = vld [vmem:[#allocation2 + $0xa8] sm:$0xff]
    %v1524 = vld [vmem:[#allocation2 + $0xb0] sm:$0xff]
    %v1525 = vld [vmem:[#allocation2 + $0xb8] sm:$0xff]
    %v1526 = vld [vmem:[#allocation2 + $0xc0] sm:$0xff]
    %v1527 = vld [vmem:[#allocation2 + $0xc8] sm:$0xff]
    %v1528 = vld [vmem:[#allocation2 + $0xd0] sm:$0xff]
    %v1529 = vld [vmem:[#allocation2 + $0xd8] sm:$0xff]
    %v1530 = vld [vmem:[#allocation2 + $0xe0] sm:$0xff]
    %v1531 = vld [vmem:[#allocation2 + $0xe8] sm:$0xff]
    %v1532 = vld [vmem:[#allocation2 + $0xf0] sm:$0xff]
    %v1533 = vld [vmem:[#allocation2 + $0xf8] sm:$0xff]
    %v1534 = vld [vmem:[#allocation2 + $0x100] sm:$0xff]
    %v1535 = vld [vmem:[#allocation2 + $0x108] sm:$0xff]
    %v1536 = vld [vmem:[#allocation2 + $0x110] sm:$0xff]
    %v1537 = vld [vmem:[#allocation2 + $0x118] sm:$0xff]
    %v1538 = vld [vmem:[#allocation2 + $0x120] sm:$0xff]
    %v1539 = vld [vmem:[#allocation2 + $0x128] sm:$0xff]
    %v1540 = vld [vmem:[#allocation2 + $0x130] sm:$0xff]
    %v1541 = vld [vmem:[#allocation2 + $0x138] sm:$0xff]
    %v1542 = vld [vmem:[#allocation2 + $0x140] sm:$0xff]
    %v1543 = vld [vmem:[#allocation2 + $0x148] sm:$0xff]
    %v1544 = vld [vmem:[#allocation2 + $0x150] sm:$0xff]
    %v1545 = vld [vmem:[#allocation2 + $0x158] sm:$0xff]
    %v1546 = vld [vmem:[#allocation2 + $0x160] sm:$0xff]
    %v1547 = vld [vmem:[#allocation2 + $0x168] sm:$0xff]
    %v1548 = vld [vmem:[#allocation2 + $0x170] sm:$0xff]
    %v1549 = vld [vmem:[#allocation2 + $0x178] sm:$0xff]
    %v1550 = vld [vmem:[#allocation2 + $0x180] sm:$0xff]
    %v1551 = vld [vmem:[#allocation2 + $0x188] sm:$0xff]
    %v1552 = vld [vmem:[#allocation2 + $0x190] sm:$0xff]
    %v1553 = vld [vmem:[#allocation2 + $0x198] sm:$0xff]
    %v1554 = vld [vmem:[#allocation2 + $0x1a0] sm:$0xff]
    %v1555 = vld [vmem:[#allocation2 + $0x1a8] sm:$0xff]
    %v1556 = vld [vmem:[#allocation2 + $0x1b0] sm:$0xff]
    %v1557 = vld [vmem:[#allocation2 + $0x1b8] sm:$0xff]
    %v1558 = vld [vmem:[#allocation2 + $0x1c0] sm:$0xff]
    %v1559 = vld [vmem:[#allocation2 + $0x1c8] sm:$0xff]
    %v1560 = vld [vmem:[#allocation2 + $0x1d0] sm:$0xff]
    %v1561 = vld [vmem:[#allocation2 + $0x1d8] sm:$0xff]
    %v1562 = vld [vmem:[#allocation2 + $0x1e0] sm:$0xff]
    %v1563 = vld [vmem:[#allocation2 + $0x1e8] sm:$0xff]
    %v1564 = vld [vmem:[#allocation2 + $0x1f0] sm:$0xff]
    %v1565 = vld [vmem:[#allocation2 + $0x1f8] sm:$0xff]
    %v1566 = vld [vmem:[#allocation2 + $0x200] sm:$0xff]
    %v1567 = vld [vmem:[#allocation2 + $0x208] sm:$0xff]
    %v1568 = vld [vmem:[#allocation2 + $0x210] sm:$0xff]
    %v1569 = vld [vmem:[#allocation2 + $0x218] sm:$0xff]
    %v1570 = vld [vmem:[#allocation2 + $0x220] sm:$0xff]
    %v1571 = vld [vmem:[#allocation2 + $0x228] sm:$0xff]
    %v1572 = vld [vmem:[#allocation2 + $0x230] sm:$0xff]
    %v1573 = vld [vmem:[#allocation2 + $0x238] sm:$0xff]
    %v1574 = vld [vmem:[#allocation2 + $0x240] sm:$0xff]
    %v1575 = vld [vmem:[#allocation2 + $0x248] sm:$0xff]
    %v1576 = vld [vmem:[#allocation2 + $0x250] sm:$0xff]
    %v1577 = vld [vmem:[#allocation2 + $0x258] sm:$0xff]
    %v1578 = vld [vmem:[#allocation2 + $0x260] sm:$0xff]
    %v1579 = vld [vmem:[#allocation2 + $0x268] sm:$0xff]
    %v1580 = vld [vmem:[#allocation2 + $0x270] sm:$0xff]
    %v1581 = vld [vmem:[#allocation2 + $0x278] sm:$0xff]
    %v1582 = vld [vmem:[#allocation2 + $0x280] sm:$0xff]
    %v1583 = vld [vmem:[#allocation2 + $0x288] sm:$0xff]
    %v1584 = vld [vmem:[#allocation2 + $0x290] sm:$0xff]
    %v1585 = vld [vmem:[#allocation2 + $0x298] sm:$0xff]
    %v1586 = vld [vmem:[#allocation2 + $0x2a0] sm:$0xff]
    %v1587 = vld [vmem:[#allocation2 + $0x2a8] sm:$0xff]
    %v1588 = vld [vmem:[#allocation2 + $0x2b0] sm:$0xff]
    %v1589 = vld [vmem:[#allocation2 + $0x2b8] sm:$0xff]
    %v1590 = vld [vmem:[#allocation2 + $0x2c0] sm:$0xff]
    %v1591 = vld [vmem:[#allocation2 + $0x2c8] sm:$0xff]
    %v1592 = vld [vmem:[#allocation2 + $0x2d0] sm:$0xff]
    %v1593 = vld [vmem:[#allocation2 + $0x2d8] sm:$0xff]
    %v1594 = vld [vmem:[#allocation2 + $0x2e0] sm:$0xff]
    %v1595 = vld [vmem:[#allocation2 + $0x2e8] sm:$0xff]
    %v1596 = vld [vmem:[#allocation2 + $0x2f0] sm:$0xff]
    %v1597 = vld [vmem:[#allocation2 + $0x2f8] sm:$0xff]
    %v1598 = vld [vmem:[#allocation2 + $0x300] sm:$0xff]
    %v1599 = vld [vmem:[#allocation2 + $0x308] sm:$0xff]
    %v1600 = vld [vmem:[#allocation2 + $0x310] sm:$0xff]
    %v1601 = vld [vmem:[#allocation2 + $0x318] sm:$0xff]
    %v1602 = vld [vmem:[#allocation2 + $0x320] sm:$0xff]
    %v1603 = vld [vmem:[#allocation2 + $0x328] sm:$0xff]
    %v1604 = vld [vmem:[#allocation2 + $0x330] sm:$0xff]
    %v1605 = vld [vmem:[#allocation2 + $0x338] sm:$0xff]
    %v1606 = vld [vmem:[#allocation2 + $0x340] sm:$0xff]
    %v1607 = vld [vmem:[#allocation2 + $0x348] sm:$0xff]
    %v1608 = vld [vmem:[#allocation2 + $0x350] sm:$0xff]
    %v1609 = vld [vmem:[#allocation2 + $0x358] sm:$0xff]
    %v1610 = vld [vmem:[#allocation2 + $0x360] sm:$0xff]
    %v1611 = vld [vmem:[#allocation2 + $0x368] sm:$0xff]
    %v1612 = vld [vmem:[#allocation2 + $0x370] sm:$0xff]
    %v1613 = vld [vmem:[#allocation2 + $0x378] sm:$0xff]
    %v1614 = vld [vmem:[#allocation2 + $0x380] sm:$0xff]
    %v1615 = vld [vmem:[#allocation2 + $0x388] sm:$0xff]
    %v1616 = vld [vmem:[#allocation2 + $0x390] sm:$0xff]
    %v1617 = vld [vmem:[#allocation2 + $0x398] sm:$0xff]
    %v1618 = vld [vmem:[#allocation2 + $0x3a0] sm:$0xff]
    %v1619 = vld [vmem:[#allocation2 + $0x3a8] sm:$0xff]
    %v1620 = vld [vmem:[#allocation2 + $0x3b0] sm:$0xff]
    %v1621 = vld [vmem:[#allocation2 + $0x3b8] sm:$0xff]
    %v1622 = vld [vmem:[#allocation2 + $0x3c0] sm:$0xff]
    %v1623 = vld [vmem:[#allocation2 + $0x3c8] sm:$0xff]
    %v1624 = vld [vmem:[#allocation2 + $0x3d0] sm:$0xff]
    %v1625 = vld [vmem:[#allocation2 + $0x3d8] sm:$0xff]
    %v1626 = vld [vmem:[#allocation2 + $0x3e0] sm:$0xff]
    %v1627 = vld [vmem:[#allocation2 + $0x3e8] sm:$0xff]
    %v1628 = vld [vmem:[#allocation2 + $0x3f0] sm:$0xff]
    %v1629 = vld [vmem:[#allocation2 + $0x3f8] sm:$0xff]
    %v1630 = vld [vmem:[%s2] sm:$0xf]
    %v1632 = vlaneseq
    %v1633 = vshrl.u32 %v1632, 7
    %v1634 = vsub.s32 0, %v1633
    %v1635 = vrot.slane %v1630, %v1634
    %v1636 = vlaneseq
    %v1637 = vshrl.u32 %v1636, 7
    %v1638 = vsub.s32 1, %v1637
    %v1639 = vrot.slane %v1630, %v1638
    %v1640 = vlaneseq
    %v1641 = vshrl.u32 %v1640, 7
    %v1642 = vsub.s32 2, %v1641
    %v1643 = vrot.slane %v1630, %v1642
    %v1644 = vlaneseq
    %v1645 = vshrl.u32 %v1644, 7
    %v1646 = vsub.s32 3, %v1645
    %v1647 = vrot.slane %v1630, %v1646
    %v1652 = vadd.f32 %v1502, %v1635
    %v1653 = vadd.f32 %v1503, %v1639
    %v1654 = vadd.f32 %v1504, %v1643
    %v1655 = vadd.f32 %v1505, %v1647
    %v1656 = vadd.f32 %v1506, %v1635
    %v1657 = vadd.f32 %v1507, %v1639
    %v1658 = vadd.f32 %v1508, %v1643
    %v1659 = vadd.f32 %v1509, %v1647
    %v1660 = vadd.f32 %v1510, %v1635
    %v1661 = vadd.f32 %v1511, %v1639
    %v1662 = vadd.f32 %v1512, %v1643
    %v1663 = vadd.f32 %v1513, %v1647
    %v1664 = vadd.f32 %v1514, %v1635
    %v1665 = vadd.f32 %v1515, %v1639
    %v1666 = vadd.f32 %v1516, %v1643
    %v1667 = vadd.f32 %v1517, %v1647
    %v1668 = vadd.f32 %v1518, %v1635
    %v1669 = vadd.f32 %v1519, %v1639
    %v1670 = vadd.f32 %v1520, %v1643
    %v1671 = vadd.f32 %v1521, %v1647
    %v1672 = vadd.f32 %v1522, %v1635
    %v1673 = vadd.f32 %v1523, %v1639
    %v1674 = vadd.f32 %v1524, %v1643
    %v1675 = vadd.f32 %v1525, %v1647
    %v1676 = vadd.f32 %v1526, %v1635
    %v1677 = vadd.f32 %v1527, %v1639
    %v1678 = vadd.f32 %v1528, %v1643
    %v1679 = vadd.f32 %v1529, %v1647
    %v1680 = vadd.f32 %v1530, %v1635
    %v1681 = vadd.f32 %v1531, %v1639
    %v1682 = vadd.f32 %v1532, %v1643
    %v1683 = vadd.f32 %v1533, %v1647
    %v1684 = vadd.f32 %v1534, %v1635
    %v1685 = vadd.f32 %v1535, %v1639
    %v1686 = vadd.f32 %v1536, %v1643
    %v1687 = vadd.f32 %v1537, %v1647
    %v1688 = vadd.f32 %v1538, %v1635
    %v1689 = vadd.f32 %v1539, %v1639
    %v1690 = vadd.f32 %v1540, %v1643
    %v1691 = vadd.f32 %v1541, %v1647
    %v1692 = vadd.f32 %v1542, %v1635
    %v1693 = vadd.f32 %v1543, %v1639
    %v1694 = vadd.f32 %v1544, %v1643
    %v1695 = vadd.f32 %v1545, %v1647
    %v1696 = vadd.f32 %v1546, %v1635
    %v1697 = vadd.f32 %v1547, %v1639
    %v1698 = vadd.f32 %v1548, %v1643
    %v1699 = vadd.f32 %v1549, %v1647
    %v1700 = vadd.f32 %v1550, %v1635
    %v1701 = vadd.f32 %v1551, %v1639
    %v1702 = vadd.f32 %v1552, %v1643
    %v1703 = vadd.f32 %v1553, %v1647
    %v1704 = vadd.f32 %v1554, %v1635
    %v1705 = vadd.f32 %v1555, %v1639
    %v1706 = vadd.f32 %v1556, %v1643
    %v1707 = vadd.f32 %v1557, %v1647
    %v1708 = vadd.f32 %v1558, %v1635
    %v1709 = vadd.f32 %v1559, %v1639
    %v1710 = vadd.f32 %v1560, %v1643
    %v1711 = vadd.f32 %v1561, %v1647
    %v1712 = vadd.f32 %v1562, %v1635
    %v1713 = vadd.f32 %v1563, %v1639
    %v1714 = vadd.f32 %v1564, %v1643
    %v1715 = vadd.f32 %v1565, %v1647
    %v1716 = vadd.f32 %v1566, %v1635
    %v1717 = vadd.f32 %v1567, %v1639
    %v1718 = vadd.f32 %v1568, %v1643
    %v1719 = vadd.f32 %v1569, %v1647
    %v1720 = vadd.f32 %v1570, %v1635
    %v1721 = vadd.f32 %v1571, %v1639
    %v1722 = vadd.f32 %v1572, %v1643
    %v1723 = vadd.f32 %v1573, %v1647
    %v1724 = vadd.f32 %v1574, %v1635
    %v1725 = vadd.f32 %v1575, %v1639
    %v1726 = vadd.f32 %v1576, %v1643
    %v1727 = vadd.f32 %v1577, %v1647
    %v1728 = vadd.f32 %v1578, %v1635
    %v1729 = vadd.f32 %v1579, %v1639
    %v1730 = vadd.f32 %v1580, %v1643
    %v1731 = vadd.f32 %v1581, %v1647
    %v1732 = vadd.f32 %v1582, %v1635
    %v1733 = vadd.f32 %v1583, %v1639
    %v1734 = vadd.f32 %v1584, %v1643
    %v1735 = vadd.f32 %v1585, %v1647
    %v1736 = vadd.f32 %v1586, %v1635
    %v1737 = vadd.f32 %v1587, %v1639
    %v1738 = vadd.f32 %v1588, %v1643
    %v1739 = vadd.f32 %v1589, %v1647
    %v1740 = vadd.f32 %v1590, %v1635
    %v1741 = vadd.f32 %v1591, %v1639
    %v1742 = vadd.f32 %v1592, %v1643
    %v1743 = vadd.f32 %v1593, %v1647
    %v1744 = vadd.f32 %v1594, %v1635
    %v1745 = vadd.f32 %v1595, %v1639
    %v1746 = vadd.f32 %v1596, %v1643
    %v1747 = vadd.f32 %v1597, %v1647
    %v1748 = vadd.f32 %v1598, %v1635
    %v1749 = vadd.f32 %v1599, %v1639
    %v1750 = vadd.f32 %v1600, %v1643
    %v1751 = vadd.f32 %v1601, %v1647
    %v1752 = vadd.f32 %v1602, %v1635
    %v1753 = vadd.f32 %v1603, %v1639
    %v1754 = vadd.f32 %v1604, %v1643
    %v1755 = vadd.f32 %v1605, %v1647
    %v1756 = vadd.f32 %v1606, %v1635
    %v1757 = vadd.f32 %v1607, %v1639
    %v1758 = vadd.f32 %v1608, %v1643
    %v1759 = vadd.f32 %v1609, %v1647
    %v1760 = vadd.f32 %v1610, %v1635
    %v1761 = vadd.f32 %v1611, %v1639
    %v1762 = vadd.f32 %v1612, %v1643
    %v1763 = vadd.f32 %v1613, %v1647
    %v1764 = vadd.f32 %v1614, %v1635
    %v1765 = vadd.f32 %v1615, %v1639
    %v1766 = vadd.f32 %v1616, %v1643
    %v1767 = vadd.f32 %v1617, %v1647
    %v1768 = vadd.f32 %v1618, %v1635
    %v1769 = vadd.f32 %v1619, %v1639
    %v1770 = vadd.f32 %v1620, %v1643
    %v1771 = vadd.f32 %v1621, %v1647
    %v1772 = vadd.f32 %v1622, %v1635
    %v1773 = vadd.f32 %v1623, %v1639
    %v1774 = vadd.f32 %v1624, %v1643
    %v1775 = vadd.f32 %v1625, %v1647
    %v1776 = vadd.f32 %v1626, %v1635
    %v1777 = vadd.f32 %v1627, %v1639
    %v1778 = vadd.f32 %v1628, %v1643
    %v1779 = vadd.f32 %v1629, %v1647
    %vm1780 = vcmp.gt.f32.partialorder %v1652, 0.0
    %vm1781 = vcmp.gt.f32.partialorder %v1653, 0.0
    %vm1782 = vcmp.gt.f32.partialorder %v1654, 0.0
    %vm1783 = vcmp.gt.f32.partialorder %v1655, 0.0
    %vm1784 = vcmp.gt.f32.partialorder %v1656, 0.0
    %vm1785 = vcmp.gt.f32.partialorder %v1657, 0.0
    %vm1786 = vcmp.gt.f32.partialorder %v1658, 0.0
    %vm1787 = vcmp.gt.f32.partialorder %v1659, 0.0
    %vm1788 = vcmp.gt.f32.partialorder %v1660, 0.0
    %vm1789 = vcmp.gt.f32.partialorder %v1661, 0.0
    %vm1790 = vcmp.gt.f32.partialorder %v1662, 0.0
    %vm1791 = vcmp.gt.f32.partialorder %v1663, 0.0
    %vm1792 = vcmp.gt.f32.partialorder %v1664, 0.0
    %vm1793 = vcmp.gt.f32.partialorder %v1665, 0.0
    %vm1794 = vcmp.gt.f32.partialorder %v1666, 0.0
    %vm1795 = vcmp.gt.f32.partialorder %v1667, 0.0
    %vm1796 = vcmp.gt.f32.partialorder %v1668, 0.0
    %vm1797 = vcmp.gt.f32.partialorder %v1669, 0.0
    %vm1798 = vcmp.gt.f32.partialorder %v1670, 0.0
    %vm1799 = vcmp.gt.f32.partialorder %v1671, 0.0
    %vm1800 = vcmp.gt.f32.partialorder %v1672, 0.0
    %vm1801 = vcmp.gt.f32.partialorder %v1673, 0.0
    %vm1802 = vcmp.gt.f32.partialorder %v1674, 0.0
    %vm1803 = vcmp.gt.f32.partialorder %v1675, 0.0
    %vm1804 = vcmp.gt.f32.partialorder %v1676, 0.0
    %vm1805 = vcmp.gt.f32.partialorder %v1677, 0.0
    %vm1806 = vcmp.gt.f32.partialorder %v1678, 0.0
    %vm1807 = vcmp.gt.f32.partialorder %v1679, 0.0
    %vm1808 = vcmp.gt.f32.partialorder %v1680, 0.0
    %vm1809 = vcmp.gt.f32.partialorder %v1681, 0.0
    %vm1810 = vcmp.gt.f32.partialorder %v1682, 0.0
    %vm1811 = vcmp.gt.f32.partialorder %v1683, 0.0
    %vm1812 = vcmp.gt.f32.partialorder %v1684, 0.0
    %vm1813 = vcmp.gt.f32.partialorder %v1685, 0.0
    %vm1814 = vcmp.gt.f32.partialorder %v1686, 0.0
    %vm1815 = vcmp.gt.f32.partialorder %v1687, 0.0
    %vm1816 = vcmp.gt.f32.partialorder %v1688, 0.0
    %vm1817 = vcmp.gt.f32.partialorder %v1689, 0.0
    %vm1818 = vcmp.gt.f32.partialorder %v1690, 0.0
    %vm1819 = vcmp.gt.f32.partialorder %v1691, 0.0
    %vm1820 = vcmp.gt.f32.partialorder %v1692, 0.0
    %vm1821 = vcmp.gt.f32.partialorder %v1693, 0.0
    %vm1822 = vcmp.gt.f32.partialorder %v1694, 0.0
    %vm1823 = vcmp.gt.f32.partialorder %v1695, 0.0
    %vm1824 = vcmp.gt.f32.partialorder %v1696, 0.0
    %vm1825 = vcmp.gt.f32.partialorder %v1697, 0.0
    %vm1826 = vcmp.gt.f32.partialorder %v1698, 0.0
    %vm1827 = vcmp.gt.f32.partialorder %v1699, 0.0
    %vm1828 = vcmp.gt.f32.partialorder %v1700, 0.0
    %vm1829 = vcmp.gt.f32.partialorder %v1701, 0.0
    %vm1830 = vcmp.gt.f32.partialorder %v1702, 0.0
    %vm1831 = vcmp.gt.f32.partialorder %v1703, 0.0
    %vm1832 = vcmp.gt.f32.partialorder %v1704, 0.0
    %vm1833 = vcmp.gt.f32.partialorder %v1705, 0.0
    %vm1834 = vcmp.gt.f32.partialorder %v1706, 0.0
    %vm1835 = vcmp.gt.f32.partialorder %v1707, 0.0
    %vm1836 = vcmp.gt.f32.partialorder %v1708, 0.0
    %vm1837 = vcmp.gt.f32.partialorder %v1709, 0.0
    %vm1838 = vcmp.gt.f32.partialorder %v1710, 0.0
    %vm1839 = vcmp.gt.f32.partialorder %v1711, 0.0
    %vm1840 = vcmp.gt.f32.partialorder %v1712, 0.0
    %vm1841 = vcmp.gt.f32.partialorder %v1713, 0.0
    %vm1842 = vcmp.gt.f32.partialorder %v1714, 0.0
    %vm1843 = vcmp.gt.f32.partialorder %v1715, 0.0
    %vm1844 = vcmp.gt.f32.partialorder %v1716, 0.0
    %vm1845 = vcmp.gt.f32.partialorder %v1717, 0.0
    %vm1846 = vcmp.gt.f32.partialorder %v1718, 0.0
    %vm1847 = vcmp.gt.f32.partialorder %v1719, 0.0
    %vm1848 = vcmp.gt.f32.partialorder %v1720, 0.0
    %vm1849 = vcmp.gt.f32.partialorder %v1721, 0.0
    %vm1850 = vcmp.gt.f32.partialorder %v1722, 0.0
    %vm1851 = vcmp.gt.f32.partialorder %v1723, 0.0
    %vm1852 = vcmp.gt.f32.partialorder %v1724, 0.0
    %vm1853 = vcmp.gt.f32.partialorder %v1725, 0.0
    %vm1854 = vcmp.gt.f32.partialorder %v1726, 0.0
    %vm1855 = vcmp.gt.f32.partialorder %v1727, 0.0
    %vm1856 = vcmp.gt.f32.partialorder %v1728, 0.0
    %vm1857 = vcmp.gt.f32.partialorder %v1729, 0.0
    %vm1858 = vcmp.gt.f32.partialorder %v1730, 0.0
    %vm1859 = vcmp.gt.f32.partialorder %v1731, 0.0
    %vm1860 = vcmp.gt.f32.partialorder %v1732, 0.0
    %vm1861 = vcmp.gt.f32.partialorder %v1733, 0.0
    %vm1862 = vcmp.gt.f32.partialorder %v1734, 0.0
    %vm1863 = vcmp.gt.f32.partialorder %v1735, 0.0
    %vm1864 = vcmp.gt.f32.partialorder %v1736, 0.0
    %vm1865 = vcmp.gt.f32.partialorder %v1737, 0.0
    %vm1866 = vcmp.gt.f32.partialorder %v1738, 0.0
    %vm1867 = vcmp.gt.f32.partialorder %v1739, 0.0
    %vm1868 = vcmp.gt.f32.partialorder %v1740, 0.0
    %vm1869 = vcmp.gt.f32.partialorder %v1741, 0.0
    %vm1870 = vcmp.gt.f32.partialorder %v1742, 0.0
    %vm1871 = vcmp.gt.f32.partialorder %v1743, 0.0
    %vm1872 = vcmp.gt.f32.partialorder %v1744, 0.0
    %vm1873 = vcmp.gt.f32.partialorder %v1745, 0.0
    %vm1874 = vcmp.gt.f32.partialorder %v1746, 0.0
    %vm1875 = vcmp.gt.f32.partialorder %v1747, 0.0
    %vm1876 = vcmp.gt.f32.partialorder %v1748, 0.0
    %vm1877 = vcmp.gt.f32.partialorder %v1749, 0.0
    %vm1878 = vcmp.gt.f32.partialorder %v1750, 0.0
    %vm1879 = vcmp.gt.f32.partialorder %v1751, 0.0
    %vm1880 = vcmp.gt.f32.partialorder %v1752, 0.0
    %vm1881 = vcmp.gt.f32.partialorder %v1753, 0.0
    %vm1882 = vcmp.gt.f32.partialorder %v1754, 0.0
    %vm1883 = vcmp.gt.f32.partialorder %v1755, 0.0
    %vm1884 = vcmp.gt.f32.partialorder %v1756, 0.0
    %vm1885 = vcmp.gt.f32.partialorder %v1757, 0.0
    %vm1886 = vcmp.gt.f32.partialorder %v1758, 0.0
    %vm1887 = vcmp.gt.f32.partialorder %v1759, 0.0
    %vm1888 = vcmp.gt.f32.partialorder %v1760, 0.0
    %vm1889 = vcmp.gt.f32.partialorder %v1761, 0.0
    %vm1890 = vcmp.gt.f32.partialorder %v1762, 0.0
    %vm1891 = vcmp.gt.f32.partialorder %v1763, 0.0
    %vm1892 = vcmp.gt.f32.partialorder %v1764, 0.0
    %vm1893 = vcmp.gt.f32.partialorder %v1765, 0.0
    %vm1894 = vcmp.gt.f32.partialorder %v1766, 0.0
    %vm1895 = vcmp.gt.f32.partialorder %v1767, 0.0
    %vm1896 = vcmp.gt.f32.partialorder %v1768, 0.0
    %vm1897 = vcmp.gt.f32.partialorder %v1769, 0.0
    %vm1898 = vcmp.gt.f32.partialorder %v1770, 0.0
    %vm1899 = vcmp.gt.f32.partialorder %v1771, 0.0
    %vm1900 = vcmp.gt.f32.partialorder %v1772, 0.0
    %vm1901 = vcmp.gt.f32.partialorder %v1773, 0.0
    %vm1902 = vcmp.gt.f32.partialorder %v1774, 0.0
    %vm1903 = vcmp.gt.f32.partialorder %v1775, 0.0
    %vm1904 = vcmp.gt.f32.partialorder %v1776, 0.0
    %vm1905 = vcmp.gt.f32.partialorder %v1777, 0.0
    %vm1906 = vcmp.gt.f32.partialorder %v1778, 0.0
    %vm1907 = vcmp.gt.f32.partialorder %v1779, 0.0
    %v1908 = vmul.f32 %v1652, 0.1
    %v1909 = vmul.f32 %v1653, 0.1
    %v1910 = vmul.f32 %v1654, 0.1
    %v1911 = vmul.f32 %v1655, 0.1
    %v1912 = vmul.f32 %v1656, 0.1
    %v1913 = vmul.f32 %v1657, 0.1
    %v1914 = vmul.f32 %v1658, 0.1
    %v1915 = vmul.f32 %v1659, 0.1
    %v1916 = vmul.f32 %v1660, 0.1
    %v1917 = vmul.f32 %v1661, 0.1
    %v1918 = vmul.f32 %v1662, 0.1
    %v1919 = vmul.f32 %v1663, 0.1
    %v1920 = vmul.f32 %v1664, 0.1
    %v1921 = vmul.f32 %v1665, 0.1
    %v1922 = vmul.f32 %v1666, 0.1
    %v1923 = vmul.f32 %v1667, 0.1
    %v1924 = vmul.f32 %v1668, 0.1
    %v1925 = vmul.f32 %v1669, 0.1
    %v1926 = vmul.f32 %v1670, 0.1
    %v1927 = vmul.f32 %v1671, 0.1
    %v1928 = vmul.f32 %v1672, 0.1
    %v1929 = vmul.f32 %v1673, 0.1
    %v1930 = vmul.f32 %v1674, 0.1
    %v1931 = vmul.f32 %v1675, 0.1
    %v1932 = vmul.f32 %v1676, 0.1
    %v1933 = vmul.f32 %v1677, 0.1
    %v1934 = vmul.f32 %v1678, 0.1
    %v1935 = vmul.f32 %v1679, 0.1
    %v1936 = vmul.f32 %v1680, 0.1
    %v1937 = vmul.f32 %v1681, 0.1
    %v1938 = vmul.f32 %v1682, 0.1
    %v1939 = vmul.f32 %v1683, 0.1
    %v1940 = vmul.f32 %v1684, 0.1
    %v1941 = vmul.f32 %v1685, 0.1
    %v1942 = vmul.f32 %v1686, 0.1
    %v1943 = vmul.f32 %v1687, 0.1
    %v1944 = vmul.f32 %v1688, 0.1
    %v1945 = vmul.f32 %v1689, 0.1
    %v1946 = vmul.f32 %v1690, 0.1
    %v1947 = vmul.f32 %v1691, 0.1
    %v1948 = vmul.f32 %v1692, 0.1
    %v1949 = vmul.f32 %v1693, 0.1
    %v1950 = vmul.f32 %v1694, 0.1
    %v1951 = vmul.f32 %v1695, 0.1
    %v1952 = vmul.f32 %v1696, 0.1
    %v1953 = vmul.f32 %v1697, 0.1
    %v1954 = vmul.f32 %v1698, 0.1
    %v1955 = vmul.f32 %v1699, 0.1
    %v1956 = vmul.f32 %v1700, 0.1
    %v1957 = vmul.f32 %v1701, 0.1
    %v1958 = vmul.f32 %v1702, 0.1
    %v1959 = vmul.f32 %v1703, 0.1
    %v1960 = vmul.f32 %v1704, 0.1
    %v1961 = vmul.f32 %v1705, 0.1
    %v1962 = vmul.f32 %v1706, 0.1
    %v1963 = vmul.f32 %v1707, 0.1
    %v1964 = vmul.f32 %v1708, 0.1
    %v1965 = vmul.f32 %v1709, 0.1
    %v1966 = vmul.f32 %v1710, 0.1
    %v1967 = vmul.f32 %v1711, 0.1
    %v1968 = vmul.f32 %v1712, 0.1
    %v1969 = vmul.f32 %v1713, 0.1
    %v1970 = vmul.f32 %v1714, 0.1
    %v1971 = vmul.f32 %v1715, 0.1
    %v1972 = vmul.f32 %v1716, 0.1
    %v1973 = vmul.f32 %v1717, 0.1
    %v1974 = vmul.f32 %v1718, 0.1
    %v1975 = vmul.f32 %v1719, 0.1
    %v1976 = vmul.f32 %v1720, 0.1
    %v1977 = vmul.f32 %v1721, 0.1
    %v1978 = vmul.f32 %v1722, 0.1
    %v1979 = vmul.f32 %v1723, 0.1
    %v1980 = vmul.f32 %v1724, 0.1
    %v1981 = vmul.f32 %v1725, 0.1
    %v1982 = vmul.f32 %v1726, 0.1
    %v1983 = vmul.f32 %v1727, 0.1
    %v1984 = vmul.f32 %v1728, 0.1
    %v1985 = vmul.f32 %v1729, 0.1
    %v1986 = vmul.f32 %v1730, 0.1
    %v1987 = vmul.f32 %v1731, 0.1
    %v1988 = vmul.f32 %v1732, 0.1
    %v1989 = vmul.f32 %v1733, 0.1
    %v1990 = vmul.f32 %v1734, 0.1
    %v1991 = vmul.f32 %v1735, 0.1
    %v1992 = vmul.f32 %v1736, 0.1
    %v1993 = vmul.f32 %v1737, 0.1
    %v1994 = vmul.f32 %v1738, 0.1
    %v1995 = vmul.f32 %v1739, 0.1
    %v1996 = vmul.f32 %v1740, 0.1
    %v1997 = vmul.f32 %v1741, 0.1
    %v1998 = vmul.f32 %v1742, 0.1
    %v1999 = vmul.f32 %v1743, 0.1
    %v2000 = vmul.f32 %v1744, 0.1
    %v2001 = vmul.f32 %v1745, 0.1
    %v2002 = vmul.f32 %v1746, 0.1
    %v2003 = vmul.f32 %v1747, 0.1
    %v2004 = vmul.f32 %v1748, 0.1
    %v2005 = vmul.f32 %v1749, 0.1
    %v2006 = vmul.f32 %v1750, 0.1
    %v2007 = vmul.f32 %v1751, 0.1
    %v2008 = vmul.f32 %v1752, 0.1
    %v2009 = vmul.f32 %v1753, 0.1
    %v2010 = vmul.f32 %v1754, 0.1
    %v2011 = vmul.f32 %v1755, 0.1
    %v2012 = vmul.f32 %v1756, 0.1
    %v2013 = vmul.f32 %v1757, 0.1
    %v2014 = vmul.f32 %v1758, 0.1
    %v2015 = vmul.f32 %v1759, 0.1
    %v2016 = vmul.f32 %v1760, 0.1
    %v2017 = vmul.f32 %v1761, 0.1
    %v2018 = vmul.f32 %v1762, 0.1
    %v2019 = vmul.f32 %v1763, 0.1
    %v2020 = vmul.f32 %v1764, 0.1
    %v2021 = vmul.f32 %v1765, 0.1
    %v2022 = vmul.f32 %v1766, 0.1
    %v2023 = vmul.f32 %v1767, 0.1
    %v2024 = vmul.f32 %v1768, 0.1
    %v2025 = vmul.f32 %v1769, 0.1
    %v2026 = vmul.f32 %v1770, 0.1
    %v2027 = vmul.f32 %v1771, 0.1
    %v2028 = vmul.f32 %v1772, 0.1
    %v2029 = vmul.f32 %v1773, 0.1
    %v2030 = vmul.f32 %v1774, 0.1
    %v2031 = vmul.f32 %v1775, 0.1
    %v2032 = vmul.f32 %v1776, 0.1
    %v2033 = vmul.f32 %v1777, 0.1
    %v2034 = vmul.f32 %v1778, 0.1
    %v2035 = vmul.f32 %v1779, 0.1
    %v2036 = vsel %vm1780, %v1652, %v1908
    %v2037 = vsel %vm1781, %v1653, %v1909
    %v2038 = vsel %vm1782, %v1654, %v1910
    %v2039 = vsel %vm1783, %v1655, %v1911
    %v2040 = vsel %vm1784, %v1656, %v1912
    %v2041 = vsel %vm1785, %v1657, %v1913
    %v2042 = vsel %vm1786, %v1658, %v1914
    %v2043 = vsel %vm1787, %v1659, %v1915
    %v2044 = vsel %vm1788, %v1660, %v1916
    %v2045 = vsel %vm1789, %v1661, %v1917
    %v2046 = vsel %vm1790, %v1662, %v1918
    %v2047 = vsel %vm1791, %v1663, %v1919
    %v2048 = vsel %vm1792, %v1664, %v1920
    %v2049 = vsel %vm1793, %v1665, %v1921
    %v2050 = vsel %vm1794, %v1666, %v1922
    %v2051 = vsel %vm1795, %v1667, %v1923
    %v2052 = vsel %vm1796, %v1668, %v1924
    %v2053 = vsel %vm1797, %v1669, %v1925
    %v2054 = vsel %vm1798, %v1670, %v1926
    %v2055 = vsel %vm1799, %v1671, %v1927
    %v2056 = vsel %vm1800, %v1672, %v1928
    %v2057 = vsel %vm1801, %v1673, %v1929
    %v2058 = vsel %vm1802, %v1674, %v1930
    %v2059 = vsel %vm1803, %v1675, %v1931
    %v2060 = vsel %vm1804, %v1676, %v1932
    %v2061 = vsel %vm1805, %v1677, %v1933
    %v2062 = vsel %vm1806, %v1678, %v1934
    %v2063 = vsel %vm1807, %v1679, %v1935
    %v2064 = vsel %vm1808, %v1680, %v1936
    %v2065 = vsel %vm1809, %v1681, %v1937
    %v2066 = vsel %vm1810, %v1682, %v1938
    %v2067 = vsel %vm1811, %v1683, %v1939
    %v2068 = vsel %vm1812, %v1684, %v1940
    %v2069 = vsel %vm1813, %v1685, %v1941
    %v2070 = vsel %vm1814, %v1686, %v1942
    %v2071 = vsel %vm1815, %v1687, %v1943
    %v2072 = vsel %vm1816, %v1688, %v1944
    %v2073 = vsel %vm1817, %v1689, %v1945
    %v2074 = vsel %vm1818, %v1690, %v1946
    %v2075 = vsel %vm1819, %v1691, %v1947
    %v2076 = vsel %vm1820, %v1692, %v1948
    %v2077 = vsel %vm1821, %v1693, %v1949
    %v2078 = vsel %vm1822, %v1694, %v1950
    %v2079 = vsel %vm1823, %v1695, %v1951
    %v2080 = vsel %vm1824, %v1696, %v1952
    %v2081 = vsel %vm1825, %v1697, %v1953
    %v2082 = vsel %vm1826, %v1698, %v1954
    %v2083 = vsel %vm1827, %v1699, %v1955
    %v2084 = vsel %vm1828, %v1700, %v1956
    %v2085 = vsel %vm1829, %v1701, %v1957
    %v2086 = vsel %vm1830, %v1702, %v1958
    %v2087 = vsel %vm1831, %v1703, %v1959
    %v2088 = vsel %vm1832, %v1704, %v1960
    %v2089 = vsel %vm1833, %v1705, %v1961
    %v2090 = vsel %vm1834, %v1706, %v1962
    %v2091 = vsel %vm1835, %v1707, %v1963
    %v2092 = vsel %vm1836, %v1708, %v1964
    %v2093 = vsel %vm1837, %v1709, %v1965
    %v2094 = vsel %vm1838, %v1710, %v1966
    %v2095 = vsel %vm1839, %v1711, %v1967
    %v2096 = vsel %vm1840, %v1712, %v1968
    %v2097 = vsel %vm1841, %v1713, %v1969
    %v2098 = vsel %vm1842, %v1714, %v1970
    %v2099 = vsel %vm1843, %v1715, %v1971
    %v2100 = vsel %vm1844, %v1716, %v1972
    %v2101 = vsel %vm1845, %v1717, %v1973
    %v2102 = vsel %vm1846, %v1718, %v1974
    %v2103 = vsel %vm1847, %v1719, %v1975
    %v2104 = vsel %vm1848, %v1720, %v1976
    %v2105 = vsel %vm1849, %v1721, %v1977
    %v2106 = vsel %vm1850, %v1722, %v1978
    %v2107 = vsel %vm1851, %v1723, %v1979
    %v2108 = vsel %vm1852, %v1724, %v1980
    %v2109 = vsel %vm1853, %v1725, %v1981
    %v2110 = vsel %vm1854, %v1726, %v1982
    %v2111 = vsel %vm1855, %v1727, %v1983
    %v2112 = vsel %vm1856, %v1728, %v1984
    %v2113 = vsel %vm1857, %v1729, %v1985
    %v2114 = vsel %vm1858, %v1730, %v1986
    %v2115 = vsel %vm1859, %v1731, %v1987
    %v2116 = vsel %vm1860, %v1732, %v1988
    %v2117 = vsel %vm1861, %v1733, %v1989
    %v2118 = vsel %vm1862, %v1734, %v1990
    %v2119 = vsel %vm1863, %v1735, %v1991
    %v2120 = vsel %vm1864, %v1736, %v1992
    %v2121 = vsel %vm1865, %v1737, %v1993
    %v2122 = vsel %vm1866, %v1738, %v1994
    %v2123 = vsel %vm1867, %v1739, %v1995
    %v2124 = vsel %vm1868, %v1740, %v1996
    %v2125 = vsel %vm1869, %v1741, %v1997
    %v2126 = vsel %vm1870, %v1742, %v1998
    %v2127 = vsel %vm1871, %v1743, %v1999
    %v2128 = vsel %vm1872, %v1744, %v2000
    %v2129 = vsel %vm1873, %v1745, %v2001
    %v2130 = vsel %vm1874, %v1746, %v2002
    %v2131 = vsel %vm1875, %v1747, %v2003
    %v2132 = vsel %vm1876, %v1748, %v2004
    %v2133 = vsel %vm1877, %v1749, %v2005
    %v2134 = vsel %vm1878, %v1750, %v2006
    %v2135 = vsel %vm1879, %v1751, %v2007
    %v2136 = vsel %vm1880, %v1752, %v2008
    %v2137 = vsel %vm1881, %v1753, %v2009
    %v2138 = vsel %vm1882, %v1754, %v2010
    %v2139 = vsel %vm1883, %v1755, %v2011
    %v2140 = vsel %vm1884, %v1756, %v2012
    %v2141 = vsel %vm1885, %v1757, %v2013
    %v2142 = vsel %vm1886, %v1758, %v2014
    %v2143 = vsel %vm1887, %v1759, %v2015
    %v2144 = vsel %vm1888, %v1760, %v2016
    %v2145 = vsel %vm1889, %v1761, %v2017
    %v2146 = vsel %vm1890, %v1762, %v2018
    %v2147 = vsel %vm1891, %v1763, %v2019
    %v2148 = vsel %vm1892, %v1764, %v2020
    %v2149 = vsel %vm1893, %v1765, %v2021
    %v2150 = vsel %vm1894, %v1766, %v2022
    %v2151 = vsel %vm1895, %v1767, %v2023
    %v2152 = vsel %vm1896, %v1768, %v2024
    %v2153 = vsel %vm1897, %v1769, %v2025
    %v2154 = vsel %vm1898, %v1770, %v2026
    %v2155 = vsel %vm1899, %v1771, %v2027
    %v2156 = vsel %vm1900, %v1772, %v2028
    %v2157 = vsel %vm1901, %v1773, %v2029
    %v2158 = vsel %vm1902, %v1774, %v2030
    %v2159 = vsel %vm1903, %v1775, %v2031
    %v2160 = vsel %vm1904, %v1776, %v2032
    %v2161 = vsel %vm1905, %v1777, %v2033
    %v2162 = vsel %vm1906, %v1778, %v2034
    %v2163 = vsel %vm1907, %v1779, %v2035
    %v2164 = vpack.c.bf16 %v2040, %v2036
    %v2165 = vpack.c.bf16 %v2041, %v2037
    %v2166 = vpack.c.bf16 %v2042, %v2038
    %v2167 = vpack.c.bf16 %v2043, %v2039
    %v2168 = vpack.c.bf16 %v2048, %v2044
    %v2169 = vpack.c.bf16 %v2049, %v2045
    %v2170 = vpack.c.bf16 %v2050, %v2046
    %v2171 = vpack.c.bf16 %v2051, %v2047
    %v2172 = vpack.c.bf16 %v2056, %v2052
    %v2173 = vpack.c.bf16 %v2057, %v2053
    %v2174 = vpack.c.bf16 %v2058, %v2054
    %v2175 = vpack.c.bf16 %v2059, %v2055
    %v2176 = vpack.c.bf16 %v2064, %v2060
    %v2177 = vpack.c.bf16 %v2065, %v2061
    %v2178 = vpack.c.bf16 %v2066, %v2062
    %v2179 = vpack.c.bf16 %v2067, %v2063
    %v2180 = vpack.c.bf16 %v2072, %v2068
    %v2181 = vpack.c.bf16 %v2073, %v2069
    %v2182 = vpack.c.bf16 %v2074, %v2070
    %v2183 = vpack.c.bf16 %v2075, %v2071
    %v2184 = vpack.c.bf16 %v2080, %v2076
    %v2185 = vpack.c.bf16 %v2081, %v2077
    %v2186 = vpack.c.bf16 %v2082, %v2078
    %v2187 = vpack.c.bf16 %v2083, %v2079
    %v2188 = vpack.c.bf16 %v2088, %v2084
    %v2189 = vpack.c.bf16 %v2089, %v2085
    %v2190 = vpack.c.bf16 %v2090, %v2086
    %v2191 = vpack.c.bf16 %v2091, %v2087
    %v2192 = vpack.c.bf16 %v2096, %v2092
    %v2193 = vpack.c.bf16 %v2097, %v2093
    %v2194 = vpack.c.bf16 %v2098, %v2094
    %v2195 = vpack.c.bf16 %v2099, %v2095
    %v2196 = vpack.c.bf16 %v2104, %v2100
    %v2197 = vpack.c.bf16 %v2105, %v2101
    %v2198 = vpack.c.bf16 %v2106, %v2102
    %v2199 = vpack.c.bf16 %v2107, %v2103
    %v2200 = vpack.c.bf16 %v2112, %v2108
    %v2201 = vpack.c.bf16 %v2113, %v2109
    %v2202 = vpack.c.bf16 %v2114, %v2110
    %v2203 = vpack.c.bf16 %v2115, %v2111
    %v2204 = vpack.c.bf16 %v2120, %v2116
    %v2205 = vpack.c.bf16 %v2121, %v2117
    %v2206 = vpack.c.bf16 %v2122, %v2118
    %v2207 = vpack.c.bf16 %v2123, %v2119
    %v2208 = vpack.c.bf16 %v2128, %v2124
    %v2209 = vpack.c.bf16 %v2129, %v2125
    %v2210 = vpack.c.bf16 %v2130, %v2126
    %v2211 = vpack.c.bf16 %v2131, %v2127
    %v2212 = vpack.c.bf16 %v2136, %v2132
    %v2213 = vpack.c.bf16 %v2137, %v2133
    %v2214 = vpack.c.bf16 %v2138, %v2134
    %v2215 = vpack.c.bf16 %v2139, %v2135
    %v2216 = vpack.c.bf16 %v2144, %v2140
    %v2217 = vpack.c.bf16 %v2145, %v2141
    %v2218 = vpack.c.bf16 %v2146, %v2142
    %v2219 = vpack.c.bf16 %v2147, %v2143
    %v2220 = vpack.c.bf16 %v2152, %v2148
    %v2221 = vpack.c.bf16 %v2153, %v2149
    %v2222 = vpack.c.bf16 %v2154, %v2150
    %v2223 = vpack.c.bf16 %v2155, %v2151
    %v2224 = vpack.c.bf16 %v2160, %v2156
    %v2225 = vpack.c.bf16 %v2161, %v2157
    %v2226 = vpack.c.bf16 %v2162, %v2158
    %v2227 = vpack.c.bf16 %v2163, %v2159
    %v2228 = vld [vmem:[%s3] sm:$0xf]
    %v2229 = vld [vmem:[%s3 + $0x4] sm:$0xf]
    %v2230 = vld [vmem:[%s3 + $0x8] sm:$0xf]
    %v2231 = vld [vmem:[%s3 + $0xc] sm:$0xf]
    %v2232 = vld [vmem:[%s3 + $0x10] sm:$0xf]
    %v2233 = vld [vmem:[%s3 + $0x14] sm:$0xf]
    %v2234 = vld [vmem:[%s3 + $0x18] sm:$0xf]
    %v2235 = vld [vmem:[%s3 + $0x1c] sm:$0xf]
    %v2236 = vld [vmem:[%s3 + $0x20] sm:$0xf]
    %v2237 = vld [vmem:[%s3 + $0x24] sm:$0xf]
    %v2238 = vld [vmem:[%s3 + $0x28] sm:$0xf]
    %v2239 = vld [vmem:[%s3 + $0x2c] sm:$0xf]
    %v2240 = vld [vmem:[%s3 + $0x30] sm:$0xf]
    %v2241 = vld [vmem:[%s3 + $0x34] sm:$0xf]
    %v2242 = vld [vmem:[%s3 + $0x38] sm:$0xf]
    %v2243 = vld [vmem:[%s3 + $0x3c] sm:$0xf]
    %v2244 = vld [vmem:[%s3 + $0x40] sm:$0xf]
    %v2245 = vld [vmem:[%s3 + $0x44] sm:$0xf]
    %v2246 = vld [vmem:[%s3 + $0x48] sm:$0xf]
    %v2247 = vld [vmem:[%s3 + $0x4c] sm:$0xf]
    %v2248 = vld [vmem:[%s3 + $0x50] sm:$0xf]
    %v2249 = vld [vmem:[%s3 + $0x54] sm:$0xf]
    %v2250 = vld [vmem:[%s3 + $0x58] sm:$0xf]
    %v2251 = vld [vmem:[%s3 + $0x5c] sm:$0xf]
    %v2252 = vld [vmem:[%s3 + $0x60] sm:$0xf]
    %v2253 = vld [vmem:[%s3 + $0x64] sm:$0xf]
    %v2254 = vld [vmem:[%s3 + $0x68] sm:$0xf]
    %v2255 = vld [vmem:[%s3 + $0x6c] sm:$0xf]
    %v2256 = vld [vmem:[%s3 + $0x70] sm:$0xf]
    %v2257 = vld [vmem:[%s3 + $0x74] sm:$0xf]
    %v2258 = vld [vmem:[%s3 + $0x78] sm:$0xf]
    %v2259 = vld [vmem:[%s3 + $0x7c] sm:$0xf]
    %v2260 = vld [vmem:[%s3 + $0x80] sm:$0xf]
    %v2261 = vld [vmem:[%s3 + $0x84] sm:$0xf]
    %v2262 = vld [vmem:[%s3 + $0x88] sm:$0xf]
    %v2263 = vld [vmem:[%s3 + $0x8c] sm:$0xf]
    %v2264 = vld [vmem:[%s3 + $0x90] sm:$0xf]
    %v2265 = vld [vmem:[%s3 + $0x94] sm:$0xf]
    %v2266 = vld [vmem:[%s3 + $0x98] sm:$0xf]
    %v2267 = vld [vmem:[%s3 + $0x9c] sm:$0xf]
    %v2268 = vld [vmem:[%s3 + $0xa0] sm:$0xf]
    %v2269 = vld [vmem:[%s3 + $0xa4] sm:$0xf]
    %v2270 = vld [vmem:[%s3 + $0xa8] sm:$0xf]
    %v2271 = vld [vmem:[%s3 + $0xac] sm:$0xf]
    %v2272 = vld [vmem:[%s3 + $0xb0] sm:$0xf]
    %v2273 = vld [vmem:[%s3 + $0xb4] sm:$0xf]
    %v2274 = vld [vmem:[%s3 + $0xb8] sm:$0xf]
    %v2275 = vld [vmem:[%s3 + $0xbc] sm:$0xf]
    %v2276 = vld [vmem:[%s3 + $0xc0] sm:$0xf]
    %v2277 = vld [vmem:[%s3 + $0xc4] sm:$0xf]
    %v2278 = vld [vmem:[%s3 + $0xc8] sm:$0xf]
    %v2279 = vld [vmem:[%s3 + $0xcc] sm:$0xf]
    %v2280 = vld [vmem:[%s3 + $0xd0] sm:$0xf]
    %v2281 = vld [vmem:[%s3 + $0xd4] sm:$0xf]
    %v2282 = vld [vmem:[%s3 + $0xd8] sm:$0xf]
    %v2283 = vld [vmem:[%s3 + $0xdc] sm:$0xf]
    %v2284 = vld [vmem:[%s3 + $0xe0] sm:$0xf]
    %v2285 = vld [vmem:[%s3 + $0xe4] sm:$0xf]
    %v2286 = vld [vmem:[%s3 + $0xe8] sm:$0xf]
    %v2287 = vld [vmem:[%s3 + $0xec] sm:$0xf]
    %v2288 = vld [vmem:[%s3 + $0xf0] sm:$0xf]
    %v2289 = vld [vmem:[%s3 + $0xf4] sm:$0xf]
    %v2290 = vld [vmem:[%s3 + $0xf8] sm:$0xf]
    %v2291 = vld [vmem:[%s3 + $0xfc] sm:$0xf]
    %v2292 = vld [vmem:[%s4] sm:$0x1]
    %v2294 = vlaneseq
    %v2295 = vshrl.u32 %v2294, 7
    %v2296 = vsub.s32 0, %v2295
    %v2297 = vrot.slane %v2292, %v2296
    %v2363 = vunpack.c.l.b16 %v2228
    %v2364 = vunpack.c.l.b16 %v2229
    %v2365 = vunpack.c.l.b16 %v2230
    %v2366 = vunpack.c.l.b16 %v2231
    %v2367 = vunpack.c.l.b16 %v2232
    %v2368 = vunpack.c.l.b16 %v2233
    %v2369 = vunpack.c.l.b16 %v2234
    %v2370 = vunpack.c.l.b16 %v2235
    %v2371 = vunpack.c.l.b16 %v2236
    %v2372 = vunpack.c.l.b16 %v2237
    %v2373 = vunpack.c.l.b16 %v2238
    %v2374 = vunpack.c.l.b16 %v2239
    %v2375 = vunpack.c.l.b16 %v2240
    %v2376 = vunpack.c.l.b16 %v2241
    %v2377 = vunpack.c.l.b16 %v2242
    %v2378 = vunpack.c.l.b16 %v2243
    %v2379 = vunpack.c.l.b16 %v2244
    %v2380 = vunpack.c.l.b16 %v2245
    %v2381 = vunpack.c.l.b16 %v2246
    %v2382 = vunpack.c.l.b16 %v2247
    %v2383 = vunpack.c.l.b16 %v2248
    %v2384 = vunpack.c.l.b16 %v2249
    %v2385 = vunpack.c.l.b16 %v2250
    %v2386 = vunpack.c.l.b16 %v2251
    %v2387 = vunpack.c.l.b16 %v2252
    %v2388 = vunpack.c.l.b16 %v2253
    %v2389 = vunpack.c.l.b16 %v2254
    %v2390 = vunpack.c.l.b16 %v2255
    %v2391 = vunpack.c.l.b16 %v2256
    %v2392 = vunpack.c.l.b16 %v2257
    %v2393 = vunpack.c.l.b16 %v2258
    %v2394 = vunpack.c.l.b16 %v2259
    %v2395 = vunpack.c.l.b16 %v2260
    %v2396 = vunpack.c.l.b16 %v2261
    %v2397 = vunpack.c.l.b16 %v2262
    %v2398 = vunpack.c.l.b16 %v2263
    %v2399 = vunpack.c.l.b16 %v2264
    %v2400 = vunpack.c.l.b16 %v2265
    %v2401 = vunpack.c.l.b16 %v2266
    %v2402 = vunpack.c.l.b16 %v2267
    %v2403 = vunpack.c.l.b16 %v2268
    %v2404 = vunpack.c.l.b16 %v2269
    %v2405 = vunpack.c.l.b16 %v2270
    %v2406 = vunpack.c.l.b16 %v2271
    %v2407 = vunpack.c.l.b16 %v2272
    %v2408 = vunpack.c.l.b16 %v2273
    %v2409 = vunpack.c.l.b16 %v2274
    %v2410 = vunpack.c.l.b16 %v2275
    %v2411 = vunpack.c.l.b16 %v2276
    %v2412 = vunpack.c.l.b16 %v2277
    %v2413 = vunpack.c.l.b16 %v2278
    %v2414 = vunpack.c.l.b16 %v2279
    %v2415 = vunpack.c.l.b16 %v2280
    %v2416 = vunpack.c.l.b16 %v2281
    %v2417 = vunpack.c.l.b16 %v2282
    %v2418 = vunpack.c.l.b16 %v2283
    %v2419 = vunpack.c.l.b16 %v2284
    %v2420 = vunpack.c.l.b16 %v2285
    %v2421 = vunpack.c.l.b16 %v2286
    %v2422 = vunpack.c.l.b16 %v2287
    %v2423 = vunpack.c.l.b16 %v2288
    %v2424 = vunpack.c.l.b16 %v2289
    %v2425 = vunpack.c.l.b16 %v2290
    %v2426 = vunpack.c.l.b16 %v2291
    %v2427 = vpack.c.b16 %v2364, %v2363
    %v2428 = vpack.c.b16 %v2366, %v2365
    %v2429 = vpack.c.b16 %v2368, %v2367
    %v2430 = vpack.c.b16 %v2370, %v2369
    %v2431 = vpack.c.b16 %v2372, %v2371
    %v2432 = vpack.c.b16 %v2374, %v2373
    %v2433 = vpack.c.b16 %v2376, %v2375
    %v2434 = vpack.c.b16 %v2378, %v2377
    %v2435 = vpack.c.b16 %v2380, %v2379
    %v2436 = vpack.c.b16 %v2382, %v2381
    %v2437 = vpack.c.b16 %v2384, %v2383
    %v2438 = vpack.c.b16 %v2386, %v2385
    %v2439 = vpack.c.b16 %v2388, %v2387
    %v2440 = vpack.c.b16 %v2390, %v2389
    %v2441 = vpack.c.b16 %v2392, %v2391
    %v2442 = vpack.c.b16 %v2394, %v2393
    %v2443 = vpack.c.b16 %v2396, %v2395
    %v2444 = vpack.c.b16 %v2398, %v2397
    %v2445 = vpack.c.b16 %v2400, %v2399
    %v2446 = vpack.c.b16 %v2402, %v2401
    %v2447 = vpack.c.b16 %v2404, %v2403
    %v2448 = vpack.c.b16 %v2406, %v2405
    %v2449 = vpack.c.b16 %v2408, %v2407
    %v2450 = vpack.c.b16 %v2410, %v2409
    %v2451 = vpack.c.b16 %v2412, %v2411
    %v2452 = vpack.c.b16 %v2414, %v2413
    %v2453 = vpack.c.b16 %v2416, %v2415
    %v2454 = vpack.c.b16 %v2418, %v2417
    %v2455 = vpack.c.b16 %v2420, %v2419
    %v2456 = vpack.c.b16 %v2422, %v2421
    %v2457 = vpack.c.b16 %v2424, %v2423
    %v2458 = vpack.c.b16 %v2426, %v2425
    %2491 = vmatprep.subr.bf16.mxu0 0
    %2492 = vmatpush1.bf16.msra.mxu0 %v2427
    %2493 = vmatprep.subr.bf16.mxu0 0
    %2494 = vmatpush1.bf16.msra.mxu0 %v2428
    %2495 = vmatprep.subr.bf16.mxu0 0
    %2496 = vmatpush1.bf16.msra.mxu0 %v2429
    %2497 = vmatprep.subr.bf16.mxu0 0
    %2498 = vmatpush1.bf16.msra.mxu0 %v2430
    %2499 = vmatprep.subr.bf16.mxu0 0
    %2500 = vmatpush1.bf16.msra.mxu0 %v2431
    %2501 = vmatprep.subr.bf16.mxu0 0
    %2502 = vmatpush1.bf16.msra.mxu0 %v2432
    %2503 = vmatprep.subr.bf16.mxu0 0
    %2504 = vmatpush1.bf16.msra.mxu0 %v2433
    %2505 = vmatprep.subr.bf16.mxu0 0
    %2506 = vmatpush1.bf16.msra.mxu0 %v2434
    %2507 = vmatprep.subr.bf16.mxu0 0
    %2508 = vmatpush1.bf16.msra.mxu0 %v2435
    %2509 = vmatprep.subr.bf16.mxu0 0
    %2510 = vmatpush1.bf16.msra.mxu0 %v2436
    %2511 = vmatprep.subr.bf16.mxu0 0
    %2512 = vmatpush1.bf16.msra.mxu0 %v2437
    %2513 = vmatprep.subr.bf16.mxu0 0
    %2514 = vmatpush1.bf16.msra.mxu0 %v2438
    %2515 = vmatprep.subr.bf16.mxu0 0
    %2516 = vmatpush1.bf16.msra.mxu0 %v2439
    %2517 = vmatprep.subr.bf16.mxu0 0
    %2518 = vmatpush1.bf16.msra.mxu0 %v2440
    %2519 = vmatprep.subr.bf16.mxu0 0
    %2520 = vmatpush1.bf16.msra.mxu0 %v2441
    %2521 = vmatprep.subr.bf16.mxu0 0
    %2522 = vmatpush1.bf16.msra.mxu0 %v2442
    %2523 = vmatprep.mubr.bf16.mxu0 %v2165
    %2524 = vmatmul.mubr.bf16.gmra.mrb[0].mxu0 %v2164
    %v2525 = vpop.f32.mrb[0].mxu0
    %v2526 = vadd.f32 %v2297, %v2525
    %v2527 = vpop.f32.mrb[0].mxu0
    %v2528 = vpop.f32.mrb[0].mxu0
    %v2529 = vadd.f32 %v2297, %v2528
    %v2530 = vpop.f32.mrb[0].mxu0
    %2531 = vmatprep.mubr.bf16.mxu0 %v2169
    %2532 = vmatmul.mubr.bf16.gmra.mrb[0].mxu0 %v2168
    %v2533 = vpop.f32.mrb[0].mxu0
    %v2534 = vadd.f32 %v2297, %v2533
    %v2535 = vpop.f32.mrb[0].mxu0
    %v2536 = vpop.f32.mrb[0].mxu0
    %v2537 = vadd.f32 %v2297, %v2536
    %v2538 = vpop.f32.mrb[0].mxu0
    %2539 = vmatprep.mubr.bf16.mxu0 %v2173
    %2540 = vmatmul.mubr.bf16.gmra.mrb[0].mxu0 %v2172
    %v2541 = vpop.f32.mrb[0].mxu0
    %v2542 = vadd.f32 %v2297, %v2541
    %v2543 = vpop.f32.mrb[0].mxu0
    %v2544 = vpop.f32.mrb[0].mxu0
    %v2545 = vadd.f32 %v2297, %v2544
    %v2546 = vpop.f32.mrb[0].mxu0
    %2547 = vmatprep.mubr.bf16.mxu0 %v2177
    %2548 = vmatmul.mubr.bf16.gmra.mrb[0].mxu0 %v2176
    %v2549 = vpop.f32.mrb[0].mxu0
    %v2550 = vadd.f32 %v2297, %v2549
    %v2551 = vpop.f32.mrb[0].mxu0
    %v2552 = vpop.f32.mrb[0].mxu0
    %v2553 = vadd.f32 %v2297, %v2552
    %v2554 = vpop.f32.mrb[0].mxu0
    %2555 = vmatprep.mubr.bf16.mxu0 %v2181
    %2556 = vmatmul.mubr.bf16.gmra.mrb[0].mxu0 %v2180
    %v2557 = vpop.f32.mrb[0].mxu0
    %v2558 = vadd.f32 %v2297, %v2557
    %v2559 = vpop.f32.mrb[0].mxu0
    %v2560 = vpop.f32.mrb[0].mxu0
    %v2561 = vadd.f32 %v2297, %v2560
    %v2562 = vpop.f32.mrb[0].mxu0
    %2563 = vmatprep.mubr.bf16.mxu0 %v2185
    %2564 = vmatmul.mubr.bf16.gmra.mrb[0].mxu0 %v2184
    %v2565 = vpop.f32.mrb[0].mxu0
    %v2566 = vadd.f32 %v2297, %v2565
    %v2567 = vpop.f32.mrb[0].mxu0
    %v2568 = vpop.f32.mrb[0].mxu0
    %v2569 = vadd.f32 %v2297, %v2568
    %v2570 = vpop.f32.mrb[0].mxu0
    %2571 = vmatprep.mubr.bf16.mxu0 %v2189
    %2572 = vmatmul.mubr.bf16.gmra.mrb[0].mxu0 %v2188
    %v2573 = vpop.f32.mrb[0].mxu0
    %v2574 = vadd.f32 %v2297, %v2573
    %v2575 = vpop.f32.mrb[0].mxu0
    %v2576 = vpop.f32.mrb[0].mxu0
    %v2577 = vadd.f32 %v2297, %v2576
    %v2578 = vpop.f32.mrb[0].mxu0
    %2579 = vmatprep.mubr.bf16.mxu0 %v2193
    %2580 = vmatmul.mubr.bf16.gmra.mrb[0].mxu0 %v2192
    %v2581 = vpop.f32.mrb[0].mxu0
    %v2582 = vadd.f32 %v2297, %v2581
    %v2583 = vpop.f32.mrb[0].mxu0
    %v2584 = vpop.f32.mrb[0].mxu0
    %v2585 = vadd.f32 %v2297, %v2584
    %v2586 = vpop.f32.mrb[0].mxu0
    %2587 = vmatprep.mubr.bf16.mxu0 %v2197
    %2588 = vmatmul.mubr.bf16.gmra.mrb[0].mxu0 %v2196
    %v2589 = vpop.f32.mrb[0].mxu0
    %v2590 = vadd.f32 %v2297, %v2589
    %v2591 = vpop.f32.mrb[0].mxu0
    %v2592 = vpop.f32.mrb[0].mxu0
    %v2593 = vadd.f32 %v2297, %v2592
    %v2594 = vpop.f32.mrb[0].mxu0
    %2595 = vmatprep.mubr.bf16.mxu0 %v2201
    %2596 = vmatmul.mubr.bf16.gmra.mrb[0].mxu0 %v2200
    %v2597 = vpop.f32.mrb[0].mxu0
    %v2598 = vadd.f32 %v2297, %v2597
    %v2599 = vpop.f32.mrb[0].mxu0
    %v2600 = vpop.f32.mrb[0].mxu0
    %v2601 = vadd.f32 %v2297, %v2600
    %v2602 = vpop.f32.mrb[0].mxu0
    %2603 = vmatprep.mubr.bf16.mxu0 %v2205
    %2604 = vmatmul.mubr.bf16.gmra.mrb[0].mxu0 %v2204
    %v2605 = vpop.f32.mrb[0].mxu0
    %v2606 = vadd.f32 %v2297, %v2605
    %v2607 = vpop.f32.mrb[0].mxu0
    %v2608 = vpop.f32.mrb[0].mxu0
    %v2609 = vadd.f32 %v2297, %v2608
    %v2610 = vpop.f32.mrb[0].mxu0
    %2611 = vmatprep.mubr.bf16.mxu0 %v2209
    %2612 = vmatmul.mubr.bf16.gmra.mrb[0].mxu0 %v2208
    %v2613 = vpop.f32.mrb[0].mxu0
    %v2614 = vadd.f32 %v2297, %v2613
    %v2615 = vpop.f32.mrb[0].mxu0
    %v2616 = vpop.f32.mrb[0].mxu0
    %v2617 = vadd.f32 %v2297, %v2616
    %v2618 = vpop.f32.mrb[0].mxu0
    %2619 = vmatprep.mubr.bf16.mxu0 %v2213
    %2620 = vmatmul.mubr.bf16.gmra.mrb[0].mxu0 %v2212
    %v2621 = vpop.f32.mrb[0].mxu0
    %v2622 = vadd.f32 %v2297, %v2621
    %v2623 = vpop.f32.mrb[0].mxu0
    %v2624 = vpop.f32.mrb[0].mxu0
    %v2625 = vadd.f32 %v2297, %v2624
    %v2626 = vpop.f32.mrb[0].mxu0
    %2627 = vmatprep.mubr.bf16.mxu0 %v2217
    %2628 = vmatmul.mubr.bf16.gmra.mrb[0].mxu0 %v2216
    %v2629 = vpop.f32.mrb[0].mxu0
    %v2630 = vadd.f32 %v2297, %v2629
    %v2631 = vpop.f32.mrb[0].mxu0
    %v2632 = vpop.f32.mrb[0].mxu0
    %v2633 = vadd.f32 %v2297, %v2632
    %v2634 = vpop.f32.mrb[0].mxu0
    %2635 = vmatprep.mubr.bf16.mxu0 %v2221
    %2636 = vmatmul.mubr.bf16.gmra.mrb[0].mxu0 %v2220
    %v2637 = vpop.f32.mrb[0].mxu0
    %v2638 = vadd.f32 %v2297, %v2637
    %v2639 = vpop.f32.mrb[0].mxu0
    %v2640 = vpop.f32.mrb[0].mxu0
    %v2641 = vadd.f32 %v2297, %v2640
    %v2642 = vpop.f32.mrb[0].mxu0
    %2643 = vmatprep.mubr.bf16.mxu0 %v2225
    %2644 = vmatmul.mubr.bf16.gmra.mrb[0].mxu0 %v2224
    %v2645 = vpop.f32.mrb[0].mxu0
    %v2646 = vadd.f32 %v2297, %v2645
    %v2647 = vpop.f32.mrb[0].mxu0
    %v2648 = vpop.f32.mrb[0].mxu0
    %v2649 = vadd.f32 %v2297, %v2648
    %v2650 = vpop.f32.mrb[0].mxu0
    %2651 = vdwg.mxu0
    %2652 = vmatprep.subr.bf16.mxu0 0
    %2653 = vmatpush1.bf16.msra.mxu0 %v2443
    %2654 = vmatprep.subr.bf16.mxu0 0
    %2655 = vmatpush1.bf16.msra.mxu0 %v2444
    %2656 = vmatprep.subr.bf16.mxu0 0
    %2657 = vmatpush1.bf16.msra.mxu0 %v2445
    %2658 = vmatprep.subr.bf16.mxu0 0
    %2659 = vmatpush1.bf16.msra.mxu0 %v2446
    %2660 = vmatprep.subr.bf16.mxu0 0
    %2661 = vmatpush1.bf16.msra.mxu0 %v2447
    %2662 = vmatprep.subr.bf16.mxu0 0
    %2663 = vmatpush1.bf16.msra.mxu0 %v2448
    %2664 = vmatprep.subr.bf16.mxu0 0
    %2665 = vmatpush1.bf16.msra.mxu0 %v2449
    %2666 = vmatprep.subr.bf16.mxu0 0
    %2667 = vmatpush1.bf16.msra.mxu0 %v2450
    %2668 = vmatprep.subr.bf16.mxu0 0
    %2669 = vmatpush1.bf16.msra.mxu0 %v2451
    %2670 = vmatprep.subr.bf16.mxu0 0
    %2671 = vmatpush1.bf16.msra.mxu0 %v2452
    %2672 = vmatprep.subr.bf16.mxu0 0
    %2673 = vmatpush1.bf16.msra.mxu0 %v2453
    %2674 = vmatprep.subr.bf16.mxu0 0
    %2675 = vmatpush1.bf16.msra.mxu0 %v2454
    %2676 = vmatprep.subr.bf16.mxu0 0
    %2677 = vmatpush1.bf16.msra.mxu0 %v2455
    %2678 = vmatprep.subr.bf16.mxu0 0
    %2679 = vmatpush1.bf16.msra.mxu0 %v2456
    %2680 = vmatprep.subr.bf16.mxu0 0
    %2681 = vmatpush1.bf16.msra.mxu0 %v2457
    %2682 = vmatprep.subr.bf16.mxu0 0
    %2683 = vmatpush1.bf16.msra.mxu0 %v2458
    %2684 = vmatprep.mubr.bf16.mxu0 %v2167
    %2685 = vmatmul.mubr.bf16.gmra.mrb[0].mxu0 %v2166
    %v2686 = vpop.f32.mrb[0].mxu0
    %v2687 = vadd.f32 %v2526, %v2686
    %v2688 = vpop.f32.mrb[0].mxu0
    %v2689 = vpop.f32.mrb[0].mxu0
    %v2690 = vadd.f32 %v2529, %v2689
    %v2691 = vpop.f32.mrb[0].mxu0
    %2692 = vmatprep.mubr.bf16.mxu0 %v2171
    %2693 = vmatmul.mubr.bf16.gmra.mrb[0].mxu0 %v2170
    %v2694 = vpop.f32.mrb[0].mxu0
    %v2695 = vadd.f32 %v2534, %v2694
    %v2696 = vpop.f32.mrb[0].mxu0
    %v2697 = vpop.f32.mrb[0].mxu0
    %v2698 = vadd.f32 %v2537, %v2697
    %v2699 = vpop.f32.mrb[0].mxu0
    %2700 = vmatprep.mubr.bf16.mxu0 %v2175
    %2701 = vmatmul.mubr.bf16.gmra.mrb[0].mxu0 %v2174
    %v2702 = vpop.f32.mrb[0].mxu0
    %v2703 = vadd.f32 %v2542, %v2702
    %v2704 = vpop.f32.mrb[0].mxu0
    %v2705 = vpop.f32.mrb[0].mxu0
    %v2706 = vadd.f32 %v2545, %v2705
    %v2707 = vpop.f32.mrb[0].mxu0
    %2708 = vmatprep.mubr.bf16.mxu0 %v2179
    %2709 = vmatmul.mubr.bf16.gmra.mrb[0].mxu0 %v2178
    %v2710 = vpop.f32.mrb[0].mxu0
    %v2711 = vadd.f32 %v2550, %v2710
    %v2712 = vpop.f32.mrb[0].mxu0
    %v2713 = vpop.f32.mrb[0].mxu0
    %v2714 = vadd.f32 %v2553, %v2713
    %v2715 = vpop.f32.mrb[0].mxu0
    %2716 = vmatprep.mubr.bf16.mxu0 %v2183
    %2717 = vmatmul.mubr.bf16.gmra.mrb[0].mxu0 %v2182
    %v2718 = vpop.f32.mrb[0].mxu0
    %v2719 = vadd.f32 %v2558, %v2718
    %v2720 = vpop.f32.mrb[0].mxu0
    %v2721 = vpop.f32.mrb[0].mxu0
    %v2722 = vadd.f32 %v2561, %v2721
    %v2723 = vpop.f32.mrb[0].mxu0
    %2724 = vmatprep.mubr.bf16.mxu0 %v2187
    %2725 = vmatmul.mubr.bf16.gmra.mrb[0].mxu0 %v2186
    %v2726 = vpop.f32.mrb[0].mxu0
    %v2727 = vadd.f32 %v2566, %v2726
    %v2728 = vpop.f32.mrb[0].mxu0
    %v2729 = vpop.f32.mrb[0].mxu0
    %v2730 = vadd.f32 %v2569, %v2729
    %v2731 = vpop.f32.mrb[0].mxu0
    %2732 = vmatprep.mubr.bf16.mxu0 %v2191
    %2733 = vmatmul.mubr.bf16.gmra.mrb[0].mxu0 %v2190
    %v2734 = vpop.f32.mrb[0].mxu0
    %v2735 = vadd.f32 %v2574, %v2734
    %v2736 = vpop.f32.mrb[0].mxu0
    %v2737 = vpop.f32.mrb[0].mxu0
    %v2738 = vadd.f32 %v2577, %v2737
    %v2739 = vpop.f32.mrb[0].mxu0
    %2740 = vmatprep.mubr.bf16.mxu0 %v2195
    %2741 = vmatmul.mubr.bf16.gmra.mrb[0].mxu0 %v2194
    %v2742 = vpop.f32.mrb[0].mxu0
    %v2743 = vadd.f32 %v2582, %v2742
    %v2744 = vpop.f32.mrb[0].mxu0
    %v2745 = vpop.f32.mrb[0].mxu0
    %v2746 = vadd.f32 %v2585, %v2745
    %v2747 = vpop.f32.mrb[0].mxu0
    %2748 = vmatprep.mubr.bf16.mxu0 %v2199
    %2749 = vmatmul.mubr.bf16.gmra.mrb[0].mxu0 %v2198
    %v2750 = vpop.f32.mrb[0].mxu0
    %v2751 = vadd.f32 %v2590, %v2750
    %v2752 = vpop.f32.mrb[0].mxu0
    %v2753 = vpop.f32.mrb[0].mxu0
    %v2754 = vadd.f32 %v2593, %v2753
    %v2755 = vpop.f32.mrb[0].mxu0
    %2756 = vmatprep.mubr.bf16.mxu0 %v2203
    %2757 = vmatmul.mubr.bf16.gmra.mrb[0].mxu0 %v2202
    %v2758 = vpop.f32.mrb[0].mxu0
    %v2759 = vadd.f32 %v2598, %v2758
    %v2760 = vpop.f32.mrb[0].mxu0
    %v2761 = vpop.f32.mrb[0].mxu0
    %v2762 = vadd.f32 %v2601, %v2761
    %v2763 = vpop.f32.mrb[0].mxu0
    %2764 = vmatprep.mubr.bf16.mxu0 %v2207
    %2765 = vmatmul.mubr.bf16.gmra.mrb[0].mxu0 %v2206
    %v2766 = vpop.f32.mrb[0].mxu0
    %v2767 = vadd.f32 %v2606, %v2766
    %v2768 = vpop.f32.mrb[0].mxu0
    %v2769 = vpop.f32.mrb[0].mxu0
    %v2770 = vadd.f32 %v2609, %v2769
    %v2771 = vpop.f32.mrb[0].mxu0
    %2772 = vmatprep.mubr.bf16.mxu0 %v2211
    %2773 = vmatmul.mubr.bf16.gmra.mrb[0].mxu0 %v2210
    %v2774 = vpop.f32.mrb[0].mxu0
    %v2775 = vadd.f32 %v2614, %v2774
    %v2776 = vpop.f32.mrb[0].mxu0
    %v2777 = vpop.f32.mrb[0].mxu0
    %v2778 = vadd.f32 %v2617, %v2777
    %v2779 = vpop.f32.mrb[0].mxu0
    %2780 = vmatprep.mubr.bf16.mxu0 %v2215
    %2781 = vmatmul.mubr.bf16.gmra.mrb[0].mxu0 %v2214
    %v2782 = vpop.f32.mrb[0].mxu0
    %v2783 = vadd.f32 %v2622, %v2782
    %v2784 = vpop.f32.mrb[0].mxu0
    %v2785 = vpop.f32.mrb[0].mxu0
    %v2786 = vadd.f32 %v2625, %v2785
    %v2787 = vpop.f32.mrb[0].mxu0
    %2788 = vmatprep.mubr.bf16.mxu0 %v2219
    %2789 = vmatmul.mubr.bf16.gmra.mrb[0].mxu0 %v2218
    %v2790 = vpop.f32.mrb[0].mxu0
    %v2791 = vadd.f32 %v2630, %v2790
    %v2792 = vpop.f32.mrb[0].mxu0
    %v2793 = vpop.f32.mrb[0].mxu0
    %v2794 = vadd.f32 %v2633, %v2793
    %v2795 = vpop.f32.mrb[0].mxu0
    %2796 = vmatprep.mubr.bf16.mxu0 %v2223
    %2797 = vmatmul.mubr.bf16.gmra.mrb[0].mxu0 %v2222
    %v2798 = vpop.f32.mrb[0].mxu0
    %v2799 = vadd.f32 %v2638, %v2798
    %v2800 = vpop.f32.mrb[0].mxu0
    %v2801 = vpop.f32.mrb[0].mxu0
    %v2802 = vadd.f32 %v2641, %v2801
    %v2803 = vpop.f32.mrb[0].mxu0
    %2804 = vmatprep.mubr.bf16.mxu0 %v2227
    %2805 = vmatmul.mubr.bf16.gmra.mrb[0].mxu0 %v2226
    %v2806 = vpop.f32.mrb[0].mxu0
    %v2807 = vadd.f32 %v2646, %v2806
    %v2808 = vpop.f32.mrb[0].mxu0
    %v2809 = vpop.f32.mrb[0].mxu0
    %v2810 = vadd.f32 %v2649, %v2809
    %v2811 = vpop.f32.mrb[0].mxu0
    %2812 = vdwg.mxu0
    %v2813 = vpack.c.bf16 %v2690, %v2687
    %v2814 = vpack.c.bf16 %v2698, %v2695
    %v2815 = vpack.c.bf16 %v2706, %v2703
    %v2816 = vpack.c.bf16 %v2714, %v2711
    %v2817 = vpack.c.bf16 %v2722, %v2719
    %v2818 = vpack.c.bf16 %v2730, %v2727
    %v2819 = vpack.c.bf16 %v2738, %v2735
    %v2820 = vpack.c.bf16 %v2746, %v2743
    %v2821 = vpack.c.bf16 %v2754, %v2751
    %v2822 = vpack.c.bf16 %v2762, %v2759
    %v2823 = vpack.c.bf16 %v2770, %v2767
    %v2824 = vpack.c.bf16 %v2778, %v2775
    %v2825 = vpack.c.bf16 %v2786, %v2783
    %v2826 = vpack.c.bf16 %v2794, %v2791
    %v2827 = vpack.c.bf16 %v2802, %v2799
    %v2828 = vpack.c.bf16 %v2810, %v2807
    %v2845 = vunpack.c.l.b16 %v2813
    %v2846 = vunpack.c.h.b16 %v2813
    %v2847 = vunpack.c.l.b16 %v2814
    %v2848 = vunpack.c.h.b16 %v2814
    %v2849 = vunpack.c.l.b16 %v2815
    %v2850 = vunpack.c.h.b16 %v2815
    %v2851 = vunpack.c.l.b16 %v2816
    %v2852 = vunpack.c.h.b16 %v2816
    %v2853 = vunpack.c.l.b16 %v2817
    %v2854 = vunpack.c.h.b16 %v2817
    %v2855 = vunpack.c.l.b16 %v2818
    %v2856 = vunpack.c.h.b16 %v2818
    %v2857 = vunpack.c.l.b16 %v2819
    %v2858 = vunpack.c.h.b16 %v2819
    %v2859 = vunpack.c.l.b16 %v2820
    %v2860 = vunpack.c.h.b16 %v2820
    %v2861 = vunpack.c.l.b16 %v2821
    %v2862 = vunpack.c.h.b16 %v2821
    %v2863 = vunpack.c.l.b16 %v2822
    %v2864 = vunpack.c.h.b16 %v2822
    %v2865 = vunpack.c.l.b16 %v2823
    %v2866 = vunpack.c.h.b16 %v2823
    %v2867 = vunpack.c.l.b16 %v2824
    %v2868 = vunpack.c.h.b16 %v2824
    %v2869 = vunpack.c.l.b16 %v2825
    %v2870 = vunpack.c.h.b16 %v2825
    %v2871 = vunpack.c.l.b16 %v2826
    %v2872 = vunpack.c.h.b16 %v2826
    %v2873 = vunpack.c.l.b16 %v2827
    %v2874 = vunpack.c.h.b16 %v2827
    %v2875 = vunpack.c.l.b16 %v2828
    %v2876 = vunpack.c.h.b16 %v2828
    %v2877 = vpack.c.b16 %v2845, %v2845
    %v2878 = vpack.c.b16 %v2846, %v2846
    %v2879 = vpack.c.b16 %v2847, %v2847
    %v2880 = vpack.c.b16 %v2848, %v2848
    %v2881 = vpack.c.b16 %v2849, %v2849
    %v2882 = vpack.c.b16 %v2850, %v2850
    %v2883 = vpack.c.b16 %v2851, %v2851
    %v2884 = vpack.c.b16 %v2852, %v2852
    %v2885 = vpack.c.b16 %v2853, %v2853
    %v2886 = vpack.c.b16 %v2854, %v2854
    %v2887 = vpack.c.b16 %v2855, %v2855
    %v2888 = vpack.c.b16 %v2856, %v2856
    %v2889 = vpack.c.b16 %v2857, %v2857
    %v2890 = vpack.c.b16 %v2858, %v2858
    %v2891 = vpack.c.b16 %v2859, %v2859
    %v2892 = vpack.c.b16 %v2860, %v2860
    %v2893 = vpack.c.b16 %v2861, %v2861
    %v2894 = vpack.c.b16 %v2862, %v2862
    %v2895 = vpack.c.b16 %v2863, %v2863
    %v2896 = vpack.c.b16 %v2864, %v2864
    %v2897 = vpack.c.b16 %v2865, %v2865
    %v2898 = vpack.c.b16 %v2866, %v2866
    %v2899 = vpack.c.b16 %v2867, %v2867
    %v2900 = vpack.c.b16 %v2868, %v2868
    %v2901 = vpack.c.b16 %v2869, %v2869
    %v2902 = vpack.c.b16 %v2870, %v2870
    %v2903 = vpack.c.b16 %v2871, %v2871
    %v2904 = vpack.c.b16 %v2872, %v2872
    %v2905 = vpack.c.b16 %v2873, %v2873
    %v2906 = vpack.c.b16 %v2874, %v2874
    %v2907 = vpack.c.b16 %v2875, %v2875
    %v2908 = vpack.c.b16 %v2876, %v2876
    %2941 = vst [vmem:[%s5] sm:$0xf] %v2877
    %2942 = vst [vmem:[%s5 + $0x4] sm:$0xf] %v2878
    %2943 = vst [vmem:[%s5 + $0x8] sm:$0xf] %v2879
    %2944 = vst [vmem:[%s5 + $0xc] sm:$0xf] %v2880
    %2945 = vst [vmem:[%s5 + $0x10] sm:$0xf] %v2881
    %2946 = vst [vmem:[%s5 + $0x14] sm:$0xf] %v2882
    %2947 = vst [vmem:[%s5 + $0x18] sm:$0xf] %v2883
    %2948 = vst [vmem:[%s5 + $0x1c] sm:$0xf] %v2884
    %2949 = vst [vmem:[%s5 + $0x20] sm:$0xf] %v2885
    %2950 = vst [vmem:[%s5 + $0x24] sm:$0xf] %v2886
    %2951 = vst [vmem:[%s5 + $0x28] sm:$0xf] %v2887
    %2952 = vst [vmem:[%s5 + $0x2c] sm:$0xf] %v2888
    %2953 = vst [vmem:[%s5 + $0x30] sm:$0xf] %v2889
    %2954 = vst [vmem:[%s5 + $0x34] sm:$0xf] %v2890
    %2955 = vst [vmem:[%s5 + $0x38] sm:$0xf] %v2891
    %2956 = vst [vmem:[%s5 + $0x3c] sm:$0xf] %v2892
    %2957 = vst [vmem:[%s5 + $0x40] sm:$0xf] %v2893
    %2958 = vst [vmem:[%s5 + $0x44] sm:$0xf] %v2894
    %2959 = vst [vmem:[%s5 + $0x48] sm:$0xf] %v2895
    %2960 = vst [vmem:[%s5 + $0x4c] sm:$0xf] %v2896
    %2961 = vst [vmem:[%s5 + $0x50] sm:$0xf] %v2897
    %2962 = vst [vmem:[%s5 + $0x54] sm:$0xf] %v2898
    %2963 = vst [vmem:[%s5 + $0x58] sm:$0xf] %v2899
    %2964 = vst [vmem:[%s5 + $0x5c] sm:$0xf] %v2900
    %2965 = vst [vmem:[%s5 + $0x60] sm:$0xf] %v2901
    %2966 = vst [vmem:[%s5 + $0x64] sm:$0xf] %v2902
    %2967 = vst [vmem:[%s5 + $0x68] sm:$0xf] %v2903
    %2968 = vst [vmem:[%s5 + $0x6c] sm:$0xf] %v2904
    %2969 = vst [vmem:[%s5 + $0x70] sm:$0xf] %v2905
    %2970 = vst [vmem:[%s5 + $0x74] sm:$0xf] %v2906
    %2971 = vst [vmem:[%s5 + $0x78] sm:$0xf] %v2907
    %2972 = vst [vmem:[%s5 + $0x7c] sm:$0xf] %v2908
  $region29: #{gcn_forward.4} parent=0 // pred_fallthru
    _
  // Predicated region
  $region30: #{gcn_forward.4} parent=0 // pred_check
    _
  $region31: #{gcn_forward.4} parent=0 // pred_check_branch
    %2974 = sbr.rel (0) target = $region33
  $region32: #{gcn_forward.4} parent=0 // pred_region
    _
  $region33: #{gcn_forward.4} parent=0 // pred_fallthru
    _
  // Predicated region
  $region34: #{gcn_forward.4} parent=0 // pred_check
    _
  $region35: #{gcn_forward.4} parent=0 // pred_check_branch
    %2976 = sbr.rel (0) target = $region37
  $region36: #{gcn_forward.4} parent=0 // pred_region
    _
  $region37: #{gcn_forward.4} parent=0 // pred_fallthru
    _

</llo_original>
